<compile_context>
chip_gen: v5e
topology: v5e:2x2
jax: 0.10.0
libtpu: 0.0.40
codegen_flags: <defaults>
</compile_context>

<pallas_src>
import jax
import jax.numpy as jnp
from jax import lax
from jax.experimental import pallas as pl
from jax.experimental.pallas import tpu as pltpu


# ---------------------------------------------------------------------------
# Kernel 1: ConvTranspose2d(Cin, Cin//2, kernel=2, stride=2) with the 2x2
# pixel-shuffle fused into the output layout.
#
#   out[n, 2i+dy, 2j+dx, oc] = sum_ci x[n, i, j, ci] * W[ci, dy, dx, oc] + b[oc]
#
# i.e. one matmul with a (Cin, 4*Ch) weight.  The kernel writes the result as
# (N, H1, 2, W1, 2*Ch) (index order n, i, dy, j, (dx, oc)); the host converts
# that to (N, 2H1, 2W1, Ch) with a pure (free) reshape.
# ---------------------------------------------------------------------------
def _up2x2_kernel(x_ref, w_ref, b_ref, o_ref):
    th, w1, cin = x_ref.shape[1], x_ref.shape[2], x_ref.shape[3]
    ch2 = w_ref.shape[1] // 2                      # = 2 * Ch (the dy=const half)
    x = x_ref[0].reshape(th * w1, cin)             # leading-dim merge only
    y = jnp.dot(x, w_ref[...], preferred_element_type=jnp.float32) + b_ref[...]
    # Columns of y are ordered (dy, dx, oc); split the two dy halves and store
    # them as the even/odd output rows (lane layout per row is (dx, oc)).
    o_ref[0, :, 0, :, :] = y[:, :ch2].reshape(th, w1, ch2)
    o_ref[0, :, 1, :, :] = y[:, ch2:].reshape(th, w1, ch2)


def conv_transpose_2x2_s2(x, w, b, *, row_tile=64):
    """x: (N,H,W,Cin), w: (Cin,2,2,Ch), b: (Ch,) -> (N,2H,2W,Ch)."""
    n, h, w_sp, cin = x.shape
    ch = w.shape[-1]
    # Largest row tile that divides H (exact blocks; >1 step/batch when H big).
    th = 1
    for cand in (row_tile, 64, 32, 16, 8, 4, 2, 1):
        if cand <= h and h % cand == 0:
            th = cand
            break
    w2d = w.reshape(cin, 4 * ch).astype(jnp.float32)        # rows ci, cols (dy,dx,oc)
    b4 = jnp.tile(b.astype(jnp.float32), 4).reshape(1, 4 * ch)

    out = pl.pallas_call(
        _up2x2_kernel,
        out_shape=jax.ShapeDtypeStruct((n, h, 2, w_sp, 2 * ch), jnp.float32),
        grid=(n, h // th),
        in_specs=[
            pl.BlockSpec((1, th, w_sp, cin), lambda i, j: (i, j, 0, 0)),
            pl.BlockSpec((cin, 4 * ch), lambda i, j: (0, 0)),
            pl.BlockSpec((1, 4 * ch), lambda i, j: (0, 0)),
        ],
        out_specs=pl.BlockSpec((1, th, 2, w_sp, 2 * ch),
                               lambda i, j: (i, j, 0, 0, 0)),
        compiler_params=pltpu.CompilerParams(
            dimension_semantics=("parallel", "parallel")),
    )(x.astype(jnp.float32), w2d, b4)
    # (n, i, dy, j, dx, oc) -> (n, 2i+dy, 2j+dx, oc): pure reshape, no transpose.
    return out.reshape(n, 2 * h, 2 * w_sp, ch)


# ---------------------------------------------------------------------------
# Kernel 2: fused DoubleConv (Conv3x3 + folded-BN + ReLU, twice), with the
# skip-connection channel concat and the zero padding fused in.  NHWC layout,
# grid over batch ("parallel" -> megacore / v7x dual-TC friendly).
#
# Padding is built in-kernel: each input is written into a zeroed VMEM scratch
# of shape (H+2, W+_LP+8, C) at interior offset (1, _LP, 0).  _LP = 8 keeps the
# sublane offset of the interior store tile-aligned; the 3x3 taps then read
# shifted (unaligned) *value* slices from the scratch, which is cheap.
# The conv1 intermediate stays entirely in VMEM (never written to HBM).
# Note: at realistic channel counts (>=128) the NHWC minor dim is lane-dense;
# packing (W*C) onto lanes for tiny test channel counts would need a
# minor-dim relayout and is intentionally not done here.
# ---------------------------------------------------------------------------
_LP = 8  # sublane-aligned left zero-pad inside the VMEM scratch


def _double_conv_kernel(x2_ref, x1_ref, w1a_ref, w1b_ref, s1_ref, t1_ref,
                        w2_ref, s2_ref, t2_ref, o_ref,
                        x2p_ref, x1p_ref, yp_ref):
    _, h, w, c2 = x2_ref.shape
    c1 = x1_ref.shape[3]
    cout = w1a_ref.shape[2]

    # ---- zero-padded input tiles (padding + channel concat fused; nothing
    # ---- extra goes through HBM) ------------------------------------------
    x2p_ref[...] = jnp.zeros(x2p_ref.shape, jnp.float32)
    x1p_ref[...] = jnp.zeros(x1p_ref.shape, jnp.float32)
    x2p_ref[1:h + 1, _LP:_LP + w, :] = x2_ref[0]
    x1p_ref[1:h + 1, _LP:_LP + w, :] = x1_ref[0]
    x2p = x2p_ref[...]
    x1p = x1p_ref[...]

    # ---- conv1: 9 shifted MXU matmuls per channel half, f32 accumulation,
    # ---- folded BatchNorm + ReLU epilogue ----------------------------------
    acc = jnp.zeros((h * w, cout), jnp.float32)
    for dy in range(3):
        for dx in range(3):
            t = dy * 3 + dx
            c0 = _LP - 1 + dx
            p2 = x2p[dy:dy + h, c0:c0 + w, :].reshape(h * w, c2)
            p1 = x1p[dy:dy + h, c0:c0 + w, :].reshape(h * w, c1)
            acc = acc + jnp.dot(p2, w1a_ref[t],
                                preferred_element_type=jnp.float32)
            acc = acc + jnp.dot(p1, w1b_ref[t],
                                preferred_element_type=jnp.float32)
    y = jnp.maximum(acc * s1_ref[...] + t1_ref[...], 0.0)

    # ---- conv2 on the VMEM-resident intermediate (never hits HBM) ----------
    yp_ref[...] = jnp.zeros(yp_ref.shape, jnp.float32)
    yp_ref[1:h + 1, _LP:_LP + w, :] = y.reshape(h, w, cout)
    yp = yp_ref[...]
    acc2 = jnp.zeros((h * w, cout), jnp.float32)
    for dy in range(3):
        for dx in range(3):
            t = dy * 3 + dx
            c0 = _LP - 1 + dx
            p = yp[dy:dy + h, c0:c0 + w, :].reshape(h * w, cout)
            acc2 = acc2 + jnp.dot(p, w2_ref[t],
                                  preferred_element_type=jnp.float32)
    z = jnp.maximum(acc2 * s2_ref[...] + t2_ref[...], 0.0)
    o_ref[0] = z.reshape(h, w, cout)


def double_conv_fused(x2, x1u, conv1_w, s1, t1, conv2_w, s2, t2):
    """x2: (N,H,W,C2), x1u: (N,H,W,C1); conv1_w: (3,3,C2+C1,Cout); -> (N,H,W,Cout)."""
    n, h, w_sp, c2 = x2.shape
    c1 = x1u.shape[-1]
    cout = conv1_w.shape[-1]
    f32 = jnp.float32
    # Split conv1 weights into the [x2 | x1] channel halves (fused concat).
    w1a = conv1_w[:, :, :c2, :].reshape(9, c2, cout).astype(f32)
    w1b = conv1_w[:, :, c2:, :].reshape(9, c1, cout).astype(f32)
    w2r = conv2_w.reshape(9, cout, cout).astype(f32)

    return pl.pallas_call(
        _double_conv_kernel,
        out_shape=jax.ShapeDtypeStruct((n, h, w_sp, cout), f32),
        grid=(n,),
        in_specs=[
            pl.BlockSpec((1, h, w_sp, c2), lambda i: (i, 0, 0, 0)),
            pl.BlockSpec((1, h, w_sp, c1), lambda i: (i, 0, 0, 0)),
            pl.BlockSpec((9, c2, cout), lambda i: (0, 0, 0)),
            pl.BlockSpec((9, c1, cout), lambda i: (0, 0, 0)),
            pl.BlockSpec((1, cout), lambda i: (0, 0)),
            pl.BlockSpec((1, cout), lambda i: (0, 0)),
            pl.BlockSpec((9, cout, cout), lambda i: (0, 0, 0)),
            pl.BlockSpec((1, cout), lambda i: (0, 0)),
            pl.BlockSpec((1, cout), lambda i: (0, 0)),
        ],
        out_specs=pl.BlockSpec((1, h, w_sp, cout), lambda i: (i, 0, 0, 0)),
        scratch_shapes=[
            pltpu.VMEM((h + 2, w_sp + 2 * _LP, c2), f32),
            pltpu.VMEM((h + 2, w_sp + 2 * _LP, c1), f32),
            pltpu.VMEM((h + 2, w_sp + 2 * _LP, cout), f32),
        ],
        compiler_params=pltpu.CompilerParams(
            dimension_semantics=("parallel",)),
    )(x2.astype(f32), x1u.astype(f32), w1a, w1b,
      s1.reshape(1, cout).astype(f32), t1.reshape(1, cout).astype(f32),
      w2r, s2.reshape(1, cout).astype(f32), t2.reshape(1, cout).astype(f32))


# ---------------------------------------------------------------------------
# Parameters (deterministic, synthetic), BN folding, and the Up forward pass.
# ---------------------------------------------------------------------------
def init_up_params(key, in_channels, out_channels):
    ch = in_channels // 2
    ks = jax.random.split(key, 6)
    f32 = jnp.float32

    def rnd(k, shape, scale=0.1):
        return (jax.random.normal(k, shape, f32) * scale).astype(f32)

    return {
        # ConvTranspose2d(in_channels, in_channels//2, 2, stride=2)
        "up_w": rnd(ks[0], (in_channels, 2, 2, ch)),
        "up_b": rnd(ks[1], (ch,)),
        # Conv2d(in_channels, out_channels, 3, padding=1) + BN + ReLU
        "conv1_w": rnd(ks[2], (3, 3, in_channels, out_channels)),
        "conv1_b": rnd(ks[3], (out_channels,)),
        "bn1_gamma": jnp.ones((out_channels,), f32),
        "bn1_beta": jnp.zeros((out_channels,), f32),
        "bn1_mean": jnp.zeros((out_channels,), f32),
        "bn1_var": jnp.ones((out_channels,), f32),
        # Conv2d(out_channels, out_channels, 3, padding=1) + BN + ReLU
        "conv2_w": rnd(ks[4], (3, 3, out_channels, out_channels)),
        "conv2_b": rnd(ks[5], (out_channels,)),
        "bn2_gamma": jnp.ones((out_channels,), f32),
        "bn2_beta": jnp.zeros((out_channels,), f32),
        "bn2_mean": jnp.zeros((out_channels,), f32),
        "bn2_var": jnp.ones((out_channels,), f32),
    }


def _fold_bn(conv_b, gamma, beta, mean, var, eps=1e-5):
    scale = gamma / jnp.sqrt(var + eps)
    shift = (conv_b - mean) * scale + beta
    return scale, shift


def _pad_hw_to_match(x, target_h, target_w):
    """F.pad semantics (zero pad; negative diffs crop) to match target H/W."""
    dy = target_h - x.shape[1]
    dx = target_w - x.shape[2]
    if dy == 0 and dx == 0:
        return x
    return lax.pad(x, jnp.zeros((), x.dtype),
                   ((0, 0, 0),
                    (dy // 2, dy - dy // 2, 0),
                    (dx // 2, dx - dx // 2, 0),
                    (0, 0, 0)))


def up_forward(params, x1_nchw, x2_nchw):
    # NCHW -> NHWC at the PyTorch boundary.
    x1 = jnp.transpose(x1_nchw, (0, 2, 3, 1)).astype(jnp.float32)
    x2 = jnp.transpose(x2_nchw, (0, 2, 3, 1)).astype(jnp.float32)

    # self.up(x1): ConvTranspose2d(Cin, Cin//2, 2, stride=2)  (Pallas kernel 1)
    x1u = conv_transpose_2x2_s2(x1, params["up_w"], params["up_b"])

    # F.pad to match x2's spatial size (no-op for the standard 2x case).
    x1u = _pad_hw_to_match(x1u, x2.shape[1], x2.shape[2])

    # concat + DoubleConv, fully fused (Pallas kernel 2).
    s1, t1 = _fold_bn(params["conv1_b"], params["bn1_gamma"], params["bn1_beta"],
                      params["bn1_mean"], params["bn1_var"])
    s2, t2 = _fold_bn(params["conv2_b"], params["bn2_gamma"], params["bn2_beta"],
                      params["bn2_mean"], params["bn2_var"])
    y = double_conv_fused(x2, x1u, params["conv1_w"], s1, t1,
                          params["conv2_w"], s2, t2)

    # NHWC -> NCHW (PyTorch output convention).
    return jnp.transpose(y, (0, 3, 1, 2))


# ---------------------------------------------------------------------------
# Pure-JAX/XLA reference (same eval-mode BN folding) for a numerical check.
# ---------------------------------------------------------------------------
def ref_up_forward(params, x1_nchw, x2_nchw):
    x1 = jnp.transpose(x1_nchw, (0, 2, 3, 1)).astype(jnp.float32)
    x2 = jnp.transpose(x2_nchw, (0, 2, 3, 1)).astype(jnp.float32)

    y = jnp.einsum("nijc,cyxo->niyjxo", x1, params["up_w"],
                   precision=lax.Precision.HIGHEST) + params["up_b"]
    n, h1, _, w1, _, ch = y.shape
    x1u = y.reshape(n, 2 * h1, 2 * w1, ch)
    x1u = _pad_hw_to_match(x1u, x2.shape[1], x2.shape[2])
    x = jnp.concatenate([x2, x1u], axis=-1)

    def conv_bn_relu(v, w, s, t):
        c = lax.conv_general_dilated(v, w, (1, 1), "SAME",
                                     dimension_numbers=("NHWC", "HWIO", "NHWC"),
                                     precision=lax.Precision.HIGHEST)
        return jnp.maximum(c * s + t, 0.0)

    s1, t1 = _fold_bn(params["conv1_b"], params["bn1_gamma"], params["bn1_beta"],
                      params["bn1_mean"], params["bn1_var"])
    s2, t2 = _fold_bn(params["conv2_b"], params["bn2_gamma"], params["bn2_beta"],
                      params["bn2_mean"], params["bn2_var"])
    x = conv_bn_relu(x, params["conv1_w"], s1, t1)
    x = conv_bn_relu(x, params["conv2_w"], s2, t2)
    return jnp.transpose(x, (0, 3, 1, 2))


if __name__ == "__main__":
    key = jax.random.PRNGKey(0)
    k_params, k_x1, k_x2 = jax.random.split(key, 3)

    in_channels, out_channels = 16, 16
    batch, h1, w1 = 2, 8, 8                      # x1 spatial
    h2, w2 = 2 * h1, 2 * w1                      # x2 spatial (skip connection)

    params = init_up_params(k_params, in_channels, out_channels)

    # PyTorch-convention NCHW inputs.
    x1 = jax.random.normal(k_x1, (batch, in_channels, h1, w1), jnp.float32)
    x2 = jax.random.normal(k_x2, (batch, in_channels // 2, h2, w2), jnp.float32)

    up_fn = jax.jit(up_forward)
    out = jax.block_until_ready(up_fn(params, x1, x2))

    assert out.shape == (batch, out_channels, h2, w2), out.shape
    assert bool(jnp.all(jnp.isfinite(out)))

    ref = jax.block_until_ready(ref_up_forward(params, x1, x2))
    max_err = float(jnp.max(jnp.abs(out - ref)))
    assert max_err < 5e-2, f"max abs error vs reference: {max_err}"

    print("KERNEL_OK")
</pallas_src>

<mosaic_0001>
module attributes {stable_mosaic.version = 11 : i64} {
  func.func @_up2x2_kernel(%arg0: i32, %arg1: i32, %arg2: memref<1x8x8x16xf32, #tpu.memory_space<vmem>>, %arg3: memref<16x32xf32, #tpu.memory_space<vmem>>, %arg4: memref<1x32xf32, #tpu.memory_space<vmem>>, %arg5: memref<1x8x2x8x16xf32, #tpu.memory_space<vmem>>) attributes {dimension_semantics = [#tpu.dimension_semantics<parallel>, #tpu.dimension_semantics<parallel>], iteration_bounds = array<i64: 2, 1>, scalar_prefetch = 0 : i64, scratch_operands = 0 : i64, tpu.core_type = #tpu.core_type<tc>, window_params = [{transform_indices = @transform_0, window_bounds = array<i64: 1, 8, 8, 16>}, {pipeline_mode = #tpu.pipeline_mode<synchronous>, transform_indices = @transform_1, window_bounds = array<i64: 16, 32>}, {pipeline_mode = #tpu.pipeline_mode<synchronous>, transform_indices = @transform_2, window_bounds = array<i64: 1, 32>}, {transform_indices = @transform_3, window_bounds = array<i64: 1, 8, 2, 8, 16>}]} {
    %c0 = arith.constant 0 : index
    %c0_0 = arith.constant 0 : index
    %c0_1 = arith.constant 0 : index
    %c0_2 = arith.constant 0 : index
    %0 = vector.load %arg2[%c0, %c0_0, %c0_1, %c0_2] : memref<1x8x8x16xf32, #tpu.memory_space<vmem>>, vector<1x8x8x16xf32>
    %1 = vector.shape_cast %0 : vector<1x8x8x16xf32> to vector<8x8x16xf32>
    %2 = vector.shape_cast %1 : vector<8x8x16xf32> to vector<64x16xf32>
    %c0_3 = arith.constant 0 : index
    %c0_4 = arith.constant 0 : index
    %3 = vector.load %arg3[%c0_3, %c0_4] : memref<16x32xf32, #tpu.memory_space<vmem>>, vector<16x32xf32>
    %cst = arith.constant dense<0.000000e+00> : vector<64x32xf32>
    %4 = tpu.matmul %2, %3, %cst {dimension_numbers = #tpu.dot_dimension_numbers<[1], [0], [0], [1], [0, 0, 1, 1], [], []>} : vector<64x16xf32>, vector<16x32xf32>, vector<64x32xf32> -> vector<64x32xf32>
    %c0_5 = arith.constant 0 : index
    %c0_6 = arith.constant 0 : index
    %5 = vector.load %arg4[%c0_5, %c0_6] : memref<1x32xf32, #tpu.memory_space<vmem>>, vector<1x32xf32>
    %6 = vector.broadcast %5 : vector<1x32xf32> to vector<64x32xf32>
    %7 = arith.addf %4, %6 : vector<64x32xf32>
    %8 = vector.extract_strided_slice %7 {offsets = [0, 0], sizes = [64, 16], strides = [1, 1]} : vector<64x32xf32> to vector<64x16xf32>
    %9 = vector.shape_cast %8 : vector<64x16xf32> to vector<8x8x16xf32>
    %c0_7 = arith.constant 0 : index
    %c0_8 = arith.constant 0 : index
    %c0_9 = arith.constant 0 : index
    %c0_10 = arith.constant 0 : index
    %c0_11 = arith.constant 0 : index
    %10 = vector.load %arg5[%c0_7, %c0_8, %c0_9, %c0_10, %c0_11] : memref<1x8x2x8x16xf32, #tpu.memory_space<vmem>>, vector<1x8x1x8x16xf32>
    %11 = vector.shape_cast %10 : vector<1x8x1x8x16xf32> to vector<8x8x16xf32>
    %12 = vector.shape_cast %9 : vector<8x8x16xf32> to vector<1x8x1x8x16xf32>
    tpu.vector_store %arg5[%c0_7, %c0_8, %c0_9, %c0_10, %c0_11], %12 {strides = array<i32>} : memref<1x8x2x8x16xf32, #tpu.memory_space<vmem>>, vector<1x8x1x8x16xf32>,
    %13 = vector.extract_strided_slice %7 {offsets = [0, 16], sizes = [64, 16], strides = [1, 1]} : vector<64x32xf32> to vector<64x16xf32>
    %14 = vector.shape_cast %13 : vector<64x16xf32> to vector<8x8x16xf32>
    %c0_12 = arith.constant 0 : index
    %c0_13 = arith.constant 0 : index
    %c1 = arith.constant 1 : index
    %c0_14 = arith.constant 0 : index
    %c0_15 = arith.constant 0 : index
    %15 = vector.load %arg5[%c0_12, %c0_13, %c1, %c0_14, %c0_15] : memref<1x8x2x8x16xf32, #tpu.memory_space<vmem>>, vector<1x8x1x8x16xf32>
    %16 = vector.shape_cast %15 : vector<1x8x1x8x16xf32> to vector<8x8x16xf32>
    %17 = vector.shape_cast %14 : vector<8x8x16xf32> to vector<1x8x1x8x16xf32>
    tpu.vector_store %arg5[%c0_12, %c0_13, %c1, %c0_14, %c0_15], %17 {strides = array<i32>} : memref<1x8x2x8x16xf32, #tpu.memory_space<vmem>>, vector<1x8x1x8x16xf32>,
    return
  }
  func.func @transform_0(%arg0: i32, %arg1: i32) -> (i32, i32, i32, i32) {
    %c0_i32 = arith.constant 0 : i32
    %c0_i32_0 = arith.constant 0 : i32
    %c0_i32_1 = arith.constant 0 : i32
    return %arg0, %arg1, %c0_i32, %c0_i32_0 : i32, i32, i32, i32
  }
  func.func @transform_1(%arg0: i32, %arg1: i32) -> (i32, i32) {
    %c0_i32 = arith.constant 0 : i32
    %c0_i32_0 = arith.constant 0 : i32
    %c0_i32_1 = arith.constant 0 : i32
    return %c0_i32, %c0_i32_0 : i32, i32
  }
  func.func @transform_2(%arg0: i32, %arg1: i32) -> (i32, i32) {
    %c0_i32 = arith.constant 0 : i32
    %c0_i32_0 = arith.constant 0 : i32
    %c0_i32_1 = arith.constant 0 : i32
    return %c0_i32, %c0_i32_0 : i32, i32
  }
  func.func @transform_3(%arg0: i32, %arg1: i32) -> (i32, i32, i32, i32, i32) {
    %c0_i32 = arith.constant 0 : i32
    %c0_i32_0 = arith.constant 0 : i32
    %c0_i32_1 = arith.constant 0 : i32
    %c0_i32_2 = arith.constant 0 : i32
    return %arg0, %arg1, %c0_i32, %c0_i32_0, %c0_i32_1 : i32, i32, i32, i32, i32
  }
}

module attributes {stable_mosaic.version = 11 : i64} {
  func.func @_double_conv_kernel(%arg0: i32, %arg1: memref<1x16x16x8xf32, #tpu.memory_space<vmem>>, %arg2: memref<1x16x16x8xf32, #tpu.memory_space<vmem>>, %arg3: memref<9x8x16xf32, #tpu.memory_space<vmem>>, %arg4: memref<9x8x16xf32, #tpu.memory_space<vmem>>, %arg5: memref<1x16xf32, #tpu.memory_space<vmem>>, %arg6: memref<1x16xf32, #tpu.memory_space<vmem>>, %arg7: memref<9x16x16xf32, #tpu.memory_space<vmem>>, %arg8: memref<1x16xf32, #tpu.memory_space<vmem>>, %arg9: memref<1x16xf32, #tpu.memory_space<vmem>>, %arg10: memref<1x16x16x16xf32, #tpu.memory_space<vmem>>, %arg11: memref<18x32x8xf32, #tpu.memory_space<vmem>>, %arg12: memref<18x32x8xf32, #tpu.memory_space<vmem>>, %arg13: memref<18x32x16xf32, #tpu.memory_space<vmem>>) attributes {dimension_semantics = [#tpu.dimension_semantics<parallel>], iteration_bounds = array<i64: 2>, scalar_prefetch = 0 : i64, scratch_operands = 3 : i64, tpu.core_type = #tpu.core_type<tc>, window_params = [{transform_indices = @transform_0, window_bounds = array<i64: 1, 16, 16, 8>}, {transform_indices = @transform_1, window_bounds = array<i64: 1, 16, 16, 8>}, {pipeline_mode = #tpu.pipeline_mode<synchronous>, transform_indices = @transform_2, window_bounds = array<i64: 9, 8, 16>}, {pipeline_mode = #tpu.pipeline_mode<synchronous>, transform_indices = @transform_3, window_bounds = array<i64: 9, 8, 16>}, {pipeline_mode = #tpu.pipeline_mode<synchronous>, transform_indices = @transform_4, window_bounds = array<i64: 1, 16>}, {pipeline_mode = #tpu.pipeline_mode<synchronous>, transform_indices = @transform_5, window_bounds = array<i64: 1, 16>}, {pipeline_mode = #tpu.pipeline_mode<synchronous>, transform_indices = @transform_6, window_bounds = array<i64: 9, 16, 16>}, {pipeline_mode = #tpu.pipeline_mode<synchronous>, transform_indices = @transform_7, window_bounds = array<i64: 1, 16>}, {pipeline_mode = #tpu.pipeline_mode<synchronous>, transform_indices = @transform_8, window_bounds = array<i64: 1, 16>}, {transform_indices = @transform_9, window_bounds = array<i64: 1, 16, 16, 16>}]} {
    %cst = arith.constant 0.000000e+00 : f32
    %0 = vector.broadcast %cst : f32 to vector<18x32x8xf32>
    %c0 = arith.constant 0 : index
    %c0_0 = arith.constant 0 : index
    %c0_1 = arith.constant 0 : index
    %1 = vector.load %arg11[%c0, %c0_0, %c0_1] : memref<18x32x8xf32, #tpu.memory_space<vmem>>, vector<18x32x8xf32>
    tpu.vector_store %arg11[%c0, %c0_0, %c0_1], %0 {strides = array<i32>} : memref<18x32x8xf32, #tpu.memory_space<vmem>>, vector<18x32x8xf32>,
    %cst_2 = arith.constant 0.000000e+00 : f32
    %2 = vector.broadcast %cst_2 : f32 to vector<18x32x8xf32>
    %c0_3 = arith.constant 0 : index
    %c0_4 = arith.constant 0 : index
    %c0_5 = arith.constant 0 : index
    %3 = vector.load %arg12[%c0_3, %c0_4, %c0_5] : memref<18x32x8xf32, #tpu.memory_space<vmem>>, vector<18x32x8xf32>
    tpu.vector_store %arg12[%c0_3, %c0_4, %c0_5], %2 {strides = array<i32>} : memref<18x32x8xf32, #tpu.memory_space<vmem>>, vector<18x32x8xf32>,
    %c0_6 = arith.constant 0 : index
    %c0_7 = arith.constant 0 : index
    %c0_8 = arith.constant 0 : index
    %c0_9 = arith.constant 0 : index
    %4 = vector.load %arg1[%c0_6, %c0_7, %c0_8, %c0_9] : memref<1x16x16x8xf32, #tpu.memory_space<vmem>>, vector<1x16x16x8xf32>
    %5 = vector.shape_cast %4 : vector<1x16x16x8xf32> to vector<16x16x8xf32>
    %c1 = arith.constant 1 : index
    %c8 = arith.constant 8 : index
    %c0_10 = arith.constant 0 : index
    %6 = vector.load %arg11[%c1, %c8, %c0_10] : memref<18x32x8xf32, #tpu.memory_space<vmem>>, vector<16x16x8xf32>
    tpu.vector_store %arg11[%c1, %c8, %c0_10], %5 {strides = array<i32>} : memref<18x32x8xf32, #tpu.memory_space<vmem>>, vector<16x16x8xf32>,
    %c0_11 = arith.constant 0 : index
    %c0_12 = arith.constant 0 : index
    %c0_13 = arith.constant 0 : index
    %c0_14 = arith.constant 0 : index
    %7 = vector.load %arg2[%c0_11, %c0_12, %c0_13, %c0_14] : memref<1x16x16x8xf32, #tpu.memory_space<vmem>>, vector<1x16x16x8xf32>
    %8 = vector.shape_cast %7 : vector<1x16x16x8xf32> to vector<16x16x8xf32>
    %c1_15 = arith.constant 1 : index
    %c8_16 = arith.constant 8 : index
    %c0_17 = arith.constant 0 : index
    %9 = vector.load %arg12[%c1_15, %c8_16, %c0_17] : memref<18x32x8xf32, #tpu.memory_space<vmem>>, vector<16x16x8xf32>
    tpu.vector_store %arg12[%c1_15, %c8_16, %c0_17], %8 {strides = array<i32>} : memref<18x32x8xf32, #tpu.memory_space<vmem>>, vector<16x16x8xf32>,
    %c0_18 = arith.constant 0 : index
    %c0_19 = arith.constant 0 : index
    %c0_20 = arith.constant 0 : index
    %10 = vector.load %arg11[%c0_18, %c0_19, %c0_20] : memref<18x32x8xf32, #tpu.memory_space<vmem>>, vector<18x32x8xf32>
    %c0_21 = arith.constant 0 : index
    %c0_22 = arith.constant 0 : index
    %c0_23 = arith.constant 0 : index
    %11 = vector.load %arg12[%c0_21, %c0_22, %c0_23] : memref<18x32x8xf32, #tpu.memory_space<vmem>>, vector<18x32x8xf32>
    %cst_24 = arith.constant 0.000000e+00 : f32
    %12 = vector.broadcast %cst_24 : f32 to vector<256x16xf32>
    %13 = vector.extract_strided_slice %10 {offsets = [0, 7, 0], sizes = [16, 16, 8], strides = [1, 1, 1]} : vector<18x32x8xf32> to vector<16x16x8xf32>
    %14 = vector.shape_cast %13 : vector<16x16x8xf32> to vector<256x8xf32>
    %15 = vector.extract_strided_slice %11 {offsets = [0, 7, 0], sizes = [16, 16, 8], strides = [1, 1, 1]} : vector<18x32x8xf32> to vector<16x16x8xf32>
    %16 = vector.shape_cast %15 : vector<16x16x8xf32> to vector<256x8xf32>
    %c0_25 = arith.constant 0 : index
    %c0_26 = arith.constant 0 : index
    %c0_27 = arith.constant 0 : index
    %17 = vector.load %arg3[%c0_25, %c0_26, %c0_27] : memref<9x8x16xf32, #tpu.memory_space<vmem>>, vector<1x8x16xf32>
    %18 = vector.shape_cast %17 : vector<1x8x16xf32> to vector<8x16xf32>
    %cst_28 = arith.constant dense<0.000000e+00> : vector<256x16xf32>
    %19 = tpu.matmul %14, %18, %cst_28 {dimension_numbers = #tpu.dot_dimension_numbers<[1], [0], [0], [1], [0, 0, 1, 1], [], []>} : vector<256x8xf32>, vector<8x16xf32>, vector<256x16xf32> -> vector<256x16xf32>
    %20 = arith.addf %12, %19 : vector<256x16xf32>
    %c0_29 = arith.constant 0 : index
    %c0_30 = arith.constant 0 : index
    %c0_31 = arith.constant 0 : index
    %21 = vector.load %arg4[%c0_29, %c0_30, %c0_31] : memref<9x8x16xf32, #tpu.memory_space<vmem>>, vector<1x8x16xf32>
    %22 = vector.shape_cast %21 : vector<1x8x16xf32> to vector<8x16xf32>
    %cst_32 = arith.constant dense<0.000000e+00> : vector<256x16xf32>
    %23 = tpu.matmul %16, %22, %cst_32 {dimension_numbers = #tpu.dot_dimension_numbers<[1], [0], [0], [1], [0, 0, 1, 1], [], []>} : vector<256x8xf32>, vector<8x16xf32>, vector<256x16xf32> -> vector<256x16xf32>
    %24 = arith.addf %20, %23 : vector<256x16xf32>
    %25 = vector.extract_strided_slice %10 {offsets = [0, 8, 0], sizes = [16, 16, 8], strides = [1, 1, 1]} : vector<18x32x8xf32> to vector<16x16x8xf32>
    %26 = vector.shape_cast %25 : vector<16x16x8xf32> to vector<256x8xf32>
    %27 = vector.extract_strided_slice %11 {offsets = [0, 8, 0], sizes = [16, 16, 8], strides = [1, 1, 1]} : vector<18x32x8xf32> to vector<16x16x8xf32>
    %28 = vector.shape_cast %27 : vector<16x16x8xf32> to vector<256x8xf32>
    %c1_33 = arith.constant 1 : index
    %c0_34 = arith.constant 0 : index
    %c0_35 = arith.constant 0 : index
    %29 = vector.load %arg3[%c1_33, %c0_34, %c0_35] : memref<9x8x16xf32, #tpu.memory_space<vmem>>, vector<1x8x16xf32>
    %30 = vector.shape_cast %29 : vector<1x8x16xf32> to vector<8x16xf32>
    %cst_36 = arith.constant dense<0.000000e+00> : vector<256x16xf32>
    %31 = tpu.matmul %26, %30, %cst_36 {dimension_numbers = #tpu.dot_dimension_numbers<[1], [0], [0], [1], [0, 0, 1, 1], [], []>} : vector<256x8xf32>, vector<8x16xf32>, vector<256x16xf32> -> vector<256x16xf32>
    %32 = arith.addf %24, %31 : vector<256x16xf32>
    %c1_37 = arith.constant 1 : index
    %c0_38 = arith.constant 0 : index
    %c0_39 = arith.constant 0 : index
    %33 = vector.load %arg4[%c1_37, %c0_38, %c0_39] : memref<9x8x16xf32, #tpu.memory_space<vmem>>, vector<1x8x16xf32>
    %34 = vector.shape_cast %33 : vector<1x8x16xf32> to vector<8x16xf32>
    %cst_40 = arith.constant dense<0.000000e+00> : vector<256x16xf32>
    %35 = tpu.matmul %28, %34, %cst_40 {dimension_numbers = #tpu.dot_dimension_numbers<[1], [0], [0], [1], [0, 0, 1, 1], [], []>} : vector<256x8xf32>, vector<8x16xf32>, vector<256x16xf32> -> vector<256x16xf32>
    %36 = arith.addf %32, %35 : vector<256x16xf32>
    %37 = vector.extract_strided_slice %10 {offsets = [0, 9, 0], sizes = [16, 16, 8], strides = [1, 1, 1]} : vector<18x32x8xf32> to vector<16x16x8xf32>
    %38 = vector.shape_cast %37 : vector<16x16x8xf32> to vector<256x8xf32>
    %39 = vector.extract_strided_slice %11 {offsets = [0, 9, 0], sizes = [16, 16, 8], strides = [1, 1, 1]} : vector<18x32x8xf32> to vector<16x16x8xf32>
    %40 = vector.shape_cast %39 : vector<16x16x8xf32> to vector<256x8xf32>
    %c2 = arith.constant 2 : index
    %c0_41 = arith.constant 0 : index
    %c0_42 = arith.constant 0 : index
    %41 = vector.load %arg3[%c2, %c0_41, %c0_42] : memref<9x8x16xf32, #tpu.memory_space<vmem>>, vector<1x8x16xf32>
    %42 = vector.shape_cast %41 : vector<1x8x16xf32> to vector<8x16xf32>
    %cst_43 = arith.constant dense<0.000000e+00> : vector<256x16xf32>
    %43 = tpu.matmul %38, %42, %cst_43 {dimension_numbers = #tpu.dot_dimension_numbers<[1], [0], [0], [1], [0, 0, 1, 1], [], []>} : vector<256x8xf32>, vector<8x16xf32>, vector<256x16xf32> -> vector<256x16xf32>
    %44 = arith.addf %36, %43 : vector<256x16xf32>
    %c2_44 = arith.constant 2 : index
    %c0_45 = arith.constant 0 : index
    %c0_46 = arith.constant 0 : index
    %45 = vector.load %arg4[%c2_44, %c0_45, %c0_46] : memref<9x8x16xf32, #tpu.memory_space<vmem>>, vector<1x8x16xf32>
    %46 = vector.shape_cast %45 : vector<1x8x16xf32> to vector<8x16xf32>
    %cst_47 = arith.constant dense<0.000000e+00> : vector<256x16xf32>
    %47 = tpu.matmul %40, %46, %cst_47 {dimension_numbers = #tpu.dot_dimension_numbers<[1], [0], [0], [1], [0, 0, 1, 1], [], []>} : vector<256x8xf32>, vector<8x16xf32>, vector<256x16xf32> -> vector<256x16xf32>
    %48 = arith.addf %44, %47 : vector<256x16xf32>
    %49 = vector.extract_strided_slice %10 {offsets = [1, 7, 0], sizes = [16, 16, 8], strides = [1, 1, 1]} : vector<18x32x8xf32> to vector<16x16x8xf32>
    %50 = vector.shape_cast %49 : vector<16x16x8xf32> to vector<256x8xf32>
    %51 = vector.extract_strided_slice %11 {offsets = [1, 7, 0], sizes = [16, 16, 8], strides = [1, 1, 1]} : vector<18x32x8xf32> to vector<16x16x8xf32>
    %52 = vector.shape_cast %51 : vector<16x16x8xf32> to vector<256x8xf32>
    %c3 = arith.constant 3 : index
    %c0_48 = arith.constant 0 : index
    %c0_49 = arith.constant 0 : index
    %53 = vector.load %arg3[%c3, %c0_48, %c0_49] : memref<9x8x16xf32, #tpu.memory_space<vmem>>, vector<1x8x16xf32>
    %54 = vector.shape_cast %53 : vector<1x8x16xf32> to vector<8x16xf32>
    %cst_50 = arith.constant dense<0.000000e+00> : vector<256x16xf32>
    %55 = tpu.matmul %50, %54, %cst_50 {dimension_numbers = #tpu.dot_dimension_numbers<[1], [0], [0], [1], [0, 0, 1, 1], [], []>} : vector<256x8xf32>, vector<8x16xf32>, vector<256x16xf32> -> vector<256x16xf32>
    %56 = arith.addf %48, %55 : vector<256x16xf32>
    %c3_51 = arith.constant 3 : index
    %c0_52 = arith.constant 0 : index
    %c0_53 = arith.constant 0 : index
    %57 = vector.load %arg4[%c3_51, %c0_52, %c0_53] : memref<9x8x16xf32, #tpu.memory_space<vmem>>, vector<1x8x16xf32>
    %58 = vector.shape_cast %57 : vector<1x8x16xf32> to vector<8x16xf32>
    %cst_54 = arith.constant dense<0.000000e+00> : vector<256x16xf32>
    %59 = tpu.matmul %52, %58, %cst_54 {dimension_numbers = #tpu.dot_dimension_numbers<[1], [0], [0], [1], [0, 0, 1, 1], [], []>} : vector<256x8xf32>, vector<8x16xf32>, vector<256x16xf32> -> vector<256x16xf32>
    %60 = arith.addf %56, %59 : vector<256x16xf32>
    %61 = vector.extract_strided_slice %10 {offsets = [1, 8, 0], sizes = [16, 16, 8], strides = [1, 1, 1]} : vector<18x32x8xf32> to vector<16x16x8xf32>
    %62 = vector.shape_cast %61 : vector<16x16x8xf32> to vector<256x8xf32>
    %63 = vector.extract_strided_slice %11 {offsets = [1, 8, 0], sizes = [16, 16, 8], strides = [1, 1, 1]} : vector<18x32x8xf32> to vector<16x16x8xf32>
    %64 = vector.shape_cast %63 : vector<16x16x8xf32> to vector<256x8xf32>
    %c4 = arith.constant 4 : index
    %c0_55 = arith.constant 0 : index
    %c0_56 = arith.constant 0 : index
    %65 = vector.load %arg3[%c4, %c0_55, %c0_56] : memref<9x8x16xf32, #tpu.memory_space<vmem>>, vector<1x8x16xf32>
    %66 = vector.shape_cast %65 : vector<1x8x16xf32> to vector<8x16xf32>
    %cst_57 = arith.constant dense<0.000000e+00> : vector<256x16xf32>
    %67 = tpu.matmul %62, %66, %cst_57 {dimension_numbers = #tpu.dot_dimension_numbers<[1], [0], [0], [1], [0, 0, 1, 1], [], []>} : vector<256x8xf32>, vector<8x16xf32>, vector<256x16xf32> -> vector<256x16xf32>
    %68 = arith.addf %60, %67 : vector<256x16xf32>
    %c4_58 = arith.constant 4 : index
    %c0_59 = arith.constant 0 : index
    %c0_60 = arith.constant 0 : index
    %69 = vector.load %arg4[%c4_58, %c0_59, %c0_60] : memref<9x8x16xf32, #tpu.memory_space<vmem>>, vector<1x8x16xf32>
    %70 = vector.shape_cast %69 : vector<1x8x16xf32> to vector<8x16xf32>
    %cst_61 = arith.constant dense<0.000000e+00> : vector<256x16xf32>
    %71 = tpu.matmul %64, %70, %cst_61 {dimension_numbers = #tpu.dot_dimension_numbers<[1], [0], [0], [1], [0, 0, 1, 1], [], []>} : vector<256x8xf32>, vector<8x16xf32>, vector<256x16xf32> -> vector<256x16xf32>
    %72 = arith.addf %68, %71 : vector<256x16xf32>
    %73 = vector.extract_strided_slice %10 {offsets = [1, 9, 0], sizes = [16, 16, 8], strides = [1, 1, 1]} : vector<18x32x8xf32> to vector<16x16x8xf32>
    %74 = vector.shape_cast %73 : vector<16x16x8xf32> to vector<256x8xf32>
    %75 = vector.extract_strided_slice %11 {offsets = [1, 9, 0], sizes = [16, 16, 8], strides = [1, 1, 1]} : vector<18x32x8xf32> to vector<16x16x8xf32>
    %76 = vector.shape_cast %75 : vector<16x16x8xf32> to vector<256x8xf32>
    %c5 = arith.constant 5 : index
    %c0_62 = arith.constant 0 : index
    %c0_63 = arith.constant 0 : index
    %77 = vector.load %arg3[%c5, %c0_62, %c0_63] : memref<9x8x16xf32, #tpu.memory_space<vmem>>, vector<1x8x16xf32>
    %78 = vector.shape_cast %77 : vector<1x8x16xf32> to vector<8x16xf32>
    %cst_64 = arith.constant dense<0.000000e+00> : vector<256x16xf32>
    %79 = tpu.matmul %74, %78, %cst_64 {dimension_numbers = #tpu.dot_dimension_numbers<[1], [0], [0], [1], [0, 0, 1, 1], [], []>} : vector<256x8xf32>, vector<8x16xf32>, vector<256x16xf32> -> vector<256x16xf32>
    %80 = arith.addf %72, %79 : vector<256x16xf32>
    %c5_65 = arith.constant 5 : index
    %c0_66 = arith.constant 0 : index
    %c0_67 = arith.constant 0 : index
    %81 = vector.load %arg4[%c5_65, %c0_66, %c0_67] : memref<9x8x16xf32, #tpu.memory_space<vmem>>, vector<1x8x16xf32>
    %82 = vector.shape_cast %81 : vector<1x8x16xf32> to vector<8x16xf32>
    %cst_68 = arith.constant dense<0.000000e+00> : vector<256x16xf32>
    %83 = tpu.matmul %76, %82, %cst_68 {dimension_numbers = #tpu.dot_dimension_numbers<[1], [0], [0], [1], [0, 0, 1, 1], [], []>} : vector<256x8xf32>, vector<8x16xf32>, vector<256x16xf32> -> vector<256x16xf32>
    %84 = arith.addf %80, %83 : vector<256x16xf32>
    %85 = vector.extract_strided_slice %10 {offsets = [2, 7, 0], sizes = [16, 16, 8], strides = [1, 1, 1]} : vector<18x32x8xf32> to vector<16x16x8xf32>
    %86 = vector.shape_cast %85 : vector<16x16x8xf32> to vector<256x8xf32>
    %87 = vector.extract_strided_slice %11 {offsets = [2, 7, 0], sizes = [16, 16, 8], strides = [1, 1, 1]} : vector<18x32x8xf32> to vector<16x16x8xf32>
    %88 = vector.shape_cast %87 : vector<16x16x8xf32> to vector<256x8xf32>
    %c6 = arith.constant 6 : index
    %c0_69 = arith.constant 0 : index
    %c0_70 = arith.constant 0 : index
    %89 = vector.load %arg3[%c6, %c0_69, %c0_70] : memref<9x8x16xf32, #tpu.memory_space<vmem>>, vector<1x8x16xf32>
    %90 = vector.shape_cast %89 : vector<1x8x16xf32> to vector<8x16xf32>
    %cst_71 = arith.constant dense<0.000000e+00> : vector<256x16xf32>
    %91 = tpu.matmul %86, %90, %cst_71 {dimension_numbers = #tpu.dot_dimension_numbers<[1], [0], [0], [1], [0, 0, 1, 1], [], []>} : vector<256x8xf32>, vector<8x16xf32>, vector<256x16xf32> -> vector<256x16xf32>
    %92 = arith.addf %84, %91 : vector<256x16xf32>
    %c6_72 = arith.constant 6 : index
    %c0_73 = arith.constant 0 : index
    %c0_74 = arith.constant 0 : index
    %93 = vector.load %arg4[%c6_72, %c0_73, %c0_74] : memref<9x8x16xf32, #tpu.memory_space<vmem>>, vector<1x8x16xf32>
    %94 = vector.shape_cast %93 : vector<1x8x16xf32> to vector<8x16xf32>
    %cst_75 = arith.constant dense<0.000000e+00> : vector<256x16xf32>
    %95 = tpu.matmul %88, %94, %cst_75 {dimension_numbers = #tpu.dot_dimension_numbers<[1], [0], [0], [1], [0, 0, 1, 1], [], []>} : vector<256x8xf32>, vector<8x16xf32>, vector<256x16xf32> -> vector<256x16xf32>
    %96 = arith.addf %92, %95 : vector<256x16xf32>
    %97 = vector.extract_strided_slice %10 {offsets = [2, 8, 0], sizes = [16, 16, 8], strides = [1, 1, 1]} : vector<18x32x8xf32> to vector<16x16x8xf32>
    %98 = vector.shape_cast %97 : vector<16x16x8xf32> to vector<256x8xf32>
    %99 = vector.extract_strided_slice %11 {offsets = [2, 8, 0], sizes = [16, 16, 8], strides = [1, 1, 1]} : vector<18x32x8xf32> to vector<16x16x8xf32>
    %100 = vector.shape_cast %99 : vector<16x16x8xf32> to vector<256x8xf32>
    %c7 = arith.constant 7 : index
    %c0_76 = arith.constant 0 : index
    %c0_77 = arith.constant 0 : index
    %101 = vector.load %arg3[%c7, %c0_76, %c0_77] : memref<9x8x16xf32, #tpu.memory_space<vmem>>, vector<1x8x16xf32>
    %102 = vector.shape_cast %101 : vector<1x8x16xf32> to vector<8x16xf32>
    %cst_78 = arith.constant dense<0.000000e+00> : vector<256x16xf32>
    %103 = tpu.matmul %98, %102, %cst_78 {dimension_numbers = #tpu.dot_dimension_numbers<[1], [0], [0], [1], [0, 0, 1, 1], [], []>} : vector<256x8xf32>, vector<8x16xf32>, vector<256x16xf32> -> vector<256x16xf32>
    %104 = arith.addf %96, %103 : vector<256x16xf32>
    %c7_79 = arith.constant 7 : index
    %c0_80 = arith.constant 0 : index
    %c0_81 = arith.constant 0 : index
    %105 = vector.load %arg4[%c7_79, %c0_80, %c0_81] : memref<9x8x16xf32, #tpu.memory_space<vmem>>, vector<1x8x16xf32>
    %106 = vector.shape_cast %105 : vector<1x8x16xf32> to vector<8x16xf32>
    %cst_82 = arith.constant dense<0.000000e+00> : vector<256x16xf32>
    %107 = tpu.matmul %100, %106, %cst_82 {dimension_numbers = #tpu.dot_dimension_numbers<[1], [0], [0], [1], [0, 0, 1, 1], [], []>} : vector<256x8xf32>, vector<8x16xf32>, vector<256x16xf32> -> vector<256x16xf32>
    %108 = arith.addf %104, %107 : vector<256x16xf32>
    %109 = vector.extract_strided_slice %10 {offsets = [2, 9, 0], sizes = [16, 16, 8], strides = [1, 1, 1]} : vector<18x32x8xf32> to vector<16x16x8xf32>
    %110 = vector.shape_cast %109 : vector<16x16x8xf32> to vector<256x8xf32>
    %111 = vector.extract_strided_slice %11 {offsets = [2, 9, 0], sizes = [16, 16, 8], strides = [1, 1, 1]} : vector<18x32x8xf32> to vector<16x16x8xf32>
    %112 = vector.shape_cast %111 : vector<16x16x8xf32> to vector<256x8xf32>
    %c8_83 = arith.constant 8 : index
    %c0_84 = arith.constant 0 : index
    %c0_85 = arith.constant 0 : index
    %113 = vector.load %arg3[%c8_83, %c0_84, %c0_85] : memref<9x8x16xf32, #tpu.memory_space<vmem>>, vector<1x8x16xf32>
    %114 = vector.shape_cast %113 : vector<1x8x16xf32> to vector<8x16xf32>
    %cst_86 = arith.constant dense<0.000000e+00> : vector<256x16xf32>
    %115 = tpu.matmul %110, %114, %cst_86 {dimension_numbers = #tpu.dot_dimension_numbers<[1], [0], [0], [1], [0, 0, 1, 1], [], []>} : vector<256x8xf32>, vector<8x16xf32>, vector<256x16xf32> -> vector<256x16xf32>
    %116 = arith.addf %108, %115 : vector<256x16xf32>
    %c8_87 = arith.constant 8 : index
    %c0_88 = arith.constant 0 : index
    %c0_89 = arith.constant 0 : index
    %117 = vector.load %arg4[%c8_87, %c0_88, %c0_89] : memref<9x8x16xf32, #tpu.memory_space<vmem>>, vector<1x8x16xf32>
    %118 = vector.shape_cast %117 : vector<1x8x16xf32> to vector<8x16xf32>
    %cst_90 = arith.constant dense<0.000000e+00> : vector<256x16xf32>
    %119 = tpu.matmul %112, %118, %cst_90 {dimension_numbers = #tpu.dot_dimension_numbers<[1], [0], [0], [1], [0, 0, 1, 1], [], []>} : vector<256x8xf32>, vector<8x16xf32>, vector<256x16xf32> -> vector<256x16xf32>
    %120 = arith.addf %116, %119 : vector<256x16xf32>
    %c0_91 = arith.constant 0 : index
    %c0_92 = arith.constant 0 : index
    %121 = vector.load %arg5[%c0_91, %c0_92] : memref<1x16xf32, #tpu.memory_space<vmem>>, vector<1x16xf32>
    %122 = vector.broadcast %121 : vector<1x16xf32> to vector<256x16xf32>
    %123 = arith.mulf %120, %122 : vector<256x16xf32>
    %c0_93 = arith.constant 0 : index
    %c0_94 = arith.constant 0 : index
    %124 = vector.load %arg6[%c0_93, %c0_94] : memref<1x16xf32, #tpu.memory_space<vmem>>, vector<1x16xf32>
    %125 = vector.broadcast %124 : vector<1x16xf32> to vector<256x16xf32>
    %126 = arith.addf %123, %125 : vector<256x16xf32>
    %cst_95 = arith.constant 0.000000e+00 : f32
    %127 = vector.broadcast %cst_95 : f32 to vector<256x16xf32>
    %128 = arith.maximumf %126, %127 : vector<256x16xf32>
    %cst_96 = arith.constant 0.000000e+00 : f32
    %129 = vector.broadcast %cst_96 : f32 to vector<18x32x16xf32>
    %c0_97 = arith.constant 0 : index
    %c0_98 = arith.constant 0 : index
    %c0_99 = arith.constant 0 : index
    %130 = vector.load %arg13[%c0_97, %c0_98, %c0_99] : memref<18x32x16xf32, #tpu.memory_space<vmem>>, vector<18x32x16xf32>
    tpu.vector_store %arg13[%c0_97, %c0_98, %c0_99], %129 {strides = array<i32>} : memref<18x32x16xf32, #tpu.memory_space<vmem>>, vector<18x32x16xf32>,
    %131 = vector.shape_cast %128 : vector<256x16xf32> to vector<16x16x16xf32>
    %c1_100 = arith.constant 1 : index
    %c8_101 = arith.constant 8 : index
    %c0_102 = arith.constant 0 : index
    %132 = vector.load %arg13[%c1_100, %c8_101, %c0_102] : memref<18x32x16xf32, #tpu.memory_space<vmem>>, vector<16x16x16xf32>
    tpu.vector_store %arg13[%c1_100, %c8_101, %c0_102], %131 {strides = array<i32>} : memref<18x32x16xf32, #tpu.memory_space<vmem>>, vector<16x16x16xf32>,
    %c0_103 = arith.constant 0 : index
    %c0_104 = arith.constant 0 : index
    %c0_105 = arith.constant 0 : index
    %133 = vector.load %arg13[%c0_103, %c0_104, %c0_105] : memref<18x32x16xf32, #tpu.memory_space<vmem>>, vector<18x32x16xf32>
    %cst_106 = arith.constant 0.000000e+00 : f32
    %134 = vector.broadcast %cst_106 : f32 to vector<256x16xf32>
    %135 = vector.extract_strided_slice %133 {offsets = [0, 7, 0], sizes = [16, 16, 16], strides = [1, 1, 1]} : vector<18x32x16xf32> to vector<16x16x16xf32>
    %136 = vector.shape_cast %135 : vector<16x16x16xf32> to vector<256x16xf32>
    %c0_107 = arith.constant 0 : index
    %c0_108 = arith.constant 0 : index
    %c0_109 = arith.constant 0 : index
    %137 = vector.load %arg7[%c0_107, %c0_108, %c0_109] : memref<9x16x16xf32, #tpu.memory_space<vmem>>, vector<1x16x16xf32>
    %138 = vector.shape_cast %137 : vector<1x16x16xf32> to vector<16x16xf32>
    %cst_110 = arith.constant dense<0.000000e+00> : vector<256x16xf32>
    %139 = tpu.matmul %136, %138, %cst_110 {dimension_numbers = #tpu.dot_dimension_numbers<[1], [0], [0], [1], [0, 0, 1, 1], [], []>} : vector<256x16xf32>, vector<16x16xf32>, vector<256x16xf32> -> vector<256x16xf32>
    %140 = arith.addf %134, %139 : vector<256x16xf32>
    %141 = vector.extract_strided_slice %133 {offsets = [0, 8, 0], sizes = [16, 16, 16], strides = [1, 1, 1]} : vector<18x32x16xf32> to vector<16x16x16xf32>
    %142 = vector.shape_cast %141 : vector<16x16x16xf32> to vector<256x16xf32>
    %c1_111 = arith.constant 1 : index
    %c0_112 = arith.constant 0 : index
    %c0_113 = arith.constant 0 : index
    %143 = vector.load %arg7[%c1_111, %c0_112, %c0_113] : memref<9x16x16xf32, #tpu.memory_space<vmem>>, vector<1x16x16xf32>
    %144 = vector.shape_cast %143 : vector<1x16x16xf32> to vector<16x16xf32>
    %cst_114 = arith.constant dense<0.000000e+00> : vector<256x16xf32>
    %145 = tpu.matmul %142, %144, %cst_114 {dimension_numbers = #tpu.dot_dimension_numbers<[1], [0], [0], [1], [0, 0, 1, 1], [], []>} : vector<256x16xf32>, vector<16x16xf32>, vector<256x16xf32> -> vector<256x16xf32>
    %146 = arith.addf %140, %145 : vector<256x16xf32>
    %147 = vector.extract_strided_slice %133 {offsets = [0, 9, 0], sizes = [16, 16, 16], strides = [1, 1, 1]} : vector<18x32x16xf32> to vector<16x16x16xf32>
    %148 = vector.shape_cast %147 : vector<16x16x16xf32> to vector<256x16xf32>
    %c2_115 = arith.constant 2 : index
    %c0_116 = arith.constant 0 : index
    %c0_117 = arith.constant 0 : index
    %149 = vector.load %arg7[%c2_115, %c0_116, %c0_117] : memref<9x16x16xf32, #tpu.memory_space<vmem>>, vector<1x16x16xf32>
    %150 = vector.shape_cast %149 : vector<1x16x16xf32> to vector<16x16xf32>
    %cst_118 = arith.constant dense<0.000000e+00> : vector<256x16xf32>
    %151 = tpu.matmul %148, %150, %cst_118 {dimension_numbers = #tpu.dot_dimension_numbers<[1], [0], [0], [1], [0, 0, 1, 1], [], []>} : vector<256x16xf32>, vector<16x16xf32>, vector<256x16xf32> -> vector<256x16xf32>
    %152 = arith.addf %146, %151 : vector<256x16xf32>
    %153 = vector.extract_strided_slice %133 {offsets = [1, 7, 0], sizes = [16, 16, 16], strides = [1, 1, 1]} : vector<18x32x16xf32> to vector<16x16x16xf32>
    %154 = vector.shape_cast %153 : vector<16x16x16xf32> to vector<256x16xf32>
    %c3_119 = arith.constant 3 : index
    %c0_120 = arith.constant 0 : index
    %c0_121 = arith.constant 0 : index
    %155 = vector.load %arg7[%c3_119, %c0_120, %c0_121] : memref<9x16x16xf32, #tpu.memory_space<vmem>>, vector<1x16x16xf32>
    %156 = vector.shape_cast %155 : vector<1x16x16xf32> to vector<16x16xf32>
    %cst_122 = arith.constant dense<0.000000e+00> : vector<256x16xf32>
    %157 = tpu.matmul %154, %156, %cst_122 {dimension_numbers = #tpu.dot_dimension_numbers<[1], [0], [0], [1], [0, 0, 1, 1], [], []>} : vector<256x16xf32>, vector<16x16xf32>, vector<256x16xf32> -> vector<256x16xf32>
    %158 = arith.addf %152, %157 : vector<256x16xf32>
    %159 = vector.extract_strided_slice %133 {offsets = [1, 8, 0], sizes = [16, 16, 16], strides = [1, 1, 1]} : vector<18x32x16xf32> to vector<16x16x16xf32>
    %160 = vector.shape_cast %159 : vector<16x16x16xf32> to vector<256x16xf32>
    %c4_123 = arith.constant 4 : index
    %c0_124 = arith.constant 0 : index
    %c0_125 = arith.constant 0 : index
    %161 = vector.load %arg7[%c4_123, %c0_124, %c0_125] : memref<9x16x16xf32, #tpu.memory_space<vmem>>, vector<1x16x16xf32>
    %162 = vector.shape_cast %161 : vector<1x16x16xf32> to vector<16x16xf32>
    %cst_126 = arith.constant dense<0.000000e+00> : vector<256x16xf32>
    %163 = tpu.matmul %160, %162, %cst_126 {dimension_numbers = #tpu.dot_dimension_numbers<[1], [0], [0], [1], [0, 0, 1, 1], [], []>} : vector<256x16xf32>, vector<16x16xf32>, vector<256x16xf32> -> vector<256x16xf32>
    %164 = arith.addf %158, %163 : vector<256x16xf32>
    %165 = vector.extract_strided_slice %133 {offsets = [1, 9, 0], sizes = [16, 16, 16], strides = [1, 1, 1]} : vector<18x32x16xf32> to vector<16x16x16xf32>
    %166 = vector.shape_cast %165 : vector<16x16x16xf32> to vector<256x16xf32>
    %c5_127 = arith.constant 5 : index
    %c0_128 = arith.constant 0 : index
    %c0_129 = arith.constant 0 : index
    %167 = vector.load %arg7[%c5_127, %c0_128, %c0_129] : memref<9x16x16xf32, #tpu.memory_space<vmem>>, vector<1x16x16xf32>
    %168 = vector.shape_cast %167 : vector<1x16x16xf32> to vector<16x16xf32>
    %cst_130 = arith.constant dense<0.000000e+00> : vector<256x16xf32>
    %169 = tpu.matmul %166, %168, %cst_130 {dimension_numbers = #tpu.dot_dimension_numbers<[1], [0], [0], [1], [0, 0, 1, 1], [], []>} : vector<256x16xf32>, vector<16x16xf32>, vector<256x16xf32> -> vector<256x16xf32>
    %170 = arith.addf %164, %169 : vector<256x16xf32>
    %171 = vector.extract_strided_slice %133 {offsets = [2, 7, 0], sizes = [16, 16, 16], strides = [1, 1, 1]} : vector<18x32x16xf32> to vector<16x16x16xf32>
    %172 = vector.shape_cast %171 : vector<16x16x16xf32> to vector<256x16xf32>
    %c6_131 = arith.constant 6 : index
    %c0_132 = arith.constant 0 : index
    %c0_133 = arith.constant 0 : index
    %173 = vector.load %arg7[%c6_131, %c0_132, %c0_133] : memref<9x16x16xf32, #tpu.memory_space<vmem>>, vector<1x16x16xf32>
    %174 = vector.shape_cast %173 : vector<1x16x16xf32> to vector<16x16xf32>
    %cst_134 = arith.constant dense<0.000000e+00> : vector<256x16xf32>
    %175 = tpu.matmul %172, %174, %cst_134 {dimension_numbers = #tpu.dot_dimension_numbers<[1], [0], [0], [1], [0, 0, 1, 1], [], []>} : vector<256x16xf32>, vector<16x16xf32>, vector<256x16xf32> -> vector<256x16xf32>
    %176 = arith.addf %170, %175 : vector<256x16xf32>
    %177 = vector.extract_strided_slice %133 {offsets = [2, 8, 0], sizes = [16, 16, 16], strides = [1, 1, 1]} : vector<18x32x16xf32> to vector<16x16x16xf32>
    %178 = vector.shape_cast %177 : vector<16x16x16xf32> to vector<256x16xf32>
    %c7_135 = arith.constant 7 : index
    %c0_136 = arith.constant 0 : index
    %c0_137 = arith.constant 0 : index
    %179 = vector.load %arg7[%c7_135, %c0_136, %c0_137] : memref<9x16x16xf32, #tpu.memory_space<vmem>>, vector<1x16x16xf32>
    %180 = vector.shape_cast %179 : vector<1x16x16xf32> to vector<16x16xf32>
    %cst_138 = arith.constant dense<0.000000e+00> : vector<256x16xf32>
    %181 = tpu.matmul %178, %180, %cst_138 {dimension_numbers = #tpu.dot_dimension_numbers<[1], [0], [0], [1], [0, 0, 1, 1], [], []>} : vector<256x16xf32>, vector<16x16xf32>, vector<256x16xf32> -> vector<256x16xf32>
    %182 = arith.addf %176, %181 : vector<256x16xf32>
    %183 = vector.extract_strided_slice %133 {offsets = [2, 9, 0], sizes = [16, 16, 16], strides = [1, 1, 1]} : vector<18x32x16xf32> to vector<16x16x16xf32>
    %184 = vector.shape_cast %183 : vector<16x16x16xf32> to vector<256x16xf32>
    %c8_139 = arith.constant 8 : index
    %c0_140 = arith.constant 0 : index
    %c0_141 = arith.constant 0 : index
    %185 = vector.load %arg7[%c8_139, %c0_140, %c0_141] : memref<9x16x16xf32, #tpu.memory_space<vmem>>, vector<1x16x16xf32>
    %186 = vector.shape_cast %185 : vector<1x16x16xf32> to vector<16x16xf32>
    %cst_142 = arith.constant dense<0.000000e+00> : vector<256x16xf32>
    %187 = tpu.matmul %184, %186, %cst_142 {dimension_numbers = #tpu.dot_dimension_numbers<[1], [0], [0], [1], [0, 0, 1, 1], [], []>} : vector<256x16xf32>, vector<16x16xf32>, vector<256x16xf32> -> vector<256x16xf32>
    %188 = arith.addf %182, %187 : vector<256x16xf32>
    %c0_143 = arith.constant 0 : index
    %c0_144 = arith.constant 0 : index
    %189 = vector.load %arg8[%c0_143, %c0_144] : memref<1x16xf32, #tpu.memory_space<vmem>>, vector<1x16xf32>
    %190 = vector.broadcast %189 : vector<1x16xf32> to vector<256x16xf32>
    %191 = arith.mulf %188, %190 : vector<256x16xf32>
    %c0_145 = arith.constant 0 : index
    %c0_146 = arith.constant 0 : index
    %192 = vector.load %arg9[%c0_145, %c0_146] : memref<1x16xf32, #tpu.memory_space<vmem>>, vector<1x16xf32>
    %193 = vector.broadcast %192 : vector<1x16xf32> to vector<256x16xf32>
    %194 = arith.addf %191, %193 : vector<256x16xf32>
    %cst_147 = arith.constant 0.000000e+00 : f32
    %195 = vector.broadcast %cst_147 : f32 to vector<256x16xf32>
    %196 = arith.maximumf %194, %195 : vector<256x16xf32>
    %197 = vector.shape_cast %196 : vector<256x16xf32> to vector<16x16x16xf32>
    %c0_148 = arith.constant 0 : index
    %c0_149 = arith.constant 0 : index
    %c0_150 = arith.constant 0 : index
    %c0_151 = arith.constant 0 : index
    %198 = vector.load %arg10[%c0_148, %c0_149, %c0_150, %c0_151] : memref<1x16x16x16xf32, #tpu.memory_space<vmem>>, vector<1x16x16x16xf32>
    %199 = vector.shape_cast %198 : vector<1x16x16x16xf32> to vector<16x16x16xf32>
    %200 = vector.shape_cast %197 : vector<16x16x16xf32> to vector<1x16x16x16xf32>
    tpu.vector_store %arg10[%c0_148, %c0_149, %c0_150, %c0_151], %200 {strides = array<i32>} : memref<1x16x16x16xf32, #tpu.memory_space<vmem>>, vector<1x16x16x16xf32>,
    return
  }
  func.func @transform_0(%arg0: i32) -> (i32, i32, i32, i32) {
    %c0_i32 = arith.constant 0 : i32
    %c0_i32_0 = arith.constant 0 : i32
    %c0_i32_1 = arith.constant 0 : i32
    %c0_i32_2 = arith.constant 0 : i32
    return %arg0, %c0_i32, %c0_i32_0, %c0_i32_1 : i32, i32, i32, i32
  }
  func.func @transform_1(%arg0: i32) -> (i32, i32, i32, i32) {
    %c0_i32 = arith.constant 0 : i32
    %c0_i32_0 = arith.constant 0 : i32
    %c0_i32_1 = arith.constant 0 : i32
    %c0_i32_2 = arith.constant 0 : i32
    return %arg0, %c0_i32, %c0_i32_0, %c0_i32_1 : i32, i32, i32, i32
  }
  func.func @transform_2(%arg0: i32) -> (i32, i32, i32) {
    %c0_i32 = arith.constant 0 : i32
    %c0_i32_0 = arith.constant 0 : i32
    %c0_i32_1 = arith.constant 0 : i32
    %c0_i32_2 = arith.constant 0 : i32
    return %c0_i32, %c0_i32_0, %c0_i32_1 : i32, i32, i32
  }
  func.func @transform_3(%arg0: i32) -> (i32, i32, i32) {
    %c0_i32 = arith.constant 0 : i32
    %c0_i32_0 = arith.constant 0 : i32
    %c0_i32_1 = arith.constant 0 : i32
    %c0_i32_2 = arith.constant 0 : i32
    return %c0_i32, %c0_i32_0, %c0_i32_1 : i32, i32, i32
  }
  func.func @transform_4(%arg0: i32) -> (i32, i32) {
    %c0_i32 = arith.constant 0 : i32
    %c0_i32_0 = arith.constant 0 : i32
    %c0_i32_1 = arith.constant 0 : i32
    return %c0_i32, %c0_i32_0 : i32, i32
  }
  func.func @transform_5(%arg0: i32) -> (i32, i32) {
    %c0_i32 = arith.constant 0 : i32
    %c0_i32_0 = arith.constant 0 : i32
    %c0_i32_1 = arith.constant 0 : i32
    return %c0_i32, %c0_i32_0 : i32, i32
  }
  func.func @transform_6(%arg0: i32) -> (i32, i32, i32) {
    %c0_i32 = arith.constant 0 : i32
    %c0_i32_0 = arith.constant 0 : i32
    %c0_i32_1 = arith.constant 0 : i32
    %c0_i32_2 = arith.constant 0 : i32
    return %c0_i32, %c0_i32_0, %c0_i32_1 : i32, i32, i32
  }
  func.func @transform_7(%arg0: i32) -> (i32, i32) {
    %c0_i32 = arith.constant 0 : i32
    %c0_i32_0 = arith.constant 0 : i32
    %c0_i32_1 = arith.constant 0 : i32
    return %c0_i32, %c0_i32_0 : i32, i32
  }
  func.func @transform_8(%arg0: i32) -> (i32, i32) {
    %c0_i32 = arith.constant 0 : i32
    %c0_i32_0 = arith.constant 0 : i32
    %c0_i32_1 = arith.constant 0 : i32
    return %c0_i32, %c0_i32_0 : i32, i32
  }
  func.func @transform_9(%arg0: i32) -> (i32, i32, i32, i32) {
    %c0_i32 = arith.constant 0 : i32
    %c0_i32_0 = arith.constant 0 : i32
    %c0_i32_1 = arith.constant 0 : i32
    %c0_i32_2 = arith.constant 0 : i32
    return %arg0, %c0_i32, %c0_i32_0, %c0_i32_1 : i32, i32, i32, i32
  }
}

</mosaic_0001>

<llo_original>
// kernel: tile.9
$region0: #{tile.9}
  %s0 = inlined_call_operand.vmem [shape: f32[4,8], index: 0, kind: input, shape index: {}]
  %s1 = inlined_call_operand.vmem [shape: f32[1,32], index: 1, kind: output, shape index: {}]
  $region1: #{tile.9} parent=0
    #allocation0 [shape = 'u8[4096]{0}', space=vmem, size = 0x1000, scoped, tag = 'scoped mem for output reshape']
    #allocation1 [shape = 'u8[4096]{0}', space=vmem, size = 0x1000, scoped, tag = 'scoped mem for input reshape']
    %s3 = ssub.s32 16, 1
    %v4 = vld [vmem:[%s0] sm:%s3]
    %5 = vst [vmem:[#allocation1] sm:%s3] %v4
    %v6 = vld [vmem:[#allocation1] sm:$0x1]
    %vm7 = vcmask 64512
    %8 = vst.msk [vmem:[#allocation0] sm:$0x1] %vm7, %v6
    %s9 = scalar_lea.vmem [#allocation1], 3
    %v10 = vld [vmem:[%s9] sm:$0x1]
    %11 = vrot.lane.b32.xlu0 %v10, 24
    %v12 = vpop.permute.xlu0 %11
    %vm13 = vcmask 261312
    %14 = vst.msk [vmem:[#allocation0] sm:$0x1] %vm13, %v12
    %s15 = scalar_lea.vmem [#allocation1], 2
    %v16 = vld [vmem:[%s15] sm:$0x1]
    %17 = vrot.lane.b32.xlu0 %v16, 16
    %v18 = vpop.permute.xlu0 %17
    %vm19 = vcmask 195712
    %20 = vst.msk [vmem:[#allocation0] sm:$0x1] %vm19, %v18
    %s21 = scalar_lea.vmem [#allocation1], 1
    %v22 = vld [vmem:[%s21] sm:$0x1]
    %23 = vrot.lane.b32.xlu0 %v22, 8
    %v24 = vpop.permute.xlu0 %23
    %vm25 = vcmask 130112
    %26 = vst.msk [vmem:[#allocation0] sm:$0x1] %vm25, %v24
    %s28 = ssub.s32 2, 1
    %v29 = vld [vmem:[#allocation0] sm:%s28]
    %s31 = ssub.s32 2, 1
    %32 = vst [vmem:[%s1] sm:%s31] %v29

// kernel: tile.8
$region0: #{tile.8}
  #allocation0 [shape = 's32[1]{0}', space=sflag, size = 0x4, scoped, tag = 'scoped memory for tile.8']
  %s0 = inlined_call_operand.vmem [shape: f32[8], index: 0, kind: input, shape index: {}]
  %s1 = inlined_call_operand.vmem [shape: f32[4,8], index: 1, kind: output, shape index: {}]
  // Predicated region
  $region2: #{tile.8} parent=0 // pred_check
    _
  $region3: #{tile.8} parent=0 // pred_check_branch
    %3 = sbr.rel (0) target = $region5
  $region4: #{tile.8} parent=0 // pred_region
    _
  $region5: #{tile.8} parent=0 // pred_fallthru
    _
  %v4 = vld [vmem:[%s0] ss:$0 sm:$0xff]
  %5 = vst [vmem:[%s1] sm:$0xf] %v4

// kernel: up_forward.2
$region0: #{up_forward.2}
  #allocation0 [shape = 'u32[]', space=smem, size = 0x4, offset = 0x4, fixed_abs, tag = 'smem constant byte address 0x4 - core index']
  #allocation1 [shape = 'u32[72,128]{1,0:T(1,128)}', space=vmem, size = 0x9000, scoped, tag = 'internal scratch']
  %s0 = inlined_call_operand.vmem [shape: f32[2,8,8,16], index: 0, kind: input, shape index: {}]
  %s1 = inlined_call_operand.vmem [shape: f32[16,32], index: 1, kind: input, shape index: {}]
  %s2 = inlined_call_operand.vmem [shape: f32[1,32], index: 2, kind: input, shape index: {}]
  %s3 = inlined_call_operand.vmem [shape: f32[2,8,2,8,16], index: 3, kind: output, shape index: {}]
  %s4 = sld [smem:[#allocation0]]
  $region45: #{up_forward.2} parent=0
    _
  %s6 = ssub.s32 1, %s4
  %s7 = scalar_select 0, %s6, %s4
  loop: start=0, step=1, limit=4
  $region2: #{up_forward.2} parent=0 // loop_pre_header
    _
  $region3: #{up_forward.2} parent=0 // loop_header
    %s9 = sphi 0, %s13
    %p10 = scmp.ge.s32.totalorder %s9, 4
    %s16 = sphi 0, %s28
    %s17 = sphi 0, %s24
    %s18 = sphi 0, %s16
    %s19 = sphi 0, %s17
    %s20 = sphi 0, %s18
    %s21 = sphi 0, %s19
    %s33 = sphi 0, %s35
    %s36 = sphi 0, %s33
    %s37 = sphi 0, %s36
    %s53 = sphi 0, %s37
    %s57 = sphi 0, %s57
    %s59 = sphi 0, %s57
    %s60 = sphi 0, %s59
    %s74 = sphi 0, %s60
    %s78 = sphi 0, %s78
    %s80 = sphi 0, %s78
    %s81 = sphi 0, %s80
    %s95 = sphi 0, %s81
    %s103 = sphi 0, %s105
    %s106 = sphi 0, %s103
    %s107 = sphi 0, %s106
    %s123 = sphi 0, %s107
  $region4: #{up_forward.2} parent=0 // loop_header_branch
    %12 = sbr.rel (%p10) target = $region8
  $region5: #{up_forward.2} parent=0 // loop_body
    %s14 = ssub.s32 %s9, 1
    %s15 = ssub.s32 %s9, 2
    %s22 = sadd.s32 1, %s17
    %p23 = scmp.ge.s32.totalorder %s22, 1
    %s24 = scalar_select %p23, 0, %s22
    %s25 = sadd.s32 1, %s16
    %s26 = scalar_select %p23, %s25, %s16
    %p27 = scmp.ge.s32.totalorder %s26, 2
    %s28 = scalar_select %p27, 0, %s26
    %s29 = ssub.s32 %s16, %s28
    %s30 = ssub.s32 %s17, %s24
    %s31 = sor.u32 %s29, %s30
    %p32 = scmp.eq.s32.totalorder %s31, 0
    %s34 = sadd.s32 %s33, 1
    %s35 = scalar_select %p32, %s33, %s34
    %p38 = pneg %p32
    %p39 = scmp.eq.s32.totalorder %s9, 1
    %p40 = por %p38, %p39
    %p41 = scmp.ne.s32.totalorder %s33, %s36
    %p42 = scmp.eq.s32.totalorder %s9, 0
    %p43 = por %p41, %p42
    %p44 = scmp.ne.s32.totalorder %s33, %s36
    %p45 = scmp.eq.s32.totalorder %s14, 1
    %p46 = por %p44, %p45
    %p47 = scmp.ne.s32.totalorder %s36, %s37
    %p48 = scmp.eq.s32.totalorder %s14, 0
    %p49 = por %p47, %p48
    %p50 = scmp.ne.s32.totalorder %s36, %s37
    %p51 = scmp.eq.s32.totalorder %s15, 1
    %p52 = por %p50, %p51
    %p54 = scmp.ne.s32.totalorder %s37, %s53
    %p55 = scmp.eq.s32.totalorder %s15, 0
    %p56 = por %p54, %p55
    %s58 = sadd.s32 %s57, 1
    %p61 = scmp.eq.s32.totalorder %s9, 1
    %p62 = scmp.ne.s32.totalorder %s57, %s59
    %p63 = scmp.eq.s32.totalorder %s9, 0
    %p64 = por %p62, %p63
    %p65 = scmp.ne.s32.totalorder %s57, %s59
    %p66 = scmp.eq.s32.totalorder %s14, 1
    %p67 = por %p65, %p66
    %p68 = scmp.ne.s32.totalorder %s59, %s60
    %p69 = scmp.eq.s32.totalorder %s14, 0
    %p70 = por %p68, %p69
    %p71 = scmp.ne.s32.totalorder %s59, %s60
    %p72 = scmp.eq.s32.totalorder %s15, 1
    %p73 = por %p71, %p72
    %p75 = scmp.ne.s32.totalorder %s60, %s74
    %p76 = scmp.eq.s32.totalorder %s15, 0
    %p77 = por %p75, %p76
    %s79 = sadd.s32 %s78, 1
    %p82 = scmp.eq.s32.totalorder %s9, 1
    %p83 = scmp.ne.s32.totalorder %s78, %s80
    %p84 = scmp.eq.s32.totalorder %s9, 0
    %p85 = por %p83, %p84
    %p86 = scmp.ne.s32.totalorder %s78, %s80
    %p87 = scmp.eq.s32.totalorder %s14, 1
    %p88 = por %p86, %p87
    %p89 = scmp.ne.s32.totalorder %s80, %s81
    %p90 = scmp.eq.s32.totalorder %s14, 0
    %p91 = por %p89, %p90
    %p92 = scmp.ne.s32.totalorder %s80, %s81
    %p93 = scmp.eq.s32.totalorder %s15, 1
    %p94 = por %p92, %p93
    %p96 = scmp.ne.s32.totalorder %s81, %s95
    %p97 = scmp.eq.s32.totalorder %s15, 0
    %p98 = por %p96, %p97
    %s99 = ssub.s32 %s16, %s28
    %s100 = ssub.s32 %s17, %s24
    %s101 = sor.u32 %s99, %s100
    %p102 = scmp.eq.s32.totalorder %s101, 0
    %s104 = sadd.s32 %s103, 1
    %s105 = scalar_select %p102, %s103, %s104
    %p108 = pneg %p102
    %p109 = scmp.eq.s32.totalorder %s9, 1
    %p110 = por %p108, %p109
    %p111 = scmp.ne.s32.totalorder %s103, %s106
    %p112 = scmp.eq.s32.totalorder %s9, 0
    %p113 = por %p111, %p112
    %p114 = scmp.ne.s32.totalorder %s103, %s106
    %p115 = scmp.eq.s32.totalorder %s14, 1
    %p116 = por %p114, %p115
    %p117 = scmp.ne.s32.totalorder %s106, %s107
    %p118 = scmp.eq.s32.totalorder %s14, 0
    %p119 = por %p117, %p118
    %p120 = scmp.ne.s32.totalorder %s106, %s107
    %p121 = scmp.eq.s32.totalorder %s15, 1
    %p122 = por %p120, %p121
    %p124 = scmp.ne.s32.totalorder %s107, %s123
    %p125 = scmp.eq.s32.totalorder %s15, 0
    %p126 = por %p124, %p125
    %p127 = scmp.le.s32.totalorder 1, %s9
    %p128 = scmp.lt.s32.totalorder %s9, 3
    %p129 = pnand %p127, %p128
    %p130 = pneg %p129
    // Predicated region
    $region9: #{up_forward.2} parent=5 // pred_check
      _
    $region10: #{up_forward.2} parent=5 // pred_check_branch
      %132 = sbr.rel (%p129) target = $region12
    $region11: #{up_forward.2} parent=5 // pred_region
      %s133 = ssub.s32 %s9, 1
      // Predicated region
      $region13: #{up_forward.2} parent=11 // pred_check
        %p134 = pneg %p70
      $region14: #{up_forward.2} parent=11 // pred_check_branch
        %136 = sbr.rel (%p134) target = $region16
      $region15: #{up_forward.2} parent=11 // pred_region
        _
      $region16: #{up_forward.2} parent=11 // pred_fallthru
        _
      // Predicated region
      $region17: #{up_forward.2} parent=11 // pred_check
        %p137 = pneg %p91
      $region18: #{up_forward.2} parent=11 // pred_check_branch
        %139 = sbr.rel (%p137) target = $region20
      $region19: #{up_forward.2} parent=11 // pred_region
        _
      $region20: #{up_forward.2} parent=11 // pred_fallthru
        _
    $region12: #{up_forward.2} parent=5 // pred_fallthru
      _
    %p140 = scmp.lt.s32.totalorder %s9, 2
    // Predicated region
    $region21: #{up_forward.2} parent=5 // pred_check
      %p141 = pneg %p140
    $region22: #{up_forward.2} parent=5 // pred_check_branch
      %143 = sbr.rel (%p141) target = $region24
    $region23: #{up_forward.2} parent=5 // pred_region
      // Predicated region
      $region25: #{up_forward.2} parent=23 // pred_check
        %p144 = pneg %p43
      $region26: #{up_forward.2} parent=23 // pred_check_branch
        %146 = sbr.rel (%p144) target = $region28
      $region27: #{up_forward.2} parent=23 // pred_region
        %s147 = smul.u32 8, %s17
        %p148 = scmp.lt.s32.totalorder %s16, 1
        %s149 = scalar_select %p148, %s16, 1
        %p150 = scmp.lt.s32.totalorder %s147, 7
        %s151 = scalar_select %p150, %s147, 7
        %s152 = smul.addr %s149, 8
        %s153 = sadd.s32 %s151, %s152
        %s154 = smul.addr %s153, 8
        %s155 = scalar_lea.vmem %s0, %s154
        %s156 = smul.u32 8, %s17
      $region28: #{up_forward.2} parent=23 // pred_fallthru
        _
    $region24: #{up_forward.2} parent=5 // pred_fallthru
      _
    %p157 = scmp.le.s32.totalorder 1, %s9
    %p158 = scmp.lt.s32.totalorder %s9, 3
    %p159 = pnand %p157, %p158
    %p160 = pneg %p159
    // Predicated region
    $region29: #{up_forward.2} parent=5 // pred_check
      _
    $region30: #{up_forward.2} parent=5 // pred_check_branch
      %162 = sbr.rel (%p159) target = $region32
    $region31: #{up_forward.2} parent=5 // pred_region
      %s163 = ssub.s32 %s9, 1
      %s164 = smul.u32 8, %s19
      %p165 = scmp.lt.s32.totalorder %s18, 1
      %s166 = scalar_select %p165, %s18, 1
      %p167 = scmp.lt.s32.totalorder %s164, 7
      %s168 = scalar_select %p167, %s164, 7
      %s169 = smul.addr %s166, 8
      %s170 = sadd.s32 %s168, %s169
      %s171 = smul.addr %s170, 8
      %s172 = scalar_lea.vmem %s0, %s171
      %p173 = pneg %p49
      %p174 = pneg %p46
      %p175 = pneg %p70
      %p176 = pneg %p67
      %p177 = pneg %p91
      %p178 = pneg %p88
      %p179 = pneg %p119
      %p180 = pneg %p116
      %s181 = smul.u32 8, %s19
      %p182 = scmp.lt.s32.totalorder %s18, 1
      %s183 = scalar_select %p182, %s18, 1
      %p184 = scmp.lt.s32.totalorder %s181, 7
      %s185 = scalar_select %p184, %s181, 7
      %s186 = smul.addr %s185, 2
      %s187 = smul.addr %s183, 16
      %s188 = sadd.s32 %s186, %s187
      %s189 = smul.addr %s188, 8
      %s190 = scalar_lea.vmem %s3, %s189
      %s191 = smul.u32 8, %s19
      %p192 = scmp.lt.s32.totalorder %s18, 1
      %s193 = scalar_select %p192, %s18, 1
      %p194 = scmp.lt.s32.totalorder %s191, 7
      %s195 = scalar_select %p194, %s191, 7
      %s196 = smul.addr %s193, 8
      %s197 = sadd.s32 %s195, %s196
      %s198 = smul.addr %s197, 8
      %s199 = scalar_lea.vmem %s0, %s198
      %s200 = smul.u32 8, %s19
      %s201 = smul.u32 8, %s19
      %p202 = scmp.lt.s32.totalorder %s18, 1
      %s203 = scalar_select %p202, %s18, 1
      %p204 = scmp.lt.s32.totalorder %s201, 7
      %s205 = scalar_select %p204, %s201, 7
      %s206 = smul.addr %s205, 2
      %s207 = smul.addr %s203, 16
      %s208 = sadd.s32 %s206, %s207
      %s209 = smul.addr %s208, 8
      %s210 = scalar_lea.vmem %s3, %s209
      %s211 = smul.u32 8, %s19
      %v212 = vld [vmem:[%s199] sm:$0xff]
      %v213 = vld [vmem:[%s199 + $0x8] sm:$0xff]
      %v214 = vld [vmem:[%s199 + $0x10] sm:$0xff]
      %v215 = vld [vmem:[%s199 + $0x18] sm:$0xff]
      %v216 = vld [vmem:[%s199 + $0x20] sm:$0xff]
      %v217 = vld [vmem:[%s199 + $0x28] sm:$0xff]
      %v218 = vld [vmem:[%s199 + $0x30] sm:$0xff]
      %v219 = vld [vmem:[%s199 + $0x38] sm:$0xff]
      %v220 = vld [vmem:[%s1] sm:$0xff]
      %v221 = vld [vmem:[%s1 + $0x8] sm:$0xff]
      %v222 = vld [vmem:[%s2] sm:$0x1]
      %v224 = vperm.slane %v222, 0
      %vm226 = vcmask 130048
      %v228 = vsel %vm226, %v212, 0
      %v231 = vsel %vm226, %v213, 0
      %v234 = vsel %vm226, %v214, 0
      %v237 = vsel %vm226, %v215, 0
      %v240 = vsel %vm226, %v216, 0
      %v243 = vsel %vm226, %v217, 0
      %v246 = vsel %vm226, %v218, 0
      %v249 = vsel %vm226, %v219, 0
      %251 = vmatpush.msra.mxu0 0.0
      %252 = vmatpush.msra.mxu0 0.0
      %253 = vmatpush.msra.mxu0 0.0
      %254 = vmatpush.msra.mxu0 0.0
      %255 = vmatpush.msra.mxu0 0.0
      %256 = vmatpush.msra.mxu0 0.0
      %257 = vmatpush.msra.mxu0 0.0
      %258 = vmatpush.msra.mxu0 0.0
      %259 = vmatpush.msra.mxu0 0.0
      %260 = vmatpush.msra.mxu0 0.0
      %261 = vmatpush.msra.mxu0 0.0
      %262 = vmatpush.msra.mxu0 0.0
      %263 = vmatpush.msra.mxu0 0.0
      %264 = vmatpush.msra.mxu0 0.0
      %265 = vmatpush.msra.mxu0 %v221
      %266 = vmatpush.msra.mxu0 %v220
      %267 = vmatmul.f32.gmra.mxu0 %v228
      %v268 = vpop.f32.mrf.mxu0
      %v269 = vadd.f32 %v224, %v268
      %270 = vmatmul.f32.gmra.mxu0 %v231
      %v271 = vpop.f32.mrf.mxu0
      %v272 = vadd.f32 %v224, %v271
      %273 = vmatmul.f32.gmra.mxu0 %v234
      %v274 = vpop.f32.mrf.mxu0
      %v275 = vadd.f32 %v224, %v274
      %276 = vmatmul.f32.gmra.mxu0 %v237
      %v277 = vpop.f32.mrf.mxu0
      %v278 = vadd.f32 %v224, %v277
      %279 = vmatmul.f32.gmra.mxu0 %v240
      %v280 = vpop.f32.mrf.mxu0
      %v281 = vadd.f32 %v224, %v280
      %282 = vmatmul.f32.gmra.mxu0 %v243
      %v283 = vpop.f32.mrf.mxu0
      %v284 = vadd.f32 %v224, %v283
      %285 = vmatmul.f32.gmra.mxu0 %v246
      %v286 = vpop.f32.mrf.mxu0
      %v287 = vadd.f32 %v224, %v286
      %288 = vmatmul.f32.gmra.mxu0 %v249
      %v289 = vpop.f32.mrf.mxu0
      %v290 = vadd.f32 %v224, %v289
      %291 = vdwg.mxu0
      %292 = vst.msk [vmem:[%s210] sm:$0xff] %vm226, %v269
      %293 = vst.msk [vmem:[%s210 + $0x10] sm:$0xff] %vm226, %v272
      %294 = vst.msk [vmem:[%s210 + $0x20] sm:$0xff] %vm226, %v275
      %295 = vst.msk [vmem:[%s210 + $0x30] sm:$0xff] %vm226, %v278
      %296 = vst.msk [vmem:[%s210 + $0x40] sm:$0xff] %vm226, %v281
      %297 = vst.msk [vmem:[%s210 + $0x50] sm:$0xff] %vm226, %v284
      %298 = vst.msk [vmem:[%s210 + $0x60] sm:$0xff] %vm226, %v287
      %299 = vst.msk [vmem:[%s210 + $0x70] sm:$0xff] %vm226, %v290
      %308 = vrot.lane.b32.xlu0 %v269, 112
      %v309 = vpop.permute.xlu0 %308
      %310 = vrot.lane.b32.xlu0 %v272, 112
      %v311 = vpop.permute.xlu0 %310
      %312 = vrot.lane.b32.xlu0 %v275, 112
      %v313 = vpop.permute.xlu0 %312
      %314 = vrot.lane.b32.xlu0 %v278, 112
      %v315 = vpop.permute.xlu0 %314
      %316 = vrot.lane.b32.xlu0 %v281, 112
      %v317 = vpop.permute.xlu0 %316
      %318 = vrot.lane.b32.xlu0 %v284, 112
      %v319 = vpop.permute.xlu0 %318
      %320 = vrot.lane.b32.xlu0 %v287, 112
      %v321 = vpop.permute.xlu0 %320
      %322 = vrot.lane.b32.xlu0 %v290, 112
      %v323 = vpop.permute.xlu0 %322
      %s332 = scalar_lea.vmem %s210, 8
      %333 = vst.msk [vmem:[%s332] sm:$0xff] %vm226, %v309
      %334 = vst.msk [vmem:[%s332 + $0x10] sm:$0xff] %vm226, %v311
      %335 = vst.msk [vmem:[%s332 + $0x20] sm:$0xff] %vm226, %v313
      %336 = vst.msk [vmem:[%s332 + $0x30] sm:$0xff] %vm226, %v315
      %337 = vst.msk [vmem:[%s332 + $0x40] sm:$0xff] %vm226, %v317
      %338 = vst.msk [vmem:[%s332 + $0x50] sm:$0xff] %vm226, %v319
      %339 = vst.msk [vmem:[%s332 + $0x60] sm:$0xff] %vm226, %v321
      %340 = vst.msk [vmem:[%s332 + $0x70] sm:$0xff] %vm226, %v323
      %s341 = smul.u32 8, %s19
      %p342 = scmp.lt.s32.totalorder %s18, 1
      %s343 = scalar_select %p342, %s18, 1
      %p344 = scmp.lt.s32.totalorder %s341, 7
      %s345 = scalar_select %p344, %s341, 7
      %s346 = smul.addr %s345, 2
      %s347 = smul.addr %s343, 16
      %s348 = sadd.s32 %s346, %s347
      %s349 = smul.addr %s348, 8
      %s350 = scalar_lea.vmem %s3, %s349
      // Predicated region
      $region33: #{up_forward.2} parent=31 // pred_check
        %p351 = pneg %p116
      $region34: #{up_forward.2} parent=31 // pred_check_branch
        %353 = sbr.rel (%p351) target = $region36
      $region35: #{up_forward.2} parent=31 // pred_region
        %s354 = smul.u32 8, %s19
      $region36: #{up_forward.2} parent=31 // pred_fallthru
        _
    $region32: #{up_forward.2} parent=5 // pred_fallthru
      _
    %p355 = scmp.le.s32.totalorder 2, %s9
    // Predicated region
    $region37: #{up_forward.2} parent=5 // pred_check
      %p356 = pneg %p355
    $region38: #{up_forward.2} parent=5 // pred_check_branch
      %358 = sbr.rel (%p356) target = $region40
    $region39: #{up_forward.2} parent=5 // pred_region
      %s359 = ssub.s32 %s9, 2
      // Predicated region
      $region41: #{up_forward.2} parent=39 // pred_check
        %p360 = pneg %p122
      $region42: #{up_forward.2} parent=39 // pred_check_branch
        %362 = sbr.rel (%p360) target = $region44
      $region43: #{up_forward.2} parent=39 // pred_region
        %s363 = smul.u32 8, %s21
        %p364 = scmp.lt.s32.totalorder %s20, 1
        %s365 = scalar_select %p364, %s20, 1
        %p366 = scmp.lt.s32.totalorder %s363, 7
        %s367 = scalar_select %p366, %s363, 7
        %s368 = smul.addr %s367, 2
        %s369 = smul.addr %s365, 16
        %s370 = sadd.s32 %s368, %s369
        %s371 = smul.addr %s370, 8
        %s372 = scalar_lea.vmem %s3, %s371
      $region44: #{up_forward.2} parent=39 // pred_fallthru
        _
    $region40: #{up_forward.2} parent=5 // pred_fallthru
      _
  $region6: #{up_forward.2} parent=0 // loop_footer
    %s13 = sadd.s32 1, %s9
  $region7: #{up_forward.2} parent=0 // loop_footer_branch
    %8 = sbr.rel target = $region3
  $region8: #{up_forward.2} parent=0 // loop_exit
    _

// kernel: up_forward.3
$region0: #{up_forward.3}
  #allocation0 [shape = 'u32[]', space=smem, size = 0x4, offset = 0x4, fixed_abs, tag = 'smem constant byte address 0x4 - core index']
  #allocation1 [shape = 'u32[72,128]{1,0:T(1,128)}', space=vmem, size = 0x9000, scoped, tag = 'internal scratch']
  #allocation2 [shape = 'f32[18,32,8]{2,1,0:T(8,128)}', space=vmem, size = 0x48000, scoped, tag = 'scratch operand']
  #allocation3 [shape = 'f32[18,32,8]{2,1,0:T(8,128)}', space=vmem, size = 0x48000, scoped, tag = 'scratch operand']
  #allocation4 [shape = 'f32[18,32,16]{2,1,0:T(8,128)}', space=vmem, size = 0x48000, scoped, tag = 'scratch operand']
  %s0 = inlined_call_operand.vmem [shape: f32[2,16,16,8], index: 0, kind: input, shape index: {}]
  %s1 = inlined_call_operand.vmem [shape: f32[2,16,16,8], index: 1, kind: input, shape index: {}]
  %s2 = inlined_call_operand.vmem [shape: f32[9,8,16], index: 2, kind: input, shape index: {}]
  %s3 = inlined_call_operand.vmem [shape: f32[9,8,16], index: 3, kind: input, shape index: {}]
  %s4 = inlined_call_operand.vmem [shape: f32[1,16], index: 4, kind: input, shape index: {}]
  %s5 = inlined_call_operand.vmem [shape: f32[1,16], index: 5, kind: input, shape index: {}]
  %s6 = inlined_call_operand.vmem [shape: f32[9,16,16], index: 6, kind: input, shape index: {}]
  %s7 = inlined_call_operand.vmem [shape: f32[1,16], index: 7, kind: input, shape index: {}]
  %s8 = inlined_call_operand.vmem [shape: f32[1,16], index: 8, kind: input, shape index: {}]
  %s9 = inlined_call_operand.vmem [shape: f32[2,16,16,16], index: 9, kind: output, shape index: {}]
  %s10 = sld [smem:[#allocation0]]
  $region69: #{up_forward.3} parent=0
    _
  %s12 = ssub.s32 1, %s10
  %s13 = scalar_select 0, %s12, %s10
  loop: start=0, step=1, limit=4
  $region2: #{up_forward.3} parent=0 // loop_pre_header
    _
  $region3: #{up_forward.3} parent=0 // loop_header
    %s15 = sphi 0, %s19
    %p16 = scmp.ge.s32.totalorder %s15, 4
    %s25 = sphi 0, %s27
    %s28 = sphi 0, %s25
    %s29 = sphi 0, %s28
    %s45 = sphi 0, %s29
    %s51 = sphi 0, %s53
    %s54 = sphi 0, %s51
    %s55 = sphi 0, %s54
    %s71 = sphi 0, %s55
    %s75 = sphi 0, %s75
    %s77 = sphi 0, %s75
    %s78 = sphi 0, %s77
    %s92 = sphi 0, %s78
    %s96 = sphi 0, %s96
    %s98 = sphi 0, %s96
    %s99 = sphi 0, %s98
    %s113 = sphi 0, %s99
    %s117 = sphi 0, %s117
    %s119 = sphi 0, %s117
    %s120 = sphi 0, %s119
    %s134 = sphi 0, %s120
    %s138 = sphi 0, %s138
    %s140 = sphi 0, %s138
    %s141 = sphi 0, %s140
    %s155 = sphi 0, %s141
    %s159 = sphi 0, %s159
    %s161 = sphi 0, %s159
    %s162 = sphi 0, %s161
    %s176 = sphi 0, %s162
    %s180 = sphi 0, %s180
    %s182 = sphi 0, %s180
    %s183 = sphi 0, %s182
    %s197 = sphi 0, %s183
    %s201 = sphi 0, %s201
    %s203 = sphi 0, %s201
    %s204 = sphi 0, %s203
    %s218 = sphi 0, %s204
    %s224 = sphi 0, %s226
    %s227 = sphi 0, %s224
    %s228 = sphi 0, %s227
    %s244 = sphi 0, %s228
  $region4: #{up_forward.3} parent=0 // loop_header_branch
    %18 = sbr.rel (%p16) target = $region8
  $region5: #{up_forward.3} parent=0 // loop_body
    %s20 = ssub.s32 %s15, 1
    %s21 = ssub.s32 %s15, 2
    %s22 = sadd.s32 %s15, 1
    %s23 = ssub.s32 %s15, %s22
    %p24 = scmp.eq.s32.totalorder %s23, 0
    %s26 = sadd.s32 %s25, 1
    %s27 = scalar_select %p24, %s25, %s26
    %p30 = pneg %p24
    %p31 = scmp.eq.s32.totalorder %s15, 1
    %p32 = por %p30, %p31
    %p33 = scmp.ne.s32.totalorder %s25, %s28
    %p34 = scmp.eq.s32.totalorder %s15, 0
    %p35 = por %p33, %p34
    %p36 = scmp.ne.s32.totalorder %s25, %s28
    %p37 = scmp.eq.s32.totalorder %s20, 1
    %p38 = por %p36, %p37
    %p39 = scmp.ne.s32.totalorder %s28, %s29
    %p40 = scmp.eq.s32.totalorder %s20, 0
    %p41 = por %p39, %p40
    %p42 = scmp.ne.s32.totalorder %s28, %s29
    %p43 = scmp.eq.s32.totalorder %s21, 1
    %p44 = por %p42, %p43
    %p46 = scmp.ne.s32.totalorder %s29, %s45
    %p47 = scmp.eq.s32.totalorder %s21, 0
    %p48 = por %p46, %p47
    %s49 = ssub.s32 %s15, %s22
    %p50 = scmp.eq.s32.totalorder %s49, 0
    %s52 = sadd.s32 %s51, 1
    %s53 = scalar_select %p50, %s51, %s52
    %p56 = pneg %p50
    %p57 = scmp.eq.s32.totalorder %s15, 1
    %p58 = por %p56, %p57
    %p59 = scmp.ne.s32.totalorder %s51, %s54
    %p60 = scmp.eq.s32.totalorder %s15, 0
    %p61 = por %p59, %p60
    %p62 = scmp.ne.s32.totalorder %s51, %s54
    %p63 = scmp.eq.s32.totalorder %s20, 1
    %p64 = por %p62, %p63
    %p65 = scmp.ne.s32.totalorder %s54, %s55
    %p66 = scmp.eq.s32.totalorder %s20, 0
    %p67 = por %p65, %p66
    %p68 = scmp.ne.s32.totalorder %s54, %s55
    %p69 = scmp.eq.s32.totalorder %s21, 1
    %p70 = por %p68, %p69
    %p72 = scmp.ne.s32.totalorder %s55, %s71
    %p73 = scmp.eq.s32.totalorder %s21, 0
    %p74 = por %p72, %p73
    %s76 = sadd.s32 %s75, 1
    %p79 = scmp.eq.s32.totalorder %s15, 1
    %p80 = scmp.ne.s32.totalorder %s75, %s77
    %p81 = scmp.eq.s32.totalorder %s15, 0
    %p82 = por %p80, %p81
    %p83 = scmp.ne.s32.totalorder %s75, %s77
    %p84 = scmp.eq.s32.totalorder %s20, 1
    %p85 = por %p83, %p84
    %p86 = scmp.ne.s32.totalorder %s77, %s78
    %p87 = scmp.eq.s32.totalorder %s20, 0
    %p88 = por %p86, %p87
    %p89 = scmp.ne.s32.totalorder %s77, %s78
    %p90 = scmp.eq.s32.totalorder %s21, 1
    %p91 = por %p89, %p90
    %p93 = scmp.ne.s32.totalorder %s78, %s92
    %p94 = scmp.eq.s32.totalorder %s21, 0
    %p95 = por %p93, %p94
    %s97 = sadd.s32 %s96, 1
    %p100 = scmp.eq.s32.totalorder %s15, 1
    %p101 = scmp.ne.s32.totalorder %s96, %s98
    %p102 = scmp.eq.s32.totalorder %s15, 0
    %p103 = por %p101, %p102
    %p104 = scmp.ne.s32.totalorder %s96, %s98
    %p105 = scmp.eq.s32.totalorder %s20, 1
    %p106 = por %p104, %p105
    %p107 = scmp.ne.s32.totalorder %s98, %s99
    %p108 = scmp.eq.s32.totalorder %s20, 0
    %p109 = por %p107, %p108
    %p110 = scmp.ne.s32.totalorder %s98, %s99
    %p111 = scmp.eq.s32.totalorder %s21, 1
    %p112 = por %p110, %p111
    %p114 = scmp.ne.s32.totalorder %s99, %s113
    %p115 = scmp.eq.s32.totalorder %s21, 0
    %p116 = por %p114, %p115
    %s118 = sadd.s32 %s117, 1
    %p121 = scmp.eq.s32.totalorder %s15, 1
    %p122 = scmp.ne.s32.totalorder %s117, %s119
    %p123 = scmp.eq.s32.totalorder %s15, 0
    %p124 = por %p122, %p123
    %p125 = scmp.ne.s32.totalorder %s117, %s119
    %p126 = scmp.eq.s32.totalorder %s20, 1
    %p127 = por %p125, %p126
    %p128 = scmp.ne.s32.totalorder %s119, %s120
    %p129 = scmp.eq.s32.totalorder %s20, 0
    %p130 = por %p128, %p129
    %p131 = scmp.ne.s32.totalorder %s119, %s120
    %p132 = scmp.eq.s32.totalorder %s21, 1
    %p133 = por %p131, %p132
    %p135 = scmp.ne.s32.totalorder %s120, %s134
    %p136 = scmp.eq.s32.totalorder %s21, 0
    %p137 = por %p135, %p136
    %s139 = sadd.s32 %s138, 1
    %p142 = scmp.eq.s32.totalorder %s15, 1
    %p143 = scmp.ne.s32.totalorder %s138, %s140
    %p144 = scmp.eq.s32.totalorder %s15, 0
    %p145 = por %p143, %p144
    %p146 = scmp.ne.s32.totalorder %s138, %s140
    %p147 = scmp.eq.s32.totalorder %s20, 1
    %p148 = por %p146, %p147
    %p149 = scmp.ne.s32.totalorder %s140, %s141
    %p150 = scmp.eq.s32.totalorder %s20, 0
    %p151 = por %p149, %p150
    %p152 = scmp.ne.s32.totalorder %s140, %s141
    %p153 = scmp.eq.s32.totalorder %s21, 1
    %p154 = por %p152, %p153
    %p156 = scmp.ne.s32.totalorder %s141, %s155
    %p157 = scmp.eq.s32.totalorder %s21, 0
    %p158 = por %p156, %p157
    %s160 = sadd.s32 %s159, 1
    %p163 = scmp.eq.s32.totalorder %s15, 1
    %p164 = scmp.ne.s32.totalorder %s159, %s161
    %p165 = scmp.eq.s32.totalorder %s15, 0
    %p166 = por %p164, %p165
    %p167 = scmp.ne.s32.totalorder %s159, %s161
    %p168 = scmp.eq.s32.totalorder %s20, 1
    %p169 = por %p167, %p168
    %p170 = scmp.ne.s32.totalorder %s161, %s162
    %p171 = scmp.eq.s32.totalorder %s20, 0
    %p172 = por %p170, %p171
    %p173 = scmp.ne.s32.totalorder %s161, %s162
    %p174 = scmp.eq.s32.totalorder %s21, 1
    %p175 = por %p173, %p174
    %p177 = scmp.ne.s32.totalorder %s162, %s176
    %p178 = scmp.eq.s32.totalorder %s21, 0
    %p179 = por %p177, %p178
    %s181 = sadd.s32 %s180, 1
    %p184 = scmp.eq.s32.totalorder %s15, 1
    %p185 = scmp.ne.s32.totalorder %s180, %s182
    %p186 = scmp.eq.s32.totalorder %s15, 0
    %p187 = por %p185, %p186
    %p188 = scmp.ne.s32.totalorder %s180, %s182
    %p189 = scmp.eq.s32.totalorder %s20, 1
    %p190 = por %p188, %p189
    %p191 = scmp.ne.s32.totalorder %s182, %s183
    %p192 = scmp.eq.s32.totalorder %s20, 0
    %p193 = por %p191, %p192
    %p194 = scmp.ne.s32.totalorder %s182, %s183
    %p195 = scmp.eq.s32.totalorder %s21, 1
    %p196 = por %p194, %p195
    %p198 = scmp.ne.s32.totalorder %s183, %s197
    %p199 = scmp.eq.s32.totalorder %s21, 0
    %p200 = por %p198, %p199
    %s202 = sadd.s32 %s201, 1
    %p205 = scmp.eq.s32.totalorder %s15, 1
    %p206 = scmp.ne.s32.totalorder %s201, %s203
    %p207 = scmp.eq.s32.totalorder %s15, 0
    %p208 = por %p206, %p207
    %p209 = scmp.ne.s32.totalorder %s201, %s203
    %p210 = scmp.eq.s32.totalorder %s20, 1
    %p211 = por %p209, %p210
    %p212 = scmp.ne.s32.totalorder %s203, %s204
    %p213 = scmp.eq.s32.totalorder %s20, 0
    %p214 = por %p212, %p213
    %p215 = scmp.ne.s32.totalorder %s203, %s204
    %p216 = scmp.eq.s32.totalorder %s21, 1
    %p217 = por %p215, %p216
    %p219 = scmp.ne.s32.totalorder %s204, %s218
    %p220 = scmp.eq.s32.totalorder %s21, 0
    %p221 = por %p219, %p220
    %s222 = ssub.s32 %s15, %s22
    %p223 = scmp.eq.s32.totalorder %s222, 0
    %s225 = sadd.s32 %s224, 1
    %s226 = scalar_select %p223, %s224, %s225
    %p229 = pneg %p223
    %p230 = scmp.eq.s32.totalorder %s15, 1
    %p231 = por %p229, %p230
    %p232 = scmp.ne.s32.totalorder %s224, %s227
    %p233 = scmp.eq.s32.totalorder %s15, 0
    %p234 = por %p232, %p233
    %p235 = scmp.ne.s32.totalorder %s224, %s227
    %p236 = scmp.eq.s32.totalorder %s20, 1
    %p237 = por %p235, %p236
    %p238 = scmp.ne.s32.totalorder %s227, %s228
    %p239 = scmp.eq.s32.totalorder %s20, 0
    %p240 = por %p238, %p239
    %p241 = scmp.ne.s32.totalorder %s227, %s228
    %p242 = scmp.eq.s32.totalorder %s21, 1
    %p243 = por %p241, %p242
    %p245 = scmp.ne.s32.totalorder %s228, %s244
    %p246 = scmp.eq.s32.totalorder %s21, 0
    %p247 = por %p245, %p246
    %p248 = scmp.le.s32.totalorder 1, %s15
    %p249 = scmp.lt.s32.totalorder %s15, 3
    %p250 = pnand %p248, %p249
    %p251 = pneg %p250
    // Predicated region
    $region9: #{up_forward.3} parent=5 // pred_check
      _
    $region10: #{up_forward.3} parent=5 // pred_check_branch
      %253 = sbr.rel (%p250) target = $region12
    $region11: #{up_forward.3} parent=5 // pred_region
      %s254 = ssub.s32 %s15, 1
      // Predicated region
      $region13: #{up_forward.3} parent=11 // pred_check
        %p255 = pneg %p88
      $region14: #{up_forward.3} parent=11 // pred_check_branch
        %257 = sbr.rel (%p255) target = $region16
      $region15: #{up_forward.3} parent=11 // pred_region
        _
      $region16: #{up_forward.3} parent=11 // pred_fallthru
        _
      // Predicated region
      $region17: #{up_forward.3} parent=11 // pred_check
        %p258 = pneg %p109
      $region18: #{up_forward.3} parent=11 // pred_check_branch
        %260 = sbr.rel (%p258) target = $region20
      $region19: #{up_forward.3} parent=11 // pred_region
        _
      $region20: #{up_forward.3} parent=11 // pred_fallthru
        _
      // Predicated region
      $region21: #{up_forward.3} parent=11 // pred_check
        %p261 = pneg %p130
      $region22: #{up_forward.3} parent=11 // pred_check_branch
        %263 = sbr.rel (%p261) target = $region24
      $region23: #{up_forward.3} parent=11 // pred_region
        _
      $region24: #{up_forward.3} parent=11 // pred_fallthru
        _
      // Predicated region
      $region25: #{up_forward.3} parent=11 // pred_check
        %p264 = pneg %p151
      $region26: #{up_forward.3} parent=11 // pred_check_branch
        %266 = sbr.rel (%p264) target = $region28
      $region27: #{up_forward.3} parent=11 // pred_region
        _
      $region28: #{up_forward.3} parent=11 // pred_fallthru
        _
      // Predicated region
      $region29: #{up_forward.3} parent=11 // pred_check
        %p267 = pneg %p172
      $region30: #{up_forward.3} parent=11 // pred_check_branch
        %269 = sbr.rel (%p267) target = $region32
      $region31: #{up_forward.3} parent=11 // pred_region
        _
      $region32: #{up_forward.3} parent=11 // pred_fallthru
        _
      // Predicated region
      $region33: #{up_forward.3} parent=11 // pred_check
        %p270 = pneg %p193
      $region34: #{up_forward.3} parent=11 // pred_check_branch
        %272 = sbr.rel (%p270) target = $region36
      $region35: #{up_forward.3} parent=11 // pred_region
        _
      $region36: #{up_forward.3} parent=11 // pred_fallthru
        _
      // Predicated region
      $region37: #{up_forward.3} parent=11 // pred_check
        %p273 = pneg %p214
      $region38: #{up_forward.3} parent=11 // pred_check_branch
        %275 = sbr.rel (%p273) target = $region40
      $region39: #{up_forward.3} parent=11 // pred_region
        _
      $region40: #{up_forward.3} parent=11 // pred_fallthru
        _
    $region12: #{up_forward.3} parent=5 // pred_fallthru
      _
    %p276 = scmp.lt.s32.totalorder %s15, 2
    // Predicated region
    $region41: #{up_forward.3} parent=5 // pred_check
      %p277 = pneg %p276
    $region42: #{up_forward.3} parent=5 // pred_check_branch
      %279 = sbr.rel (%p277) target = $region44
    $region43: #{up_forward.3} parent=5 // pred_region
      // Predicated region
      $region45: #{up_forward.3} parent=43 // pred_check
        %p280 = pneg %p35
      $region46: #{up_forward.3} parent=43 // pred_check_branch
        %282 = sbr.rel (%p280) target = $region48
      $region47: #{up_forward.3} parent=43 // pred_region
        %p283 = scmp.lt.s32.totalorder %s15, 1
        %s284 = scalar_select %p283, %s15, 1
        %s285 = smul.addr %s284, 32
        %s286 = smul.addr %s285, 8
        %s287 = scalar_lea.vmem %s0, %s286
      $region48: #{up_forward.3} parent=43 // pred_fallthru
        _
      // Predicated region
      $region49: #{up_forward.3} parent=43 // pred_check
        %p288 = pneg %p61
      $region50: #{up_forward.3} parent=43 // pred_check_branch
        %290 = sbr.rel (%p288) target = $region52
      $region51: #{up_forward.3} parent=43 // pred_region
        %p291 = scmp.lt.s32.totalorder %s15, 1
        %s292 = scalar_select %p291, %s15, 1
        %s293 = smul.addr %s292, 32
        %s294 = smul.addr %s293, 8
        %s295 = scalar_lea.vmem %s1, %s294
      $region52: #{up_forward.3} parent=43 // pred_fallthru
        _
    $region44: #{up_forward.3} parent=5 // pred_fallthru
      _
    %p296 = scmp.le.s32.totalorder 1, %s15
    %p297 = scmp.lt.s32.totalorder %s15, 3
    %p298 = pnand %p296, %p297
    %p299 = pneg %p298
    // Predicated region
    $region53: #{up_forward.3} parent=5 // pred_check
      _
    $region54: #{up_forward.3} parent=5 // pred_check_branch
      %301 = sbr.rel (%p298) target = $region56
    $region55: #{up_forward.3} parent=5 // pred_region
      %s302 = ssub.s32 %s15, 1
      %p303 = scmp.lt.s32.totalorder %s20, 1
      %s304 = scalar_select %p303, %s20, 1
      %s305 = smul.addr %s304, 32
      %s306 = smul.addr %s305, 8
      %s307 = scalar_lea.vmem %s0, %s306
      %p308 = pneg %p41
      %p309 = pneg %p38
      %p310 = scmp.lt.s32.totalorder %s20, 1
      %s311 = scalar_select %p310, %s20, 1
      %s312 = smul.addr %s311, 32
      %s313 = smul.addr %s312, 8
      %s314 = scalar_lea.vmem %s1, %s313
      %p315 = pneg %p67
      %p316 = pneg %p64
      %p317 = pneg %p88
      %p318 = pneg %p85
      %p319 = pneg %p109
      %p320 = pneg %p106
      %p321 = pneg %p130
      %p322 = pneg %p127
      %p323 = pneg %p151
      %p324 = pneg %p148
      %p325 = pneg %p172
      %p326 = pneg %p169
      %p327 = pneg %p193
      %p328 = pneg %p190
      %p329 = pneg %p214
      %p330 = pneg %p211
      %p331 = pneg %p240
      %p332 = pneg %p237
      %p333 = scmp.lt.s32.totalorder %s20, 1
      %s334 = scalar_select %p333, %s20, 1
      %s335 = smul.addr %s334, 32
      %s336 = smul.addr %s335, 8
      %s337 = scalar_lea.vmem %s9, %s336
      %p338 = scmp.lt.s32.totalorder %s20, 1
      %s339 = scalar_select %p338, %s20, 1
      %s340 = smul.addr %s339, 32
      %s341 = smul.addr %s340, 8
      %s342 = scalar_lea.vmem %s0, %s341
      %p343 = scmp.lt.s32.totalorder %s20, 1
      %s344 = scalar_select %p343, %s20, 1
      %s345 = smul.addr %s344, 32
      %s346 = smul.addr %s345, 8
      %s347 = scalar_lea.vmem %s1, %s346
      %p348 = scmp.lt.s32.totalorder %s20, 1
      %s349 = scalar_select %p348, %s20, 1
      %s350 = smul.addr %s349, 32
      %s351 = smul.addr %s350, 8
      %s352 = scalar_lea.vmem %s9, %s351
      %vm353 = vcmask 64512
      %354 = vst.msk [vmem:[#allocation2] sm:$0xff] %vm353, 0.0
      %355 = vst.msk [vmem:[#allocation2 + $0x8] sm:$0xff] %vm353, 0.0
      %356 = vst.msk [vmem:[#allocation2 + $0x10] sm:$0xff] %vm353, 0.0
      %357 = vst.msk [vmem:[#allocation2 + $0x18] sm:$0xff] %vm353, 0.0
      %358 = vst.msk [vmem:[#allocation2 + $0x20] sm:$0xff] %vm353, 0.0
      %359 = vst.msk [vmem:[#allocation2 + $0x28] sm:$0xff] %vm353, 0.0
      %360 = vst.msk [vmem:[#allocation2 + $0x30] sm:$0xff] %vm353, 0.0
      %361 = vst.msk [vmem:[#allocation2 + $0x38] sm:$0xff] %vm353, 0.0
      %362 = vst.msk [vmem:[#allocation2 + $0x40] sm:$0xff] %vm353, 0.0
      %363 = vst.msk [vmem:[#allocation2 + $0x48] sm:$0xff] %vm353, 0.0
      %364 = vst.msk [vmem:[#allocation2 + $0x50] sm:$0xff] %vm353, 0.0
      %365 = vst.msk [vmem:[#allocation2 + $0x58] sm:$0xff] %vm353, 0.0
      %366 = vst.msk [vmem:[#allocation2 + $0x60] sm:$0xff] %vm353, 0.0
      %367 = vst.msk [vmem:[#allocation2 + $0x68] sm:$0xff] %vm353, 0.0
      %368 = vst.msk [vmem:[#allocation2 + $0x70] sm:$0xff] %vm353, 0.0
      %369 = vst.msk [vmem:[#allocation2 + $0x78] sm:$0xff] %vm353, 0.0
      %370 = vst.msk [vmem:[#allocation2 + $0x80] sm:$0xff] %vm353, 0.0
      %371 = vst.msk [vmem:[#allocation2 + $0x88] sm:$0xff] %vm353, 0.0
      %372 = vst.msk [vmem:[#allocation2 + $0x90] sm:$0xff] %vm353, 0.0
      %373 = vst.msk [vmem:[#allocation2 + $0x98] sm:$0xff] %vm353, 0.0
      %374 = vst.msk [vmem:[#allocation2 + $0xa0] sm:$0xff] %vm353, 0.0
      %375 = vst.msk [vmem:[#allocation2 + $0xa8] sm:$0xff] %vm353, 0.0
      %376 = vst.msk [vmem:[#allocation2 + $0xb0] sm:$0xff] %vm353, 0.0
      %377 = vst.msk [vmem:[#allocation2 + $0xb8] sm:$0xff] %vm353, 0.0
      %378 = vst.msk [vmem:[#allocation2 + $0xc0] sm:$0xff] %vm353, 0.0
      %379 = vst.msk [vmem:[#allocation2 + $0xc8] sm:$0xff] %vm353, 0.0
      %380 = vst.msk [vmem:[#allocation2 + $0xd0] sm:$0xff] %vm353, 0.0
      %381 = vst.msk [vmem:[#allocation2 + $0xd8] sm:$0xff] %vm353, 0.0
      %382 = vst.msk [vmem:[#allocation2 + $0xe0] sm:$0xff] %vm353, 0.0
      %383 = vst.msk [vmem:[#allocation2 + $0xe8] sm:$0xff] %vm353, 0.0
      %384 = vst.msk [vmem:[#allocation2 + $0xf0] sm:$0xff] %vm353, 0.0
      %385 = vst.msk [vmem:[#allocation2 + $0xf8] sm:$0xff] %vm353, 0.0
      %386 = vst.msk [vmem:[#allocation2 + $0x100] sm:$0xff] %vm353, 0.0
      %387 = vst.msk [vmem:[#allocation2 + $0x108] sm:$0xff] %vm353, 0.0
      %388 = vst.msk [vmem:[#allocation2 + $0x110] sm:$0xff] %vm353, 0.0
      %389 = vst.msk [vmem:[#allocation2 + $0x118] sm:$0xff] %vm353, 0.0
      %390 = vst.msk [vmem:[#allocation2 + $0x120] sm:$0xff] %vm353, 0.0
      %391 = vst.msk [vmem:[#allocation2 + $0x128] sm:$0xff] %vm353, 0.0
      %392 = vst.msk [vmem:[#allocation2 + $0x130] sm:$0xff] %vm353, 0.0
      %393 = vst.msk [vmem:[#allocation2 + $0x138] sm:$0xff] %vm353, 0.0
      %394 = vst.msk [vmem:[#allocation2 + $0x140] sm:$0xff] %vm353, 0.0
      %395 = vst.msk [vmem:[#allocation2 + $0x148] sm:$0xff] %vm353, 0.0
      %396 = vst.msk [vmem:[#allocation2 + $0x150] sm:$0xff] %vm353, 0.0
      %397 = vst.msk [vmem:[#allocation2 + $0x158] sm:$0xff] %vm353, 0.0
      %398 = vst.msk [vmem:[#allocation2 + $0x160] sm:$0xff] %vm353, 0.0
      %399 = vst.msk [vmem:[#allocation2 + $0x168] sm:$0xff] %vm353, 0.0
      %400 = vst.msk [vmem:[#allocation2 + $0x170] sm:$0xff] %vm353, 0.0
      %401 = vst.msk [vmem:[#allocation2 + $0x178] sm:$0xff] %vm353, 0.0
      %402 = vst.msk [vmem:[#allocation2 + $0x180] sm:$0xff] %vm353, 0.0
      %403 = vst.msk [vmem:[#allocation2 + $0x188] sm:$0xff] %vm353, 0.0
      %404 = vst.msk [vmem:[#allocation2 + $0x190] sm:$0xff] %vm353, 0.0
      %405 = vst.msk [vmem:[#allocation2 + $0x198] sm:$0xff] %vm353, 0.0
      %406 = vst.msk [vmem:[#allocation2 + $0x1a0] sm:$0xff] %vm353, 0.0
      %407 = vst.msk [vmem:[#allocation2 + $0x1a8] sm:$0xff] %vm353, 0.0
      %408 = vst.msk [vmem:[#allocation2 + $0x1b0] sm:$0xff] %vm353, 0.0
      %409 = vst.msk [vmem:[#allocation2 + $0x1b8] sm:$0xff] %vm353, 0.0
      %410 = vst.msk [vmem:[#allocation2 + $0x1c0] sm:$0xff] %vm353, 0.0
      %411 = vst.msk [vmem:[#allocation2 + $0x1c8] sm:$0xff] %vm353, 0.0
      %412 = vst.msk [vmem:[#allocation2 + $0x1d0] sm:$0xff] %vm353, 0.0
      %413 = vst.msk [vmem:[#allocation2 + $0x1d8] sm:$0xff] %vm353, 0.0
      %414 = vst.msk [vmem:[#allocation2 + $0x1e0] sm:$0xff] %vm353, 0.0
      %415 = vst.msk [vmem:[#allocation2 + $0x1e8] sm:$0xff] %vm353, 0.0
      %416 = vst.msk [vmem:[#allocation2 + $0x1f0] sm:$0xff] %vm353, 0.0
      %417 = vst.msk [vmem:[#allocation2 + $0x1f8] sm:$0xff] %vm353, 0.0
      %418 = vst.msk [vmem:[#allocation2 + $0x200] sm:$0xff] %vm353, 0.0
      %419 = vst.msk [vmem:[#allocation2 + $0x208] sm:$0xff] %vm353, 0.0
      %420 = vst.msk [vmem:[#allocation2 + $0x210] sm:$0xff] %vm353, 0.0
      %421 = vst.msk [vmem:[#allocation2 + $0x218] sm:$0xff] %vm353, 0.0
      %422 = vst.msk [vmem:[#allocation2 + $0x220] sm:$0xff] %vm353, 0.0
      %423 = vst.msk [vmem:[#allocation2 + $0x228] sm:$0xff] %vm353, 0.0
      %424 = vst.msk [vmem:[#allocation2 + $0x230] sm:$0xff] %vm353, 0.0
      %425 = vst.msk [vmem:[#allocation2 + $0x238] sm:$0xff] %vm353, 0.0
      %426 = vst.msk [vmem:[#allocation3] sm:$0xff] %vm353, 0.0
      %427 = vst.msk [vmem:[#allocation3 + $0x8] sm:$0xff] %vm353, 0.0
      %428 = vst.msk [vmem:[#allocation3 + $0x10] sm:$0xff] %vm353, 0.0
      %429 = vst.msk [vmem:[#allocation3 + $0x18] sm:$0xff] %vm353, 0.0
      %430 = vst.msk [vmem:[#allocation3 + $0x20] sm:$0xff] %vm353, 0.0
      %431 = vst.msk [vmem:[#allocation3 + $0x28] sm:$0xff] %vm353, 0.0
      %432 = vst.msk [vmem:[#allocation3 + $0x30] sm:$0xff] %vm353, 0.0
      %433 = vst.msk [vmem:[#allocation3 + $0x38] sm:$0xff] %vm353, 0.0
      %434 = vst.msk [vmem:[#allocation3 + $0x40] sm:$0xff] %vm353, 0.0
      %435 = vst.msk [vmem:[#allocation3 + $0x48] sm:$0xff] %vm353, 0.0
      %436 = vst.msk [vmem:[#allocation3 + $0x50] sm:$0xff] %vm353, 0.0
      %437 = vst.msk [vmem:[#allocation3 + $0x58] sm:$0xff] %vm353, 0.0
      %438 = vst.msk [vmem:[#allocation3 + $0x60] sm:$0xff] %vm353, 0.0
      %439 = vst.msk [vmem:[#allocation3 + $0x68] sm:$0xff] %vm353, 0.0
      %440 = vst.msk [vmem:[#allocation3 + $0x70] sm:$0xff] %vm353, 0.0
      %441 = vst.msk [vmem:[#allocation3 + $0x78] sm:$0xff] %vm353, 0.0
      %442 = vst.msk [vmem:[#allocation3 + $0x80] sm:$0xff] %vm353, 0.0
      %443 = vst.msk [vmem:[#allocation3 + $0x88] sm:$0xff] %vm353, 0.0
      %444 = vst.msk [vmem:[#allocation3 + $0x90] sm:$0xff] %vm353, 0.0
      %445 = vst.msk [vmem:[#allocation3 + $0x98] sm:$0xff] %vm353, 0.0
      %446 = vst.msk [vmem:[#allocation3 + $0xa0] sm:$0xff] %vm353, 0.0
      %447 = vst.msk [vmem:[#allocation3 + $0xa8] sm:$0xff] %vm353, 0.0
      %448 = vst.msk [vmem:[#allocation3 + $0xb0] sm:$0xff] %vm353, 0.0
      %449 = vst.msk [vmem:[#allocation3 + $0xb8] sm:$0xff] %vm353, 0.0
      %450 = vst.msk [vmem:[#allocation3 + $0xc0] sm:$0xff] %vm353, 0.0
      %451 = vst.msk [vmem:[#allocation3 + $0xc8] sm:$0xff] %vm353, 0.0
      %452 = vst.msk [vmem:[#allocation3 + $0xd0] sm:$0xff] %vm353, 0.0
      %453 = vst.msk [vmem:[#allocation3 + $0xd8] sm:$0xff] %vm353, 0.0
      %454 = vst.msk [vmem:[#allocation3 + $0xe0] sm:$0xff] %vm353, 0.0
      %455 = vst.msk [vmem:[#allocation3 + $0xe8] sm:$0xff] %vm353, 0.0
      %456 = vst.msk [vmem:[#allocation3 + $0xf0] sm:$0xff] %vm353, 0.0
      %457 = vst.msk [vmem:[#allocation3 + $0xf8] sm:$0xff] %vm353, 0.0
      %458 = vst.msk [vmem:[#allocation3 + $0x100] sm:$0xff] %vm353, 0.0
      %459 = vst.msk [vmem:[#allocation3 + $0x108] sm:$0xff] %vm353, 0.0
      %460 = vst.msk [vmem:[#allocation3 + $0x110] sm:$0xff] %vm353, 0.0
      %461 = vst.msk [vmem:[#allocation3 + $0x118] sm:$0xff] %vm353, 0.0
      %462 = vst.msk [vmem:[#allocation3 + $0x120] sm:$0xff] %vm353, 0.0
      %463 = vst.msk [vmem:[#allocation3 + $0x128] sm:$0xff] %vm353, 0.0
      %464 = vst.msk [vmem:[#allocation3 + $0x130] sm:$0xff] %vm353, 0.0
      %465 = vst.msk [vmem:[#allocation3 + $0x138] sm:$0xff] %vm353, 0.0
      %466 = vst.msk [vmem:[#allocation3 + $0x140] sm:$0xff] %vm353, 0.0
      %467 = vst.msk [vmem:[#allocation3 + $0x148] sm:$0xff] %vm353, 0.0
      %468 = vst.msk [vmem:[#allocation3 + $0x150] sm:$0xff] %vm353, 0.0
      %469 = vst.msk [vmem:[#allocation3 + $0x158] sm:$0xff] %vm353, 0.0
      %470 = vst.msk [vmem:[#allocation3 + $0x160] sm:$0xff] %vm353, 0.0
      %471 = vst.msk [vmem:[#allocation3 + $0x168] sm:$0xff] %vm353, 0.0
      %472 = vst.msk [vmem:[#allocation3 + $0x170] sm:$0xff] %vm353, 0.0
      %473 = vst.msk [vmem:[#allocation3 + $0x178] sm:$0xff] %vm353, 0.0
      %474 = vst.msk [vmem:[#allocation3 + $0x180] sm:$0xff] %vm353, 0.0
      %475 = vst.msk [vmem:[#allocation3 + $0x188] sm:$0xff] %vm353, 0.0
      %476 = vst.msk [vmem:[#allocation3 + $0x190] sm:$0xff] %vm353, 0.0
      %477 = vst.msk [vmem:[#allocation3 + $0x198] sm:$0xff] %vm353, 0.0
      %478 = vst.msk [vmem:[#allocation3 + $0x1a0] sm:$0xff] %vm353, 0.0
      %479 = vst.msk [vmem:[#allocation3 + $0x1a8] sm:$0xff] %vm353, 0.0
      %480 = vst.msk [vmem:[#allocation3 + $0x1b0] sm:$0xff] %vm353, 0.0
      %481 = vst.msk [vmem:[#allocation3 + $0x1b8] sm:$0xff] %vm353, 0.0
      %482 = vst.msk [vmem:[#allocation3 + $0x1c0] sm:$0xff] %vm353, 0.0
      %483 = vst.msk [vmem:[#allocation3 + $0x1c8] sm:$0xff] %vm353, 0.0
      %484 = vst.msk [vmem:[#allocation3 + $0x1d0] sm:$0xff] %vm353, 0.0
      %485 = vst.msk [vmem:[#allocation3 + $0x1d8] sm:$0xff] %vm353, 0.0
      %486 = vst.msk [vmem:[#allocation3 + $0x1e0] sm:$0xff] %vm353, 0.0
      %487 = vst.msk [vmem:[#allocation3 + $0x1e8] sm:$0xff] %vm353, 0.0
      %488 = vst.msk [vmem:[#allocation3 + $0x1f0] sm:$0xff] %vm353, 0.0
      %489 = vst.msk [vmem:[#allocation3 + $0x1f8] sm:$0xff] %vm353, 0.0
      %490 = vst.msk [vmem:[#allocation3 + $0x200] sm:$0xff] %vm353, 0.0
      %491 = vst.msk [vmem:[#allocation3 + $0x208] sm:$0xff] %vm353, 0.0
      %492 = vst.msk [vmem:[#allocation3 + $0x210] sm:$0xff] %vm353, 0.0
      %493 = vst.msk [vmem:[#allocation3 + $0x218] sm:$0xff] %vm353, 0.0
      %494 = vst.msk [vmem:[#allocation3 + $0x220] sm:$0xff] %vm353, 0.0
      %495 = vst.msk [vmem:[#allocation3 + $0x228] sm:$0xff] %vm353, 0.0
      %496 = vst.msk [vmem:[#allocation3 + $0x230] sm:$0xff] %vm353, 0.0
      %497 = vst.msk [vmem:[#allocation3 + $0x238] sm:$0xff] %vm353, 0.0
      %v498 = vld [vmem:[%s342] sm:$0xff]
      %v499 = vld [vmem:[%s342 + $0x8] sm:$0xff]
      %v500 = vld [vmem:[%s342 + $0x10] sm:$0xff]
      %v501 = vld [vmem:[%s342 + $0x18] sm:$0xff]
      %v502 = vld [vmem:[%s342 + $0x20] sm:$0xff]
      %v503 = vld [vmem:[%s342 + $0x28] sm:$0xff]
      %v504 = vld [vmem:[%s342 + $0x30] sm:$0xff]
      %v505 = vld [vmem:[%s342 + $0x38] sm:$0xff]
      %v506 = vld [vmem:[%s342 + $0x40] sm:$0xff]
      %v507 = vld [vmem:[%s342 + $0x48] sm:$0xff]
      %v508 = vld [vmem:[%s342 + $0x50] sm:$0xff]
      %v509 = vld [vmem:[%s342 + $0x58] sm:$0xff]
      %v510 = vld [vmem:[%s342 + $0x60] sm:$0xff]
      %v511 = vld [vmem:[%s342 + $0x68] sm:$0xff]
      %v512 = vld [vmem:[%s342 + $0x70] sm:$0xff]
      %v513 = vld [vmem:[%s342 + $0x78] sm:$0xff]
      %v514 = vld [vmem:[%s342 + $0x80] sm:$0xff]
      %v515 = vld [vmem:[%s342 + $0x88] sm:$0xff]
      %v516 = vld [vmem:[%s342 + $0x90] sm:$0xff]
      %v517 = vld [vmem:[%s342 + $0x98] sm:$0xff]
      %v518 = vld [vmem:[%s342 + $0xa0] sm:$0xff]
      %v519 = vld [vmem:[%s342 + $0xa8] sm:$0xff]
      %v520 = vld [vmem:[%s342 + $0xb0] sm:$0xff]
      %v521 = vld [vmem:[%s342 + $0xb8] sm:$0xff]
      %v522 = vld [vmem:[%s342 + $0xc0] sm:$0xff]
      %v523 = vld [vmem:[%s342 + $0xc8] sm:$0xff]
      %v524 = vld [vmem:[%s342 + $0xd0] sm:$0xff]
      %v525 = vld [vmem:[%s342 + $0xd8] sm:$0xff]
      %v526 = vld [vmem:[%s342 + $0xe0] sm:$0xff]
      %v527 = vld [vmem:[%s342 + $0xe8] sm:$0xff]
      %v528 = vld [vmem:[%s342 + $0xf0] sm:$0xff]
      %v529 = vld [vmem:[%s342 + $0xf8] sm:$0xff]
      %s530 = scalar_lea.vmem [#allocation2], 32
      %531 = vst.msk [vmem:[%s530 + $0x8] sm:$0xff] %vm353, %v498
      %532 = vst.msk [vmem:[%s530 + $0x10] sm:$0xff] %vm353, %v499
      %533 = vst.msk [vmem:[%s530 + $0x28] sm:$0xff] %vm353, %v500
      %534 = vst.msk [vmem:[%s530 + $0x30] sm:$0xff] %vm353, %v501
      %535 = vst.msk [vmem:[%s530 + $0x48] sm:$0xff] %vm353, %v502
      %536 = vst.msk [vmem:[%s530 + $0x50] sm:$0xff] %vm353, %v503
      %537 = vst.msk [vmem:[%s530 + $0x68] sm:$0xff] %vm353, %v504
      %538 = vst.msk [vmem:[%s530 + $0x70] sm:$0xff] %vm353, %v505
      %539 = vst.msk [vmem:[%s530 + $0x88] sm:$0xff] %vm353, %v506
      %540 = vst.msk [vmem:[%s530 + $0x90] sm:$0xff] %vm353, %v507
      %541 = vst.msk [vmem:[%s530 + $0xa8] sm:$0xff] %vm353, %v508
      %542 = vst.msk [vmem:[%s530 + $0xb0] sm:$0xff] %vm353, %v509
      %543 = vst.msk [vmem:[%s530 + $0xc8] sm:$0xff] %vm353, %v510
      %544 = vst.msk [vmem:[%s530 + $0xd0] sm:$0xff] %vm353, %v511
      %545 = vst.msk [vmem:[%s530 + $0xe8] sm:$0xff] %vm353, %v512
      %546 = vst.msk [vmem:[%s530 + $0xf0] sm:$0xff] %vm353, %v513
      %547 = vst.msk [vmem:[%s530 + $0x108] sm:$0xff] %vm353, %v514
      %548 = vst.msk [vmem:[%s530 + $0x110] sm:$0xff] %vm353, %v515
      %549 = vst.msk [vmem:[%s530 + $0x128] sm:$0xff] %vm353, %v516
      %550 = vst.msk [vmem:[%s530 + $0x130] sm:$0xff] %vm353, %v517
      %551 = vst.msk [vmem:[%s530 + $0x148] sm:$0xff] %vm353, %v518
      %552 = vst.msk [vmem:[%s530 + $0x150] sm:$0xff] %vm353, %v519
      %553 = vst.msk [vmem:[%s530 + $0x168] sm:$0xff] %vm353, %v520
      %554 = vst.msk [vmem:[%s530 + $0x170] sm:$0xff] %vm353, %v521
      %555 = vst.msk [vmem:[%s530 + $0x188] sm:$0xff] %vm353, %v522
      %556 = vst.msk [vmem:[%s530 + $0x190] sm:$0xff] %vm353, %v523
      %557 = vst.msk [vmem:[%s530 + $0x1a8] sm:$0xff] %vm353, %v524
      %558 = vst.msk [vmem:[%s530 + $0x1b0] sm:$0xff] %vm353, %v525
      %559 = vst.msk [vmem:[%s530 + $0x1c8] sm:$0xff] %vm353, %v526
      %560 = vst.msk [vmem:[%s530 + $0x1d0] sm:$0xff] %vm353, %v527
      %561 = vst.msk [vmem:[%s530 + $0x1e8] sm:$0xff] %vm353, %v528
      %562 = vst.msk [vmem:[%s530 + $0x1f0] sm:$0xff] %vm353, %v529
      %v563 = vld [vmem:[%s347] sm:$0xff]
      %v564 = vld [vmem:[%s347 + $0x8] sm:$0xff]
      %v565 = vld [vmem:[%s347 + $0x10] sm:$0xff]
      %v566 = vld [vmem:[%s347 + $0x18] sm:$0xff]
      %v567 = vld [vmem:[%s347 + $0x20] sm:$0xff]
      %v568 = vld [vmem:[%s347 + $0x28] sm:$0xff]
      %v569 = vld [vmem:[%s347 + $0x30] sm:$0xff]
      %v570 = vld [vmem:[%s347 + $0x38] sm:$0xff]
      %v571 = vld [vmem:[%s347 + $0x40] sm:$0xff]
      %v572 = vld [vmem:[%s347 + $0x48] sm:$0xff]
      %v573 = vld [vmem:[%s347 + $0x50] sm:$0xff]
      %v574 = vld [vmem:[%s347 + $0x58] sm:$0xff]
      %v575 = vld [vmem:[%s347 + $0x60] sm:$0xff]
      %v576 = vld [vmem:[%s347 + $0x68] sm:$0xff]
      %v577 = vld [vmem:[%s347 + $0x70] sm:$0xff]
      %v578 = vld [vmem:[%s347 + $0x78] sm:$0xff]
      %v579 = vld [vmem:[%s347 + $0x80] sm:$0xff]
      %v580 = vld [vmem:[%s347 + $0x88] sm:$0xff]
      %v581 = vld [vmem:[%s347 + $0x90] sm:$0xff]
      %v582 = vld [vmem:[%s347 + $0x98] sm:$0xff]
      %v583 = vld [vmem:[%s347 + $0xa0] sm:$0xff]
      %v584 = vld [vmem:[%s347 + $0xa8] sm:$0xff]
      %v585 = vld [vmem:[%s347 + $0xb0] sm:$0xff]
      %v586 = vld [vmem:[%s347 + $0xb8] sm:$0xff]
      %v587 = vld [vmem:[%s347 + $0xc0] sm:$0xff]
      %v588 = vld [vmem:[%s347 + $0xc8] sm:$0xff]
      %v589 = vld [vmem:[%s347 + $0xd0] sm:$0xff]
      %v590 = vld [vmem:[%s347 + $0xd8] sm:$0xff]
      %v591 = vld [vmem:[%s347 + $0xe0] sm:$0xff]
      %v592 = vld [vmem:[%s347 + $0xe8] sm:$0xff]
      %v593 = vld [vmem:[%s347 + $0xf0] sm:$0xff]
      %v594 = vld [vmem:[%s347 + $0xf8] sm:$0xff]
      %s595 = scalar_lea.vmem [#allocation3], 32
      %596 = vst.msk [vmem:[%s595 + $0x8] sm:$0xff] %vm353, %v563
      %597 = vst.msk [vmem:[%s595 + $0x10] sm:$0xff] %vm353, %v564
      %598 = vst.msk [vmem:[%s595 + $0x28] sm:$0xff] %vm353, %v565
      %599 = vst.msk [vmem:[%s595 + $0x30] sm:$0xff] %vm353, %v566
      %600 = vst.msk [vmem:[%s595 + $0x48] sm:$0xff] %vm353, %v567
      %601 = vst.msk [vmem:[%s595 + $0x50] sm:$0xff] %vm353, %v568
      %602 = vst.msk [vmem:[%s595 + $0x68] sm:$0xff] %vm353, %v569
      %603 = vst.msk [vmem:[%s595 + $0x70] sm:$0xff] %vm353, %v570
      %604 = vst.msk [vmem:[%s595 + $0x88] sm:$0xff] %vm353, %v571
      %605 = vst.msk [vmem:[%s595 + $0x90] sm:$0xff] %vm353, %v572
      %606 = vst.msk [vmem:[%s595 + $0xa8] sm:$0xff] %vm353, %v573
      %607 = vst.msk [vmem:[%s595 + $0xb0] sm:$0xff] %vm353, %v574
      %608 = vst.msk [vmem:[%s595 + $0xc8] sm:$0xff] %vm353, %v575
      %609 = vst.msk [vmem:[%s595 + $0xd0] sm:$0xff] %vm353, %v576
      %610 = vst.msk [vmem:[%s595 + $0xe8] sm:$0xff] %vm353, %v577
      %611 = vst.msk [vmem:[%s595 + $0xf0] sm:$0xff] %vm353, %v578
      %612 = vst.msk [vmem:[%s595 + $0x108] sm:$0xff] %vm353, %v579
      %613 = vst.msk [vmem:[%s595 + $0x110] sm:$0xff] %vm353, %v580
      %614 = vst.msk [vmem:[%s595 + $0x128] sm:$0xff] %vm353, %v581
      %615 = vst.msk [vmem:[%s595 + $0x130] sm:$0xff] %vm353, %v582
      %616 = vst.msk [vmem:[%s595 + $0x148] sm:$0xff] %vm353, %v583
      %617 = vst.msk [vmem:[%s595 + $0x150] sm:$0xff] %vm353, %v584
      %618 = vst.msk [vmem:[%s595 + $0x168] sm:$0xff] %vm353, %v585
      %619 = vst.msk [vmem:[%s595 + $0x170] sm:$0xff] %vm353, %v586
      %620 = vst.msk [vmem:[%s595 + $0x188] sm:$0xff] %vm353, %v587
      %621 = vst.msk [vmem:[%s595 + $0x190] sm:$0xff] %vm353, %v588
      %622 = vst.msk [vmem:[%s595 + $0x1a8] sm:$0xff] %vm353, %v589
      %623 = vst.msk [vmem:[%s595 + $0x1b0] sm:$0xff] %vm353, %v590
      %624 = vst.msk [vmem:[%s595 + $0x1c8] sm:$0xff] %vm353, %v591
      %625 = vst.msk [vmem:[%s595 + $0x1d0] sm:$0xff] %vm353, %v592
      %626 = vst.msk [vmem:[%s595 + $0x1e8] sm:$0xff] %vm353, %v593
      %627 = vst.msk [vmem:[%s595 + $0x1f0] sm:$0xff] %vm353, %v594
      %v628 = vld [vmem:[#allocation2] sm:$0xff]
      %v629 = vld [vmem:[#allocation2 + $0x8] sm:$0xff]
      %v630 = vld [vmem:[#allocation2 + $0x10] sm:$0xff]
      %v631 = vld [vmem:[#allocation2 + $0x18] sm:$0xff]
      %v632 = vld [vmem:[#allocation2 + $0x20] sm:$0xff]
      %v633 = vld [vmem:[#allocation2 + $0x28] sm:$0xff]
      %v634 = vld [vmem:[#allocation2 + $0x30] sm:$0xff]
      %v635 = vld [vmem:[#allocation2 + $0x38] sm:$0xff]
      %v636 = vld [vmem:[#allocation2 + $0x40] sm:$0xff]
      %v637 = vld [vmem:[#allocation2 + $0x48] sm:$0xff]
      %v638 = vld [vmem:[#allocation2 + $0x50] sm:$0xff]
      %v639 = vld [vmem:[#allocation2 + $0x58] sm:$0xff]
      %v640 = vld [vmem:[#allocation2 + $0x60] sm:$0xff]
      %v641 = vld [vmem:[#allocation2 + $0x68] sm:$0xff]
      %v642 = vld [vmem:[#allocation2 + $0x70] sm:$0xff]
      %v643 = vld [vmem:[#allocation2 + $0x78] sm:$0xff]
      %v644 = vld [vmem:[#allocation2 + $0x80] sm:$0xff]
      %v645 = vld [vmem:[#allocation2 + $0x88] sm:$0xff]
      %v646 = vld [vmem:[#allocation2 + $0x90] sm:$0xff]
      %v647 = vld [vmem:[#allocation2 + $0x98] sm:$0xff]
      %v648 = vld [vmem:[#allocation2 + $0xa0] sm:$0xff]
      %v649 = vld [vmem:[#allocation2 + $0xa8] sm:$0xff]
      %v650 = vld [vmem:[#allocation2 + $0xb0] sm:$0xff]
      %v651 = vld [vmem:[#allocation2 + $0xb8] sm:$0xff]
      %v652 = vld [vmem:[#allocation2 + $0xc0] sm:$0xff]
      %v653 = vld [vmem:[#allocation2 + $0xc8] sm:$0xff]
      %v654 = vld [vmem:[#allocation2 + $0xd0] sm:$0xff]
      %v655 = vld [vmem:[#allocation2 + $0xd8] sm:$0xff]
      %v656 = vld [vmem:[#allocation2 + $0xe0] sm:$0xff]
      %v657 = vld [vmem:[#allocation2 + $0xe8] sm:$0xff]
      %v658 = vld [vmem:[#allocation2 + $0xf0] sm:$0xff]
      %v659 = vld [vmem:[#allocation2 + $0xf8] sm:$0xff]
      %v660 = vld [vmem:[#allocation2 + $0x100] sm:$0xff]
      %v661 = vld [vmem:[#allocation2 + $0x108] sm:$0xff]
      %v662 = vld [vmem:[#allocation2 + $0x110] sm:$0xff]
      %v663 = vld [vmem:[#allocation2 + $0x118] sm:$0xff]
      %v664 = vld [vmem:[#allocation2 + $0x120] sm:$0xff]
      %v665 = vld [vmem:[#allocation2 + $0x128] sm:$0xff]
      %v666 = vld [vmem:[#allocation2 + $0x130] sm:$0xff]
      %v667 = vld [vmem:[#allocation2 + $0x138] sm:$0xff]
      %v668 = vld [vmem:[#allocation2 + $0x140] sm:$0xff]
      %v669 = vld [vmem:[#allocation2 + $0x148] sm:$0xff]
      %v670 = vld [vmem:[#allocation2 + $0x150] sm:$0xff]
      %v671 = vld [vmem:[#allocation2 + $0x158] sm:$0xff]
      %v672 = vld [vmem:[#allocation2 + $0x160] sm:$0xff]
      %v673 = vld [vmem:[#allocation2 + $0x168] sm:$0xff]
      %v674 = vld [vmem:[#allocation2 + $0x170] sm:$0xff]
      %v675 = vld [vmem:[#allocation2 + $0x178] sm:$0xff]
      %v676 = vld [vmem:[#allocation2 + $0x180] sm:$0xff]
      %v677 = vld [vmem:[#allocation2 + $0x188] sm:$0xff]
      %v678 = vld [vmem:[#allocation2 + $0x190] sm:$0xff]
      %v679 = vld [vmem:[#allocation2 + $0x198] sm:$0xff]
      %v680 = vld [vmem:[#allocation2 + $0x1a0] sm:$0xff]
      %v681 = vld [vmem:[#allocation2 + $0x1a8] sm:$0xff]
      %v682 = vld [vmem:[#allocation2 + $0x1b0] sm:$0xff]
      %v683 = vld [vmem:[#allocation2 + $0x1b8] sm:$0xff]
      %v684 = vld [vmem:[#allocation2 + $0x1c0] sm:$0xff]
      %v685 = vld [vmem:[#allocation2 + $0x1c8] sm:$0xff]
      %v686 = vld [vmem:[#allocation2 + $0x1d0] sm:$0xff]
      %v687 = vld [vmem:[#allocation2 + $0x1d8] sm:$0xff]
      %v688 = vld [vmem:[#allocation2 + $0x1e0] sm:$0xff]
      %v689 = vld [vmem:[#allocation2 + $0x1e8] sm:$0xff]
      %v690 = vld [vmem:[#allocation2 + $0x1f0] sm:$0xff]
      %v691 = vld [vmem:[#allocation2 + $0x1f8] sm:$0xff]
      %v692 = vld [vmem:[#allocation2 + $0x200] sm:$0xff]
      %v693 = vld [vmem:[#allocation2 + $0x208] sm:$0xff]
      %v694 = vld [vmem:[#allocation2 + $0x210] sm:$0xff]
      %v695 = vld [vmem:[#allocation2 + $0x218] sm:$0xff]
      %v696 = vld [vmem:[#allocation2 + $0x220] sm:$0xff]
      %v697 = vld [vmem:[#allocation2 + $0x228] sm:$0xff]
      %v698 = vld [vmem:[#allocation2 + $0x230] sm:$0xff]
      %v699 = vld [vmem:[#allocation2 + $0x238] sm:$0xff]
      %v700 = vld [vmem:[#allocation3] sm:$0xff]
      %v701 = vld [vmem:[#allocation3 + $0x8] sm:$0xff]
      %v702 = vld [vmem:[#allocation3 + $0x10] sm:$0xff]
      %v703 = vld [vmem:[#allocation3 + $0x18] sm:$0xff]
      %v704 = vld [vmem:[#allocation3 + $0x20] sm:$0xff]
      %v705 = vld [vmem:[#allocation3 + $0x28] sm:$0xff]
      %v706 = vld [vmem:[#allocation3 + $0x30] sm:$0xff]
      %v707 = vld [vmem:[#allocation3 + $0x38] sm:$0xff]
      %v708 = vld [vmem:[#allocation3 + $0x40] sm:$0xff]
      %v709 = vld [vmem:[#allocation3 + $0x48] sm:$0xff]
      %v710 = vld [vmem:[#allocation3 + $0x50] sm:$0xff]
      %v711 = vld [vmem:[#allocation3 + $0x58] sm:$0xff]
      %v712 = vld [vmem:[#allocation3 + $0x60] sm:$0xff]
      %v713 = vld [vmem:[#allocation3 + $0x68] sm:$0xff]
      %v714 = vld [vmem:[#allocation3 + $0x70] sm:$0xff]
      %v715 = vld [vmem:[#allocation3 + $0x78] sm:$0xff]
      %v716 = vld [vmem:[#allocation3 + $0x80] sm:$0xff]
      %v717 = vld [vmem:[#allocation3 + $0x88] sm:$0xff]
      %v718 = vld [vmem:[#allocation3 + $0x90] sm:$0xff]
      %v719 = vld [vmem:[#allocation3 + $0x98] sm:$0xff]
      %v720 = vld [vmem:[#allocation3 + $0xa0] sm:$0xff]
      %v721 = vld [vmem:[#allocation3 + $0xa8] sm:$0xff]
      %v722 = vld [vmem:[#allocation3 + $0xb0] sm:$0xff]
      %v723 = vld [vmem:[#allocation3 + $0xb8] sm:$0xff]
      %v724 = vld [vmem:[#allocation3 + $0xc0] sm:$0xff]
      %v725 = vld [vmem:[#allocation3 + $0xc8] sm:$0xff]
      %v726 = vld [vmem:[#allocation3 + $0xd0] sm:$0xff]
      %v727 = vld [vmem:[#allocation3 + $0xd8] sm:$0xff]
      %v728 = vld [vmem:[#allocation3 + $0xe0] sm:$0xff]
      %v729 = vld [vmem:[#allocation3 + $0xe8] sm:$0xff]
      %v730 = vld [vmem:[#allocation3 + $0xf0] sm:$0xff]
      %v731 = vld [vmem:[#allocation3 + $0xf8] sm:$0xff]
      %v732 = vld [vmem:[#allocation3 + $0x100] sm:$0xff]
      %v733 = vld [vmem:[#allocation3 + $0x108] sm:$0xff]
      %v734 = vld [vmem:[#allocation3 + $0x110] sm:$0xff]
      %v735 = vld [vmem:[#allocation3 + $0x118] sm:$0xff]
      %v736 = vld [vmem:[#allocation3 + $0x120] sm:$0xff]
      %v737 = vld [vmem:[#allocation3 + $0x128] sm:$0xff]
      %v738 = vld [vmem:[#allocation3 + $0x130] sm:$0xff]
      %v739 = vld [vmem:[#allocation3 + $0x138] sm:$0xff]
      %v740 = vld [vmem:[#allocation3 + $0x140] sm:$0xff]
      %v741 = vld [vmem:[#allocation3 + $0x148] sm:$0xff]
      %v742 = vld [vmem:[#allocation3 + $0x150] sm:$0xff]
      %v743 = vld [vmem:[#allocation3 + $0x158] sm:$0xff]
      %v744 = vld [vmem:[#allocation3 + $0x160] sm:$0xff]
      %v745 = vld [vmem:[#allocation3 + $0x168] sm:$0xff]
      %v746 = vld [vmem:[#allocation3 + $0x170] sm:$0xff]
      %v747 = vld [vmem:[#allocation3 + $0x178] sm:$0xff]
      %v748 = vld [vmem:[#allocation3 + $0x180] sm:$0xff]
      %v749 = vld [vmem:[#allocation3 + $0x188] sm:$0xff]
      %v750 = vld [vmem:[#allocation3 + $0x190] sm:$0xff]
      %v751 = vld [vmem:[#allocation3 + $0x198] sm:$0xff]
      %v752 = vld [vmem:[#allocation3 + $0x1a0] sm:$0xff]
      %v753 = vld [vmem:[#allocation3 + $0x1a8] sm:$0xff]
      %v754 = vld [vmem:[#allocation3 + $0x1b0] sm:$0xff]
      %v755 = vld [vmem:[#allocation3 + $0x1b8] sm:$0xff]
      %v756 = vld [vmem:[#allocation3 + $0x1c0] sm:$0xff]
      %v757 = vld [vmem:[#allocation3 + $0x1c8] sm:$0xff]
      %v758 = vld [vmem:[#allocation3 + $0x1d0] sm:$0xff]
      %v759 = vld [vmem:[#allocation3 + $0x1d8] sm:$0xff]
      %v760 = vld [vmem:[#allocation3 + $0x1e0] sm:$0xff]
      %v761 = vld [vmem:[#allocation3 + $0x1e8] sm:$0xff]
      %v762 = vld [vmem:[#allocation3 + $0x1f0] sm:$0xff]
      %v763 = vld [vmem:[#allocation3 + $0x1f8] sm:$0xff]
      %v764 = vld [vmem:[#allocation3 + $0x200] sm:$0xff]
      %v765 = vld [vmem:[#allocation3 + $0x208] sm:$0xff]
      %v766 = vld [vmem:[#allocation3 + $0x210] sm:$0xff]
      %v767 = vld [vmem:[#allocation3 + $0x218] sm:$0xff]
      %v768 = vld [vmem:[#allocation3 + $0x220] sm:$0xff]
      %v769 = vld [vmem:[#allocation3 + $0x228] sm:$0xff]
      %v770 = vld [vmem:[#allocation3 + $0x230] sm:$0xff]
      %v771 = vld [vmem:[#allocation3 + $0x238] sm:$0xff]
      %vm820 = vcmask 1040384
      %v821 = vrot.slane %v628, 7
      %v822 = vrot.slane %v629, 7
      %v823 = vsel %vm820, %v821, %v822
      %v824 = vrot.slane %v630, 7
      %v825 = vsel %vm820, %v822, %v824
      %v826 = vrot.slane %v632, 7
      %v827 = vrot.slane %v633, 7
      %v828 = vsel %vm820, %v826, %v827
      %v829 = vrot.slane %v634, 7
      %v830 = vsel %vm820, %v827, %v829
      %v831 = vrot.slane %v636, 7
      %v832 = vrot.slane %v637, 7
      %v833 = vsel %vm820, %v831, %v832
      %v834 = vrot.slane %v638, 7
      %v835 = vsel %vm820, %v832, %v834
      %v836 = vrot.slane %v640, 7
      %v837 = vrot.slane %v641, 7
      %v838 = vsel %vm820, %v836, %v837
      %v839 = vrot.slane %v642, 7
      %v840 = vsel %vm820, %v837, %v839
      %v841 = vrot.slane %v644, 7
      %v842 = vrot.slane %v645, 7
      %v843 = vsel %vm820, %v841, %v842
      %v844 = vrot.slane %v646, 7
      %v845 = vsel %vm820, %v842, %v844
      %v846 = vrot.slane %v648, 7
      %v847 = vrot.slane %v649, 7
      %v848 = vsel %vm820, %v846, %v847
      %v849 = vrot.slane %v650, 7
      %v850 = vsel %vm820, %v847, %v849
      %v851 = vrot.slane %v652, 7
      %v852 = vrot.slane %v653, 7
      %v853 = vsel %vm820, %v851, %v852
      %v854 = vrot.slane %v654, 7
      %v855 = vsel %vm820, %v852, %v854
      %v856 = vrot.slane %v656, 7
      %v857 = vrot.slane %v657, 7
      %v858 = vsel %vm820, %v856, %v857
      %v859 = vrot.slane %v658, 7
      %v860 = vsel %vm820, %v857, %v859
      %v861 = vrot.slane %v660, 7
      %v862 = vrot.slane %v661, 7
      %v863 = vsel %vm820, %v861, %v862
      %v864 = vrot.slane %v662, 7
      %v865 = vsel %vm820, %v862, %v864
      %v866 = vrot.slane %v664, 7
      %v867 = vrot.slane %v665, 7
      %v868 = vsel %vm820, %v866, %v867
      %v869 = vrot.slane %v666, 7
      %v870 = vsel %vm820, %v867, %v869
      %v871 = vrot.slane %v668, 7
      %v872 = vrot.slane %v669, 7
      %v873 = vsel %vm820, %v871, %v872
      %v874 = vrot.slane %v670, 7
      %v875 = vsel %vm820, %v872, %v874
      %v876 = vrot.slane %v672, 7
      %v877 = vrot.slane %v673, 7
      %v878 = vsel %vm820, %v876, %v877
      %v879 = vrot.slane %v674, 7
      %v880 = vsel %vm820, %v877, %v879
      %v881 = vrot.slane %v676, 7
      %v882 = vrot.slane %v677, 7
      %v883 = vsel %vm820, %v881, %v882
      %v884 = vrot.slane %v678, 7
      %v885 = vsel %vm820, %v882, %v884
      %v886 = vrot.slane %v680, 7
      %v887 = vrot.slane %v681, 7
      %v888 = vsel %vm820, %v886, %v887
      %v889 = vrot.slane %v682, 7
      %v890 = vsel %vm820, %v887, %v889
      %v891 = vrot.slane %v684, 7
      %v892 = vrot.slane %v685, 7
      %v893 = vsel %vm820, %v891, %v892
      %v894 = vrot.slane %v686, 7
      %v895 = vsel %vm820, %v892, %v894
      %v896 = vrot.slane %v688, 7
      %v897 = vrot.slane %v689, 7
      %v898 = vsel %vm820, %v896, %v897
      %v899 = vrot.slane %v690, 7
      %v900 = vsel %vm820, %v897, %v899
      %v949 = vrot.slane %v700, 7
      %v950 = vrot.slane %v701, 7
      %v951 = vsel %vm820, %v949, %v950
      %v952 = vrot.slane %v702, 7
      %v953 = vsel %vm820, %v950, %v952
      %v954 = vrot.slane %v704, 7
      %v955 = vrot.slane %v705, 7
      %v956 = vsel %vm820, %v954, %v955
      %v957 = vrot.slane %v706, 7
      %v958 = vsel %vm820, %v955, %v957
      %v959 = vrot.slane %v708, 7
      %v960 = vrot.slane %v709, 7
      %v961 = vsel %vm820, %v959, %v960
      %v962 = vrot.slane %v710, 7
      %v963 = vsel %vm820, %v960, %v962
      %v964 = vrot.slane %v712, 7
      %v965 = vrot.slane %v713, 7
      %v966 = vsel %vm820, %v964, %v965
      %v967 = vrot.slane %v714, 7
      %v968 = vsel %vm820, %v965, %v967
      %v969 = vrot.slane %v716, 7
      %v970 = vrot.slane %v717, 7
      %v971 = vsel %vm820, %v969, %v970
      %v972 = vrot.slane %v718, 7
      %v973 = vsel %vm820, %v970, %v972
      %v974 = vrot.slane %v720, 7
      %v975 = vrot.slane %v721, 7
      %v976 = vsel %vm820, %v974, %v975
      %v977 = vrot.slane %v722, 7
      %v978 = vsel %vm820, %v975, %v977
      %v979 = vrot.slane %v724, 7
      %v980 = vrot.slane %v725, 7
      %v981 = vsel %vm820, %v979, %v980
      %v982 = vrot.slane %v726, 7
      %v983 = vsel %vm820, %v980, %v982
      %v984 = vrot.slane %v728, 7
      %v985 = vrot.slane %v729, 7
      %v986 = vsel %vm820, %v984, %v985
      %v987 = vrot.slane %v730, 7
      %v988 = vsel %vm820, %v985, %v987
      %v989 = vrot.slane %v732, 7
      %v990 = vrot.slane %v733, 7
      %v991 = vsel %vm820, %v989, %v990
      %v992 = vrot.slane %v734, 7
      %v993 = vsel %vm820, %v990, %v992
      %v994 = vrot.slane %v736, 7
      %v995 = vrot.slane %v737, 7
      %v996 = vsel %vm820, %v994, %v995
      %v997 = vrot.slane %v738, 7
      %v998 = vsel %vm820, %v995, %v997
      %v999 = vrot.slane %v740, 7
      %v1000 = vrot.slane %v741, 7
      %v1001 = vsel %vm820, %v999, %v1000
      %v1002 = vrot.slane %v742, 7
      %v1003 = vsel %vm820, %v1000, %v1002
      %v1004 = vrot.slane %v744, 7
      %v1005 = vrot.slane %v745, 7
      %v1006 = vsel %vm820, %v1004, %v1005
      %v1007 = vrot.slane %v746, 7
      %v1008 = vsel %vm820, %v1005, %v1007
      %v1009 = vrot.slane %v748, 7
      %v1010 = vrot.slane %v749, 7
      %v1011 = vsel %vm820, %v1009, %v1010
      %v1012 = vrot.slane %v750, 7
      %v1013 = vsel %vm820, %v1010, %v1012
      %v1014 = vrot.slane %v752, 7
      %v1015 = vrot.slane %v753, 7
      %v1016 = vsel %vm820, %v1014, %v1015
      %v1017 = vrot.slane %v754, 7
      %v1018 = vsel %vm820, %v1015, %v1017
      %v1019 = vrot.slane %v756, 7
      %v1020 = vrot.slane %v757, 7
      %v1021 = vsel %vm820, %v1019, %v1020
      %v1022 = vrot.slane %v758, 7
      %v1023 = vsel %vm820, %v1020, %v1022
      %v1024 = vrot.slane %v760, 7
      %v1025 = vrot.slane %v761, 7
      %v1026 = vsel %vm820, %v1024, %v1025
      %v1027 = vrot.slane %v762, 7
      %v1028 = vsel %vm820, %v1025, %v1027
      %v1029 = vld [vmem:[%s2] sm:$0xff]
      %v1030 = vld [vmem:[%s3] sm:$0xff]
      %v1031 = vsel %vm353, %v951, 0
      %v1033 = vsel %vm353, %v953, 0
      %v1035 = vsel %vm353, %v956, 0
      %v1037 = vsel %vm353, %v958, 0
      %v1039 = vsel %vm353, %v961, 0
      %v1041 = vsel %vm353, %v963, 0
      %v1043 = vsel %vm353, %v966, 0
      %v1045 = vsel %vm353, %v968, 0
      %v1047 = vsel %vm353, %v971, 0
      %v1049 = vsel %vm353, %v973, 0
      %v1051 = vsel %vm353, %v976, 0
      %v1053 = vsel %vm353, %v978, 0
      %v1055 = vsel %vm353, %v981, 0
      %v1057 = vsel %vm353, %v983, 0
      %v1059 = vsel %vm353, %v986, 0
      %v1061 = vsel %vm353, %v988, 0
      %v1063 = vsel %vm353, %v991, 0
      %v1065 = vsel %vm353, %v993, 0
      %v1067 = vsel %vm353, %v996, 0
      %v1069 = vsel %vm353, %v998, 0
      %v1071 = vsel %vm353, %v1001, 0
      %v1073 = vsel %vm353, %v1003, 0
      %v1075 = vsel %vm353, %v1006, 0
      %v1077 = vsel %vm353, %v1008, 0
      %v1079 = vsel %vm353, %v1011, 0
      %v1081 = vsel %vm353, %v1013, 0
      %v1083 = vsel %vm353, %v1016, 0
      %v1085 = vsel %vm353, %v1018, 0
      %v1087 = vsel %vm353, %v1021, 0
      %v1089 = vsel %vm353, %v1023, 0
      %v1091 = vsel %vm353, %v1026, 0
      %v1093 = vsel %vm353, %v1028, 0
      %1095 = vmatpush.msra.mxu0 0.0
      %1096 = vmatpush.msra.mxu0 0.0
      %1097 = vmatpush.msra.mxu0 0.0
      %1098 = vmatpush.msra.mxu0 0.0
      %1099 = vmatpush.msra.mxu0 0.0
      %1100 = vmatpush.msra.mxu0 0.0
      %1101 = vmatpush.msra.mxu0 0.0
      %1102 = vmatpush.msra.mxu0 0.0
      %1103 = vmatpush.msra.mxu0 0.0
      %1104 = vmatpush.msra.mxu0 0.0
      %1105 = vmatpush.msra.mxu0 0.0
      %1106 = vmatpush.msra.mxu0 0.0
      %1107 = vmatpush.msra.mxu0 0.0
      %1108 = vmatpush.msra.mxu0 0.0
      %1109 = vmatpush.msra.mxu0 0.0
      %1110 = vmatpush.msra.mxu0 %v1030
      %1111 = vmatmul.f32.gmra.mxu0 %v1031
      %v1112 = vpop.f32.mrf.mxu0
      %v1113 = vadd.f32 0.0, %v1112
      %1114 = vmatmul.f32.gmra.mxu0 %v1033
      %v1115 = vpop.f32.mrf.mxu0
      %v1116 = vadd.f32 0.0, %v1115
      %1117 = vmatmul.f32.gmra.mxu0 %v1035
      %v1118 = vpop.f32.mrf.mxu0
      %v1119 = vadd.f32 0.0, %v1118
      %1120 = vmatmul.f32.gmra.mxu0 %v1037
      %v1121 = vpop.f32.mrf.mxu0
      %v1122 = vadd.f32 0.0, %v1121
      %1123 = vmatmul.f32.gmra.mxu0 %v1039
      %v1124 = vpop.f32.mrf.mxu0
      %v1125 = vadd.f32 0.0, %v1124
      %1126 = vmatmul.f32.gmra.mxu0 %v1041
      %v1127 = vpop.f32.mrf.mxu0
      %v1128 = vadd.f32 0.0, %v1127
      %1129 = vmatmul.f32.gmra.mxu0 %v1043
      %v1130 = vpop.f32.mrf.mxu0
      %v1131 = vadd.f32 0.0, %v1130
      %1132 = vmatmul.f32.gmra.mxu0 %v1045
      %v1133 = vpop.f32.mrf.mxu0
      %v1134 = vadd.f32 0.0, %v1133
      %1135 = vmatmul.f32.gmra.mxu0 %v1047
      %v1136 = vpop.f32.mrf.mxu0
      %v1137 = vadd.f32 0.0, %v1136
      %1138 = vmatmul.f32.gmra.mxu0 %v1049
      %v1139 = vpop.f32.mrf.mxu0
      %v1140 = vadd.f32 0.0, %v1139
      %1141 = vmatmul.f32.gmra.mxu0 %v1051
      %v1142 = vpop.f32.mrf.mxu0
      %v1143 = vadd.f32 0.0, %v1142
      %1144 = vmatmul.f32.gmra.mxu0 %v1053
      %v1145 = vpop.f32.mrf.mxu0
      %v1146 = vadd.f32 0.0, %v1145
      %1147 = vmatmul.f32.gmra.mxu0 %v1055
      %v1148 = vpop.f32.mrf.mxu0
      %v1149 = vadd.f32 0.0, %v1148
      %1150 = vmatmul.f32.gmra.mxu0 %v1057
      %v1151 = vpop.f32.mrf.mxu0
      %v1152 = vadd.f32 0.0, %v1151
      %1153 = vmatmul.f32.gmra.mxu0 %v1059
      %v1154 = vpop.f32.mrf.mxu0
      %v1155 = vadd.f32 0.0, %v1154
      %1156 = vmatmul.f32.gmra.mxu0 %v1061
      %v1157 = vpop.f32.mrf.mxu0
      %v1158 = vadd.f32 0.0, %v1157
      %1159 = vmatmul.f32.gmra.mxu0 %v1063
      %v1160 = vpop.f32.mrf.mxu0
      %v1161 = vadd.f32 0.0, %v1160
      %1162 = vmatmul.f32.gmra.mxu0 %v1065
      %v1163 = vpop.f32.mrf.mxu0
      %v1164 = vadd.f32 0.0, %v1163
      %1165 = vmatmul.f32.gmra.mxu0 %v1067
      %v1166 = vpop.f32.mrf.mxu0
      %v1167 = vadd.f32 0.0, %v1166
      %1168 = vmatmul.f32.gmra.mxu0 %v1069
      %v1169 = vpop.f32.mrf.mxu0
      %v1170 = vadd.f32 0.0, %v1169
      %1171 = vmatmul.f32.gmra.mxu0 %v1071
      %v1172 = vpop.f32.mrf.mxu0
      %v1173 = vadd.f32 0.0, %v1172
      %1174 = vmatmul.f32.gmra.mxu0 %v1073
      %v1175 = vpop.f32.mrf.mxu0
      %v1176 = vadd.f32 0.0, %v1175
      %1177 = vmatmul.f32.gmra.mxu0 %v1075
      %v1178 = vpop.f32.mrf.mxu0
      %v1179 = vadd.f32 0.0, %v1178
      %1180 = vmatmul.f32.gmra.mxu0 %v1077
      %v1181 = vpop.f32.mrf.mxu0
      %v1182 = vadd.f32 0.0, %v1181
      %1183 = vmatmul.f32.gmra.mxu0 %v1079
      %v1184 = vpop.f32.mrf.mxu0
      %v1185 = vadd.f32 0.0, %v1184
      %1186 = vmatmul.f32.gmra.mxu0 %v1081
      %v1187 = vpop.f32.mrf.mxu0
      %v1188 = vadd.f32 0.0, %v1187
      %1189 = vmatmul.f32.gmra.mxu0 %v1083
      %v1190 = vpop.f32.mrf.mxu0
      %v1191 = vadd.f32 0.0, %v1190
      %1192 = vmatmul.f32.gmra.mxu0 %v1085
      %v1193 = vpop.f32.mrf.mxu0
      %v1194 = vadd.f32 0.0, %v1193
      %1195 = vmatmul.f32.gmra.mxu0 %v1087
      %v1196 = vpop.f32.mrf.mxu0
      %v1197 = vadd.f32 0.0, %v1196
      %1198 = vmatmul.f32.gmra.mxu0 %v1089
      %v1199 = vpop.f32.mrf.mxu0
      %v1200 = vadd.f32 0.0, %v1199
      %1201 = vmatmul.f32.gmra.mxu0 %v1091
      %v1202 = vpop.f32.mrf.mxu0
      %v1203 = vadd.f32 0.0, %v1202
      %1204 = vmatmul.f32.gmra.mxu0 %v1093
      %v1205 = vpop.f32.mrf.mxu0
      %v1206 = vadd.f32 0.0, %v1205
      %1207 = vdwg.mxu0
      %v1208 = vsel %vm353, %v823, 0
      %v1210 = vsel %vm353, %v825, 0
      %v1212 = vsel %vm353, %v828, 0
      %v1214 = vsel %vm353, %v830, 0
      %v1216 = vsel %vm353, %v833, 0
      %v1218 = vsel %vm353, %v835, 0
      %v1220 = vsel %vm353, %v838, 0
      %v1222 = vsel %vm353, %v840, 0
      %v1224 = vsel %vm353, %v843, 0
      %v1226 = vsel %vm353, %v845, 0
      %v1228 = vsel %vm353, %v848, 0
      %v1230 = vsel %vm353, %v850, 0
      %v1232 = vsel %vm353, %v853, 0
      %v1234 = vsel %vm353, %v855, 0
      %v1236 = vsel %vm353, %v858, 0
      %v1238 = vsel %vm353, %v860, 0
      %v1240 = vsel %vm353, %v863, 0
      %v1242 = vsel %vm353, %v865, 0
      %v1244 = vsel %vm353, %v868, 0
      %v1246 = vsel %vm353, %v870, 0
      %v1248 = vsel %vm353, %v873, 0
      %v1250 = vsel %vm353, %v875, 0
      %v1252 = vsel %vm353, %v878, 0
      %v1254 = vsel %vm353, %v880, 0
      %v1256 = vsel %vm353, %v883, 0
      %v1258 = vsel %vm353, %v885, 0
      %v1260 = vsel %vm353, %v888, 0
      %v1262 = vsel %vm353, %v890, 0
      %v1264 = vsel %vm353, %v893, 0
      %v1266 = vsel %vm353, %v895, 0
      %v1268 = vsel %vm353, %v898, 0
      %v1270 = vsel %vm353, %v900, 0
      %1272 = vmatpush.msra.mxu0 0.0
      %1273 = vmatpush.msra.mxu0 0.0
      %1274 = vmatpush.msra.mxu0 0.0
      %1275 = vmatpush.msra.mxu0 0.0
      %1276 = vmatpush.msra.mxu0 0.0
      %1277 = vmatpush.msra.mxu0 0.0
      %1278 = vmatpush.msra.mxu0 0.0
      %1279 = vmatpush.msra.mxu0 0.0
      %1280 = vmatpush.msra.mxu0 0.0
      %1281 = vmatpush.msra.mxu0 0.0
      %1282 = vmatpush.msra.mxu0 0.0
      %1283 = vmatpush.msra.mxu0 0.0
      %1284 = vmatpush.msra.mxu0 0.0
      %1285 = vmatpush.msra.mxu0 0.0
      %1286 = vmatpush.msra.mxu0 0.0
      %1287 = vmatpush.msra.mxu0 %v1029
      %1288 = vmatmul.f32.gmra.mxu0 %v1208
      %v1289 = vpop.f32.mrf.mxu0
      %v1290 = vadd.f32 %v1113, %v1289
      %1291 = vmatmul.f32.gmra.mxu0 %v1210
      %v1292 = vpop.f32.mrf.mxu0
      %v1293 = vadd.f32 %v1116, %v1292
      %1294 = vmatmul.f32.gmra.mxu0 %v1212
      %v1295 = vpop.f32.mrf.mxu0
      %v1296 = vadd.f32 %v1119, %v1295
      %1297 = vmatmul.f32.gmra.mxu0 %v1214
      %v1298 = vpop.f32.mrf.mxu0
      %v1299 = vadd.f32 %v1122, %v1298
      %1300 = vmatmul.f32.gmra.mxu0 %v1216
      %v1301 = vpop.f32.mrf.mxu0
      %v1302 = vadd.f32 %v1125, %v1301
      %1303 = vmatmul.f32.gmra.mxu0 %v1218
      %v1304 = vpop.f32.mrf.mxu0
      %v1305 = vadd.f32 %v1128, %v1304
      %1306 = vmatmul.f32.gmra.mxu0 %v1220
      %v1307 = vpop.f32.mrf.mxu0
      %v1308 = vadd.f32 %v1131, %v1307
      %1309 = vmatmul.f32.gmra.mxu0 %v1222
      %v1310 = vpop.f32.mrf.mxu0
      %v1311 = vadd.f32 %v1134, %v1310
      %1312 = vmatmul.f32.gmra.mxu0 %v1224
      %v1313 = vpop.f32.mrf.mxu0
      %v1314 = vadd.f32 %v1137, %v1313
      %1315 = vmatmul.f32.gmra.mxu0 %v1226
      %v1316 = vpop.f32.mrf.mxu0
      %v1317 = vadd.f32 %v1140, %v1316
      %1318 = vmatmul.f32.gmra.mxu0 %v1228
      %v1319 = vpop.f32.mrf.mxu0
      %v1320 = vadd.f32 %v1143, %v1319
      %1321 = vmatmul.f32.gmra.mxu0 %v1230
      %v1322 = vpop.f32.mrf.mxu0
      %v1323 = vadd.f32 %v1146, %v1322
      %1324 = vmatmul.f32.gmra.mxu0 %v1232
      %v1325 = vpop.f32.mrf.mxu0
      %v1326 = vadd.f32 %v1149, %v1325
      %1327 = vmatmul.f32.gmra.mxu0 %v1234
      %v1328 = vpop.f32.mrf.mxu0
      %v1329 = vadd.f32 %v1152, %v1328
      %1330 = vmatmul.f32.gmra.mxu0 %v1236
      %v1331 = vpop.f32.mrf.mxu0
      %v1332 = vadd.f32 %v1155, %v1331
      %1333 = vmatmul.f32.gmra.mxu0 %v1238
      %v1334 = vpop.f32.mrf.mxu0
      %v1335 = vadd.f32 %v1158, %v1334
      %1336 = vmatmul.f32.gmra.mxu0 %v1240
      %v1337 = vpop.f32.mrf.mxu0
      %v1338 = vadd.f32 %v1161, %v1337
      %1339 = vmatmul.f32.gmra.mxu0 %v1242
      %v1340 = vpop.f32.mrf.mxu0
      %v1341 = vadd.f32 %v1164, %v1340
      %1342 = vmatmul.f32.gmra.mxu0 %v1244
      %v1343 = vpop.f32.mrf.mxu0
      %v1344 = vadd.f32 %v1167, %v1343
      %1345 = vmatmul.f32.gmra.mxu0 %v1246
      %v1346 = vpop.f32.mrf.mxu0
      %v1347 = vadd.f32 %v1170, %v1346
      %1348 = vmatmul.f32.gmra.mxu0 %v1248
      %v1349 = vpop.f32.mrf.mxu0
      %v1350 = vadd.f32 %v1173, %v1349
      %1351 = vmatmul.f32.gmra.mxu0 %v1250
      %v1352 = vpop.f32.mrf.mxu0
      %v1353 = vadd.f32 %v1176, %v1352
      %1354 = vmatmul.f32.gmra.mxu0 %v1252
      %v1355 = vpop.f32.mrf.mxu0
      %v1356 = vadd.f32 %v1179, %v1355
      %1357 = vmatmul.f32.gmra.mxu0 %v1254
      %v1358 = vpop.f32.mrf.mxu0
      %v1359 = vadd.f32 %v1182, %v1358
      %1360 = vmatmul.f32.gmra.mxu0 %v1256
      %v1361 = vpop.f32.mrf.mxu0
      %v1362 = vadd.f32 %v1185, %v1361
      %1363 = vmatmul.f32.gmra.mxu0 %v1258
      %v1364 = vpop.f32.mrf.mxu0
      %v1365 = vadd.f32 %v1188, %v1364
      %1366 = vmatmul.f32.gmra.mxu0 %v1260
      %v1367 = vpop.f32.mrf.mxu0
      %v1368 = vadd.f32 %v1191, %v1367
      %1369 = vmatmul.f32.gmra.mxu0 %v1262
      %v1370 = vpop.f32.mrf.mxu0
      %v1371 = vadd.f32 %v1194, %v1370
      %1372 = vmatmul.f32.gmra.mxu0 %v1264
      %v1373 = vpop.f32.mrf.mxu0
      %v1374 = vadd.f32 %v1197, %v1373
      %1375 = vmatmul.f32.gmra.mxu0 %v1266
      %v1376 = vpop.f32.mrf.mxu0
      %v1377 = vadd.f32 %v1200, %v1376
      %1378 = vmatmul.f32.gmra.mxu0 %v1268
      %v1379 = vpop.f32.mrf.mxu0
      %v1380 = vadd.f32 %v1203, %v1379
      %1381 = vmatmul.f32.gmra.mxu0 %v1270
      %v1382 = vpop.f32.mrf.mxu0
      %v1383 = vadd.f32 %v1206, %v1382
      %1384 = vdwg.mxu0
      %s1385 = scalar_lea.vmem %s2, 8
      %v1386 = vld [vmem:[%s1385] sm:$0xff]
      %v1387 = vsel %vm353, %v629, 0
      %v1389 = vsel %vm353, %v630, 0
      %v1391 = vsel %vm353, %v633, 0
      %v1393 = vsel %vm353, %v634, 0
      %v1395 = vsel %vm353, %v637, 0
      %v1397 = vsel %vm353, %v638, 0
      %v1399 = vsel %vm353, %v641, 0
      %v1401 = vsel %vm353, %v642, 0
      %v1403 = vsel %vm353, %v645, 0
      %v1405 = vsel %vm353, %v646, 0
      %v1407 = vsel %vm353, %v649, 0
      %v1409 = vsel %vm353, %v650, 0
      %v1411 = vsel %vm353, %v653, 0
      %v1413 = vsel %vm353, %v654, 0
      %v1415 = vsel %vm353, %v657, 0
      %v1417 = vsel %vm353, %v658, 0
      %v1419 = vsel %vm353, %v661, 0
      %v1421 = vsel %vm353, %v662, 0
      %v1423 = vsel %vm353, %v665, 0
      %v1425 = vsel %vm353, %v666, 0
      %v1427 = vsel %vm353, %v669, 0
      %v1429 = vsel %vm353, %v670, 0
      %v1431 = vsel %vm353, %v673, 0
      %v1433 = vsel %vm353, %v674, 0
      %v1435 = vsel %vm353, %v677, 0
      %v1437 = vsel %vm353, %v678, 0
      %v1439 = vsel %vm353, %v681, 0
      %v1441 = vsel %vm353, %v682, 0
      %v1443 = vsel %vm353, %v685, 0
      %v1445 = vsel %vm353, %v686, 0
      %v1447 = vsel %vm353, %v689, 0
      %v1449 = vsel %vm353, %v690, 0
      %1451 = vmatpush.msra.mxu0 0.0
      %1452 = vmatpush.msra.mxu0 0.0
      %1453 = vmatpush.msra.mxu0 0.0
      %1454 = vmatpush.msra.mxu0 0.0
      %1455 = vmatpush.msra.mxu0 0.0
      %1456 = vmatpush.msra.mxu0 0.0
      %1457 = vmatpush.msra.mxu0 0.0
      %1458 = vmatpush.msra.mxu0 0.0
      %1459 = vmatpush.msra.mxu0 0.0
      %1460 = vmatpush.msra.mxu0 0.0
      %1461 = vmatpush.msra.mxu0 0.0
      %1462 = vmatpush.msra.mxu0 0.0
      %1463 = vmatpush.msra.mxu0 0.0
      %1464 = vmatpush.msra.mxu0 0.0
      %1465 = vmatpush.msra.mxu0 0.0
      %1466 = vmatpush.msra.mxu0 %v1386
      %1467 = vmatmul.f32.gmra.mxu0 %v1387
      %v1468 = vpop.f32.mrf.mxu0
      %v1469 = vadd.f32 0.0, %v1468
      %1470 = vmatmul.f32.gmra.mxu0 %v1389
      %v1471 = vpop.f32.mrf.mxu0
      %v1472 = vadd.f32 0.0, %v1471
      %1473 = vmatmul.f32.gmra.mxu0 %v1391
      %v1474 = vpop.f32.mrf.mxu0
      %v1475 = vadd.f32 0.0, %v1474
      %1476 = vmatmul.f32.gmra.mxu0 %v1393
      %v1477 = vpop.f32.mrf.mxu0
      %v1478 = vadd.f32 0.0, %v1477
      %1479 = vmatmul.f32.gmra.mxu0 %v1395
      %v1480 = vpop.f32.mrf.mxu0
      %v1481 = vadd.f32 0.0, %v1480
      %1482 = vmatmul.f32.gmra.mxu0 %v1397
      %v1483 = vpop.f32.mrf.mxu0
      %v1484 = vadd.f32 0.0, %v1483
      %1485 = vmatmul.f32.gmra.mxu0 %v1399
      %v1486 = vpop.f32.mrf.mxu0
      %v1487 = vadd.f32 0.0, %v1486
      %1488 = vmatmul.f32.gmra.mxu0 %v1401
      %v1489 = vpop.f32.mrf.mxu0
      %v1490 = vadd.f32 0.0, %v1489
      %1491 = vmatmul.f32.gmra.mxu0 %v1403
      %v1492 = vpop.f32.mrf.mxu0
      %v1493 = vadd.f32 0.0, %v1492
      %1494 = vmatmul.f32.gmra.mxu0 %v1405
      %v1495 = vpop.f32.mrf.mxu0
      %v1496 = vadd.f32 0.0, %v1495
      %1497 = vmatmul.f32.gmra.mxu0 %v1407
      %v1498 = vpop.f32.mrf.mxu0
      %v1499 = vadd.f32 0.0, %v1498
      %1500 = vmatmul.f32.gmra.mxu0 %v1409
      %v1501 = vpop.f32.mrf.mxu0
      %v1502 = vadd.f32 0.0, %v1501
      %1503 = vmatmul.f32.gmra.mxu0 %v1411
      %v1504 = vpop.f32.mrf.mxu0
      %v1505 = vadd.f32 0.0, %v1504
      %1506 = vmatmul.f32.gmra.mxu0 %v1413
      %v1507 = vpop.f32.mrf.mxu0
      %v1508 = vadd.f32 0.0, %v1507
      %1509 = vmatmul.f32.gmra.mxu0 %v1415
      %v1510 = vpop.f32.mrf.mxu0
      %v1511 = vadd.f32 0.0, %v1510
      %1512 = vmatmul.f32.gmra.mxu0 %v1417
      %v1513 = vpop.f32.mrf.mxu0
      %v1514 = vadd.f32 0.0, %v1513
      %1515 = vmatmul.f32.gmra.mxu0 %v1419
      %v1516 = vpop.f32.mrf.mxu0
      %v1517 = vadd.f32 0.0, %v1516
      %1518 = vmatmul.f32.gmra.mxu0 %v1421
      %v1519 = vpop.f32.mrf.mxu0
      %v1520 = vadd.f32 0.0, %v1519
      %1521 = vmatmul.f32.gmra.mxu0 %v1423
      %v1522 = vpop.f32.mrf.mxu0
      %v1523 = vadd.f32 0.0, %v1522
      %1524 = vmatmul.f32.gmra.mxu0 %v1425
      %v1525 = vpop.f32.mrf.mxu0
      %v1526 = vadd.f32 0.0, %v1525
      %1527 = vmatmul.f32.gmra.mxu0 %v1427
      %v1528 = vpop.f32.mrf.mxu0
      %v1529 = vadd.f32 0.0, %v1528
      %1530 = vmatmul.f32.gmra.mxu0 %v1429
      %v1531 = vpop.f32.mrf.mxu0
      %v1532 = vadd.f32 0.0, %v1531
      %1533 = vmatmul.f32.gmra.mxu0 %v1431
      %v1534 = vpop.f32.mrf.mxu0
      %v1535 = vadd.f32 0.0, %v1534
      %1536 = vmatmul.f32.gmra.mxu0 %v1433
      %v1537 = vpop.f32.mrf.mxu0
      %v1538 = vadd.f32 0.0, %v1537
      %1539 = vmatmul.f32.gmra.mxu0 %v1435
      %v1540 = vpop.f32.mrf.mxu0
      %v1541 = vadd.f32 0.0, %v1540
      %1542 = vmatmul.f32.gmra.mxu0 %v1437
      %v1543 = vpop.f32.mrf.mxu0
      %v1544 = vadd.f32 0.0, %v1543
      %1545 = vmatmul.f32.gmra.mxu0 %v1439
      %v1546 = vpop.f32.mrf.mxu0
      %v1547 = vadd.f32 0.0, %v1546
      %1548 = vmatmul.f32.gmra.mxu0 %v1441
      %v1549 = vpop.f32.mrf.mxu0
      %v1550 = vadd.f32 0.0, %v1549
      %1551 = vmatmul.f32.gmra.mxu0 %v1443
      %v1552 = vpop.f32.mrf.mxu0
      %v1553 = vadd.f32 0.0, %v1552
      %1554 = vmatmul.f32.gmra.mxu0 %v1445
      %v1555 = vpop.f32.mrf.mxu0
      %v1556 = vadd.f32 0.0, %v1555
      %1557 = vmatmul.f32.gmra.mxu0 %v1447
      %v1558 = vpop.f32.mrf.mxu0
      %v1559 = vadd.f32 0.0, %v1558
      %1560 = vmatmul.f32.gmra.mxu0 %v1449
      %v1561 = vpop.f32.mrf.mxu0
      %v1562 = vadd.f32 0.0, %v1561
      %1563 = vdwg.mxu0
      %v1564 = vadd.f32 %v1290, %v1469
      %v1565 = vadd.f32 %v1293, %v1472
      %v1566 = vadd.f32 %v1296, %v1475
      %v1567 = vadd.f32 %v1299, %v1478
      %v1568 = vadd.f32 %v1302, %v1481
      %v1569 = vadd.f32 %v1305, %v1484
      %v1570 = vadd.f32 %v1308, %v1487
      %v1571 = vadd.f32 %v1311, %v1490
      %v1572 = vadd.f32 %v1314, %v1493
      %v1573 = vadd.f32 %v1317, %v1496
      %v1574 = vadd.f32 %v1320, %v1499
      %v1575 = vadd.f32 %v1323, %v1502
      %v1576 = vadd.f32 %v1326, %v1505
      %v1577 = vadd.f32 %v1329, %v1508
      %v1578 = vadd.f32 %v1332, %v1511
      %v1579 = vadd.f32 %v1335, %v1514
      %v1580 = vadd.f32 %v1338, %v1517
      %v1581 = vadd.f32 %v1341, %v1520
      %v1582 = vadd.f32 %v1344, %v1523
      %v1583 = vadd.f32 %v1347, %v1526
      %v1584 = vadd.f32 %v1350, %v1529
      %v1585 = vadd.f32 %v1353, %v1532
      %v1586 = vadd.f32 %v1356, %v1535
      %v1587 = vadd.f32 %v1359, %v1538
      %v1588 = vadd.f32 %v1362, %v1541
      %v1589 = vadd.f32 %v1365, %v1544
      %v1590 = vadd.f32 %v1368, %v1547
      %v1591 = vadd.f32 %v1371, %v1550
      %v1592 = vadd.f32 %v1374, %v1553
      %v1593 = vadd.f32 %v1377, %v1556
      %v1594 = vadd.f32 %v1380, %v1559
      %v1595 = vadd.f32 %v1383, %v1562
      %s1596 = scalar_lea.vmem %s3, 8
      %v1597 = vld [vmem:[%s1596] sm:$0xff]
      %v1598 = vsel %vm353, %v701, 0
      %v1600 = vsel %vm353, %v702, 0
      %v1602 = vsel %vm353, %v705, 0
      %v1604 = vsel %vm353, %v706, 0
      %v1606 = vsel %vm353, %v709, 0
      %v1608 = vsel %vm353, %v710, 0
      %v1610 = vsel %vm353, %v713, 0
      %v1612 = vsel %vm353, %v714, 0
      %v1614 = vsel %vm353, %v717, 0
      %v1616 = vsel %vm353, %v718, 0
      %v1618 = vsel %vm353, %v721, 0
      %v1620 = vsel %vm353, %v722, 0
      %v1622 = vsel %vm353, %v725, 0
      %v1624 = vsel %vm353, %v726, 0
      %v1626 = vsel %vm353, %v729, 0
      %v1628 = vsel %vm353, %v730, 0
      %v1630 = vsel %vm353, %v733, 0
      %v1632 = vsel %vm353, %v734, 0
      %v1634 = vsel %vm353, %v737, 0
      %v1636 = vsel %vm353, %v738, 0
      %v1638 = vsel %vm353, %v741, 0
      %v1640 = vsel %vm353, %v742, 0
      %v1642 = vsel %vm353, %v745, 0
      %v1644 = vsel %vm353, %v746, 0
      %v1646 = vsel %vm353, %v749, 0
      %v1648 = vsel %vm353, %v750, 0
      %v1650 = vsel %vm353, %v753, 0
      %v1652 = vsel %vm353, %v754, 0
      %v1654 = vsel %vm353, %v757, 0
      %v1656 = vsel %vm353, %v758, 0
      %v1658 = vsel %vm353, %v761, 0
      %v1660 = vsel %vm353, %v762, 0
      %1662 = vmatpush.msra.mxu0 0.0
      %1663 = vmatpush.msra.mxu0 0.0
      %1664 = vmatpush.msra.mxu0 0.0
      %1665 = vmatpush.msra.mxu0 0.0
      %1666 = vmatpush.msra.mxu0 0.0
      %1667 = vmatpush.msra.mxu0 0.0
      %1668 = vmatpush.msra.mxu0 0.0
      %1669 = vmatpush.msra.mxu0 0.0
      %1670 = vmatpush.msra.mxu0 0.0
      %1671 = vmatpush.msra.mxu0 0.0
      %1672 = vmatpush.msra.mxu0 0.0
      %1673 = vmatpush.msra.mxu0 0.0
      %1674 = vmatpush.msra.mxu0 0.0
      %1675 = vmatpush.msra.mxu0 0.0
      %1676 = vmatpush.msra.mxu0 0.0
      %1677 = vmatpush.msra.mxu0 %v1597
      %1678 = vmatmul.f32.gmra.mxu0 %v1598
      %v1679 = vpop.f32.mrf.mxu0
      %v1680 = vadd.f32 0.0, %v1679
      %1681 = vmatmul.f32.gmra.mxu0 %v1600
      %v1682 = vpop.f32.mrf.mxu0
      %v1683 = vadd.f32 0.0, %v1682
      %1684 = vmatmul.f32.gmra.mxu0 %v1602
      %v1685 = vpop.f32.mrf.mxu0
      %v1686 = vadd.f32 0.0, %v1685
      %1687 = vmatmul.f32.gmra.mxu0 %v1604
      %v1688 = vpop.f32.mrf.mxu0
      %v1689 = vadd.f32 0.0, %v1688
      %1690 = vmatmul.f32.gmra.mxu0 %v1606
      %v1691 = vpop.f32.mrf.mxu0
      %v1692 = vadd.f32 0.0, %v1691
      %1693 = vmatmul.f32.gmra.mxu0 %v1608
      %v1694 = vpop.f32.mrf.mxu0
      %v1695 = vadd.f32 0.0, %v1694
      %1696 = vmatmul.f32.gmra.mxu0 %v1610
      %v1697 = vpop.f32.mrf.mxu0
      %v1698 = vadd.f32 0.0, %v1697
      %1699 = vmatmul.f32.gmra.mxu0 %v1612
      %v1700 = vpop.f32.mrf.mxu0
      %v1701 = vadd.f32 0.0, %v1700
      %1702 = vmatmul.f32.gmra.mxu0 %v1614
      %v1703 = vpop.f32.mrf.mxu0
      %v1704 = vadd.f32 0.0, %v1703
      %1705 = vmatmul.f32.gmra.mxu0 %v1616
      %v1706 = vpop.f32.mrf.mxu0
      %v1707 = vadd.f32 0.0, %v1706
      %1708 = vmatmul.f32.gmra.mxu0 %v1618
      %v1709 = vpop.f32.mrf.mxu0
      %v1710 = vadd.f32 0.0, %v1709
      %1711 = vmatmul.f32.gmra.mxu0 %v1620
      %v1712 = vpop.f32.mrf.mxu0
      %v1713 = vadd.f32 0.0, %v1712
      %1714 = vmatmul.f32.gmra.mxu0 %v1622
      %v1715 = vpop.f32.mrf.mxu0
      %v1716 = vadd.f32 0.0, %v1715
      %1717 = vmatmul.f32.gmra.mxu0 %v1624
      %v1718 = vpop.f32.mrf.mxu0
      %v1719 = vadd.f32 0.0, %v1718
      %1720 = vmatmul.f32.gmra.mxu0 %v1626
      %v1721 = vpop.f32.mrf.mxu0
      %v1722 = vadd.f32 0.0, %v1721
      %1723 = vmatmul.f32.gmra.mxu0 %v1628
      %v1724 = vpop.f32.mrf.mxu0
      %v1725 = vadd.f32 0.0, %v1724
      %1726 = vmatmul.f32.gmra.mxu0 %v1630
      %v1727 = vpop.f32.mrf.mxu0
      %v1728 = vadd.f32 0.0, %v1727
      %1729 = vmatmul.f32.gmra.mxu0 %v1632
      %v1730 = vpop.f32.mrf.mxu0
      %v1731 = vadd.f32 0.0, %v1730
      %1732 = vmatmul.f32.gmra.mxu0 %v1634
      %v1733 = vpop.f32.mrf.mxu0
      %v1734 = vadd.f32 0.0, %v1733
      %1735 = vmatmul.f32.gmra.mxu0 %v1636
      %v1736 = vpop.f32.mrf.mxu0
      %v1737 = vadd.f32 0.0, %v1736
      %1738 = vmatmul.f32.gmra.mxu0 %v1638
      %v1739 = vpop.f32.mrf.mxu0
      %v1740 = vadd.f32 0.0, %v1739
      %1741 = vmatmul.f32.gmra.mxu0 %v1640
      %v1742 = vpop.f32.mrf.mxu0
      %v1743 = vadd.f32 0.0, %v1742
      %1744 = vmatmul.f32.gmra.mxu0 %v1642
      %v1745 = vpop.f32.mrf.mxu0
      %v1746 = vadd.f32 0.0, %v1745
      %1747 = vmatmul.f32.gmra.mxu0 %v1644
      %v1748 = vpop.f32.mrf.mxu0
      %v1749 = vadd.f32 0.0, %v1748
      %1750 = vmatmul.f32.gmra.mxu0 %v1646
      %v1751 = vpop.f32.mrf.mxu0
      %v1752 = vadd.f32 0.0, %v1751
      %1753 = vmatmul.f32.gmra.mxu0 %v1648
      %v1754 = vpop.f32.mrf.mxu0
      %v1755 = vadd.f32 0.0, %v1754
      %1756 = vmatmul.f32.gmra.mxu0 %v1650
      %v1757 = vpop.f32.mrf.mxu0
      %v1758 = vadd.f32 0.0, %v1757
      %1759 = vmatmul.f32.gmra.mxu0 %v1652
      %v1760 = vpop.f32.mrf.mxu0
      %v1761 = vadd.f32 0.0, %v1760
      %1762 = vmatmul.f32.gmra.mxu0 %v1654
      %v1763 = vpop.f32.mrf.mxu0
      %v1764 = vadd.f32 0.0, %v1763
      %1765 = vmatmul.f32.gmra.mxu0 %v1656
      %v1766 = vpop.f32.mrf.mxu0
      %v1767 = vadd.f32 0.0, %v1766
      %1768 = vmatmul.f32.gmra.mxu0 %v1658
      %v1769 = vpop.f32.mrf.mxu0
      %v1770 = vadd.f32 0.0, %v1769
      %1771 = vmatmul.f32.gmra.mxu0 %v1660
      %v1772 = vpop.f32.mrf.mxu0
      %v1773 = vadd.f32 0.0, %v1772
      %1774 = vdwg.mxu0
      %v1775 = vadd.f32 %v1564, %v1680
      %v1776 = vadd.f32 %v1565, %v1683
      %v1777 = vadd.f32 %v1566, %v1686
      %v1778 = vadd.f32 %v1567, %v1689
      %v1779 = vadd.f32 %v1568, %v1692
      %v1780 = vadd.f32 %v1569, %v1695
      %v1781 = vadd.f32 %v1570, %v1698
      %v1782 = vadd.f32 %v1571, %v1701
      %v1783 = vadd.f32 %v1572, %v1704
      %v1784 = vadd.f32 %v1573, %v1707
      %v1785 = vadd.f32 %v1574, %v1710
      %v1786 = vadd.f32 %v1575, %v1713
      %v1787 = vadd.f32 %v1576, %v1716
      %v1788 = vadd.f32 %v1577, %v1719
      %v1789 = vadd.f32 %v1578, %v1722
      %v1790 = vadd.f32 %v1579, %v1725
      %v1791 = vadd.f32 %v1580, %v1728
      %v1792 = vadd.f32 %v1581, %v1731
      %v1793 = vadd.f32 %v1582, %v1734
      %v1794 = vadd.f32 %v1583, %v1737
      %v1795 = vadd.f32 %v1584, %v1740
      %v1796 = vadd.f32 %v1585, %v1743
      %v1797 = vadd.f32 %v1586, %v1746
      %v1798 = vadd.f32 %v1587, %v1749
      %v1799 = vadd.f32 %v1588, %v1752
      %v1800 = vadd.f32 %v1589, %v1755
      %v1801 = vadd.f32 %v1590, %v1758
      %v1802 = vadd.f32 %v1591, %v1761
      %v1803 = vadd.f32 %v1592, %v1764
      %v1804 = vadd.f32 %v1593, %v1767
      %v1805 = vadd.f32 %v1594, %v1770
      %v1806 = vadd.f32 %v1595, %v1773
      %vm1823 = vcmask 1046528
      %v1824 = vrot.slane %v629, 1
      %v1825 = vrot.slane %v630, 1
      %v1826 = vsel %vm1823, %v1824, %v1825
      %v1827 = vrot.slane %v631, 1
      %v1828 = vsel %vm1823, %v1825, %v1827
      %v1829 = vrot.slane %v633, 1
      %v1830 = vrot.slane %v634, 1
      %v1831 = vsel %vm1823, %v1829, %v1830
      %v1832 = vrot.slane %v635, 1
      %v1833 = vsel %vm1823, %v1830, %v1832
      %v1834 = vrot.slane %v637, 1
      %v1835 = vrot.slane %v638, 1
      %v1836 = vsel %vm1823, %v1834, %v1835
      %v1837 = vrot.slane %v639, 1
      %v1838 = vsel %vm1823, %v1835, %v1837
      %v1839 = vrot.slane %v641, 1
      %v1840 = vrot.slane %v642, 1
      %v1841 = vsel %vm1823, %v1839, %v1840
      %v1842 = vrot.slane %v643, 1
      %v1843 = vsel %vm1823, %v1840, %v1842
      %v1844 = vrot.slane %v645, 1
      %v1845 = vrot.slane %v646, 1
      %v1846 = vsel %vm1823, %v1844, %v1845
      %v1847 = vrot.slane %v647, 1
      %v1848 = vsel %vm1823, %v1845, %v1847
      %v1849 = vrot.slane %v649, 1
      %v1850 = vrot.slane %v650, 1
      %v1851 = vsel %vm1823, %v1849, %v1850
      %v1852 = vrot.slane %v651, 1
      %v1853 = vsel %vm1823, %v1850, %v1852
      %v1854 = vrot.slane %v653, 1
      %v1855 = vrot.slane %v654, 1
      %v1856 = vsel %vm1823, %v1854, %v1855
      %v1857 = vrot.slane %v655, 1
      %v1858 = vsel %vm1823, %v1855, %v1857
      %v1859 = vrot.slane %v657, 1
      %v1860 = vrot.slane %v658, 1
      %v1861 = vsel %vm1823, %v1859, %v1860
      %v1862 = vrot.slane %v659, 1
      %v1863 = vsel %vm1823, %v1860, %v1862
      %v1864 = vrot.slane %v661, 1
      %v1865 = vrot.slane %v662, 1
      %v1866 = vsel %vm1823, %v1864, %v1865
      %v1867 = vrot.slane %v663, 1
      %v1868 = vsel %vm1823, %v1865, %v1867
      %v1869 = vrot.slane %v665, 1
      %v1870 = vrot.slane %v666, 1
      %v1871 = vsel %vm1823, %v1869, %v1870
      %v1872 = vrot.slane %v667, 1
      %v1873 = vsel %vm1823, %v1870, %v1872
      %v1874 = vrot.slane %v669, 1
      %v1875 = vrot.slane %v670, 1
      %v1876 = vsel %vm1823, %v1874, %v1875
      %v1877 = vrot.slane %v671, 1
      %v1878 = vsel %vm1823, %v1875, %v1877
      %v1879 = vrot.slane %v673, 1
      %v1880 = vrot.slane %v674, 1
      %v1881 = vsel %vm1823, %v1879, %v1880
      %v1882 = vrot.slane %v675, 1
      %v1883 = vsel %vm1823, %v1880, %v1882
      %v1884 = vrot.slane %v677, 1
      %v1885 = vrot.slane %v678, 1
      %v1886 = vsel %vm1823, %v1884, %v1885
      %v1887 = vrot.slane %v679, 1
      %v1888 = vsel %vm1823, %v1885, %v1887
      %v1889 = vrot.slane %v681, 1
      %v1890 = vrot.slane %v682, 1
      %v1891 = vsel %vm1823, %v1889, %v1890
      %v1892 = vrot.slane %v683, 1
      %v1893 = vsel %vm1823, %v1890, %v1892
      %v1894 = vrot.slane %v685, 1
      %v1895 = vrot.slane %v686, 1
      %v1896 = vsel %vm1823, %v1894, %v1895
      %v1897 = vrot.slane %v687, 1
      %v1898 = vsel %vm1823, %v1895, %v1897
      %v1899 = vrot.slane %v689, 1
      %v1900 = vrot.slane %v690, 1
      %v1901 = vsel %vm1823, %v1899, %v1900
      %v1902 = vrot.slane %v691, 1
      %v1903 = vsel %vm1823, %v1900, %v1902
      %v1920 = vrot.slane %v701, 1
      %v1921 = vrot.slane %v702, 1
      %v1922 = vsel %vm1823, %v1920, %v1921
      %v1923 = vrot.slane %v703, 1
      %v1924 = vsel %vm1823, %v1921, %v1923
      %v1925 = vrot.slane %v705, 1
      %v1926 = vrot.slane %v706, 1
      %v1927 = vsel %vm1823, %v1925, %v1926
      %v1928 = vrot.slane %v707, 1
      %v1929 = vsel %vm1823, %v1926, %v1928
      %v1930 = vrot.slane %v709, 1
      %v1931 = vrot.slane %v710, 1
      %v1932 = vsel %vm1823, %v1930, %v1931
      %v1933 = vrot.slane %v711, 1
      %v1934 = vsel %vm1823, %v1931, %v1933
      %v1935 = vrot.slane %v713, 1
      %v1936 = vrot.slane %v714, 1
      %v1937 = vsel %vm1823, %v1935, %v1936
      %v1938 = vrot.slane %v715, 1
      %v1939 = vsel %vm1823, %v1936, %v1938
      %v1940 = vrot.slane %v717, 1
      %v1941 = vrot.slane %v718, 1
      %v1942 = vsel %vm1823, %v1940, %v1941
      %v1943 = vrot.slane %v719, 1
      %v1944 = vsel %vm1823, %v1941, %v1943
      %v1945 = vrot.slane %v721, 1
      %v1946 = vrot.slane %v722, 1
      %v1947 = vsel %vm1823, %v1945, %v1946
      %v1948 = vrot.slane %v723, 1
      %v1949 = vsel %vm1823, %v1946, %v1948
      %v1950 = vrot.slane %v725, 1
      %v1951 = vrot.slane %v726, 1
      %v1952 = vsel %vm1823, %v1950, %v1951
      %v1953 = vrot.slane %v727, 1
      %v1954 = vsel %vm1823, %v1951, %v1953
      %v1955 = vrot.slane %v729, 1
      %v1956 = vrot.slane %v730, 1
      %v1957 = vsel %vm1823, %v1955, %v1956
      %v1958 = vrot.slane %v731, 1
      %v1959 = vsel %vm1823, %v1956, %v1958
      %v1960 = vrot.slane %v733, 1
      %v1961 = vrot.slane %v734, 1
      %v1962 = vsel %vm1823, %v1960, %v1961
      %v1963 = vrot.slane %v735, 1
      %v1964 = vsel %vm1823, %v1961, %v1963
      %v1965 = vrot.slane %v737, 1
      %v1966 = vrot.slane %v738, 1
      %v1967 = vsel %vm1823, %v1965, %v1966
      %v1968 = vrot.slane %v739, 1
      %v1969 = vsel %vm1823, %v1966, %v1968
      %v1970 = vrot.slane %v741, 1
      %v1971 = vrot.slane %v742, 1
      %v1972 = vsel %vm1823, %v1970, %v1971
      %v1973 = vrot.slane %v743, 1
      %v1974 = vsel %vm1823, %v1971, %v1973
      %v1975 = vrot.slane %v745, 1
      %v1976 = vrot.slane %v746, 1
      %v1977 = vsel %vm1823, %v1975, %v1976
      %v1978 = vrot.slane %v747, 1
      %v1979 = vsel %vm1823, %v1976, %v1978
      %v1980 = vrot.slane %v749, 1
      %v1981 = vrot.slane %v750, 1
      %v1982 = vsel %vm1823, %v1980, %v1981
      %v1983 = vrot.slane %v751, 1
      %v1984 = vsel %vm1823, %v1981, %v1983
      %v1985 = vrot.slane %v753, 1
      %v1986 = vrot.slane %v754, 1
      %v1987 = vsel %vm1823, %v1985, %v1986
      %v1988 = vrot.slane %v755, 1
      %v1989 = vsel %vm1823, %v1986, %v1988
      %v1990 = vrot.slane %v757, 1
      %v1991 = vrot.slane %v758, 1
      %v1992 = vsel %vm1823, %v1990, %v1991
      %v1993 = vrot.slane %v759, 1
      %v1994 = vsel %vm1823, %v1991, %v1993
      %v1995 = vrot.slane %v761, 1
      %v1996 = vrot.slane %v762, 1
      %v1997 = vsel %vm1823, %v1995, %v1996
      %v1998 = vrot.slane %v763, 1
      %v1999 = vsel %vm1823, %v1996, %v1998
      %s2000 = scalar_lea.vmem %s2, 16
      %v2001 = vld [vmem:[%s2000] sm:$0xff]
      %v2002 = vsel %vm353, %v1826, 0
      %v2004 = vsel %vm353, %v1828, 0
      %v2006 = vsel %vm353, %v1831, 0
      %v2008 = vsel %vm353, %v1833, 0
      %v2010 = vsel %vm353, %v1836, 0
      %v2012 = vsel %vm353, %v1838, 0
      %v2014 = vsel %vm353, %v1841, 0
      %v2016 = vsel %vm353, %v1843, 0
      %v2018 = vsel %vm353, %v1846, 0
      %v2020 = vsel %vm353, %v1848, 0
      %v2022 = vsel %vm353, %v1851, 0
      %v2024 = vsel %vm353, %v1853, 0
      %v2026 = vsel %vm353, %v1856, 0
      %v2028 = vsel %vm353, %v1858, 0
      %v2030 = vsel %vm353, %v1861, 0
      %v2032 = vsel %vm353, %v1863, 0
      %v2034 = vsel %vm353, %v1866, 0
      %v2036 = vsel %vm353, %v1868, 0
      %v2038 = vsel %vm353, %v1871, 0
      %v2040 = vsel %vm353, %v1873, 0
      %v2042 = vsel %vm353, %v1876, 0
      %v2044 = vsel %vm353, %v1878, 0
      %v2046 = vsel %vm353, %v1881, 0
      %v2048 = vsel %vm353, %v1883, 0
      %v2050 = vsel %vm353, %v1886, 0
      %v2052 = vsel %vm353, %v1888, 0
      %v2054 = vsel %vm353, %v1891, 0
      %v2056 = vsel %vm353, %v1893, 0
      %v2058 = vsel %vm353, %v1896, 0
      %v2060 = vsel %vm353, %v1898, 0
      %v2062 = vsel %vm353, %v1901, 0
      %v2064 = vsel %vm353, %v1903, 0
      %2066 = vmatpush.msra.mxu0 0.0
      %2067 = vmatpush.msra.mxu0 0.0
      %2068 = vmatpush.msra.mxu0 0.0
      %2069 = vmatpush.msra.mxu0 0.0
      %2070 = vmatpush.msra.mxu0 0.0
      %2071 = vmatpush.msra.mxu0 0.0
      %2072 = vmatpush.msra.mxu0 0.0
      %2073 = vmatpush.msra.mxu0 0.0
      %2074 = vmatpush.msra.mxu0 0.0
      %2075 = vmatpush.msra.mxu0 0.0
      %2076 = vmatpush.msra.mxu0 0.0
      %2077 = vmatpush.msra.mxu0 0.0
      %2078 = vmatpush.msra.mxu0 0.0
      %2079 = vmatpush.msra.mxu0 0.0
      %2080 = vmatpush.msra.mxu0 0.0
      %2081 = vmatpush.msra.mxu0 %v2001
      %2082 = vmatmul.f32.gmra.mxu0 %v2002
      %v2083 = vpop.f32.mrf.mxu0
      %v2084 = vadd.f32 0.0, %v2083
      %2085 = vmatmul.f32.gmra.mxu0 %v2004
      %v2086 = vpop.f32.mrf.mxu0
      %v2087 = vadd.f32 0.0, %v2086
      %2088 = vmatmul.f32.gmra.mxu0 %v2006
      %v2089 = vpop.f32.mrf.mxu0
      %v2090 = vadd.f32 0.0, %v2089
      %2091 = vmatmul.f32.gmra.mxu0 %v2008
      %v2092 = vpop.f32.mrf.mxu0
      %v2093 = vadd.f32 0.0, %v2092
      %2094 = vmatmul.f32.gmra.mxu0 %v2010
      %v2095 = vpop.f32.mrf.mxu0
      %v2096 = vadd.f32 0.0, %v2095
      %2097 = vmatmul.f32.gmra.mxu0 %v2012
      %v2098 = vpop.f32.mrf.mxu0
      %v2099 = vadd.f32 0.0, %v2098
      %2100 = vmatmul.f32.gmra.mxu0 %v2014
      %v2101 = vpop.f32.mrf.mxu0
      %v2102 = vadd.f32 0.0, %v2101
      %2103 = vmatmul.f32.gmra.mxu0 %v2016
      %v2104 = vpop.f32.mrf.mxu0
      %v2105 = vadd.f32 0.0, %v2104
      %2106 = vmatmul.f32.gmra.mxu0 %v2018
      %v2107 = vpop.f32.mrf.mxu0
      %v2108 = vadd.f32 0.0, %v2107
      %2109 = vmatmul.f32.gmra.mxu0 %v2020
      %v2110 = vpop.f32.mrf.mxu0
      %v2111 = vadd.f32 0.0, %v2110
      %2112 = vmatmul.f32.gmra.mxu0 %v2022
      %v2113 = vpop.f32.mrf.mxu0
      %v2114 = vadd.f32 0.0, %v2113
      %2115 = vmatmul.f32.gmra.mxu0 %v2024
      %v2116 = vpop.f32.mrf.mxu0
      %v2117 = vadd.f32 0.0, %v2116
      %2118 = vmatmul.f32.gmra.mxu0 %v2026
      %v2119 = vpop.f32.mrf.mxu0
      %v2120 = vadd.f32 0.0, %v2119
      %2121 = vmatmul.f32.gmra.mxu0 %v2028
      %v2122 = vpop.f32.mrf.mxu0
      %v2123 = vadd.f32 0.0, %v2122
      %2124 = vmatmul.f32.gmra.mxu0 %v2030
      %v2125 = vpop.f32.mrf.mxu0
      %v2126 = vadd.f32 0.0, %v2125
      %2127 = vmatmul.f32.gmra.mxu0 %v2032
      %v2128 = vpop.f32.mrf.mxu0
      %v2129 = vadd.f32 0.0, %v2128
      %2130 = vmatmul.f32.gmra.mxu0 %v2034
      %v2131 = vpop.f32.mrf.mxu0
      %v2132 = vadd.f32 0.0, %v2131
      %2133 = vmatmul.f32.gmra.mxu0 %v2036
      %v2134 = vpop.f32.mrf.mxu0
      %v2135 = vadd.f32 0.0, %v2134
      %2136 = vmatmul.f32.gmra.mxu0 %v2038
      %v2137 = vpop.f32.mrf.mxu0
      %v2138 = vadd.f32 0.0, %v2137
      %2139 = vmatmul.f32.gmra.mxu0 %v2040
      %v2140 = vpop.f32.mrf.mxu0
      %v2141 = vadd.f32 0.0, %v2140
      %2142 = vmatmul.f32.gmra.mxu0 %v2042
      %v2143 = vpop.f32.mrf.mxu0
      %v2144 = vadd.f32 0.0, %v2143
      %2145 = vmatmul.f32.gmra.mxu0 %v2044
      %v2146 = vpop.f32.mrf.mxu0
      %v2147 = vadd.f32 0.0, %v2146
      %2148 = vmatmul.f32.gmra.mxu0 %v2046
      %v2149 = vpop.f32.mrf.mxu0
      %v2150 = vadd.f32 0.0, %v2149
      %2151 = vmatmul.f32.gmra.mxu0 %v2048
      %v2152 = vpop.f32.mrf.mxu0
      %v2153 = vadd.f32 0.0, %v2152
      %2154 = vmatmul.f32.gmra.mxu0 %v2050
      %v2155 = vpop.f32.mrf.mxu0
      %v2156 = vadd.f32 0.0, %v2155
      %2157 = vmatmul.f32.gmra.mxu0 %v2052
      %v2158 = vpop.f32.mrf.mxu0
      %v2159 = vadd.f32 0.0, %v2158
      %2160 = vmatmul.f32.gmra.mxu0 %v2054
      %v2161 = vpop.f32.mrf.mxu0
      %v2162 = vadd.f32 0.0, %v2161
      %2163 = vmatmul.f32.gmra.mxu0 %v2056
      %v2164 = vpop.f32.mrf.mxu0
      %v2165 = vadd.f32 0.0, %v2164
      %2166 = vmatmul.f32.gmra.mxu0 %v2058
      %v2167 = vpop.f32.mrf.mxu0
      %v2168 = vadd.f32 0.0, %v2167
      %2169 = vmatmul.f32.gmra.mxu0 %v2060
      %v2170 = vpop.f32.mrf.mxu0
      %v2171 = vadd.f32 0.0, %v2170
      %2172 = vmatmul.f32.gmra.mxu0 %v2062
      %v2173 = vpop.f32.mrf.mxu0
      %v2174 = vadd.f32 0.0, %v2173
      %2175 = vmatmul.f32.gmra.mxu0 %v2064
      %v2176 = vpop.f32.mrf.mxu0
      %v2177 = vadd.f32 0.0, %v2176
      %2178 = vdwg.mxu0
      %v2179 = vadd.f32 %v1775, %v2084
      %v2180 = vadd.f32 %v1776, %v2087
      %v2181 = vadd.f32 %v1777, %v2090
      %v2182 = vadd.f32 %v1778, %v2093
      %v2183 = vadd.f32 %v1779, %v2096
      %v2184 = vadd.f32 %v1780, %v2099
      %v2185 = vadd.f32 %v1781, %v2102
      %v2186 = vadd.f32 %v1782, %v2105
      %v2187 = vadd.f32 %v1783, %v2108
      %v2188 = vadd.f32 %v1784, %v2111
      %v2189 = vadd.f32 %v1785, %v2114
      %v2190 = vadd.f32 %v1786, %v2117
      %v2191 = vadd.f32 %v1787, %v2120
      %v2192 = vadd.f32 %v1788, %v2123
      %v2193 = vadd.f32 %v1789, %v2126
      %v2194 = vadd.f32 %v1790, %v2129
      %v2195 = vadd.f32 %v1791, %v2132
      %v2196 = vadd.f32 %v1792, %v2135
      %v2197 = vadd.f32 %v1793, %v2138
      %v2198 = vadd.f32 %v1794, %v2141
      %v2199 = vadd.f32 %v1795, %v2144
      %v2200 = vadd.f32 %v1796, %v2147
      %v2201 = vadd.f32 %v1797, %v2150
      %v2202 = vadd.f32 %v1798, %v2153
      %v2203 = vadd.f32 %v1799, %v2156
      %v2204 = vadd.f32 %v1800, %v2159
      %v2205 = vadd.f32 %v1801, %v2162
      %v2206 = vadd.f32 %v1802, %v2165
      %v2207 = vadd.f32 %v1803, %v2168
      %v2208 = vadd.f32 %v1804, %v2171
      %v2209 = vadd.f32 %v1805, %v2174
      %v2210 = vadd.f32 %v1806, %v2177
      %s2211 = scalar_lea.vmem %s3, 16
      %v2212 = vld [vmem:[%s2211] sm:$0xff]
      %v2213 = vsel %vm353, %v1922, 0
      %v2215 = vsel %vm353, %v1924, 0
      %v2217 = vsel %vm353, %v1927, 0
      %v2219 = vsel %vm353, %v1929, 0
      %v2221 = vsel %vm353, %v1932, 0
      %v2223 = vsel %vm353, %v1934, 0
      %v2225 = vsel %vm353, %v1937, 0
      %v2227 = vsel %vm353, %v1939, 0
      %v2229 = vsel %vm353, %v1942, 0
      %v2231 = vsel %vm353, %v1944, 0
      %v2233 = vsel %vm353, %v1947, 0
      %v2235 = vsel %vm353, %v1949, 0
      %v2237 = vsel %vm353, %v1952, 0
      %v2239 = vsel %vm353, %v1954, 0
      %v2241 = vsel %vm353, %v1957, 0
      %v2243 = vsel %vm353, %v1959, 0
      %v2245 = vsel %vm353, %v1962, 0
      %v2247 = vsel %vm353, %v1964, 0
      %v2249 = vsel %vm353, %v1967, 0
      %v2251 = vsel %vm353, %v1969, 0
      %v2253 = vsel %vm353, %v1972, 0
      %v2255 = vsel %vm353, %v1974, 0
      %v2257 = vsel %vm353, %v1977, 0
      %v2259 = vsel %vm353, %v1979, 0
      %v2261 = vsel %vm353, %v1982, 0
      %v2263 = vsel %vm353, %v1984, 0
      %v2265 = vsel %vm353, %v1987, 0
      %v2267 = vsel %vm353, %v1989, 0
      %v2269 = vsel %vm353, %v1992, 0
      %v2271 = vsel %vm353, %v1994, 0
      %v2273 = vsel %vm353, %v1997, 0
      %v2275 = vsel %vm353, %v1999, 0
      %2277 = vmatpush.msra.mxu0 0.0
      %2278 = vmatpush.msra.mxu0 0.0
      %2279 = vmatpush.msra.mxu0 0.0
      %2280 = vmatpush.msra.mxu0 0.0
      %2281 = vmatpush.msra.mxu0 0.0
      %2282 = vmatpush.msra.mxu0 0.0
      %2283 = vmatpush.msra.mxu0 0.0
      %2284 = vmatpush.msra.mxu0 0.0
      %2285 = vmatpush.msra.mxu0 0.0
      %2286 = vmatpush.msra.mxu0 0.0
      %2287 = vmatpush.msra.mxu0 0.0
      %2288 = vmatpush.msra.mxu0 0.0
      %2289 = vmatpush.msra.mxu0 0.0
      %2290 = vmatpush.msra.mxu0 0.0
      %2291 = vmatpush.msra.mxu0 0.0
      %2292 = vmatpush.msra.mxu0 %v2212
      %2293 = vmatmul.f32.gmra.mxu0 %v2213
      %v2294 = vpop.f32.mrf.mxu0
      %v2295 = vadd.f32 0.0, %v2294
      %2296 = vmatmul.f32.gmra.mxu0 %v2215
      %v2297 = vpop.f32.mrf.mxu0
      %v2298 = vadd.f32 0.0, %v2297
      %2299 = vmatmul.f32.gmra.mxu0 %v2217
      %v2300 = vpop.f32.mrf.mxu0
      %v2301 = vadd.f32 0.0, %v2300
      %2302 = vmatmul.f32.gmra.mxu0 %v2219
      %v2303 = vpop.f32.mrf.mxu0
      %v2304 = vadd.f32 0.0, %v2303
      %2305 = vmatmul.f32.gmra.mxu0 %v2221
      %v2306 = vpop.f32.mrf.mxu0
      %v2307 = vadd.f32 0.0, %v2306
      %2308 = vmatmul.f32.gmra.mxu0 %v2223
      %v2309 = vpop.f32.mrf.mxu0
      %v2310 = vadd.f32 0.0, %v2309
      %2311 = vmatmul.f32.gmra.mxu0 %v2225
      %v2312 = vpop.f32.mrf.mxu0
      %v2313 = vadd.f32 0.0, %v2312
      %2314 = vmatmul.f32.gmra.mxu0 %v2227
      %v2315 = vpop.f32.mrf.mxu0
      %v2316 = vadd.f32 0.0, %v2315
      %2317 = vmatmul.f32.gmra.mxu0 %v2229
      %v2318 = vpop.f32.mrf.mxu0
      %v2319 = vadd.f32 0.0, %v2318
      %2320 = vmatmul.f32.gmra.mxu0 %v2231
      %v2321 = vpop.f32.mrf.mxu0
      %v2322 = vadd.f32 0.0, %v2321
      %2323 = vmatmul.f32.gmra.mxu0 %v2233
      %v2324 = vpop.f32.mrf.mxu0
      %v2325 = vadd.f32 0.0, %v2324
      %2326 = vmatmul.f32.gmra.mxu0 %v2235
      %v2327 = vpop.f32.mrf.mxu0
      %v2328 = vadd.f32 0.0, %v2327
      %2329 = vmatmul.f32.gmra.mxu0 %v2237
      %v2330 = vpop.f32.mrf.mxu0
      %v2331 = vadd.f32 0.0, %v2330
      %2332 = vmatmul.f32.gmra.mxu0 %v2239
      %v2333 = vpop.f32.mrf.mxu0
      %v2334 = vadd.f32 0.0, %v2333
      %2335 = vmatmul.f32.gmra.mxu0 %v2241
      %v2336 = vpop.f32.mrf.mxu0
      %v2337 = vadd.f32 0.0, %v2336
      %2338 = vmatmul.f32.gmra.mxu0 %v2243
      %v2339 = vpop.f32.mrf.mxu0
      %v2340 = vadd.f32 0.0, %v2339
      %2341 = vmatmul.f32.gmra.mxu0 %v2245
      %v2342 = vpop.f32.mrf.mxu0
      %v2343 = vadd.f32 0.0, %v2342
      %2344 = vmatmul.f32.gmra.mxu0 %v2247
      %v2345 = vpop.f32.mrf.mxu0
      %v2346 = vadd.f32 0.0, %v2345
      %2347 = vmatmul.f32.gmra.mxu0 %v2249
      %v2348 = vpop.f32.mrf.mxu0
      %v2349 = vadd.f32 0.0, %v2348
      %2350 = vmatmul.f32.gmra.mxu0 %v2251
      %v2351 = vpop.f32.mrf.mxu0
      %v2352 = vadd.f32 0.0, %v2351
      %2353 = vmatmul.f32.gmra.mxu0 %v2253
      %v2354 = vpop.f32.mrf.mxu0
      %v2355 = vadd.f32 0.0, %v2354
      %2356 = vmatmul.f32.gmra.mxu0 %v2255
      %v2357 = vpop.f32.mrf.mxu0
      %v2358 = vadd.f32 0.0, %v2357
      %2359 = vmatmul.f32.gmra.mxu0 %v2257
      %v2360 = vpop.f32.mrf.mxu0
      %v2361 = vadd.f32 0.0, %v2360
      %2362 = vmatmul.f32.gmra.mxu0 %v2259
      %v2363 = vpop.f32.mrf.mxu0
      %v2364 = vadd.f32 0.0, %v2363
      %2365 = vmatmul.f32.gmra.mxu0 %v2261
      %v2366 = vpop.f32.mrf.mxu0
      %v2367 = vadd.f32 0.0, %v2366
      %2368 = vmatmul.f32.gmra.mxu0 %v2263
      %v2369 = vpop.f32.mrf.mxu0
      %v2370 = vadd.f32 0.0, %v2369
      %2371 = vmatmul.f32.gmra.mxu0 %v2265
      %v2372 = vpop.f32.mrf.mxu0
      %v2373 = vadd.f32 0.0, %v2372
      %2374 = vmatmul.f32.gmra.mxu0 %v2267
      %v2375 = vpop.f32.mrf.mxu0
      %v2376 = vadd.f32 0.0, %v2375
      %2377 = vmatmul.f32.gmra.mxu0 %v2269
      %v2378 = vpop.f32.mrf.mxu0
      %v2379 = vadd.f32 0.0, %v2378
      %2380 = vmatmul.f32.gmra.mxu0 %v2271
      %v2381 = vpop.f32.mrf.mxu0
      %v2382 = vadd.f32 0.0, %v2381
      %2383 = vmatmul.f32.gmra.mxu0 %v2273
      %v2384 = vpop.f32.mrf.mxu0
      %v2385 = vadd.f32 0.0, %v2384
      %2386 = vmatmul.f32.gmra.mxu0 %v2275
      %v2387 = vpop.f32.mrf.mxu0
      %v2388 = vadd.f32 0.0, %v2387
      %2389 = vdwg.mxu0
      %v2390 = vadd.f32 %v2179, %v2295
      %v2391 = vadd.f32 %v2180, %v2298
      %v2392 = vadd.f32 %v2181, %v2301
      %v2393 = vadd.f32 %v2182, %v2304
      %v2394 = vadd.f32 %v2183, %v2307
      %v2395 = vadd.f32 %v2184, %v2310
      %v2396 = vadd.f32 %v2185, %v2313
      %v2397 = vadd.f32 %v2186, %v2316
      %v2398 = vadd.f32 %v2187, %v2319
      %v2399 = vadd.f32 %v2188, %v2322
      %v2400 = vadd.f32 %v2189, %v2325
      %v2401 = vadd.f32 %v2190, %v2328
      %v2402 = vadd.f32 %v2191, %v2331
      %v2403 = vadd.f32 %v2192, %v2334
      %v2404 = vadd.f32 %v2193, %v2337
      %v2405 = vadd.f32 %v2194, %v2340
      %v2406 = vadd.f32 %v2195, %v2343
      %v2407 = vadd.f32 %v2196, %v2346
      %v2408 = vadd.f32 %v2197, %v2349
      %v2409 = vadd.f32 %v2198, %v2352
      %v2410 = vadd.f32 %v2199, %v2355
      %v2411 = vadd.f32 %v2200, %v2358
      %v2412 = vadd.f32 %v2201, %v2361
      %v2413 = vadd.f32 %v2202, %v2364
      %v2414 = vadd.f32 %v2203, %v2367
      %v2415 = vadd.f32 %v2204, %v2370
      %v2416 = vadd.f32 %v2205, %v2373
      %v2417 = vadd.f32 %v2206, %v2376
      %v2418 = vadd.f32 %v2207, %v2379
      %v2419 = vadd.f32 %v2208, %v2382
      %v2420 = vadd.f32 %v2209, %v2385
      %v2421 = vadd.f32 %v2210, %v2388
      %v2425 = vrot.slane %v692, 7
      %v2426 = vrot.slane %v693, 7
      %v2427 = vsel %vm820, %v2425, %v2426
      %v2428 = vrot.slane %v694, 7
      %v2429 = vsel %vm820, %v2426, %v2428
      %v2433 = vrot.slane %v764, 7
      %v2434 = vrot.slane %v765, 7
      %v2435 = vsel %vm820, %v2433, %v2434
      %v2436 = vrot.slane %v766, 7
      %v2437 = vsel %vm820, %v2434, %v2436
      %s2438 = scalar_lea.vmem %s2, 24
      %v2439 = vld [vmem:[%s2438] sm:$0xff]
      %v2440 = vsel %vm353, %v2427, 0
      %v2442 = vsel %vm353, %v2429, 0
      %2444 = vmatpush.msra.mxu0 0.0
      %2445 = vmatpush.msra.mxu0 0.0
      %2446 = vmatpush.msra.mxu0 0.0
      %2447 = vmatpush.msra.mxu0 0.0
      %2448 = vmatpush.msra.mxu0 0.0
      %2449 = vmatpush.msra.mxu0 0.0
      %2450 = vmatpush.msra.mxu0 0.0
      %2451 = vmatpush.msra.mxu0 0.0
      %2452 = vmatpush.msra.mxu0 0.0
      %2453 = vmatpush.msra.mxu0 0.0
      %2454 = vmatpush.msra.mxu0 0.0
      %2455 = vmatpush.msra.mxu0 0.0
      %2456 = vmatpush.msra.mxu0 0.0
      %2457 = vmatpush.msra.mxu0 0.0
      %2458 = vmatpush.msra.mxu0 0.0
      %2459 = vmatpush.msra.mxu0 %v2439
      %2460 = vmatmul.f32.gmra.mxu0 %v1212
      %v2461 = vpop.f32.mrf.mxu0
      %v2462 = vadd.f32 0.0, %v2461
      %2463 = vmatmul.f32.gmra.mxu0 %v1214
      %v2464 = vpop.f32.mrf.mxu0
      %v2465 = vadd.f32 0.0, %v2464
      %2466 = vmatmul.f32.gmra.mxu0 %v1216
      %v2467 = vpop.f32.mrf.mxu0
      %v2468 = vadd.f32 0.0, %v2467
      %2469 = vmatmul.f32.gmra.mxu0 %v1218
      %v2470 = vpop.f32.mrf.mxu0
      %v2471 = vadd.f32 0.0, %v2470
      %2472 = vmatmul.f32.gmra.mxu0 %v1220
      %v2473 = vpop.f32.mrf.mxu0
      %v2474 = vadd.f32 0.0, %v2473
      %2475 = vmatmul.f32.gmra.mxu0 %v1222
      %v2476 = vpop.f32.mrf.mxu0
      %v2477 = vadd.f32 0.0, %v2476
      %2478 = vmatmul.f32.gmra.mxu0 %v1224
      %v2479 = vpop.f32.mrf.mxu0
      %v2480 = vadd.f32 0.0, %v2479
      %2481 = vmatmul.f32.gmra.mxu0 %v1226
      %v2482 = vpop.f32.mrf.mxu0
      %v2483 = vadd.f32 0.0, %v2482
      %2484 = vmatmul.f32.gmra.mxu0 %v1228
      %v2485 = vpop.f32.mrf.mxu0
      %v2486 = vadd.f32 0.0, %v2485
      %2487 = vmatmul.f32.gmra.mxu0 %v1230
      %v2488 = vpop.f32.mrf.mxu0
      %v2489 = vadd.f32 0.0, %v2488
      %2490 = vmatmul.f32.gmra.mxu0 %v1232
      %v2491 = vpop.f32.mrf.mxu0
      %v2492 = vadd.f32 0.0, %v2491
      %2493 = vmatmul.f32.gmra.mxu0 %v1234
      %v2494 = vpop.f32.mrf.mxu0
      %v2495 = vadd.f32 0.0, %v2494
      %2496 = vmatmul.f32.gmra.mxu0 %v1236
      %v2497 = vpop.f32.mrf.mxu0
      %v2498 = vadd.f32 0.0, %v2497
      %2499 = vmatmul.f32.gmra.mxu0 %v1238
      %v2500 = vpop.f32.mrf.mxu0
      %v2501 = vadd.f32 0.0, %v2500
      %2502 = vmatmul.f32.gmra.mxu0 %v1240
      %v2503 = vpop.f32.mrf.mxu0
      %v2504 = vadd.f32 0.0, %v2503
      %2505 = vmatmul.f32.gmra.mxu0 %v1242
      %v2506 = vpop.f32.mrf.mxu0
      %v2507 = vadd.f32 0.0, %v2506
      %2508 = vmatmul.f32.gmra.mxu0 %v1244
      %v2509 = vpop.f32.mrf.mxu0
      %v2510 = vadd.f32 0.0, %v2509
      %2511 = vmatmul.f32.gmra.mxu0 %v1246
      %v2512 = vpop.f32.mrf.mxu0
      %v2513 = vadd.f32 0.0, %v2512
      %2514 = vmatmul.f32.gmra.mxu0 %v1248
      %v2515 = vpop.f32.mrf.mxu0
      %v2516 = vadd.f32 0.0, %v2515
      %2517 = vmatmul.f32.gmra.mxu0 %v1250
      %v2518 = vpop.f32.mrf.mxu0
      %v2519 = vadd.f32 0.0, %v2518
      %2520 = vmatmul.f32.gmra.mxu0 %v1252
      %v2521 = vpop.f32.mrf.mxu0
      %v2522 = vadd.f32 0.0, %v2521
      %2523 = vmatmul.f32.gmra.mxu0 %v1254
      %v2524 = vpop.f32.mrf.mxu0
      %v2525 = vadd.f32 0.0, %v2524
      %2526 = vmatmul.f32.gmra.mxu0 %v1256
      %v2527 = vpop.f32.mrf.mxu0
      %v2528 = vadd.f32 0.0, %v2527
      %2529 = vmatmul.f32.gmra.mxu0 %v1258
      %v2530 = vpop.f32.mrf.mxu0
      %v2531 = vadd.f32 0.0, %v2530
      %2532 = vmatmul.f32.gmra.mxu0 %v1260
      %v2533 = vpop.f32.mrf.mxu0
      %v2534 = vadd.f32 0.0, %v2533
      %2535 = vmatmul.f32.gmra.mxu0 %v1262
      %v2536 = vpop.f32.mrf.mxu0
      %v2537 = vadd.f32 0.0, %v2536
      %2538 = vmatmul.f32.gmra.mxu0 %v1264
      %v2539 = vpop.f32.mrf.mxu0
      %v2540 = vadd.f32 0.0, %v2539
      %2541 = vmatmul.f32.gmra.mxu0 %v1266
      %v2542 = vpop.f32.mrf.mxu0
      %v2543 = vadd.f32 0.0, %v2542
      %2544 = vmatmul.f32.gmra.mxu0 %v1268
      %v2545 = vpop.f32.mrf.mxu0
      %v2546 = vadd.f32 0.0, %v2545
      %2547 = vmatmul.f32.gmra.mxu0 %v1270
      %v2548 = vpop.f32.mrf.mxu0
      %v2549 = vadd.f32 0.0, %v2548
      %2550 = vmatmul.f32.gmra.mxu0 %v2440
      %v2551 = vpop.f32.mrf.mxu0
      %v2552 = vadd.f32 0.0, %v2551
      %2553 = vmatmul.f32.gmra.mxu0 %v2442
      %v2554 = vpop.f32.mrf.mxu0
      %v2555 = vadd.f32 0.0, %v2554
      %2556 = vdwg.mxu0
      %v2557 = vadd.f32 %v2390, %v2462
      %v2558 = vadd.f32 %v2391, %v2465
      %v2559 = vadd.f32 %v2392, %v2468
      %v2560 = vadd.f32 %v2393, %v2471
      %v2561 = vadd.f32 %v2394, %v2474
      %v2562 = vadd.f32 %v2395, %v2477
      %v2563 = vadd.f32 %v2396, %v2480
      %v2564 = vadd.f32 %v2397, %v2483
      %v2565 = vadd.f32 %v2398, %v2486
      %v2566 = vadd.f32 %v2399, %v2489
      %v2567 = vadd.f32 %v2400, %v2492
      %v2568 = vadd.f32 %v2401, %v2495
      %v2569 = vadd.f32 %v2402, %v2498
      %v2570 = vadd.f32 %v2403, %v2501
      %v2571 = vadd.f32 %v2404, %v2504
      %v2572 = vadd.f32 %v2405, %v2507
      %v2573 = vadd.f32 %v2406, %v2510
      %v2574 = vadd.f32 %v2407, %v2513
      %v2575 = vadd.f32 %v2408, %v2516
      %v2576 = vadd.f32 %v2409, %v2519
      %v2577 = vadd.f32 %v2410, %v2522
      %v2578 = vadd.f32 %v2411, %v2525
      %v2579 = vadd.f32 %v2412, %v2528
      %v2580 = vadd.f32 %v2413, %v2531
      %v2581 = vadd.f32 %v2414, %v2534
      %v2582 = vadd.f32 %v2415, %v2537
      %v2583 = vadd.f32 %v2416, %v2540
      %v2584 = vadd.f32 %v2417, %v2543
      %v2585 = vadd.f32 %v2418, %v2546
      %v2586 = vadd.f32 %v2419, %v2549
      %v2587 = vadd.f32 %v2420, %v2552
      %v2588 = vadd.f32 %v2421, %v2555
      %s2589 = scalar_lea.vmem %s3, 24
      %v2590 = vld [vmem:[%s2589] sm:$0xff]
      %v2591 = vsel %vm353, %v2435, 0
      %v2593 = vsel %vm353, %v2437, 0
      %2595 = vmatpush.msra.mxu0 0.0
      %2596 = vmatpush.msra.mxu0 0.0
      %2597 = vmatpush.msra.mxu0 0.0
      %2598 = vmatpush.msra.mxu0 0.0
      %2599 = vmatpush.msra.mxu0 0.0
      %2600 = vmatpush.msra.mxu0 0.0
      %2601 = vmatpush.msra.mxu0 0.0
      %2602 = vmatpush.msra.mxu0 0.0
      %2603 = vmatpush.msra.mxu0 0.0
      %2604 = vmatpush.msra.mxu0 0.0
      %2605 = vmatpush.msra.mxu0 0.0
      %2606 = vmatpush.msra.mxu0 0.0
      %2607 = vmatpush.msra.mxu0 0.0
      %2608 = vmatpush.msra.mxu0 0.0
      %2609 = vmatpush.msra.mxu0 0.0
      %2610 = vmatpush.msra.mxu0 %v2590
      %2611 = vmatmul.f32.gmra.mxu0 %v1035
      %v2612 = vpop.f32.mrf.mxu0
      %v2613 = vadd.f32 0.0, %v2612
      %2614 = vmatmul.f32.gmra.mxu0 %v1037
      %v2615 = vpop.f32.mrf.mxu0
      %v2616 = vadd.f32 0.0, %v2615
      %2617 = vmatmul.f32.gmra.mxu0 %v1039
      %v2618 = vpop.f32.mrf.mxu0
      %v2619 = vadd.f32 0.0, %v2618
      %2620 = vmatmul.f32.gmra.mxu0 %v1041
      %v2621 = vpop.f32.mrf.mxu0
      %v2622 = vadd.f32 0.0, %v2621
      %2623 = vmatmul.f32.gmra.mxu0 %v1043
      %v2624 = vpop.f32.mrf.mxu0
      %v2625 = vadd.f32 0.0, %v2624
      %2626 = vmatmul.f32.gmra.mxu0 %v1045
      %v2627 = vpop.f32.mrf.mxu0
      %v2628 = vadd.f32 0.0, %v2627
      %2629 = vmatmul.f32.gmra.mxu0 %v1047
      %v2630 = vpop.f32.mrf.mxu0
      %v2631 = vadd.f32 0.0, %v2630
      %2632 = vmatmul.f32.gmra.mxu0 %v1049
      %v2633 = vpop.f32.mrf.mxu0
      %v2634 = vadd.f32 0.0, %v2633
      %2635 = vmatmul.f32.gmra.mxu0 %v1051
      %v2636 = vpop.f32.mrf.mxu0
      %v2637 = vadd.f32 0.0, %v2636
      %2638 = vmatmul.f32.gmra.mxu0 %v1053
      %v2639 = vpop.f32.mrf.mxu0
      %v2640 = vadd.f32 0.0, %v2639
      %2641 = vmatmul.f32.gmra.mxu0 %v1055
      %v2642 = vpop.f32.mrf.mxu0
      %v2643 = vadd.f32 0.0, %v2642
      %2644 = vmatmul.f32.gmra.mxu0 %v1057
      %v2645 = vpop.f32.mrf.mxu0
      %v2646 = vadd.f32 0.0, %v2645
      %2647 = vmatmul.f32.gmra.mxu0 %v1059
      %v2648 = vpop.f32.mrf.mxu0
      %v2649 = vadd.f32 0.0, %v2648
      %2650 = vmatmul.f32.gmra.mxu0 %v1061
      %v2651 = vpop.f32.mrf.mxu0
      %v2652 = vadd.f32 0.0, %v2651
      %2653 = vmatmul.f32.gmra.mxu0 %v1063
      %v2654 = vpop.f32.mrf.mxu0
      %v2655 = vadd.f32 0.0, %v2654
      %2656 = vmatmul.f32.gmra.mxu0 %v1065
      %v2657 = vpop.f32.mrf.mxu0
      %v2658 = vadd.f32 0.0, %v2657
      %2659 = vmatmul.f32.gmra.mxu0 %v1067
      %v2660 = vpop.f32.mrf.mxu0
      %v2661 = vadd.f32 0.0, %v2660
      %2662 = vmatmul.f32.gmra.mxu0 %v1069
      %v2663 = vpop.f32.mrf.mxu0
      %v2664 = vadd.f32 0.0, %v2663
      %2665 = vmatmul.f32.gmra.mxu0 %v1071
      %v2666 = vpop.f32.mrf.mxu0
      %v2667 = vadd.f32 0.0, %v2666
      %2668 = vmatmul.f32.gmra.mxu0 %v1073
      %v2669 = vpop.f32.mrf.mxu0
      %v2670 = vadd.f32 0.0, %v2669
      %2671 = vmatmul.f32.gmra.mxu0 %v1075
      %v2672 = vpop.f32.mrf.mxu0
      %v2673 = vadd.f32 0.0, %v2672
      %2674 = vmatmul.f32.gmra.mxu0 %v1077
      %v2675 = vpop.f32.mrf.mxu0
      %v2676 = vadd.f32 0.0, %v2675
      %2677 = vmatmul.f32.gmra.mxu0 %v1079
      %v2678 = vpop.f32.mrf.mxu0
      %v2679 = vadd.f32 0.0, %v2678
      %2680 = vmatmul.f32.gmra.mxu0 %v1081
      %v2681 = vpop.f32.mrf.mxu0
      %v2682 = vadd.f32 0.0, %v2681
      %2683 = vmatmul.f32.gmra.mxu0 %v1083
      %v2684 = vpop.f32.mrf.mxu0
      %v2685 = vadd.f32 0.0, %v2684
      %2686 = vmatmul.f32.gmra.mxu0 %v1085
      %v2687 = vpop.f32.mrf.mxu0
      %v2688 = vadd.f32 0.0, %v2687
      %2689 = vmatmul.f32.gmra.mxu0 %v1087
      %v2690 = vpop.f32.mrf.mxu0
      %v2691 = vadd.f32 0.0, %v2690
      %2692 = vmatmul.f32.gmra.mxu0 %v1089
      %v2693 = vpop.f32.mrf.mxu0
      %v2694 = vadd.f32 0.0, %v2693
      %2695 = vmatmul.f32.gmra.mxu0 %v1091
      %v2696 = vpop.f32.mrf.mxu0
      %v2697 = vadd.f32 0.0, %v2696
      %2698 = vmatmul.f32.gmra.mxu0 %v1093
      %v2699 = vpop.f32.mrf.mxu0
      %v2700 = vadd.f32 0.0, %v2699
      %2701 = vmatmul.f32.gmra.mxu0 %v2591
      %v2702 = vpop.f32.mrf.mxu0
      %v2703 = vadd.f32 0.0, %v2702
      %2704 = vmatmul.f32.gmra.mxu0 %v2593
      %v2705 = vpop.f32.mrf.mxu0
      %v2706 = vadd.f32 0.0, %v2705
      %2707 = vdwg.mxu0
      %v2708 = vadd.f32 %v2557, %v2613
      %v2709 = vadd.f32 %v2558, %v2616
      %v2710 = vadd.f32 %v2559, %v2619
      %v2711 = vadd.f32 %v2560, %v2622
      %v2712 = vadd.f32 %v2561, %v2625
      %v2713 = vadd.f32 %v2562, %v2628
      %v2714 = vadd.f32 %v2563, %v2631
      %v2715 = vadd.f32 %v2564, %v2634
      %v2716 = vadd.f32 %v2565, %v2637
      %v2717 = vadd.f32 %v2566, %v2640
      %v2718 = vadd.f32 %v2567, %v2643
      %v2719 = vadd.f32 %v2568, %v2646
      %v2720 = vadd.f32 %v2569, %v2649
      %v2721 = vadd.f32 %v2570, %v2652
      %v2722 = vadd.f32 %v2571, %v2655
      %v2723 = vadd.f32 %v2572, %v2658
      %v2724 = vadd.f32 %v2573, %v2661
      %v2725 = vadd.f32 %v2574, %v2664
      %v2726 = vadd.f32 %v2575, %v2667
      %v2727 = vadd.f32 %v2576, %v2670
      %v2728 = vadd.f32 %v2577, %v2673
      %v2729 = vadd.f32 %v2578, %v2676
      %v2730 = vadd.f32 %v2579, %v2679
      %v2731 = vadd.f32 %v2580, %v2682
      %v2732 = vadd.f32 %v2581, %v2685
      %v2733 = vadd.f32 %v2582, %v2688
      %v2734 = vadd.f32 %v2583, %v2691
      %v2735 = vadd.f32 %v2584, %v2694
      %v2736 = vadd.f32 %v2585, %v2697
      %v2737 = vadd.f32 %v2586, %v2700
      %v2738 = vadd.f32 %v2587, %v2703
      %v2739 = vadd.f32 %v2588, %v2706
      %s2740 = scalar_lea.vmem %s2, 32
      %v2741 = vld [vmem:[%s2740] sm:$0xff]
      %v2742 = vsel %vm353, %v693, 0
      %v2744 = vsel %vm353, %v694, 0
      %2746 = vmatpush.msra.mxu0 0.0
      %2747 = vmatpush.msra.mxu0 0.0
      %2748 = vmatpush.msra.mxu0 0.0
      %2749 = vmatpush.msra.mxu0 0.0
      %2750 = vmatpush.msra.mxu0 0.0
      %2751 = vmatpush.msra.mxu0 0.0
      %2752 = vmatpush.msra.mxu0 0.0
      %2753 = vmatpush.msra.mxu0 0.0
      %2754 = vmatpush.msra.mxu0 0.0
      %2755 = vmatpush.msra.mxu0 0.0
      %2756 = vmatpush.msra.mxu0 0.0
      %2757 = vmatpush.msra.mxu0 0.0
      %2758 = vmatpush.msra.mxu0 0.0
      %2759 = vmatpush.msra.mxu0 0.0
      %2760 = vmatpush.msra.mxu0 0.0
      %2761 = vmatpush.msra.mxu0 %v2741
      %2762 = vmatmul.f32.gmra.mxu0 %v1391
      %v2763 = vpop.f32.mrf.mxu0
      %v2764 = vadd.f32 0.0, %v2763
      %2765 = vmatmul.f32.gmra.mxu0 %v1393
      %v2766 = vpop.f32.mrf.mxu0
      %v2767 = vadd.f32 0.0, %v2766
      %2768 = vmatmul.f32.gmra.mxu0 %v1395
      %v2769 = vpop.f32.mrf.mxu0
      %v2770 = vadd.f32 0.0, %v2769
      %2771 = vmatmul.f32.gmra.mxu0 %v1397
      %v2772 = vpop.f32.mrf.mxu0
      %v2773 = vadd.f32 0.0, %v2772
      %2774 = vmatmul.f32.gmra.mxu0 %v1399
      %v2775 = vpop.f32.mrf.mxu0
      %v2776 = vadd.f32 0.0, %v2775
      %2777 = vmatmul.f32.gmra.mxu0 %v1401
      %v2778 = vpop.f32.mrf.mxu0
      %v2779 = vadd.f32 0.0, %v2778
      %2780 = vmatmul.f32.gmra.mxu0 %v1403
      %v2781 = vpop.f32.mrf.mxu0
      %v2782 = vadd.f32 0.0, %v2781
      %2783 = vmatmul.f32.gmra.mxu0 %v1405
      %v2784 = vpop.f32.mrf.mxu0
      %v2785 = vadd.f32 0.0, %v2784
      %2786 = vmatmul.f32.gmra.mxu0 %v1407
      %v2787 = vpop.f32.mrf.mxu0
      %v2788 = vadd.f32 0.0, %v2787
      %2789 = vmatmul.f32.gmra.mxu0 %v1409
      %v2790 = vpop.f32.mrf.mxu0
      %v2791 = vadd.f32 0.0, %v2790
      %2792 = vmatmul.f32.gmra.mxu0 %v1411
      %v2793 = vpop.f32.mrf.mxu0
      %v2794 = vadd.f32 0.0, %v2793
      %2795 = vmatmul.f32.gmra.mxu0 %v1413
      %v2796 = vpop.f32.mrf.mxu0
      %v2797 = vadd.f32 0.0, %v2796
      %2798 = vmatmul.f32.gmra.mxu0 %v1415
      %v2799 = vpop.f32.mrf.mxu0
      %v2800 = vadd.f32 0.0, %v2799
      %2801 = vmatmul.f32.gmra.mxu0 %v1417
      %v2802 = vpop.f32.mrf.mxu0
      %v2803 = vadd.f32 0.0, %v2802
      %2804 = vmatmul.f32.gmra.mxu0 %v1419
      %v2805 = vpop.f32.mrf.mxu0
      %v2806 = vadd.f32 0.0, %v2805
      %2807 = vmatmul.f32.gmra.mxu0 %v1421
      %v2808 = vpop.f32.mrf.mxu0
      %v2809 = vadd.f32 0.0, %v2808
      %2810 = vmatmul.f32.gmra.mxu0 %v1423
      %v2811 = vpop.f32.mrf.mxu0
      %v2812 = vadd.f32 0.0, %v2811
      %2813 = vmatmul.f32.gmra.mxu0 %v1425
      %v2814 = vpop.f32.mrf.mxu0
      %v2815 = vadd.f32 0.0, %v2814
      %2816 = vmatmul.f32.gmra.mxu0 %v1427
      %v2817 = vpop.f32.mrf.mxu0
      %v2818 = vadd.f32 0.0, %v2817
      %2819 = vmatmul.f32.gmra.mxu0 %v1429
      %v2820 = vpop.f32.mrf.mxu0
      %v2821 = vadd.f32 0.0, %v2820
      %2822 = vmatmul.f32.gmra.mxu0 %v1431
      %v2823 = vpop.f32.mrf.mxu0
      %v2824 = vadd.f32 0.0, %v2823
      %2825 = vmatmul.f32.gmra.mxu0 %v1433
      %v2826 = vpop.f32.mrf.mxu0
      %v2827 = vadd.f32 0.0, %v2826
      %2828 = vmatmul.f32.gmra.mxu0 %v1435
      %v2829 = vpop.f32.mrf.mxu0
      %v2830 = vadd.f32 0.0, %v2829
      %2831 = vmatmul.f32.gmra.mxu0 %v1437
      %v2832 = vpop.f32.mrf.mxu0
      %v2833 = vadd.f32 0.0, %v2832
      %2834 = vmatmul.f32.gmra.mxu0 %v1439
      %v2835 = vpop.f32.mrf.mxu0
      %v2836 = vadd.f32 0.0, %v2835
      %2837 = vmatmul.f32.gmra.mxu0 %v1441
      %v2838 = vpop.f32.mrf.mxu0
      %v2839 = vadd.f32 0.0, %v2838
      %2840 = vmatmul.f32.gmra.mxu0 %v1443
      %v2841 = vpop.f32.mrf.mxu0
      %v2842 = vadd.f32 0.0, %v2841
      %2843 = vmatmul.f32.gmra.mxu0 %v1445
      %v2844 = vpop.f32.mrf.mxu0
      %v2845 = vadd.f32 0.0, %v2844
      %2846 = vmatmul.f32.gmra.mxu0 %v1447
      %v2847 = vpop.f32.mrf.mxu0
      %v2848 = vadd.f32 0.0, %v2847
      %2849 = vmatmul.f32.gmra.mxu0 %v1449
      %v2850 = vpop.f32.mrf.mxu0
      %v2851 = vadd.f32 0.0, %v2850
      %2852 = vmatmul.f32.gmra.mxu0 %v2742
      %v2853 = vpop.f32.mrf.mxu0
      %v2854 = vadd.f32 0.0, %v2853
      %2855 = vmatmul.f32.gmra.mxu0 %v2744
      %v2856 = vpop.f32.mrf.mxu0
      %v2857 = vadd.f32 0.0, %v2856
      %2858 = vdwg.mxu0
      %v2859 = vadd.f32 %v2708, %v2764
      %v2860 = vadd.f32 %v2709, %v2767
      %v2861 = vadd.f32 %v2710, %v2770
      %v2862 = vadd.f32 %v2711, %v2773
      %v2863 = vadd.f32 %v2712, %v2776
      %v2864 = vadd.f32 %v2713, %v2779
      %v2865 = vadd.f32 %v2714, %v2782
      %v2866 = vadd.f32 %v2715, %v2785
      %v2867 = vadd.f32 %v2716, %v2788
      %v2868 = vadd.f32 %v2717, %v2791
      %v2869 = vadd.f32 %v2718, %v2794
      %v2870 = vadd.f32 %v2719, %v2797
      %v2871 = vadd.f32 %v2720, %v2800
      %v2872 = vadd.f32 %v2721, %v2803
      %v2873 = vadd.f32 %v2722, %v2806
      %v2874 = vadd.f32 %v2723, %v2809
      %v2875 = vadd.f32 %v2724, %v2812
      %v2876 = vadd.f32 %v2725, %v2815
      %v2877 = vadd.f32 %v2726, %v2818
      %v2878 = vadd.f32 %v2727, %v2821
      %v2879 = vadd.f32 %v2728, %v2824
      %v2880 = vadd.f32 %v2729, %v2827
      %v2881 = vadd.f32 %v2730, %v2830
      %v2882 = vadd.f32 %v2731, %v2833
      %v2883 = vadd.f32 %v2732, %v2836
      %v2884 = vadd.f32 %v2733, %v2839
      %v2885 = vadd.f32 %v2734, %v2842
      %v2886 = vadd.f32 %v2735, %v2845
      %v2887 = vadd.f32 %v2736, %v2848
      %v2888 = vadd.f32 %v2737, %v2851
      %v2889 = vadd.f32 %v2738, %v2854
      %v2890 = vadd.f32 %v2739, %v2857
      %s2891 = scalar_lea.vmem %s3, 32
      %v2892 = vld [vmem:[%s2891] sm:$0xff]
      %v2893 = vsel %vm353, %v765, 0
      %v2895 = vsel %vm353, %v766, 0
      %2897 = vmatpush.msra.mxu0 0.0
      %2898 = vmatpush.msra.mxu0 0.0
      %2899 = vmatpush.msra.mxu0 0.0
      %2900 = vmatpush.msra.mxu0 0.0
      %2901 = vmatpush.msra.mxu0 0.0
      %2902 = vmatpush.msra.mxu0 0.0
      %2903 = vmatpush.msra.mxu0 0.0
      %2904 = vmatpush.msra.mxu0 0.0
      %2905 = vmatpush.msra.mxu0 0.0
      %2906 = vmatpush.msra.mxu0 0.0
      %2907 = vmatpush.msra.mxu0 0.0
      %2908 = vmatpush.msra.mxu0 0.0
      %2909 = vmatpush.msra.mxu0 0.0
      %2910 = vmatpush.msra.mxu0 0.0
      %2911 = vmatpush.msra.mxu0 0.0
      %2912 = vmatpush.msra.mxu0 %v2892
      %2913 = vmatmul.f32.gmra.mxu0 %v1602
      %v2914 = vpop.f32.mrf.mxu0
      %v2915 = vadd.f32 0.0, %v2914
      %2916 = vmatmul.f32.gmra.mxu0 %v1604
      %v2917 = vpop.f32.mrf.mxu0
      %v2918 = vadd.f32 0.0, %v2917
      %2919 = vmatmul.f32.gmra.mxu0 %v1606
      %v2920 = vpop.f32.mrf.mxu0
      %v2921 = vadd.f32 0.0, %v2920
      %2922 = vmatmul.f32.gmra.mxu0 %v1608
      %v2923 = vpop.f32.mrf.mxu0
      %v2924 = vadd.f32 0.0, %v2923
      %2925 = vmatmul.f32.gmra.mxu0 %v1610
      %v2926 = vpop.f32.mrf.mxu0
      %v2927 = vadd.f32 0.0, %v2926
      %2928 = vmatmul.f32.gmra.mxu0 %v1612
      %v2929 = vpop.f32.mrf.mxu0
      %v2930 = vadd.f32 0.0, %v2929
      %2931 = vmatmul.f32.gmra.mxu0 %v1614
      %v2932 = vpop.f32.mrf.mxu0
      %v2933 = vadd.f32 0.0, %v2932
      %2934 = vmatmul.f32.gmra.mxu0 %v1616
      %v2935 = vpop.f32.mrf.mxu0
      %v2936 = vadd.f32 0.0, %v2935
      %2937 = vmatmul.f32.gmra.mxu0 %v1618
      %v2938 = vpop.f32.mrf.mxu0
      %v2939 = vadd.f32 0.0, %v2938
      %2940 = vmatmul.f32.gmra.mxu0 %v1620
      %v2941 = vpop.f32.mrf.mxu0
      %v2942 = vadd.f32 0.0, %v2941
      %2943 = vmatmul.f32.gmra.mxu0 %v1622
      %v2944 = vpop.f32.mrf.mxu0
      %v2945 = vadd.f32 0.0, %v2944
      %2946 = vmatmul.f32.gmra.mxu0 %v1624
      %v2947 = vpop.f32.mrf.mxu0
      %v2948 = vadd.f32 0.0, %v2947
      %2949 = vmatmul.f32.gmra.mxu0 %v1626
      %v2950 = vpop.f32.mrf.mxu0
      %v2951 = vadd.f32 0.0, %v2950
      %2952 = vmatmul.f32.gmra.mxu0 %v1628
      %v2953 = vpop.f32.mrf.mxu0
      %v2954 = vadd.f32 0.0, %v2953
      %2955 = vmatmul.f32.gmra.mxu0 %v1630
      %v2956 = vpop.f32.mrf.mxu0
      %v2957 = vadd.f32 0.0, %v2956
      %2958 = vmatmul.f32.gmra.mxu0 %v1632
      %v2959 = vpop.f32.mrf.mxu0
      %v2960 = vadd.f32 0.0, %v2959
      %2961 = vmatmul.f32.gmra.mxu0 %v1634
      %v2962 = vpop.f32.mrf.mxu0
      %v2963 = vadd.f32 0.0, %v2962
      %2964 = vmatmul.f32.gmra.mxu0 %v1636
      %v2965 = vpop.f32.mrf.mxu0
      %v2966 = vadd.f32 0.0, %v2965
      %2967 = vmatmul.f32.gmra.mxu0 %v1638
      %v2968 = vpop.f32.mrf.mxu0
      %v2969 = vadd.f32 0.0, %v2968
      %2970 = vmatmul.f32.gmra.mxu0 %v1640
      %v2971 = vpop.f32.mrf.mxu0
      %v2972 = vadd.f32 0.0, %v2971
      %2973 = vmatmul.f32.gmra.mxu0 %v1642
      %v2974 = vpop.f32.mrf.mxu0
      %v2975 = vadd.f32 0.0, %v2974
      %2976 = vmatmul.f32.gmra.mxu0 %v1644
      %v2977 = vpop.f32.mrf.mxu0
      %v2978 = vadd.f32 0.0, %v2977
      %2979 = vmatmul.f32.gmra.mxu0 %v1646
      %v2980 = vpop.f32.mrf.mxu0
      %v2981 = vadd.f32 0.0, %v2980
      %2982 = vmatmul.f32.gmra.mxu0 %v1648
      %v2983 = vpop.f32.mrf.mxu0
      %v2984 = vadd.f32 0.0, %v2983
      %2985 = vmatmul.f32.gmra.mxu0 %v1650
      %v2986 = vpop.f32.mrf.mxu0
      %v2987 = vadd.f32 0.0, %v2986
      %2988 = vmatmul.f32.gmra.mxu0 %v1652
      %v2989 = vpop.f32.mrf.mxu0
      %v2990 = vadd.f32 0.0, %v2989
      %2991 = vmatmul.f32.gmra.mxu0 %v1654
      %v2992 = vpop.f32.mrf.mxu0
      %v2993 = vadd.f32 0.0, %v2992
      %2994 = vmatmul.f32.gmra.mxu0 %v1656
      %v2995 = vpop.f32.mrf.mxu0
      %v2996 = vadd.f32 0.0, %v2995
      %2997 = vmatmul.f32.gmra.mxu0 %v1658
      %v2998 = vpop.f32.mrf.mxu0
      %v2999 = vadd.f32 0.0, %v2998
      %3000 = vmatmul.f32.gmra.mxu0 %v1660
      %v3001 = vpop.f32.mrf.mxu0
      %v3002 = vadd.f32 0.0, %v3001
      %3003 = vmatmul.f32.gmra.mxu0 %v2893
      %v3004 = vpop.f32.mrf.mxu0
      %v3005 = vadd.f32 0.0, %v3004
      %3006 = vmatmul.f32.gmra.mxu0 %v2895
      %v3007 = vpop.f32.mrf.mxu0
      %v3008 = vadd.f32 0.0, %v3007
      %3009 = vdwg.mxu0
      %v3010 = vadd.f32 %v2859, %v2915
      %v3011 = vadd.f32 %v2860, %v2918
      %v3012 = vadd.f32 %v2861, %v2921
      %v3013 = vadd.f32 %v2862, %v2924
      %v3014 = vadd.f32 %v2863, %v2927
      %v3015 = vadd.f32 %v2864, %v2930
      %v3016 = vadd.f32 %v2865, %v2933
      %v3017 = vadd.f32 %v2866, %v2936
      %v3018 = vadd.f32 %v2867, %v2939
      %v3019 = vadd.f32 %v2868, %v2942
      %v3020 = vadd.f32 %v2869, %v2945
      %v3021 = vadd.f32 %v2870, %v2948
      %v3022 = vadd.f32 %v2871, %v2951
      %v3023 = vadd.f32 %v2872, %v2954
      %v3024 = vadd.f32 %v2873, %v2957
      %v3025 = vadd.f32 %v2874, %v2960
      %v3026 = vadd.f32 %v2875, %v2963
      %v3027 = vadd.f32 %v2876, %v2966
      %v3028 = vadd.f32 %v2877, %v2969
      %v3029 = vadd.f32 %v2878, %v2972
      %v3030 = vadd.f32 %v2879, %v2975
      %v3031 = vadd.f32 %v2880, %v2978
      %v3032 = vadd.f32 %v2881, %v2981
      %v3033 = vadd.f32 %v2882, %v2984
      %v3034 = vadd.f32 %v2883, %v2987
      %v3035 = vadd.f32 %v2884, %v2990
      %v3036 = vadd.f32 %v2885, %v2993
      %v3037 = vadd.f32 %v2886, %v2996
      %v3038 = vadd.f32 %v2887, %v2999
      %v3039 = vadd.f32 %v2888, %v3002
      %v3040 = vadd.f32 %v2889, %v3005
      %v3041 = vadd.f32 %v2890, %v3008
      %v3043 = vrot.slane %v693, 1
      %v3044 = vrot.slane %v694, 1
      %v3045 = vsel %vm1823, %v3043, %v3044
      %v3046 = vrot.slane %v695, 1
      %v3047 = vsel %vm1823, %v3044, %v3046
      %v3049 = vrot.slane %v765, 1
      %v3050 = vrot.slane %v766, 1
      %v3051 = vsel %vm1823, %v3049, %v3050
      %v3052 = vrot.slane %v767, 1
      %v3053 = vsel %vm1823, %v3050, %v3052
      %s3054 = scalar_lea.vmem %s2, 40
      %v3055 = vld [vmem:[%s3054] sm:$0xff]
      %v3056 = vsel %vm353, %v3045, 0
      %v3058 = vsel %vm353, %v3047, 0
      %3060 = vmatpush.msra.mxu0 0.0
      %3061 = vmatpush.msra.mxu0 0.0
      %3062 = vmatpush.msra.mxu0 0.0
      %3063 = vmatpush.msra.mxu0 0.0
      %3064 = vmatpush.msra.mxu0 0.0
      %3065 = vmatpush.msra.mxu0 0.0
      %3066 = vmatpush.msra.mxu0 0.0
      %3067 = vmatpush.msra.mxu0 0.0
      %3068 = vmatpush.msra.mxu0 0.0
      %3069 = vmatpush.msra.mxu0 0.0
      %3070 = vmatpush.msra.mxu0 0.0
      %3071 = vmatpush.msra.mxu0 0.0
      %3072 = vmatpush.msra.mxu0 0.0
      %3073 = vmatpush.msra.mxu0 0.0
      %3074 = vmatpush.msra.mxu0 0.0
      %3075 = vmatpush.msra.mxu0 %v3055
      %3076 = vmatmul.f32.gmra.mxu0 %v2006
      %v3077 = vpop.f32.mrf.mxu0
      %v3078 = vadd.f32 0.0, %v3077
      %3079 = vmatmul.f32.gmra.mxu0 %v2008
      %v3080 = vpop.f32.mrf.mxu0
      %v3081 = vadd.f32 0.0, %v3080
      %3082 = vmatmul.f32.gmra.mxu0 %v2010
      %v3083 = vpop.f32.mrf.mxu0
      %v3084 = vadd.f32 0.0, %v3083
      %3085 = vmatmul.f32.gmra.mxu0 %v2012
      %v3086 = vpop.f32.mrf.mxu0
      %v3087 = vadd.f32 0.0, %v3086
      %3088 = vmatmul.f32.gmra.mxu0 %v2014
      %v3089 = vpop.f32.mrf.mxu0
      %v3090 = vadd.f32 0.0, %v3089
      %3091 = vmatmul.f32.gmra.mxu0 %v2016
      %v3092 = vpop.f32.mrf.mxu0
      %v3093 = vadd.f32 0.0, %v3092
      %3094 = vmatmul.f32.gmra.mxu0 %v2018
      %v3095 = vpop.f32.mrf.mxu0
      %v3096 = vadd.f32 0.0, %v3095
      %3097 = vmatmul.f32.gmra.mxu0 %v2020
      %v3098 = vpop.f32.mrf.mxu0
      %v3099 = vadd.f32 0.0, %v3098
      %3100 = vmatmul.f32.gmra.mxu0 %v2022
      %v3101 = vpop.f32.mrf.mxu0
      %v3102 = vadd.f32 0.0, %v3101
      %3103 = vmatmul.f32.gmra.mxu0 %v2024
      %v3104 = vpop.f32.mrf.mxu0
      %v3105 = vadd.f32 0.0, %v3104
      %3106 = vmatmul.f32.gmra.mxu0 %v2026
      %v3107 = vpop.f32.mrf.mxu0
      %v3108 = vadd.f32 0.0, %v3107
      %3109 = vmatmul.f32.gmra.mxu0 %v2028
      %v3110 = vpop.f32.mrf.mxu0
      %v3111 = vadd.f32 0.0, %v3110
      %3112 = vmatmul.f32.gmra.mxu0 %v2030
      %v3113 = vpop.f32.mrf.mxu0
      %v3114 = vadd.f32 0.0, %v3113
      %3115 = vmatmul.f32.gmra.mxu0 %v2032
      %v3116 = vpop.f32.mrf.mxu0
      %v3117 = vadd.f32 0.0, %v3116
      %3118 = vmatmul.f32.gmra.mxu0 %v2034
      %v3119 = vpop.f32.mrf.mxu0
      %v3120 = vadd.f32 0.0, %v3119
      %3121 = vmatmul.f32.gmra.mxu0 %v2036
      %v3122 = vpop.f32.mrf.mxu0
      %v3123 = vadd.f32 0.0, %v3122
      %3124 = vmatmul.f32.gmra.mxu0 %v2038
      %v3125 = vpop.f32.mrf.mxu0
      %v3126 = vadd.f32 0.0, %v3125
      %3127 = vmatmul.f32.gmra.mxu0 %v2040
      %v3128 = vpop.f32.mrf.mxu0
      %v3129 = vadd.f32 0.0, %v3128
      %3130 = vmatmul.f32.gmra.mxu0 %v2042
      %v3131 = vpop.f32.mrf.mxu0
      %v3132 = vadd.f32 0.0, %v3131
      %3133 = vmatmul.f32.gmra.mxu0 %v2044
      %v3134 = vpop.f32.mrf.mxu0
      %v3135 = vadd.f32 0.0, %v3134
      %3136 = vmatmul.f32.gmra.mxu0 %v2046
      %v3137 = vpop.f32.mrf.mxu0
      %v3138 = vadd.f32 0.0, %v3137
      %3139 = vmatmul.f32.gmra.mxu0 %v2048
      %v3140 = vpop.f32.mrf.mxu0
      %v3141 = vadd.f32 0.0, %v3140
      %3142 = vmatmul.f32.gmra.mxu0 %v2050
      %v3143 = vpop.f32.mrf.mxu0
      %v3144 = vadd.f32 0.0, %v3143
      %3145 = vmatmul.f32.gmra.mxu0 %v2052
      %v3146 = vpop.f32.mrf.mxu0
      %v3147 = vadd.f32 0.0, %v3146
      %3148 = vmatmul.f32.gmra.mxu0 %v2054
      %v3149 = vpop.f32.mrf.mxu0
      %v3150 = vadd.f32 0.0, %v3149
      %3151 = vmatmul.f32.gmra.mxu0 %v2056
      %v3152 = vpop.f32.mrf.mxu0
      %v3153 = vadd.f32 0.0, %v3152
      %3154 = vmatmul.f32.gmra.mxu0 %v2058
      %v3155 = vpop.f32.mrf.mxu0
      %v3156 = vadd.f32 0.0, %v3155
      %3157 = vmatmul.f32.gmra.mxu0 %v2060
      %v3158 = vpop.f32.mrf.mxu0
      %v3159 = vadd.f32 0.0, %v3158
      %3160 = vmatmul.f32.gmra.mxu0 %v2062
      %v3161 = vpop.f32.mrf.mxu0
      %v3162 = vadd.f32 0.0, %v3161
      %3163 = vmatmul.f32.gmra.mxu0 %v2064
      %v3164 = vpop.f32.mrf.mxu0
      %v3165 = vadd.f32 0.0, %v3164
      %3166 = vmatmul.f32.gmra.mxu0 %v3056
      %v3167 = vpop.f32.mrf.mxu0
      %v3168 = vadd.f32 0.0, %v3167
      %3169 = vmatmul.f32.gmra.mxu0 %v3058
      %v3170 = vpop.f32.mrf.mxu0
      %v3171 = vadd.f32 0.0, %v3170
      %3172 = vdwg.mxu0
      %v3173 = vadd.f32 %v3010, %v3078
      %v3174 = vadd.f32 %v3011, %v3081
      %v3175 = vadd.f32 %v3012, %v3084
      %v3176 = vadd.f32 %v3013, %v3087
      %v3177 = vadd.f32 %v3014, %v3090
      %v3178 = vadd.f32 %v3015, %v3093
      %v3179 = vadd.f32 %v3016, %v3096
      %v3180 = vadd.f32 %v3017, %v3099
      %v3181 = vadd.f32 %v3018, %v3102
      %v3182 = vadd.f32 %v3019, %v3105
      %v3183 = vadd.f32 %v3020, %v3108
      %v3184 = vadd.f32 %v3021, %v3111
      %v3185 = vadd.f32 %v3022, %v3114
      %v3186 = vadd.f32 %v3023, %v3117
      %v3187 = vadd.f32 %v3024, %v3120
      %v3188 = vadd.f32 %v3025, %v3123
      %v3189 = vadd.f32 %v3026, %v3126
      %v3190 = vadd.f32 %v3027, %v3129
      %v3191 = vadd.f32 %v3028, %v3132
      %v3192 = vadd.f32 %v3029, %v3135
      %v3193 = vadd.f32 %v3030, %v3138
      %v3194 = vadd.f32 %v3031, %v3141
      %v3195 = vadd.f32 %v3032, %v3144
      %v3196 = vadd.f32 %v3033, %v3147
      %v3197 = vadd.f32 %v3034, %v3150
      %v3198 = vadd.f32 %v3035, %v3153
      %v3199 = vadd.f32 %v3036, %v3156
      %v3200 = vadd.f32 %v3037, %v3159
      %v3201 = vadd.f32 %v3038, %v3162
      %v3202 = vadd.f32 %v3039, %v3165
      %v3203 = vadd.f32 %v3040, %v3168
      %v3204 = vadd.f32 %v3041, %v3171
      %s3205 = scalar_lea.vmem %s3, 40
      %v3206 = vld [vmem:[%s3205] sm:$0xff]
      %v3207 = vsel %vm353, %v3051, 0
      %v3209 = vsel %vm353, %v3053, 0
      %3211 = vmatpush.msra.mxu0 0.0
      %3212 = vmatpush.msra.mxu0 0.0
      %3213 = vmatpush.msra.mxu0 0.0
      %3214 = vmatpush.msra.mxu0 0.0
      %3215 = vmatpush.msra.mxu0 0.0
      %3216 = vmatpush.msra.mxu0 0.0
      %3217 = vmatpush.msra.mxu0 0.0
      %3218 = vmatpush.msra.mxu0 0.0
      %3219 = vmatpush.msra.mxu0 0.0
      %3220 = vmatpush.msra.mxu0 0.0
      %3221 = vmatpush.msra.mxu0 0.0
      %3222 = vmatpush.msra.mxu0 0.0
      %3223 = vmatpush.msra.mxu0 0.0
      %3224 = vmatpush.msra.mxu0 0.0
      %3225 = vmatpush.msra.mxu0 0.0
      %3226 = vmatpush.msra.mxu0 %v3206
      %3227 = vmatmul.f32.gmra.mxu0 %v2217
      %v3228 = vpop.f32.mrf.mxu0
      %v3229 = vadd.f32 0.0, %v3228
      %3230 = vmatmul.f32.gmra.mxu0 %v2219
      %v3231 = vpop.f32.mrf.mxu0
      %v3232 = vadd.f32 0.0, %v3231
      %3233 = vmatmul.f32.gmra.mxu0 %v2221
      %v3234 = vpop.f32.mrf.mxu0
      %v3235 = vadd.f32 0.0, %v3234
      %3236 = vmatmul.f32.gmra.mxu0 %v2223
      %v3237 = vpop.f32.mrf.mxu0
      %v3238 = vadd.f32 0.0, %v3237
      %3239 = vmatmul.f32.gmra.mxu0 %v2225
      %v3240 = vpop.f32.mrf.mxu0
      %v3241 = vadd.f32 0.0, %v3240
      %3242 = vmatmul.f32.gmra.mxu0 %v2227
      %v3243 = vpop.f32.mrf.mxu0
      %v3244 = vadd.f32 0.0, %v3243
      %3245 = vmatmul.f32.gmra.mxu0 %v2229
      %v3246 = vpop.f32.mrf.mxu0
      %v3247 = vadd.f32 0.0, %v3246
      %3248 = vmatmul.f32.gmra.mxu0 %v2231
      %v3249 = vpop.f32.mrf.mxu0
      %v3250 = vadd.f32 0.0, %v3249
      %3251 = vmatmul.f32.gmra.mxu0 %v2233
      %v3252 = vpop.f32.mrf.mxu0
      %v3253 = vadd.f32 0.0, %v3252
      %3254 = vmatmul.f32.gmra.mxu0 %v2235
      %v3255 = vpop.f32.mrf.mxu0
      %v3256 = vadd.f32 0.0, %v3255
      %3257 = vmatmul.f32.gmra.mxu0 %v2237
      %v3258 = vpop.f32.mrf.mxu0
      %v3259 = vadd.f32 0.0, %v3258
      %3260 = vmatmul.f32.gmra.mxu0 %v2239
      %v3261 = vpop.f32.mrf.mxu0
      %v3262 = vadd.f32 0.0, %v3261
      %3263 = vmatmul.f32.gmra.mxu0 %v2241
      %v3264 = vpop.f32.mrf.mxu0
      %v3265 = vadd.f32 0.0, %v3264
      %3266 = vmatmul.f32.gmra.mxu0 %v2243
      %v3267 = vpop.f32.mrf.mxu0
      %v3268 = vadd.f32 0.0, %v3267
      %3269 = vmatmul.f32.gmra.mxu0 %v2245
      %v3270 = vpop.f32.mrf.mxu0
      %v3271 = vadd.f32 0.0, %v3270
      %3272 = vmatmul.f32.gmra.mxu0 %v2247
      %v3273 = vpop.f32.mrf.mxu0
      %v3274 = vadd.f32 0.0, %v3273
      %3275 = vmatmul.f32.gmra.mxu0 %v2249
      %v3276 = vpop.f32.mrf.mxu0
      %v3277 = vadd.f32 0.0, %v3276
      %3278 = vmatmul.f32.gmra.mxu0 %v2251
      %v3279 = vpop.f32.mrf.mxu0
      %v3280 = vadd.f32 0.0, %v3279
      %3281 = vmatmul.f32.gmra.mxu0 %v2253
      %v3282 = vpop.f32.mrf.mxu0
      %v3283 = vadd.f32 0.0, %v3282
      %3284 = vmatmul.f32.gmra.mxu0 %v2255
      %v3285 = vpop.f32.mrf.mxu0
      %v3286 = vadd.f32 0.0, %v3285
      %3287 = vmatmul.f32.gmra.mxu0 %v2257
      %v3288 = vpop.f32.mrf.mxu0
      %v3289 = vadd.f32 0.0, %v3288
      %3290 = vmatmul.f32.gmra.mxu0 %v2259
      %v3291 = vpop.f32.mrf.mxu0
      %v3292 = vadd.f32 0.0, %v3291
      %3293 = vmatmul.f32.gmra.mxu0 %v2261
      %v3294 = vpop.f32.mrf.mxu0
      %v3295 = vadd.f32 0.0, %v3294
      %3296 = vmatmul.f32.gmra.mxu0 %v2263
      %v3297 = vpop.f32.mrf.mxu0
      %v3298 = vadd.f32 0.0, %v3297
      %3299 = vmatmul.f32.gmra.mxu0 %v2265
      %v3300 = vpop.f32.mrf.mxu0
      %v3301 = vadd.f32 0.0, %v3300
      %3302 = vmatmul.f32.gmra.mxu0 %v2267
      %v3303 = vpop.f32.mrf.mxu0
      %v3304 = vadd.f32 0.0, %v3303
      %3305 = vmatmul.f32.gmra.mxu0 %v2269
      %v3306 = vpop.f32.mrf.mxu0
      %v3307 = vadd.f32 0.0, %v3306
      %3308 = vmatmul.f32.gmra.mxu0 %v2271
      %v3309 = vpop.f32.mrf.mxu0
      %v3310 = vadd.f32 0.0, %v3309
      %3311 = vmatmul.f32.gmra.mxu0 %v2273
      %v3312 = vpop.f32.mrf.mxu0
      %v3313 = vadd.f32 0.0, %v3312
      %3314 = vmatmul.f32.gmra.mxu0 %v2275
      %v3315 = vpop.f32.mrf.mxu0
      %v3316 = vadd.f32 0.0, %v3315
      %3317 = vmatmul.f32.gmra.mxu0 %v3207
      %v3318 = vpop.f32.mrf.mxu0
      %v3319 = vadd.f32 0.0, %v3318
      %3320 = vmatmul.f32.gmra.mxu0 %v3209
      %v3321 = vpop.f32.mrf.mxu0
      %v3322 = vadd.f32 0.0, %v3321
      %3323 = vdwg.mxu0
      %v3324 = vadd.f32 %v3173, %v3229
      %v3325 = vadd.f32 %v3174, %v3232
      %v3326 = vadd.f32 %v3175, %v3235
      %v3327 = vadd.f32 %v3176, %v3238
      %v3328 = vadd.f32 %v3177, %v3241
      %v3329 = vadd.f32 %v3178, %v3244
      %v3330 = vadd.f32 %v3179, %v3247
      %v3331 = vadd.f32 %v3180, %v3250
      %v3332 = vadd.f32 %v3181, %v3253
      %v3333 = vadd.f32 %v3182, %v3256
      %v3334 = vadd.f32 %v3183, %v3259
      %v3335 = vadd.f32 %v3184, %v3262
      %v3336 = vadd.f32 %v3185, %v3265
      %v3337 = vadd.f32 %v3186, %v3268
      %v3338 = vadd.f32 %v3187, %v3271
      %v3339 = vadd.f32 %v3188, %v3274
      %v3340 = vadd.f32 %v3189, %v3277
      %v3341 = vadd.f32 %v3190, %v3280
      %v3342 = vadd.f32 %v3191, %v3283
      %v3343 = vadd.f32 %v3192, %v3286
      %v3344 = vadd.f32 %v3193, %v3289
      %v3345 = vadd.f32 %v3194, %v3292
      %v3346 = vadd.f32 %v3195, %v3295
      %v3347 = vadd.f32 %v3196, %v3298
      %v3348 = vadd.f32 %v3197, %v3301
      %v3349 = vadd.f32 %v3198, %v3304
      %v3350 = vadd.f32 %v3199, %v3307
      %v3351 = vadd.f32 %v3200, %v3310
      %v3352 = vadd.f32 %v3201, %v3313
      %v3353 = vadd.f32 %v3202, %v3316
      %v3354 = vadd.f32 %v3203, %v3319
      %v3355 = vadd.f32 %v3204, %v3322
      %v3359 = vrot.slane %v696, 7
      %v3360 = vrot.slane %v697, 7
      %v3361 = vsel %vm820, %v3359, %v3360
      %v3362 = vrot.slane %v698, 7
      %v3363 = vsel %vm820, %v3360, %v3362
      %v3367 = vrot.slane %v768, 7
      %v3368 = vrot.slane %v769, 7
      %v3369 = vsel %vm820, %v3367, %v3368
      %v3370 = vrot.slane %v770, 7
      %v3371 = vsel %vm820, %v3368, %v3370
      %s3372 = scalar_lea.vmem %s2, 48
      %v3373 = vld [vmem:[%s3372] sm:$0xff]
      %v3374 = vsel %vm353, %v3361, 0
      %v3376 = vsel %vm353, %v3363, 0
      %3378 = vmatpush.msra.mxu0 0.0
      %3379 = vmatpush.msra.mxu0 0.0
      %3380 = vmatpush.msra.mxu0 0.0
      %3381 = vmatpush.msra.mxu0 0.0
      %3382 = vmatpush.msra.mxu0 0.0
      %3383 = vmatpush.msra.mxu0 0.0
      %3384 = vmatpush.msra.mxu0 0.0
      %3385 = vmatpush.msra.mxu0 0.0
      %3386 = vmatpush.msra.mxu0 0.0
      %3387 = vmatpush.msra.mxu0 0.0
      %3388 = vmatpush.msra.mxu0 0.0
      %3389 = vmatpush.msra.mxu0 0.0
      %3390 = vmatpush.msra.mxu0 0.0
      %3391 = vmatpush.msra.mxu0 0.0
      %3392 = vmatpush.msra.mxu0 0.0
      %3393 = vmatpush.msra.mxu0 %v3373
      %3394 = vmatmul.f32.gmra.mxu0 %v1216
      %v3395 = vpop.f32.mrf.mxu0
      %v3396 = vadd.f32 0.0, %v3395
      %3397 = vmatmul.f32.gmra.mxu0 %v1218
      %v3398 = vpop.f32.mrf.mxu0
      %v3399 = vadd.f32 0.0, %v3398
      %3400 = vmatmul.f32.gmra.mxu0 %v1220
      %v3401 = vpop.f32.mrf.mxu0
      %v3402 = vadd.f32 0.0, %v3401
      %3403 = vmatmul.f32.gmra.mxu0 %v1222
      %v3404 = vpop.f32.mrf.mxu0
      %v3405 = vadd.f32 0.0, %v3404
      %3406 = vmatmul.f32.gmra.mxu0 %v1224
      %v3407 = vpop.f32.mrf.mxu0
      %v3408 = vadd.f32 0.0, %v3407
      %3409 = vmatmul.f32.gmra.mxu0 %v1226
      %v3410 = vpop.f32.mrf.mxu0
      %v3411 = vadd.f32 0.0, %v3410
      %3412 = vmatmul.f32.gmra.mxu0 %v1228
      %v3413 = vpop.f32.mrf.mxu0
      %v3414 = vadd.f32 0.0, %v3413
      %3415 = vmatmul.f32.gmra.mxu0 %v1230
      %v3416 = vpop.f32.mrf.mxu0
      %v3417 = vadd.f32 0.0, %v3416
      %3418 = vmatmul.f32.gmra.mxu0 %v1232
      %v3419 = vpop.f32.mrf.mxu0
      %v3420 = vadd.f32 0.0, %v3419
      %3421 = vmatmul.f32.gmra.mxu0 %v1234
      %v3422 = vpop.f32.mrf.mxu0
      %v3423 = vadd.f32 0.0, %v3422
      %3424 = vmatmul.f32.gmra.mxu0 %v1236
      %v3425 = vpop.f32.mrf.mxu0
      %v3426 = vadd.f32 0.0, %v3425
      %3427 = vmatmul.f32.gmra.mxu0 %v1238
      %v3428 = vpop.f32.mrf.mxu0
      %v3429 = vadd.f32 0.0, %v3428
      %3430 = vmatmul.f32.gmra.mxu0 %v1240
      %v3431 = vpop.f32.mrf.mxu0
      %v3432 = vadd.f32 0.0, %v3431
      %3433 = vmatmul.f32.gmra.mxu0 %v1242
      %v3434 = vpop.f32.mrf.mxu0
      %v3435 = vadd.f32 0.0, %v3434
      %3436 = vmatmul.f32.gmra.mxu0 %v1244
      %v3437 = vpop.f32.mrf.mxu0
      %v3438 = vadd.f32 0.0, %v3437
      %3439 = vmatmul.f32.gmra.mxu0 %v1246
      %v3440 = vpop.f32.mrf.mxu0
      %v3441 = vadd.f32 0.0, %v3440
      %3442 = vmatmul.f32.gmra.mxu0 %v1248
      %v3443 = vpop.f32.mrf.mxu0
      %v3444 = vadd.f32 0.0, %v3443
      %3445 = vmatmul.f32.gmra.mxu0 %v1250
      %v3446 = vpop.f32.mrf.mxu0
      %v3447 = vadd.f32 0.0, %v3446
      %3448 = vmatmul.f32.gmra.mxu0 %v1252
      %v3449 = vpop.f32.mrf.mxu0
      %v3450 = vadd.f32 0.0, %v3449
      %3451 = vmatmul.f32.gmra.mxu0 %v1254
      %v3452 = vpop.f32.mrf.mxu0
      %v3453 = vadd.f32 0.0, %v3452
      %3454 = vmatmul.f32.gmra.mxu0 %v1256
      %v3455 = vpop.f32.mrf.mxu0
      %v3456 = vadd.f32 0.0, %v3455
      %3457 = vmatmul.f32.gmra.mxu0 %v1258
      %v3458 = vpop.f32.mrf.mxu0
      %v3459 = vadd.f32 0.0, %v3458
      %3460 = vmatmul.f32.gmra.mxu0 %v1260
      %v3461 = vpop.f32.mrf.mxu0
      %v3462 = vadd.f32 0.0, %v3461
      %3463 = vmatmul.f32.gmra.mxu0 %v1262
      %v3464 = vpop.f32.mrf.mxu0
      %v3465 = vadd.f32 0.0, %v3464
      %3466 = vmatmul.f32.gmra.mxu0 %v1264
      %v3467 = vpop.f32.mrf.mxu0
      %v3468 = vadd.f32 0.0, %v3467
      %3469 = vmatmul.f32.gmra.mxu0 %v1266
      %v3470 = vpop.f32.mrf.mxu0
      %v3471 = vadd.f32 0.0, %v3470
      %3472 = vmatmul.f32.gmra.mxu0 %v1268
      %v3473 = vpop.f32.mrf.mxu0
      %v3474 = vadd.f32 0.0, %v3473
      %3475 = vmatmul.f32.gmra.mxu0 %v1270
      %v3476 = vpop.f32.mrf.mxu0
      %v3477 = vadd.f32 0.0, %v3476
      %3478 = vmatmul.f32.gmra.mxu0 %v2440
      %v3479 = vpop.f32.mrf.mxu0
      %v3480 = vadd.f32 0.0, %v3479
      %3481 = vmatmul.f32.gmra.mxu0 %v2442
      %v3482 = vpop.f32.mrf.mxu0
      %v3483 = vadd.f32 0.0, %v3482
      %3484 = vmatmul.f32.gmra.mxu0 %v3374
      %v3485 = vpop.f32.mrf.mxu0
      %v3486 = vadd.f32 0.0, %v3485
      %3487 = vmatmul.f32.gmra.mxu0 %v3376
      %v3488 = vpop.f32.mrf.mxu0
      %v3489 = vadd.f32 0.0, %v3488
      %3490 = vdwg.mxu0
      %v3491 = vadd.f32 %v3324, %v3396
      %v3492 = vadd.f32 %v3325, %v3399
      %v3493 = vadd.f32 %v3326, %v3402
      %v3494 = vadd.f32 %v3327, %v3405
      %v3495 = vadd.f32 %v3328, %v3408
      %v3496 = vadd.f32 %v3329, %v3411
      %v3497 = vadd.f32 %v3330, %v3414
      %v3498 = vadd.f32 %v3331, %v3417
      %v3499 = vadd.f32 %v3332, %v3420
      %v3500 = vadd.f32 %v3333, %v3423
      %v3501 = vadd.f32 %v3334, %v3426
      %v3502 = vadd.f32 %v3335, %v3429
      %v3503 = vadd.f32 %v3336, %v3432
      %v3504 = vadd.f32 %v3337, %v3435
      %v3505 = vadd.f32 %v3338, %v3438
      %v3506 = vadd.f32 %v3339, %v3441
      %v3507 = vadd.f32 %v3340, %v3444
      %v3508 = vadd.f32 %v3341, %v3447
      %v3509 = vadd.f32 %v3342, %v3450
      %v3510 = vadd.f32 %v3343, %v3453
      %v3511 = vadd.f32 %v3344, %v3456
      %v3512 = vadd.f32 %v3345, %v3459
      %v3513 = vadd.f32 %v3346, %v3462
      %v3514 = vadd.f32 %v3347, %v3465
      %v3515 = vadd.f32 %v3348, %v3468
      %v3516 = vadd.f32 %v3349, %v3471
      %v3517 = vadd.f32 %v3350, %v3474
      %v3518 = vadd.f32 %v3351, %v3477
      %v3519 = vadd.f32 %v3352, %v3480
      %v3520 = vadd.f32 %v3353, %v3483
      %v3521 = vadd.f32 %v3354, %v3486
      %v3522 = vadd.f32 %v3355, %v3489
      %s3523 = scalar_lea.vmem %s3, 48
      %v3524 = vld [vmem:[%s3523] sm:$0xff]
      %v3525 = vsel %vm353, %v3369, 0
      %v3527 = vsel %vm353, %v3371, 0
      %3529 = vmatpush.msra.mxu0 0.0
      %3530 = vmatpush.msra.mxu0 0.0
      %3531 = vmatpush.msra.mxu0 0.0
      %3532 = vmatpush.msra.mxu0 0.0
      %3533 = vmatpush.msra.mxu0 0.0
      %3534 = vmatpush.msra.mxu0 0.0
      %3535 = vmatpush.msra.mxu0 0.0
      %3536 = vmatpush.msra.mxu0 0.0
      %3537 = vmatpush.msra.mxu0 0.0
      %3538 = vmatpush.msra.mxu0 0.0
      %3539 = vmatpush.msra.mxu0 0.0
      %3540 = vmatpush.msra.mxu0 0.0
      %3541 = vmatpush.msra.mxu0 0.0
      %3542 = vmatpush.msra.mxu0 0.0
      %3543 = vmatpush.msra.mxu0 0.0
      %3544 = vmatpush.msra.mxu0 %v3524
      %3545 = vmatmul.f32.gmra.mxu0 %v1039
      %v3546 = vpop.f32.mrf.mxu0
      %v3547 = vadd.f32 0.0, %v3546
      %3548 = vmatmul.f32.gmra.mxu0 %v1041
      %v3549 = vpop.f32.mrf.mxu0
      %v3550 = vadd.f32 0.0, %v3549
      %3551 = vmatmul.f32.gmra.mxu0 %v1043
      %v3552 = vpop.f32.mrf.mxu0
      %v3553 = vadd.f32 0.0, %v3552
      %3554 = vmatmul.f32.gmra.mxu0 %v1045
      %v3555 = vpop.f32.mrf.mxu0
      %v3556 = vadd.f32 0.0, %v3555
      %3557 = vmatmul.f32.gmra.mxu0 %v1047
      %v3558 = vpop.f32.mrf.mxu0
      %v3559 = vadd.f32 0.0, %v3558
      %3560 = vmatmul.f32.gmra.mxu0 %v1049
      %v3561 = vpop.f32.mrf.mxu0
      %v3562 = vadd.f32 0.0, %v3561
      %3563 = vmatmul.f32.gmra.mxu0 %v1051
      %v3564 = vpop.f32.mrf.mxu0
      %v3565 = vadd.f32 0.0, %v3564
      %3566 = vmatmul.f32.gmra.mxu0 %v1053
      %v3567 = vpop.f32.mrf.mxu0
      %v3568 = vadd.f32 0.0, %v3567
      %3569 = vmatmul.f32.gmra.mxu0 %v1055
      %v3570 = vpop.f32.mrf.mxu0
      %v3571 = vadd.f32 0.0, %v3570
      %3572 = vmatmul.f32.gmra.mxu0 %v1057
      %v3573 = vpop.f32.mrf.mxu0
      %v3574 = vadd.f32 0.0, %v3573
      %3575 = vmatmul.f32.gmra.mxu0 %v1059
      %v3576 = vpop.f32.mrf.mxu0
      %v3577 = vadd.f32 0.0, %v3576
      %3578 = vmatmul.f32.gmra.mxu0 %v1061
      %v3579 = vpop.f32.mrf.mxu0
      %v3580 = vadd.f32 0.0, %v3579
      %3581 = vmatmul.f32.gmra.mxu0 %v1063
      %v3582 = vpop.f32.mrf.mxu0
      %v3583 = vadd.f32 0.0, %v3582
      %3584 = vmatmul.f32.gmra.mxu0 %v1065
      %v3585 = vpop.f32.mrf.mxu0
      %v3586 = vadd.f32 0.0, %v3585
      %3587 = vmatmul.f32.gmra.mxu0 %v1067
      %v3588 = vpop.f32.mrf.mxu0
      %v3589 = vadd.f32 0.0, %v3588
      %3590 = vmatmul.f32.gmra.mxu0 %v1069
      %v3591 = vpop.f32.mrf.mxu0
      %v3592 = vadd.f32 0.0, %v3591
      %3593 = vmatmul.f32.gmra.mxu0 %v1071
      %v3594 = vpop.f32.mrf.mxu0
      %v3595 = vadd.f32 0.0, %v3594
      %3596 = vmatmul.f32.gmra.mxu0 %v1073
      %v3597 = vpop.f32.mrf.mxu0
      %v3598 = vadd.f32 0.0, %v3597
      %3599 = vmatmul.f32.gmra.mxu0 %v1075
      %v3600 = vpop.f32.mrf.mxu0
      %v3601 = vadd.f32 0.0, %v3600
      %3602 = vmatmul.f32.gmra.mxu0 %v1077
      %v3603 = vpop.f32.mrf.mxu0
      %v3604 = vadd.f32 0.0, %v3603
      %3605 = vmatmul.f32.gmra.mxu0 %v1079
      %v3606 = vpop.f32.mrf.mxu0
      %v3607 = vadd.f32 0.0, %v3606
      %3608 = vmatmul.f32.gmra.mxu0 %v1081
      %v3609 = vpop.f32.mrf.mxu0
      %v3610 = vadd.f32 0.0, %v3609
      %3611 = vmatmul.f32.gmra.mxu0 %v1083
      %v3612 = vpop.f32.mrf.mxu0
      %v3613 = vadd.f32 0.0, %v3612
      %3614 = vmatmul.f32.gmra.mxu0 %v1085
      %v3615 = vpop.f32.mrf.mxu0
      %v3616 = vadd.f32 0.0, %v3615
      %3617 = vmatmul.f32.gmra.mxu0 %v1087
      %v3618 = vpop.f32.mrf.mxu0
      %v3619 = vadd.f32 0.0, %v3618
      %3620 = vmatmul.f32.gmra.mxu0 %v1089
      %v3621 = vpop.f32.mrf.mxu0
      %v3622 = vadd.f32 0.0, %v3621
      %3623 = vmatmul.f32.gmra.mxu0 %v1091
      %v3624 = vpop.f32.mrf.mxu0
      %v3625 = vadd.f32 0.0, %v3624
      %3626 = vmatmul.f32.gmra.mxu0 %v1093
      %v3627 = vpop.f32.mrf.mxu0
      %v3628 = vadd.f32 0.0, %v3627
      %3629 = vmatmul.f32.gmra.mxu0 %v2591
      %v3630 = vpop.f32.mrf.mxu0
      %v3631 = vadd.f32 0.0, %v3630
      %3632 = vmatmul.f32.gmra.mxu0 %v2593
      %v3633 = vpop.f32.mrf.mxu0
      %v3634 = vadd.f32 0.0, %v3633
      %3635 = vmatmul.f32.gmra.mxu0 %v3525
      %v3636 = vpop.f32.mrf.mxu0
      %v3637 = vadd.f32 0.0, %v3636
      %3638 = vmatmul.f32.gmra.mxu0 %v3527
      %v3639 = vpop.f32.mrf.mxu0
      %v3640 = vadd.f32 0.0, %v3639
      %3641 = vdwg.mxu0
      %v3642 = vadd.f32 %v3491, %v3547
      %v3643 = vadd.f32 %v3492, %v3550
      %v3644 = vadd.f32 %v3493, %v3553
      %v3645 = vadd.f32 %v3494, %v3556
      %v3646 = vadd.f32 %v3495, %v3559
      %v3647 = vadd.f32 %v3496, %v3562
      %v3648 = vadd.f32 %v3497, %v3565
      %v3649 = vadd.f32 %v3498, %v3568
      %v3650 = vadd.f32 %v3499, %v3571
      %v3651 = vadd.f32 %v3500, %v3574
      %v3652 = vadd.f32 %v3501, %v3577
      %v3653 = vadd.f32 %v3502, %v3580
      %v3654 = vadd.f32 %v3503, %v3583
      %v3655 = vadd.f32 %v3504, %v3586
      %v3656 = vadd.f32 %v3505, %v3589
      %v3657 = vadd.f32 %v3506, %v3592
      %v3658 = vadd.f32 %v3507, %v3595
      %v3659 = vadd.f32 %v3508, %v3598
      %v3660 = vadd.f32 %v3509, %v3601
      %v3661 = vadd.f32 %v3510, %v3604
      %v3662 = vadd.f32 %v3511, %v3607
      %v3663 = vadd.f32 %v3512, %v3610
      %v3664 = vadd.f32 %v3513, %v3613
      %v3665 = vadd.f32 %v3514, %v3616
      %v3666 = vadd.f32 %v3515, %v3619
      %v3667 = vadd.f32 %v3516, %v3622
      %v3668 = vadd.f32 %v3517, %v3625
      %v3669 = vadd.f32 %v3518, %v3628
      %v3670 = vadd.f32 %v3519, %v3631
      %v3671 = vadd.f32 %v3520, %v3634
      %v3672 = vadd.f32 %v3521, %v3637
      %v3673 = vadd.f32 %v3522, %v3640
      %s3674 = scalar_lea.vmem %s2, 56
      %v3675 = vld [vmem:[%s3674] sm:$0xff]
      %v3676 = vsel %vm353, %v697, 0
      %v3678 = vsel %vm353, %v698, 0
      %3680 = vmatpush.msra.mxu0 0.0
      %3681 = vmatpush.msra.mxu0 0.0
      %3682 = vmatpush.msra.mxu0 0.0
      %3683 = vmatpush.msra.mxu0 0.0
      %3684 = vmatpush.msra.mxu0 0.0
      %3685 = vmatpush.msra.mxu0 0.0
      %3686 = vmatpush.msra.mxu0 0.0
      %3687 = vmatpush.msra.mxu0 0.0
      %3688 = vmatpush.msra.mxu0 0.0
      %3689 = vmatpush.msra.mxu0 0.0
      %3690 = vmatpush.msra.mxu0 0.0
      %3691 = vmatpush.msra.mxu0 0.0
      %3692 = vmatpush.msra.mxu0 0.0
      %3693 = vmatpush.msra.mxu0 0.0
      %3694 = vmatpush.msra.mxu0 0.0
      %3695 = vmatpush.msra.mxu0 %v3675
      %3696 = vmatmul.f32.gmra.mxu0 %v1395
      %v3697 = vpop.f32.mrf.mxu0
      %v3698 = vadd.f32 0.0, %v3697
      %3699 = vmatmul.f32.gmra.mxu0 %v1397
      %v3700 = vpop.f32.mrf.mxu0
      %v3701 = vadd.f32 0.0, %v3700
      %3702 = vmatmul.f32.gmra.mxu0 %v1399
      %v3703 = vpop.f32.mrf.mxu0
      %v3704 = vadd.f32 0.0, %v3703
      %3705 = vmatmul.f32.gmra.mxu0 %v1401
      %v3706 = vpop.f32.mrf.mxu0
      %v3707 = vadd.f32 0.0, %v3706
      %3708 = vmatmul.f32.gmra.mxu0 %v1403
      %v3709 = vpop.f32.mrf.mxu0
      %v3710 = vadd.f32 0.0, %v3709
      %3711 = vmatmul.f32.gmra.mxu0 %v1405
      %v3712 = vpop.f32.mrf.mxu0
      %v3713 = vadd.f32 0.0, %v3712
      %3714 = vmatmul.f32.gmra.mxu0 %v1407
      %v3715 = vpop.f32.mrf.mxu0
      %v3716 = vadd.f32 0.0, %v3715
      %3717 = vmatmul.f32.gmra.mxu0 %v1409
      %v3718 = vpop.f32.mrf.mxu0
      %v3719 = vadd.f32 0.0, %v3718
      %3720 = vmatmul.f32.gmra.mxu0 %v1411
      %v3721 = vpop.f32.mrf.mxu0
      %v3722 = vadd.f32 0.0, %v3721
      %3723 = vmatmul.f32.gmra.mxu0 %v1413
      %v3724 = vpop.f32.mrf.mxu0
      %v3725 = vadd.f32 0.0, %v3724
      %3726 = vmatmul.f32.gmra.mxu0 %v1415
      %v3727 = vpop.f32.mrf.mxu0
      %v3728 = vadd.f32 0.0, %v3727
      %3729 = vmatmul.f32.gmra.mxu0 %v1417
      %v3730 = vpop.f32.mrf.mxu0
      %v3731 = vadd.f32 0.0, %v3730
      %3732 = vmatmul.f32.gmra.mxu0 %v1419
      %v3733 = vpop.f32.mrf.mxu0
      %v3734 = vadd.f32 0.0, %v3733
      %3735 = vmatmul.f32.gmra.mxu0 %v1421
      %v3736 = vpop.f32.mrf.mxu0
      %v3737 = vadd.f32 0.0, %v3736
      %3738 = vmatmul.f32.gmra.mxu0 %v1423
      %v3739 = vpop.f32.mrf.mxu0
      %v3740 = vadd.f32 0.0, %v3739
      %3741 = vmatmul.f32.gmra.mxu0 %v1425
      %v3742 = vpop.f32.mrf.mxu0
      %v3743 = vadd.f32 0.0, %v3742
      %3744 = vmatmul.f32.gmra.mxu0 %v1427
      %v3745 = vpop.f32.mrf.mxu0
      %v3746 = vadd.f32 0.0, %v3745
      %3747 = vmatmul.f32.gmra.mxu0 %v1429
      %v3748 = vpop.f32.mrf.mxu0
      %v3749 = vadd.f32 0.0, %v3748
      %3750 = vmatmul.f32.gmra.mxu0 %v1431
      %v3751 = vpop.f32.mrf.mxu0
      %v3752 = vadd.f32 0.0, %v3751
      %3753 = vmatmul.f32.gmra.mxu0 %v1433
      %v3754 = vpop.f32.mrf.mxu0
      %v3755 = vadd.f32 0.0, %v3754
      %3756 = vmatmul.f32.gmra.mxu0 %v1435
      %v3757 = vpop.f32.mrf.mxu0
      %v3758 = vadd.f32 0.0, %v3757
      %3759 = vmatmul.f32.gmra.mxu0 %v1437
      %v3760 = vpop.f32.mrf.mxu0
      %v3761 = vadd.f32 0.0, %v3760
      %3762 = vmatmul.f32.gmra.mxu0 %v1439
      %v3763 = vpop.f32.mrf.mxu0
      %v3764 = vadd.f32 0.0, %v3763
      %3765 = vmatmul.f32.gmra.mxu0 %v1441
      %v3766 = vpop.f32.mrf.mxu0
      %v3767 = vadd.f32 0.0, %v3766
      %3768 = vmatmul.f32.gmra.mxu0 %v1443
      %v3769 = vpop.f32.mrf.mxu0
      %v3770 = vadd.f32 0.0, %v3769
      %3771 = vmatmul.f32.gmra.mxu0 %v1445
      %v3772 = vpop.f32.mrf.mxu0
      %v3773 = vadd.f32 0.0, %v3772
      %3774 = vmatmul.f32.gmra.mxu0 %v1447
      %v3775 = vpop.f32.mrf.mxu0
      %v3776 = vadd.f32 0.0, %v3775
      %3777 = vmatmul.f32.gmra.mxu0 %v1449
      %v3778 = vpop.f32.mrf.mxu0
      %v3779 = vadd.f32 0.0, %v3778
      %3780 = vmatmul.f32.gmra.mxu0 %v2742
      %v3781 = vpop.f32.mrf.mxu0
      %v3782 = vadd.f32 0.0, %v3781
      %3783 = vmatmul.f32.gmra.mxu0 %v2744
      %v3784 = vpop.f32.mrf.mxu0
      %v3785 = vadd.f32 0.0, %v3784
      %3786 = vmatmul.f32.gmra.mxu0 %v3676
      %v3787 = vpop.f32.mrf.mxu0
      %v3788 = vadd.f32 0.0, %v3787
      %3789 = vmatmul.f32.gmra.mxu0 %v3678
      %v3790 = vpop.f32.mrf.mxu0
      %v3791 = vadd.f32 0.0, %v3790
      %3792 = vdwg.mxu0
      %v3793 = vadd.f32 %v3642, %v3698
      %v3794 = vadd.f32 %v3643, %v3701
      %v3795 = vadd.f32 %v3644, %v3704
      %v3796 = vadd.f32 %v3645, %v3707
      %v3797 = vadd.f32 %v3646, %v3710
      %v3798 = vadd.f32 %v3647, %v3713
      %v3799 = vadd.f32 %v3648, %v3716
      %v3800 = vadd.f32 %v3649, %v3719
      %v3801 = vadd.f32 %v3650, %v3722
      %v3802 = vadd.f32 %v3651, %v3725
      %v3803 = vadd.f32 %v3652, %v3728
      %v3804 = vadd.f32 %v3653, %v3731
      %v3805 = vadd.f32 %v3654, %v3734
      %v3806 = vadd.f32 %v3655, %v3737
      %v3807 = vadd.f32 %v3656, %v3740
      %v3808 = vadd.f32 %v3657, %v3743
      %v3809 = vadd.f32 %v3658, %v3746
      %v3810 = vadd.f32 %v3659, %v3749
      %v3811 = vadd.f32 %v3660, %v3752
      %v3812 = vadd.f32 %v3661, %v3755
      %v3813 = vadd.f32 %v3662, %v3758
      %v3814 = vadd.f32 %v3663, %v3761
      %v3815 = vadd.f32 %v3664, %v3764
      %v3816 = vadd.f32 %v3665, %v3767
      %v3817 = vadd.f32 %v3666, %v3770
      %v3818 = vadd.f32 %v3667, %v3773
      %v3819 = vadd.f32 %v3668, %v3776
      %v3820 = vadd.f32 %v3669, %v3779
      %v3821 = vadd.f32 %v3670, %v3782
      %v3822 = vadd.f32 %v3671, %v3785
      %v3823 = vadd.f32 %v3672, %v3788
      %v3824 = vadd.f32 %v3673, %v3791
      %s3825 = scalar_lea.vmem %s3, 56
      %v3826 = vld [vmem:[%s3825] sm:$0xff]
      %v3827 = vsel %vm353, %v769, 0
      %v3829 = vsel %vm353, %v770, 0
      %3831 = vmatpush.msra.mxu0 0.0
      %3832 = vmatpush.msra.mxu0 0.0
      %3833 = vmatpush.msra.mxu0 0.0
      %3834 = vmatpush.msra.mxu0 0.0
      %3835 = vmatpush.msra.mxu0 0.0
      %3836 = vmatpush.msra.mxu0 0.0
      %3837 = vmatpush.msra.mxu0 0.0
      %3838 = vmatpush.msra.mxu0 0.0
      %3839 = vmatpush.msra.mxu0 0.0
      %3840 = vmatpush.msra.mxu0 0.0
      %3841 = vmatpush.msra.mxu0 0.0
      %3842 = vmatpush.msra.mxu0 0.0
      %3843 = vmatpush.msra.mxu0 0.0
      %3844 = vmatpush.msra.mxu0 0.0
      %3845 = vmatpush.msra.mxu0 0.0
      %3846 = vmatpush.msra.mxu0 %v3826
      %3847 = vmatmul.f32.gmra.mxu0 %v1606
      %v3848 = vpop.f32.mrf.mxu0
      %v3849 = vadd.f32 0.0, %v3848
      %3850 = vmatmul.f32.gmra.mxu0 %v1608
      %v3851 = vpop.f32.mrf.mxu0
      %v3852 = vadd.f32 0.0, %v3851
      %3853 = vmatmul.f32.gmra.mxu0 %v1610
      %v3854 = vpop.f32.mrf.mxu0
      %v3855 = vadd.f32 0.0, %v3854
      %3856 = vmatmul.f32.gmra.mxu0 %v1612
      %v3857 = vpop.f32.mrf.mxu0
      %v3858 = vadd.f32 0.0, %v3857
      %3859 = vmatmul.f32.gmra.mxu0 %v1614
      %v3860 = vpop.f32.mrf.mxu0
      %v3861 = vadd.f32 0.0, %v3860
      %3862 = vmatmul.f32.gmra.mxu0 %v1616
      %v3863 = vpop.f32.mrf.mxu0
      %v3864 = vadd.f32 0.0, %v3863
      %3865 = vmatmul.f32.gmra.mxu0 %v1618
      %v3866 = vpop.f32.mrf.mxu0
      %v3867 = vadd.f32 0.0, %v3866
      %3868 = vmatmul.f32.gmra.mxu0 %v1620
      %v3869 = vpop.f32.mrf.mxu0
      %v3870 = vadd.f32 0.0, %v3869
      %3871 = vmatmul.f32.gmra.mxu0 %v1622
      %v3872 = vpop.f32.mrf.mxu0
      %v3873 = vadd.f32 0.0, %v3872
      %3874 = vmatmul.f32.gmra.mxu0 %v1624
      %v3875 = vpop.f32.mrf.mxu0
      %v3876 = vadd.f32 0.0, %v3875
      %3877 = vmatmul.f32.gmra.mxu0 %v1626
      %v3878 = vpop.f32.mrf.mxu0
      %v3879 = vadd.f32 0.0, %v3878
      %3880 = vmatmul.f32.gmra.mxu0 %v1628
      %v3881 = vpop.f32.mrf.mxu0
      %v3882 = vadd.f32 0.0, %v3881
      %3883 = vmatmul.f32.gmra.mxu0 %v1630
      %v3884 = vpop.f32.mrf.mxu0
      %v3885 = vadd.f32 0.0, %v3884
      %3886 = vmatmul.f32.gmra.mxu0 %v1632
      %v3887 = vpop.f32.mrf.mxu0
      %v3888 = vadd.f32 0.0, %v3887
      %3889 = vmatmul.f32.gmra.mxu0 %v1634
      %v3890 = vpop.f32.mrf.mxu0
      %v3891 = vadd.f32 0.0, %v3890
      %3892 = vmatmul.f32.gmra.mxu0 %v1636
      %v3893 = vpop.f32.mrf.mxu0
      %v3894 = vadd.f32 0.0, %v3893
      %3895 = vmatmul.f32.gmra.mxu0 %v1638
      %v3896 = vpop.f32.mrf.mxu0
      %v3897 = vadd.f32 0.0, %v3896
      %3898 = vmatmul.f32.gmra.mxu0 %v1640
      %v3899 = vpop.f32.mrf.mxu0
      %v3900 = vadd.f32 0.0, %v3899
      %3901 = vmatmul.f32.gmra.mxu0 %v1642
      %v3902 = vpop.f32.mrf.mxu0
      %v3903 = vadd.f32 0.0, %v3902
      %3904 = vmatmul.f32.gmra.mxu0 %v1644
      %v3905 = vpop.f32.mrf.mxu0
      %v3906 = vadd.f32 0.0, %v3905
      %3907 = vmatmul.f32.gmra.mxu0 %v1646
      %v3908 = vpop.f32.mrf.mxu0
      %v3909 = vadd.f32 0.0, %v3908
      %3910 = vmatmul.f32.gmra.mxu0 %v1648
      %v3911 = vpop.f32.mrf.mxu0
      %v3912 = vadd.f32 0.0, %v3911
      %3913 = vmatmul.f32.gmra.mxu0 %v1650
      %v3914 = vpop.f32.mrf.mxu0
      %v3915 = vadd.f32 0.0, %v3914
      %3916 = vmatmul.f32.gmra.mxu0 %v1652
      %v3917 = vpop.f32.mrf.mxu0
      %v3918 = vadd.f32 0.0, %v3917
      %3919 = vmatmul.f32.gmra.mxu0 %v1654
      %v3920 = vpop.f32.mrf.mxu0
      %v3921 = vadd.f32 0.0, %v3920
      %3922 = vmatmul.f32.gmra.mxu0 %v1656
      %v3923 = vpop.f32.mrf.mxu0
      %v3924 = vadd.f32 0.0, %v3923
      %3925 = vmatmul.f32.gmra.mxu0 %v1658
      %v3926 = vpop.f32.mrf.mxu0
      %v3927 = vadd.f32 0.0, %v3926
      %3928 = vmatmul.f32.gmra.mxu0 %v1660
      %v3929 = vpop.f32.mrf.mxu0
      %v3930 = vadd.f32 0.0, %v3929
      %3931 = vmatmul.f32.gmra.mxu0 %v2893
      %v3932 = vpop.f32.mrf.mxu0
      %v3933 = vadd.f32 0.0, %v3932
      %3934 = vmatmul.f32.gmra.mxu0 %v2895
      %v3935 = vpop.f32.mrf.mxu0
      %v3936 = vadd.f32 0.0, %v3935
      %3937 = vmatmul.f32.gmra.mxu0 %v3827
      %v3938 = vpop.f32.mrf.mxu0
      %v3939 = vadd.f32 0.0, %v3938
      %3940 = vmatmul.f32.gmra.mxu0 %v3829
      %v3941 = vpop.f32.mrf.mxu0
      %v3942 = vadd.f32 0.0, %v3941
      %3943 = vdwg.mxu0
      %v3944 = vadd.f32 %v3793, %v3849
      %v3945 = vadd.f32 %v3794, %v3852
      %v3946 = vadd.f32 %v3795, %v3855
      %v3947 = vadd.f32 %v3796, %v3858
      %v3948 = vadd.f32 %v3797, %v3861
      %v3949 = vadd.f32 %v3798, %v3864
      %v3950 = vadd.f32 %v3799, %v3867
      %v3951 = vadd.f32 %v3800, %v3870
      %v3952 = vadd.f32 %v3801, %v3873
      %v3953 = vadd.f32 %v3802, %v3876
      %v3954 = vadd.f32 %v3803, %v3879
      %v3955 = vadd.f32 %v3804, %v3882
      %v3956 = vadd.f32 %v3805, %v3885
      %v3957 = vadd.f32 %v3806, %v3888
      %v3958 = vadd.f32 %v3807, %v3891
      %v3959 = vadd.f32 %v3808, %v3894
      %v3960 = vadd.f32 %v3809, %v3897
      %v3961 = vadd.f32 %v3810, %v3900
      %v3962 = vadd.f32 %v3811, %v3903
      %v3963 = vadd.f32 %v3812, %v3906
      %v3964 = vadd.f32 %v3813, %v3909
      %v3965 = vadd.f32 %v3814, %v3912
      %v3966 = vadd.f32 %v3815, %v3915
      %v3967 = vadd.f32 %v3816, %v3918
      %v3968 = vadd.f32 %v3817, %v3921
      %v3969 = vadd.f32 %v3818, %v3924
      %v3970 = vadd.f32 %v3819, %v3927
      %v3971 = vadd.f32 %v3820, %v3930
      %v3972 = vadd.f32 %v3821, %v3933
      %v3973 = vadd.f32 %v3822, %v3936
      %v3974 = vadd.f32 %v3823, %v3939
      %v3975 = vadd.f32 %v3824, %v3942
      %v3977 = vrot.slane %v697, 1
      %v3978 = vrot.slane %v698, 1
      %v3979 = vsel %vm1823, %v3977, %v3978
      %v3980 = vrot.slane %v699, 1
      %v3981 = vsel %vm1823, %v3978, %v3980
      %v3983 = vrot.slane %v769, 1
      %v3984 = vrot.slane %v770, 1
      %v3985 = vsel %vm1823, %v3983, %v3984
      %v3986 = vrot.slane %v771, 1
      %v3987 = vsel %vm1823, %v3984, %v3986
      %s3988 = scalar_lea.vmem %s2, 64
      %v3989 = vld [vmem:[%s3988] sm:$0xff]
      %v3990 = vsel %vm353, %v3979, 0
      %v3992 = vsel %vm353, %v3981, 0
      %3994 = vmatpush.msra.mxu0 0.0
      %3995 = vmatpush.msra.mxu0 0.0
      %3996 = vmatpush.msra.mxu0 0.0
      %3997 = vmatpush.msra.mxu0 0.0
      %3998 = vmatpush.msra.mxu0 0.0
      %3999 = vmatpush.msra.mxu0 0.0
      %4000 = vmatpush.msra.mxu0 0.0
      %4001 = vmatpush.msra.mxu0 0.0
      %4002 = vmatpush.msra.mxu0 0.0
      %4003 = vmatpush.msra.mxu0 0.0
      %4004 = vmatpush.msra.mxu0 0.0
      %4005 = vmatpush.msra.mxu0 0.0
      %4006 = vmatpush.msra.mxu0 0.0
      %4007 = vmatpush.msra.mxu0 0.0
      %4008 = vmatpush.msra.mxu0 0.0
      %4009 = vmatpush.msra.mxu0 %v3989
      %4010 = vmatmul.f32.gmra.mxu0 %v2010
      %v4011 = vpop.f32.mrf.mxu0
      %v4012 = vadd.f32 0.0, %v4011
      %4013 = vmatmul.f32.gmra.mxu0 %v2012
      %v4014 = vpop.f32.mrf.mxu0
      %v4015 = vadd.f32 0.0, %v4014
      %4016 = vmatmul.f32.gmra.mxu0 %v2014
      %v4017 = vpop.f32.mrf.mxu0
      %v4018 = vadd.f32 0.0, %v4017
      %4019 = vmatmul.f32.gmra.mxu0 %v2016
      %v4020 = vpop.f32.mrf.mxu0
      %v4021 = vadd.f32 0.0, %v4020
      %4022 = vmatmul.f32.gmra.mxu0 %v2018
      %v4023 = vpop.f32.mrf.mxu0
      %v4024 = vadd.f32 0.0, %v4023
      %4025 = vmatmul.f32.gmra.mxu0 %v2020
      %v4026 = vpop.f32.mrf.mxu0
      %v4027 = vadd.f32 0.0, %v4026
      %4028 = vmatmul.f32.gmra.mxu0 %v2022
      %v4029 = vpop.f32.mrf.mxu0
      %v4030 = vadd.f32 0.0, %v4029
      %4031 = vmatmul.f32.gmra.mxu0 %v2024
      %v4032 = vpop.f32.mrf.mxu0
      %v4033 = vadd.f32 0.0, %v4032
      %4034 = vmatmul.f32.gmra.mxu0 %v2026
      %v4035 = vpop.f32.mrf.mxu0
      %v4036 = vadd.f32 0.0, %v4035
      %4037 = vmatmul.f32.gmra.mxu0 %v2028
      %v4038 = vpop.f32.mrf.mxu0
      %v4039 = vadd.f32 0.0, %v4038
      %4040 = vmatmul.f32.gmra.mxu0 %v2030
      %v4041 = vpop.f32.mrf.mxu0
      %v4042 = vadd.f32 0.0, %v4041
      %4043 = vmatmul.f32.gmra.mxu0 %v2032
      %v4044 = vpop.f32.mrf.mxu0
      %v4045 = vadd.f32 0.0, %v4044
      %4046 = vmatmul.f32.gmra.mxu0 %v2034
      %v4047 = vpop.f32.mrf.mxu0
      %v4048 = vadd.f32 0.0, %v4047
      %4049 = vmatmul.f32.gmra.mxu0 %v2036
      %v4050 = vpop.f32.mrf.mxu0
      %v4051 = vadd.f32 0.0, %v4050
      %4052 = vmatmul.f32.gmra.mxu0 %v2038
      %v4053 = vpop.f32.mrf.mxu0
      %v4054 = vadd.f32 0.0, %v4053
      %4055 = vmatmul.f32.gmra.mxu0 %v2040
      %v4056 = vpop.f32.mrf.mxu0
      %v4057 = vadd.f32 0.0, %v4056
      %4058 = vmatmul.f32.gmra.mxu0 %v2042
      %v4059 = vpop.f32.mrf.mxu0
      %v4060 = vadd.f32 0.0, %v4059
      %4061 = vmatmul.f32.gmra.mxu0 %v2044
      %v4062 = vpop.f32.mrf.mxu0
      %v4063 = vadd.f32 0.0, %v4062
      %4064 = vmatmul.f32.gmra.mxu0 %v2046
      %v4065 = vpop.f32.mrf.mxu0
      %v4066 = vadd.f32 0.0, %v4065
      %4067 = vmatmul.f32.gmra.mxu0 %v2048
      %v4068 = vpop.f32.mrf.mxu0
      %v4069 = vadd.f32 0.0, %v4068
      %4070 = vmatmul.f32.gmra.mxu0 %v2050
      %v4071 = vpop.f32.mrf.mxu0
      %v4072 = vadd.f32 0.0, %v4071
      %4073 = vmatmul.f32.gmra.mxu0 %v2052
      %v4074 = vpop.f32.mrf.mxu0
      %v4075 = vadd.f32 0.0, %v4074
      %4076 = vmatmul.f32.gmra.mxu0 %v2054
      %v4077 = vpop.f32.mrf.mxu0
      %v4078 = vadd.f32 0.0, %v4077
      %4079 = vmatmul.f32.gmra.mxu0 %v2056
      %v4080 = vpop.f32.mrf.mxu0
      %v4081 = vadd.f32 0.0, %v4080
      %4082 = vmatmul.f32.gmra.mxu0 %v2058
      %v4083 = vpop.f32.mrf.mxu0
      %v4084 = vadd.f32 0.0, %v4083
      %4085 = vmatmul.f32.gmra.mxu0 %v2060
      %v4086 = vpop.f32.mrf.mxu0
      %v4087 = vadd.f32 0.0, %v4086
      %4088 = vmatmul.f32.gmra.mxu0 %v2062
      %v4089 = vpop.f32.mrf.mxu0
      %v4090 = vadd.f32 0.0, %v4089
      %4091 = vmatmul.f32.gmra.mxu0 %v2064
      %v4092 = vpop.f32.mrf.mxu0
      %v4093 = vadd.f32 0.0, %v4092
      %4094 = vmatmul.f32.gmra.mxu0 %v3056
      %v4095 = vpop.f32.mrf.mxu0
      %v4096 = vadd.f32 0.0, %v4095
      %4097 = vmatmul.f32.gmra.mxu0 %v3058
      %v4098 = vpop.f32.mrf.mxu0
      %v4099 = vadd.f32 0.0, %v4098
      %4100 = vmatmul.f32.gmra.mxu0 %v3990
      %v4101 = vpop.f32.mrf.mxu0
      %v4102 = vadd.f32 0.0, %v4101
      %4103 = vmatmul.f32.gmra.mxu0 %v3992
      %v4104 = vpop.f32.mrf.mxu0
      %v4105 = vadd.f32 0.0, %v4104
      %4106 = vdwg.mxu0
      %v4107 = vadd.f32 %v3944, %v4012
      %v4108 = vadd.f32 %v3945, %v4015
      %v4109 = vadd.f32 %v3946, %v4018
      %v4110 = vadd.f32 %v3947, %v4021
      %v4111 = vadd.f32 %v3948, %v4024
      %v4112 = vadd.f32 %v3949, %v4027
      %v4113 = vadd.f32 %v3950, %v4030
      %v4114 = vadd.f32 %v3951, %v4033
      %v4115 = vadd.f32 %v3952, %v4036
      %v4116 = vadd.f32 %v3953, %v4039
      %v4117 = vadd.f32 %v3954, %v4042
      %v4118 = vadd.f32 %v3955, %v4045
      %v4119 = vadd.f32 %v3956, %v4048
      %v4120 = vadd.f32 %v3957, %v4051
      %v4121 = vadd.f32 %v3958, %v4054
      %v4122 = vadd.f32 %v3959, %v4057
      %v4123 = vadd.f32 %v3960, %v4060
      %v4124 = vadd.f32 %v3961, %v4063
      %v4125 = vadd.f32 %v3962, %v4066
      %v4126 = vadd.f32 %v3963, %v4069
      %v4127 = vadd.f32 %v3964, %v4072
      %v4128 = vadd.f32 %v3965, %v4075
      %v4129 = vadd.f32 %v3966, %v4078
      %v4130 = vadd.f32 %v3967, %v4081
      %v4131 = vadd.f32 %v3968, %v4084
      %v4132 = vadd.f32 %v3969, %v4087
      %v4133 = vadd.f32 %v3970, %v4090
      %v4134 = vadd.f32 %v3971, %v4093
      %v4135 = vadd.f32 %v3972, %v4096
      %v4136 = vadd.f32 %v3973, %v4099
      %v4137 = vadd.f32 %v3974, %v4102
      %v4138 = vadd.f32 %v3975, %v4105
      %s4139 = scalar_lea.vmem %s3, 64
      %v4140 = vld [vmem:[%s4139] sm:$0xff]
      %v4141 = vsel %vm353, %v3985, 0
      %v4143 = vsel %vm353, %v3987, 0
      %4145 = vmatpush.msra.mxu0 0.0
      %4146 = vmatpush.msra.mxu0 0.0
      %4147 = vmatpush.msra.mxu0 0.0
      %4148 = vmatpush.msra.mxu0 0.0
      %4149 = vmatpush.msra.mxu0 0.0
      %4150 = vmatpush.msra.mxu0 0.0
      %4151 = vmatpush.msra.mxu0 0.0
      %4152 = vmatpush.msra.mxu0 0.0
      %4153 = vmatpush.msra.mxu0 0.0
      %4154 = vmatpush.msra.mxu0 0.0
      %4155 = vmatpush.msra.mxu0 0.0
      %4156 = vmatpush.msra.mxu0 0.0
      %4157 = vmatpush.msra.mxu0 0.0
      %4158 = vmatpush.msra.mxu0 0.0
      %4159 = vmatpush.msra.mxu0 0.0
      %4160 = vmatpush.msra.mxu0 %v4140
      %4161 = vmatmul.f32.gmra.mxu0 %v2221
      %v4162 = vpop.f32.mrf.mxu0
      %v4163 = vadd.f32 0.0, %v4162
      %4164 = vmatmul.f32.gmra.mxu0 %v2223
      %v4165 = vpop.f32.mrf.mxu0
      %v4166 = vadd.f32 0.0, %v4165
      %4167 = vmatmul.f32.gmra.mxu0 %v2225
      %v4168 = vpop.f32.mrf.mxu0
      %v4169 = vadd.f32 0.0, %v4168
      %4170 = vmatmul.f32.gmra.mxu0 %v2227
      %v4171 = vpop.f32.mrf.mxu0
      %v4172 = vadd.f32 0.0, %v4171
      %4173 = vmatmul.f32.gmra.mxu0 %v2229
      %v4174 = vpop.f32.mrf.mxu0
      %v4175 = vadd.f32 0.0, %v4174
      %4176 = vmatmul.f32.gmra.mxu0 %v2231
      %v4177 = vpop.f32.mrf.mxu0
      %v4178 = vadd.f32 0.0, %v4177
      %4179 = vmatmul.f32.gmra.mxu0 %v2233
      %v4180 = vpop.f32.mrf.mxu0
      %v4181 = vadd.f32 0.0, %v4180
      %4182 = vmatmul.f32.gmra.mxu0 %v2235
      %v4183 = vpop.f32.mrf.mxu0
      %v4184 = vadd.f32 0.0, %v4183
      %4185 = vmatmul.f32.gmra.mxu0 %v2237
      %v4186 = vpop.f32.mrf.mxu0
      %v4187 = vadd.f32 0.0, %v4186
      %4188 = vmatmul.f32.gmra.mxu0 %v2239
      %v4189 = vpop.f32.mrf.mxu0
      %v4190 = vadd.f32 0.0, %v4189
      %4191 = vmatmul.f32.gmra.mxu0 %v2241
      %v4192 = vpop.f32.mrf.mxu0
      %v4193 = vadd.f32 0.0, %v4192
      %4194 = vmatmul.f32.gmra.mxu0 %v2243
      %v4195 = vpop.f32.mrf.mxu0
      %v4196 = vadd.f32 0.0, %v4195
      %4197 = vmatmul.f32.gmra.mxu0 %v2245
      %v4198 = vpop.f32.mrf.mxu0
      %v4199 = vadd.f32 0.0, %v4198
      %4200 = vmatmul.f32.gmra.mxu0 %v2247
      %v4201 = vpop.f32.mrf.mxu0
      %v4202 = vadd.f32 0.0, %v4201
      %4203 = vmatmul.f32.gmra.mxu0 %v2249
      %v4204 = vpop.f32.mrf.mxu0
      %v4205 = vadd.f32 0.0, %v4204
      %4206 = vmatmul.f32.gmra.mxu0 %v2251
      %v4207 = vpop.f32.mrf.mxu0
      %v4208 = vadd.f32 0.0, %v4207
      %4209 = vmatmul.f32.gmra.mxu0 %v2253
      %v4210 = vpop.f32.mrf.mxu0
      %v4211 = vadd.f32 0.0, %v4210
      %4212 = vmatmul.f32.gmra.mxu0 %v2255
      %v4213 = vpop.f32.mrf.mxu0
      %v4214 = vadd.f32 0.0, %v4213
      %4215 = vmatmul.f32.gmra.mxu0 %v2257
      %v4216 = vpop.f32.mrf.mxu0
      %v4217 = vadd.f32 0.0, %v4216
      %4218 = vmatmul.f32.gmra.mxu0 %v2259
      %v4219 = vpop.f32.mrf.mxu0
      %v4220 = vadd.f32 0.0, %v4219
      %4221 = vmatmul.f32.gmra.mxu0 %v2261
      %v4222 = vpop.f32.mrf.mxu0
      %v4223 = vadd.f32 0.0, %v4222
      %4224 = vmatmul.f32.gmra.mxu0 %v2263
      %v4225 = vpop.f32.mrf.mxu0
      %v4226 = vadd.f32 0.0, %v4225
      %4227 = vmatmul.f32.gmra.mxu0 %v2265
      %v4228 = vpop.f32.mrf.mxu0
      %v4229 = vadd.f32 0.0, %v4228
      %4230 = vmatmul.f32.gmra.mxu0 %v2267
      %v4231 = vpop.f32.mrf.mxu0
      %v4232 = vadd.f32 0.0, %v4231
      %4233 = vmatmul.f32.gmra.mxu0 %v2269
      %v4234 = vpop.f32.mrf.mxu0
      %v4235 = vadd.f32 0.0, %v4234
      %4236 = vmatmul.f32.gmra.mxu0 %v2271
      %v4237 = vpop.f32.mrf.mxu0
      %v4238 = vadd.f32 0.0, %v4237
      %4239 = vmatmul.f32.gmra.mxu0 %v2273
      %v4240 = vpop.f32.mrf.mxu0
      %v4241 = vadd.f32 0.0, %v4240
      %4242 = vmatmul.f32.gmra.mxu0 %v2275
      %v4243 = vpop.f32.mrf.mxu0
      %v4244 = vadd.f32 0.0, %v4243
      %4245 = vmatmul.f32.gmra.mxu0 %v3207
      %v4246 = vpop.f32.mrf.mxu0
      %v4247 = vadd.f32 0.0, %v4246
      %4248 = vmatmul.f32.gmra.mxu0 %v3209
      %v4249 = vpop.f32.mrf.mxu0
      %v4250 = vadd.f32 0.0, %v4249
      %4251 = vmatmul.f32.gmra.mxu0 %v4141
      %v4252 = vpop.f32.mrf.mxu0
      %v4253 = vadd.f32 0.0, %v4252
      %4254 = vmatmul.f32.gmra.mxu0 %v4143
      %v4255 = vpop.f32.mrf.mxu0
      %v4256 = vadd.f32 0.0, %v4255
      %4257 = vdwg.mxu0
      %v4258 = vadd.f32 %v4107, %v4163
      %v4259 = vadd.f32 %v4108, %v4166
      %v4260 = vadd.f32 %v4109, %v4169
      %v4261 = vadd.f32 %v4110, %v4172
      %v4262 = vadd.f32 %v4111, %v4175
      %v4263 = vadd.f32 %v4112, %v4178
      %v4264 = vadd.f32 %v4113, %v4181
      %v4265 = vadd.f32 %v4114, %v4184
      %v4266 = vadd.f32 %v4115, %v4187
      %v4267 = vadd.f32 %v4116, %v4190
      %v4268 = vadd.f32 %v4117, %v4193
      %v4269 = vadd.f32 %v4118, %v4196
      %v4270 = vadd.f32 %v4119, %v4199
      %v4271 = vadd.f32 %v4120, %v4202
      %v4272 = vadd.f32 %v4121, %v4205
      %v4273 = vadd.f32 %v4122, %v4208
      %v4274 = vadd.f32 %v4123, %v4211
      %v4275 = vadd.f32 %v4124, %v4214
      %v4276 = vadd.f32 %v4125, %v4217
      %v4277 = vadd.f32 %v4126, %v4220
      %v4278 = vadd.f32 %v4127, %v4223
      %v4279 = vadd.f32 %v4128, %v4226
      %v4280 = vadd.f32 %v4129, %v4229
      %v4281 = vadd.f32 %v4130, %v4232
      %v4282 = vadd.f32 %v4131, %v4235
      %v4283 = vadd.f32 %v4132, %v4238
      %v4284 = vadd.f32 %v4133, %v4241
      %v4285 = vadd.f32 %v4134, %v4244
      %v4286 = vadd.f32 %v4135, %v4247
      %v4287 = vadd.f32 %v4136, %v4250
      %v4288 = vadd.f32 %v4137, %v4253
      %v4289 = vadd.f32 %v4138, %v4256
      %v4290 = vld [vmem:[%s4] sm:$0x1]
      %v4292 = vperm.slane %v4290, 0
      %v4294 = vmul.f32 %v4258, %v4292
      %v4295 = vmul.f32 %v4259, %v4292
      %v4296 = vmul.f32 %v4260, %v4292
      %v4297 = vmul.f32 %v4261, %v4292
      %v4298 = vmul.f32 %v4262, %v4292
      %v4299 = vmul.f32 %v4263, %v4292
      %v4300 = vmul.f32 %v4264, %v4292
      %v4301 = vmul.f32 %v4265, %v4292
      %v4302 = vmul.f32 %v4266, %v4292
      %v4303 = vmul.f32 %v4267, %v4292
      %v4304 = vmul.f32 %v4268, %v4292
      %v4305 = vmul.f32 %v4269, %v4292
      %v4306 = vmul.f32 %v4270, %v4292
      %v4307 = vmul.f32 %v4271, %v4292
      %v4308 = vmul.f32 %v4272, %v4292
      %v4309 = vmul.f32 %v4273, %v4292
      %v4310 = vmul.f32 %v4274, %v4292
      %v4311 = vmul.f32 %v4275, %v4292
      %v4312 = vmul.f32 %v4276, %v4292
      %v4313 = vmul.f32 %v4277, %v4292
      %v4314 = vmul.f32 %v4278, %v4292
      %v4315 = vmul.f32 %v4279, %v4292
      %v4316 = vmul.f32 %v4280, %v4292
      %v4317 = vmul.f32 %v4281, %v4292
      %v4318 = vmul.f32 %v4282, %v4292
      %v4319 = vmul.f32 %v4283, %v4292
      %v4320 = vmul.f32 %v4284, %v4292
      %v4321 = vmul.f32 %v4285, %v4292
      %v4322 = vmul.f32 %v4286, %v4292
      %v4323 = vmul.f32 %v4287, %v4292
      %v4324 = vmul.f32 %v4288, %v4292
      %v4325 = vmul.f32 %v4289, %v4292
      %v4326 = vld [vmem:[%s5] sm:$0x1]
      %v4328 = vperm.slane %v4326, 0
      %v4330 = vadd.f32 %v4294, %v4328
      %v4331 = vadd.f32 %v4295, %v4328
      %v4332 = vadd.f32 %v4296, %v4328
      %v4333 = vadd.f32 %v4297, %v4328
      %v4334 = vadd.f32 %v4298, %v4328
      %v4335 = vadd.f32 %v4299, %v4328
      %v4336 = vadd.f32 %v4300, %v4328
      %v4337 = vadd.f32 %v4301, %v4328
      %v4338 = vadd.f32 %v4302, %v4328
      %v4339 = vadd.f32 %v4303, %v4328
      %v4340 = vadd.f32 %v4304, %v4328
      %v4341 = vadd.f32 %v4305, %v4328
      %v4342 = vadd.f32 %v4306, %v4328
      %v4343 = vadd.f32 %v4307, %v4328
      %v4344 = vadd.f32 %v4308, %v4328
      %v4345 = vadd.f32 %v4309, %v4328
      %v4346 = vadd.f32 %v4310, %v4328
      %v4347 = vadd.f32 %v4311, %v4328
      %v4348 = vadd.f32 %v4312, %v4328
      %v4349 = vadd.f32 %v4313, %v4328
      %v4350 = vadd.f32 %v4314, %v4328
      %v4351 = vadd.f32 %v4315, %v4328
      %v4352 = vadd.f32 %v4316, %v4328
      %v4353 = vadd.f32 %v4317, %v4328
      %v4354 = vadd.f32 %v4318, %v4328
      %v4355 = vadd.f32 %v4319, %v4328
      %v4356 = vadd.f32 %v4320, %v4328
      %v4357 = vadd.f32 %v4321, %v4328
      %v4358 = vadd.f32 %v4322, %v4328
      %v4359 = vadd.f32 %v4323, %v4328
      %v4360 = vadd.f32 %v4324, %v4328
      %v4361 = vadd.f32 %v4325, %v4328
      %v4362 = vmax.f32 %v4330, 0.0
      %v4363 = vmax.f32 %v4331, 0.0
      %v4364 = vmax.f32 %v4332, 0.0
      %v4365 = vmax.f32 %v4333, 0.0
      %v4366 = vmax.f32 %v4334, 0.0
      %v4367 = vmax.f32 %v4335, 0.0
      %v4368 = vmax.f32 %v4336, 0.0
      %v4369 = vmax.f32 %v4337, 0.0
      %v4370 = vmax.f32 %v4338, 0.0
      %v4371 = vmax.f32 %v4339, 0.0
      %v4372 = vmax.f32 %v4340, 0.0
      %v4373 = vmax.f32 %v4341, 0.0
      %v4374 = vmax.f32 %v4342, 0.0
      %v4375 = vmax.f32 %v4343, 0.0
      %v4376 = vmax.f32 %v4344, 0.0
      %v4377 = vmax.f32 %v4345, 0.0
      %v4378 = vmax.f32 %v4346, 0.0
      %v4379 = vmax.f32 %v4347, 0.0
      %v4380 = vmax.f32 %v4348, 0.0
      %v4381 = vmax.f32 %v4349, 0.0
      %v4382 = vmax.f32 %v4350, 0.0
      %v4383 = vmax.f32 %v4351, 0.0
      %v4384 = vmax.f32 %v4352, 0.0
      %v4385 = vmax.f32 %v4353, 0.0
      %v4386 = vmax.f32 %v4354, 0.0
      %v4387 = vmax.f32 %v4355, 0.0
      %v4388 = vmax.f32 %v4356, 0.0
      %v4389 = vmax.f32 %v4357, 0.0
      %v4390 = vmax.f32 %v4358, 0.0
      %v4391 = vmax.f32 %v4359, 0.0
      %v4392 = vmax.f32 %v4360, 0.0
      %v4393 = vmax.f32 %v4361, 0.0
      %vm4394 = vcmask 130048
      %4395 = vst.msk [vmem:[#allocation4] sm:$0xff] %vm4394, 0.0
      %4396 = vst.msk [vmem:[#allocation4 + $0x8] sm:$0xff] %vm4394, 0.0
      %4397 = vst.msk [vmem:[#allocation4 + $0x10] sm:$0xff] %vm4394, 0.0
      %4398 = vst.msk [vmem:[#allocation4 + $0x18] sm:$0xff] %vm4394, 0.0
      %4399 = vst.msk [vmem:[#allocation4 + $0x20] sm:$0xff] %vm4394, 0.0
      %4400 = vst.msk [vmem:[#allocation4 + $0x28] sm:$0xff] %vm4394, 0.0
      %4401 = vst.msk [vmem:[#allocation4 + $0x30] sm:$0xff] %vm4394, 0.0
      %4402 = vst.msk [vmem:[#allocation4 + $0x38] sm:$0xff] %vm4394, 0.0
      %4403 = vst.msk [vmem:[#allocation4 + $0x40] sm:$0xff] %vm4394, 0.0
      %4404 = vst.msk [vmem:[#allocation4 + $0x48] sm:$0xff] %vm4394, 0.0
      %4405 = vst.msk [vmem:[#allocation4 + $0x50] sm:$0xff] %vm4394, 0.0
      %4406 = vst.msk [vmem:[#allocation4 + $0x58] sm:$0xff] %vm4394, 0.0
      %4407 = vst.msk [vmem:[#allocation4 + $0x60] sm:$0xff] %vm4394, 0.0
      %4408 = vst.msk [vmem:[#allocation4 + $0x68] sm:$0xff] %vm4394, 0.0
      %4409 = vst.msk [vmem:[#allocation4 + $0x70] sm:$0xff] %vm4394, 0.0
      %4410 = vst.msk [vmem:[#allocation4 + $0x78] sm:$0xff] %vm4394, 0.0
      %4411 = vst.msk [vmem:[#allocation4 + $0x80] sm:$0xff] %vm4394, 0.0
      %4412 = vst.msk [vmem:[#allocation4 + $0x88] sm:$0xff] %vm4394, 0.0
      %4413 = vst.msk [vmem:[#allocation4 + $0x90] sm:$0xff] %vm4394, 0.0
      %4414 = vst.msk [vmem:[#allocation4 + $0x98] sm:$0xff] %vm4394, 0.0
      %4415 = vst.msk [vmem:[#allocation4 + $0xa0] sm:$0xff] %vm4394, 0.0
      %4416 = vst.msk [vmem:[#allocation4 + $0xa8] sm:$0xff] %vm4394, 0.0
      %4417 = vst.msk [vmem:[#allocation4 + $0xb0] sm:$0xff] %vm4394, 0.0
      %4418 = vst.msk [vmem:[#allocation4 + $0xb8] sm:$0xff] %vm4394, 0.0
      %4419 = vst.msk [vmem:[#allocation4 + $0xc0] sm:$0xff] %vm4394, 0.0
      %4420 = vst.msk [vmem:[#allocation4 + $0xc8] sm:$0xff] %vm4394, 0.0
      %4421 = vst.msk [vmem:[#allocation4 + $0xd0] sm:$0xff] %vm4394, 0.0
      %4422 = vst.msk [vmem:[#allocation4 + $0xd8] sm:$0xff] %vm4394, 0.0
      %4423 = vst.msk [vmem:[#allocation4 + $0xe0] sm:$0xff] %vm4394, 0.0
      %4424 = vst.msk [vmem:[#allocation4 + $0xe8] sm:$0xff] %vm4394, 0.0
      %4425 = vst.msk [vmem:[#allocation4 + $0xf0] sm:$0xff] %vm4394, 0.0
      %4426 = vst.msk [vmem:[#allocation4 + $0xf8] sm:$0xff] %vm4394, 0.0
      %4427 = vst.msk [vmem:[#allocation4 + $0x100] sm:$0xff] %vm4394, 0.0
      %4428 = vst.msk [vmem:[#allocation4 + $0x108] sm:$0xff] %vm4394, 0.0
      %4429 = vst.msk [vmem:[#allocation4 + $0x110] sm:$0xff] %vm4394, 0.0
      %4430 = vst.msk [vmem:[#allocation4 + $0x118] sm:$0xff] %vm4394, 0.0
      %4431 = vst.msk [vmem:[#allocation4 + $0x120] sm:$0xff] %vm4394, 0.0
      %4432 = vst.msk [vmem:[#allocation4 + $0x128] sm:$0xff] %vm4394, 0.0
      %4433 = vst.msk [vmem:[#allocation4 + $0x130] sm:$0xff] %vm4394, 0.0
      %4434 = vst.msk [vmem:[#allocation4 + $0x138] sm:$0xff] %vm4394, 0.0
      %4435 = vst.msk [vmem:[#allocation4 + $0x140] sm:$0xff] %vm4394, 0.0
      %4436 = vst.msk [vmem:[#allocation4 + $0x148] sm:$0xff] %vm4394, 0.0
      %4437 = vst.msk [vmem:[#allocation4 + $0x150] sm:$0xff] %vm4394, 0.0
      %4438 = vst.msk [vmem:[#allocation4 + $0x158] sm:$0xff] %vm4394, 0.0
      %4439 = vst.msk [vmem:[#allocation4 + $0x160] sm:$0xff] %vm4394, 0.0
      %4440 = vst.msk [vmem:[#allocation4 + $0x168] sm:$0xff] %vm4394, 0.0
      %4441 = vst.msk [vmem:[#allocation4 + $0x170] sm:$0xff] %vm4394, 0.0
      %4442 = vst.msk [vmem:[#allocation4 + $0x178] sm:$0xff] %vm4394, 0.0
      %4443 = vst.msk [vmem:[#allocation4 + $0x180] sm:$0xff] %vm4394, 0.0
      %4444 = vst.msk [vmem:[#allocation4 + $0x188] sm:$0xff] %vm4394, 0.0
      %4445 = vst.msk [vmem:[#allocation4 + $0x190] sm:$0xff] %vm4394, 0.0
      %4446 = vst.msk [vmem:[#allocation4 + $0x198] sm:$0xff] %vm4394, 0.0
      %4447 = vst.msk [vmem:[#allocation4 + $0x1a0] sm:$0xff] %vm4394, 0.0
      %4448 = vst.msk [vmem:[#allocation4 + $0x1a8] sm:$0xff] %vm4394, 0.0
      %4449 = vst.msk [vmem:[#allocation4 + $0x1b0] sm:$0xff] %vm4394, 0.0
      %4450 = vst.msk [vmem:[#allocation4 + $0x1b8] sm:$0xff] %vm4394, 0.0
      %4451 = vst.msk [vmem:[#allocation4 + $0x1c0] sm:$0xff] %vm4394, 0.0
      %4452 = vst.msk [vmem:[#allocation4 + $0x1c8] sm:$0xff] %vm4394, 0.0
      %4453 = vst.msk [vmem:[#allocation4 + $0x1d0] sm:$0xff] %vm4394, 0.0
      %4454 = vst.msk [vmem:[#allocation4 + $0x1d8] sm:$0xff] %vm4394, 0.0
      %4455 = vst.msk [vmem:[#allocation4 + $0x1e0] sm:$0xff] %vm4394, 0.0
      %4456 = vst.msk [vmem:[#allocation4 + $0x1e8] sm:$0xff] %vm4394, 0.0
      %4457 = vst.msk [vmem:[#allocation4 + $0x1f0] sm:$0xff] %vm4394, 0.0
      %4458 = vst.msk [vmem:[#allocation4 + $0x1f8] sm:$0xff] %vm4394, 0.0
      %4459 = vst.msk [vmem:[#allocation4 + $0x200] sm:$0xff] %vm4394, 0.0
      %4460 = vst.msk [vmem:[#allocation4 + $0x208] sm:$0xff] %vm4394, 0.0
      %4461 = vst.msk [vmem:[#allocation4 + $0x210] sm:$0xff] %vm4394, 0.0
      %4462 = vst.msk [vmem:[#allocation4 + $0x218] sm:$0xff] %vm4394, 0.0
      %4463 = vst.msk [vmem:[#allocation4 + $0x220] sm:$0xff] %vm4394, 0.0
      %4464 = vst.msk [vmem:[#allocation4 + $0x228] sm:$0xff] %vm4394, 0.0
      %4465 = vst.msk [vmem:[#allocation4 + $0x230] sm:$0xff] %vm4394, 0.0
      %4466 = vst.msk [vmem:[#allocation4 + $0x238] sm:$0xff] %vm4394, 0.0
      %s4467 = scalar_lea.vmem [#allocation4], 32
      %4468 = vst.msk [vmem:[%s4467 + $0x8] sm:$0xff] %vm4394, %v4362
      %4469 = vst.msk [vmem:[%s4467 + $0x10] sm:$0xff] %vm4394, %v4363
      %4470 = vst.msk [vmem:[%s4467 + $0x28] sm:$0xff] %vm4394, %v4364
      %4471 = vst.msk [vmem:[%s4467 + $0x30] sm:$0xff] %vm4394, %v4365
      %4472 = vst.msk [vmem:[%s4467 + $0x48] sm:$0xff] %vm4394, %v4366
      %4473 = vst.msk [vmem:[%s4467 + $0x50] sm:$0xff] %vm4394, %v4367
      %4474 = vst.msk [vmem:[%s4467 + $0x68] sm:$0xff] %vm4394, %v4368
      %4475 = vst.msk [vmem:[%s4467 + $0x70] sm:$0xff] %vm4394, %v4369
      %4476 = vst.msk [vmem:[%s4467 + $0x88] sm:$0xff] %vm4394, %v4370
      %4477 = vst.msk [vmem:[%s4467 + $0x90] sm:$0xff] %vm4394, %v4371
      %4478 = vst.msk [vmem:[%s4467 + $0xa8] sm:$0xff] %vm4394, %v4372
      %4479 = vst.msk [vmem:[%s4467 + $0xb0] sm:$0xff] %vm4394, %v4373
      %4480 = vst.msk [vmem:[%s4467 + $0xc8] sm:$0xff] %vm4394, %v4374
      %4481 = vst.msk [vmem:[%s4467 + $0xd0] sm:$0xff] %vm4394, %v4375
      %4482 = vst.msk [vmem:[%s4467 + $0xe8] sm:$0xff] %vm4394, %v4376
      %4483 = vst.msk [vmem:[%s4467 + $0xf0] sm:$0xff] %vm4394, %v4377
      %4484 = vst.msk [vmem:[%s4467 + $0x108] sm:$0xff] %vm4394, %v4378
      %4485 = vst.msk [vmem:[%s4467 + $0x110] sm:$0xff] %vm4394, %v4379
      %4486 = vst.msk [vmem:[%s4467 + $0x128] sm:$0xff] %vm4394, %v4380
      %4487 = vst.msk [vmem:[%s4467 + $0x130] sm:$0xff] %vm4394, %v4381
      %4488 = vst.msk [vmem:[%s4467 + $0x148] sm:$0xff] %vm4394, %v4382
      %4489 = vst.msk [vmem:[%s4467 + $0x150] sm:$0xff] %vm4394, %v4383
      %4490 = vst.msk [vmem:[%s4467 + $0x168] sm:$0xff] %vm4394, %v4384
      %4491 = vst.msk [vmem:[%s4467 + $0x170] sm:$0xff] %vm4394, %v4385
      %4492 = vst.msk [vmem:[%s4467 + $0x188] sm:$0xff] %vm4394, %v4386
      %4493 = vst.msk [vmem:[%s4467 + $0x190] sm:$0xff] %vm4394, %v4387
      %4494 = vst.msk [vmem:[%s4467 + $0x1a8] sm:$0xff] %vm4394, %v4388
      %4495 = vst.msk [vmem:[%s4467 + $0x1b0] sm:$0xff] %vm4394, %v4389
      %4496 = vst.msk [vmem:[%s4467 + $0x1c8] sm:$0xff] %vm4394, %v4390
      %4497 = vst.msk [vmem:[%s4467 + $0x1d0] sm:$0xff] %vm4394, %v4391
      %4498 = vst.msk [vmem:[%s4467 + $0x1e8] sm:$0xff] %vm4394, %v4392
      %4499 = vst.msk [vmem:[%s4467 + $0x1f0] sm:$0xff] %vm4394, %v4393
      %v4500 = vld [vmem:[#allocation4] sm:$0xff]
      %v4501 = vld [vmem:[#allocation4 + $0x8] sm:$0xff]
      %v4502 = vld [vmem:[#allocation4 + $0x10] sm:$0xff]
      %v4503 = vld [vmem:[#allocation4 + $0x18] sm:$0xff]
      %v4504 = vld [vmem:[#allocation4 + $0x20] sm:$0xff]
      %v4505 = vld [vmem:[#allocation4 + $0x28] sm:$0xff]
      %v4506 = vld [vmem:[#allocation4 + $0x30] sm:$0xff]
      %v4507 = vld [vmem:[#allocation4 + $0x38] sm:$0xff]
      %v4508 = vld [vmem:[#allocation4 + $0x40] sm:$0xff]
      %v4509 = vld [vmem:[#allocation4 + $0x48] sm:$0xff]
      %v4510 = vld [vmem:[#allocation4 + $0x50] sm:$0xff]
      %v4511 = vld [vmem:[#allocation4 + $0x58] sm:$0xff]
      %v4512 = vld [vmem:[#allocation4 + $0x60] sm:$0xff]
      %v4513 = vld [vmem:[#allocation4 + $0x68] sm:$0xff]
      %v4514 = vld [vmem:[#allocation4 + $0x70] sm:$0xff]
      %v4515 = vld [vmem:[#allocation4 + $0x78] sm:$0xff]
      %v4516 = vld [vmem:[#allocation4 + $0x80] sm:$0xff]
      %v4517 = vld [vmem:[#allocation4 + $0x88] sm:$0xff]
      %v4518 = vld [vmem:[#allocation4 + $0x90] sm:$0xff]
      %v4519 = vld [vmem:[#allocation4 + $0x98] sm:$0xff]
      %v4520 = vld [vmem:[#allocation4 + $0xa0] sm:$0xff]
      %v4521 = vld [vmem:[#allocation4 + $0xa8] sm:$0xff]
      %v4522 = vld [vmem:[#allocation4 + $0xb0] sm:$0xff]
      %v4523 = vld [vmem:[#allocation4 + $0xb8] sm:$0xff]
      %v4524 = vld [vmem:[#allocation4 + $0xc0] sm:$0xff]
      %v4525 = vld [vmem:[#allocation4 + $0xc8] sm:$0xff]
      %v4526 = vld [vmem:[#allocation4 + $0xd0] sm:$0xff]
      %v4527 = vld [vmem:[#allocation4 + $0xd8] sm:$0xff]
      %v4528 = vld [vmem:[#allocation4 + $0xe0] sm:$0xff]
      %v4529 = vld [vmem:[#allocation4 + $0xe8] sm:$0xff]
      %v4530 = vld [vmem:[#allocation4 + $0xf0] sm:$0xff]
      %v4531 = vld [vmem:[#allocation4 + $0xf8] sm:$0xff]
      %v4532 = vld [vmem:[#allocation4 + $0x100] sm:$0xff]
      %v4533 = vld [vmem:[#allocation4 + $0x108] sm:$0xff]
      %v4534 = vld [vmem:[#allocation4 + $0x110] sm:$0xff]
      %v4535 = vld [vmem:[#allocation4 + $0x118] sm:$0xff]
      %v4536 = vld [vmem:[#allocation4 + $0x120] sm:$0xff]
      %v4537 = vld [vmem:[#allocation4 + $0x128] sm:$0xff]
      %v4538 = vld [vmem:[#allocation4 + $0x130] sm:$0xff]
      %v4539 = vld [vmem:[#allocation4 + $0x138] sm:$0xff]
      %v4540 = vld [vmem:[#allocation4 + $0x140] sm:$0xff]
      %v4541 = vld [vmem:[#allocation4 + $0x148] sm:$0xff]
      %v4542 = vld [vmem:[#allocation4 + $0x150] sm:$0xff]
      %v4543 = vld [vmem:[#allocation4 + $0x158] sm:$0xff]
      %v4544 = vld [vmem:[#allocation4 + $0x160] sm:$0xff]
      %v4545 = vld [vmem:[#allocation4 + $0x168] sm:$0xff]
      %v4546 = vld [vmem:[#allocation4 + $0x170] sm:$0xff]
      %v4547 = vld [vmem:[#allocation4 + $0x178] sm:$0xff]
      %v4548 = vld [vmem:[#allocation4 + $0x180] sm:$0xff]
      %v4549 = vld [vmem:[#allocation4 + $0x188] sm:$0xff]
      %v4550 = vld [vmem:[#allocation4 + $0x190] sm:$0xff]
      %v4551 = vld [vmem:[#allocation4 + $0x198] sm:$0xff]
      %v4552 = vld [vmem:[#allocation4 + $0x1a0] sm:$0xff]
      %v4553 = vld [vmem:[#allocation4 + $0x1a8] sm:$0xff]
      %v4554 = vld [vmem:[#allocation4 + $0x1b0] sm:$0xff]
      %v4555 = vld [vmem:[#allocation4 + $0x1b8] sm:$0xff]
      %v4556 = vld [vmem:[#allocation4 + $0x1c0] sm:$0xff]
      %v4557 = vld [vmem:[#allocation4 + $0x1c8] sm:$0xff]
      %v4558 = vld [vmem:[#allocation4 + $0x1d0] sm:$0xff]
      %v4559 = vld [vmem:[#allocation4 + $0x1d8] sm:$0xff]
      %v4560 = vld [vmem:[#allocation4 + $0x1e0] sm:$0xff]
      %v4561 = vld [vmem:[#allocation4 + $0x1e8] sm:$0xff]
      %v4562 = vld [vmem:[#allocation4 + $0x1f0] sm:$0xff]
      %v4563 = vld [vmem:[#allocation4 + $0x1f8] sm:$0xff]
      %v4564 = vld [vmem:[#allocation4 + $0x200] sm:$0xff]
      %v4565 = vld [vmem:[#allocation4 + $0x208] sm:$0xff]
      %v4566 = vld [vmem:[#allocation4 + $0x210] sm:$0xff]
      %v4567 = vld [vmem:[#allocation4 + $0x218] sm:$0xff]
      %v4568 = vld [vmem:[#allocation4 + $0x220] sm:$0xff]
      %v4569 = vld [vmem:[#allocation4 + $0x228] sm:$0xff]
      %v4570 = vld [vmem:[#allocation4 + $0x230] sm:$0xff]
      %v4571 = vld [vmem:[#allocation4 + $0x238] sm:$0xff]
      %v4620 = vrot.slane %v4500, 7
      %v4621 = vrot.slane %v4501, 7
      %v4622 = vsel %vm820, %v4620, %v4621
      %v4623 = vrot.slane %v4502, 7
      %v4624 = vsel %vm820, %v4621, %v4623
      %v4625 = vrot.slane %v4504, 7
      %v4626 = vrot.slane %v4505, 7
      %v4627 = vsel %vm820, %v4625, %v4626
      %v4628 = vrot.slane %v4506, 7
      %v4629 = vsel %vm820, %v4626, %v4628
      %v4630 = vrot.slane %v4508, 7
      %v4631 = vrot.slane %v4509, 7
      %v4632 = vsel %vm820, %v4630, %v4631
      %v4633 = vrot.slane %v4510, 7
      %v4634 = vsel %vm820, %v4631, %v4633
      %v4635 = vrot.slane %v4512, 7
      %v4636 = vrot.slane %v4513, 7
      %v4637 = vsel %vm820, %v4635, %v4636
      %v4638 = vrot.slane %v4514, 7
      %v4639 = vsel %vm820, %v4636, %v4638
      %v4640 = vrot.slane %v4516, 7
      %v4641 = vrot.slane %v4517, 7
      %v4642 = vsel %vm820, %v4640, %v4641
      %v4643 = vrot.slane %v4518, 7
      %v4644 = vsel %vm820, %v4641, %v4643
      %v4645 = vrot.slane %v4520, 7
      %v4646 = vrot.slane %v4521, 7
      %v4647 = vsel %vm820, %v4645, %v4646
      %v4648 = vrot.slane %v4522, 7
      %v4649 = vsel %vm820, %v4646, %v4648
      %v4650 = vrot.slane %v4524, 7
      %v4651 = vrot.slane %v4525, 7
      %v4652 = vsel %vm820, %v4650, %v4651
      %v4653 = vrot.slane %v4526, 7
      %v4654 = vsel %vm820, %v4651, %v4653
      %v4655 = vrot.slane %v4528, 7
      %v4656 = vrot.slane %v4529, 7
      %v4657 = vsel %vm820, %v4655, %v4656
      %v4658 = vrot.slane %v4530, 7
      %v4659 = vsel %vm820, %v4656, %v4658
      %v4660 = vrot.slane %v4532, 7
      %v4661 = vrot.slane %v4533, 7
      %v4662 = vsel %vm820, %v4660, %v4661
      %v4663 = vrot.slane %v4534, 7
      %v4664 = vsel %vm820, %v4661, %v4663
      %v4665 = vrot.slane %v4536, 7
      %v4666 = vrot.slane %v4537, 7
      %v4667 = vsel %vm820, %v4665, %v4666
      %v4668 = vrot.slane %v4538, 7
      %v4669 = vsel %vm820, %v4666, %v4668
      %v4670 = vrot.slane %v4540, 7
      %v4671 = vrot.slane %v4541, 7
      %v4672 = vsel %vm820, %v4670, %v4671
      %v4673 = vrot.slane %v4542, 7
      %v4674 = vsel %vm820, %v4671, %v4673
      %v4675 = vrot.slane %v4544, 7
      %v4676 = vrot.slane %v4545, 7
      %v4677 = vsel %vm820, %v4675, %v4676
      %v4678 = vrot.slane %v4546, 7
      %v4679 = vsel %vm820, %v4676, %v4678
      %v4680 = vrot.slane %v4548, 7
      %v4681 = vrot.slane %v4549, 7
      %v4682 = vsel %vm820, %v4680, %v4681
      %v4683 = vrot.slane %v4550, 7
      %v4684 = vsel %vm820, %v4681, %v4683
      %v4685 = vrot.slane %v4552, 7
      %v4686 = vrot.slane %v4553, 7
      %v4687 = vsel %vm820, %v4685, %v4686
      %v4688 = vrot.slane %v4554, 7
      %v4689 = vsel %vm820, %v4686, %v4688
      %v4690 = vrot.slane %v4556, 7
      %v4691 = vrot.slane %v4557, 7
      %v4692 = vsel %vm820, %v4690, %v4691
      %v4693 = vrot.slane %v4558, 7
      %v4694 = vsel %vm820, %v4691, %v4693
      %v4695 = vrot.slane %v4560, 7
      %v4696 = vrot.slane %v4561, 7
      %v4697 = vsel %vm820, %v4695, %v4696
      %v4698 = vrot.slane %v4562, 7
      %v4699 = vsel %vm820, %v4696, %v4698
      %v4700 = vld [vmem:[%s6] sm:$0xff]
      %v4701 = vld [vmem:[%s6 + $0x8] sm:$0xff]
      %s4702 = scalar_lea.vmem %s6, 16
      %v4703 = vld [vmem:[%s4702] sm:$0xff]
      %v4704 = vld [vmem:[%s4702 + $0x8] sm:$0xff]
      %v4705 = vsel %vm4394, %v4501, 0
      %v4707 = vsel %vm4394, %v4502, 0
      %v4709 = vsel %vm4394, %v4505, 0
      %v4711 = vsel %vm4394, %v4506, 0
      %v4713 = vsel %vm4394, %v4509, 0
      %v4715 = vsel %vm4394, %v4510, 0
      %v4717 = vsel %vm4394, %v4513, 0
      %v4719 = vsel %vm4394, %v4514, 0
      %v4721 = vsel %vm4394, %v4517, 0
      %v4723 = vsel %vm4394, %v4518, 0
      %v4725 = vsel %vm4394, %v4521, 0
      %v4727 = vsel %vm4394, %v4522, 0
      %v4729 = vsel %vm4394, %v4525, 0
      %v4731 = vsel %vm4394, %v4526, 0
      %v4733 = vsel %vm4394, %v4529, 0
      %v4735 = vsel %vm4394, %v4530, 0
      %v4737 = vsel %vm4394, %v4533, 0
      %v4739 = vsel %vm4394, %v4534, 0
      %v4741 = vsel %vm4394, %v4537, 0
      %v4743 = vsel %vm4394, %v4538, 0
      %v4745 = vsel %vm4394, %v4541, 0
      %v4747 = vsel %vm4394, %v4542, 0
      %v4749 = vsel %vm4394, %v4545, 0
      %v4751 = vsel %vm4394, %v4546, 0
      %v4753 = vsel %vm4394, %v4549, 0
      %v4755 = vsel %vm4394, %v4550, 0
      %v4757 = vsel %vm4394, %v4553, 0
      %v4759 = vsel %vm4394, %v4554, 0
      %v4761 = vsel %vm4394, %v4557, 0
      %v4763 = vsel %vm4394, %v4558, 0
      %v4765 = vsel %vm4394, %v4561, 0
      %v4767 = vsel %vm4394, %v4562, 0
      %4769 = vmatpush.msra.mxu0 0.0
      %4770 = vmatpush.msra.mxu0 0.0
      %4771 = vmatpush.msra.mxu0 0.0
      %4772 = vmatpush.msra.mxu0 0.0
      %4773 = vmatpush.msra.mxu0 0.0
      %4774 = vmatpush.msra.mxu0 0.0
      %4775 = vmatpush.msra.mxu0 0.0
      %4776 = vmatpush.msra.mxu0 0.0
      %4777 = vmatpush.msra.mxu0 0.0
      %4778 = vmatpush.msra.mxu0 0.0
      %4779 = vmatpush.msra.mxu0 0.0
      %4780 = vmatpush.msra.mxu0 0.0
      %4781 = vmatpush.msra.mxu0 0.0
      %4782 = vmatpush.msra.mxu0 0.0
      %4783 = vmatpush.msra.mxu0 %v4704
      %4784 = vmatpush.msra.mxu0 %v4703
      %4785 = vmatmul.f32.gmra.mxu0 %v4705
      %v4786 = vpop.f32.mrf.mxu0
      %v4787 = vadd.f32 0.0, %v4786
      %4788 = vmatmul.f32.gmra.mxu0 %v4707
      %v4789 = vpop.f32.mrf.mxu0
      %v4790 = vadd.f32 0.0, %v4789
      %4791 = vmatmul.f32.gmra.mxu0 %v4709
      %v4792 = vpop.f32.mrf.mxu0
      %v4793 = vadd.f32 0.0, %v4792
      %4794 = vmatmul.f32.gmra.mxu0 %v4711
      %v4795 = vpop.f32.mrf.mxu0
      %v4796 = vadd.f32 0.0, %v4795
      %4797 = vmatmul.f32.gmra.mxu0 %v4713
      %v4798 = vpop.f32.mrf.mxu0
      %v4799 = vadd.f32 0.0, %v4798
      %4800 = vmatmul.f32.gmra.mxu0 %v4715
      %v4801 = vpop.f32.mrf.mxu0
      %v4802 = vadd.f32 0.0, %v4801
      %4803 = vmatmul.f32.gmra.mxu0 %v4717
      %v4804 = vpop.f32.mrf.mxu0
      %v4805 = vadd.f32 0.0, %v4804
      %4806 = vmatmul.f32.gmra.mxu0 %v4719
      %v4807 = vpop.f32.mrf.mxu0
      %v4808 = vadd.f32 0.0, %v4807
      %4809 = vmatmul.f32.gmra.mxu0 %v4721
      %v4810 = vpop.f32.mrf.mxu0
      %v4811 = vadd.f32 0.0, %v4810
      %4812 = vmatmul.f32.gmra.mxu0 %v4723
      %v4813 = vpop.f32.mrf.mxu0
      %v4814 = vadd.f32 0.0, %v4813
      %4815 = vmatmul.f32.gmra.mxu0 %v4725
      %v4816 = vpop.f32.mrf.mxu0
      %v4817 = vadd.f32 0.0, %v4816
      %4818 = vmatmul.f32.gmra.mxu0 %v4727
      %v4819 = vpop.f32.mrf.mxu0
      %v4820 = vadd.f32 0.0, %v4819
      %4821 = vmatmul.f32.gmra.mxu0 %v4729
      %v4822 = vpop.f32.mrf.mxu0
      %v4823 = vadd.f32 0.0, %v4822
      %4824 = vmatmul.f32.gmra.mxu0 %v4731
      %v4825 = vpop.f32.mrf.mxu0
      %v4826 = vadd.f32 0.0, %v4825
      %4827 = vmatmul.f32.gmra.mxu0 %v4733
      %v4828 = vpop.f32.mrf.mxu0
      %v4829 = vadd.f32 0.0, %v4828
      %4830 = vmatmul.f32.gmra.mxu0 %v4735
      %v4831 = vpop.f32.mrf.mxu0
      %v4832 = vadd.f32 0.0, %v4831
      %4833 = vmatmul.f32.gmra.mxu0 %v4737
      %v4834 = vpop.f32.mrf.mxu0
      %v4835 = vadd.f32 0.0, %v4834
      %4836 = vmatmul.f32.gmra.mxu0 %v4739
      %v4837 = vpop.f32.mrf.mxu0
      %v4838 = vadd.f32 0.0, %v4837
      %4839 = vmatmul.f32.gmra.mxu0 %v4741
      %v4840 = vpop.f32.mrf.mxu0
      %v4841 = vadd.f32 0.0, %v4840
      %4842 = vmatmul.f32.gmra.mxu0 %v4743
      %v4843 = vpop.f32.mrf.mxu0
      %v4844 = vadd.f32 0.0, %v4843
      %4845 = vmatmul.f32.gmra.mxu0 %v4745
      %v4846 = vpop.f32.mrf.mxu0
      %v4847 = vadd.f32 0.0, %v4846
      %4848 = vmatmul.f32.gmra.mxu0 %v4747
      %v4849 = vpop.f32.mrf.mxu0
      %v4850 = vadd.f32 0.0, %v4849
      %4851 = vmatmul.f32.gmra.mxu0 %v4749
      %v4852 = vpop.f32.mrf.mxu0
      %v4853 = vadd.f32 0.0, %v4852
      %4854 = vmatmul.f32.gmra.mxu0 %v4751
      %v4855 = vpop.f32.mrf.mxu0
      %v4856 = vadd.f32 0.0, %v4855
      %4857 = vmatmul.f32.gmra.mxu0 %v4753
      %v4858 = vpop.f32.mrf.mxu0
      %v4859 = vadd.f32 0.0, %v4858
      %4860 = vmatmul.f32.gmra.mxu0 %v4755
      %v4861 = vpop.f32.mrf.mxu0
      %v4862 = vadd.f32 0.0, %v4861
      %4863 = vmatmul.f32.gmra.mxu0 %v4757
      %v4864 = vpop.f32.mrf.mxu0
      %v4865 = vadd.f32 0.0, %v4864
      %4866 = vmatmul.f32.gmra.mxu0 %v4759
      %v4867 = vpop.f32.mrf.mxu0
      %v4868 = vadd.f32 0.0, %v4867
      %4869 = vmatmul.f32.gmra.mxu0 %v4761
      %v4870 = vpop.f32.mrf.mxu0
      %v4871 = vadd.f32 0.0, %v4870
      %4872 = vmatmul.f32.gmra.mxu0 %v4763
      %v4873 = vpop.f32.mrf.mxu0
      %v4874 = vadd.f32 0.0, %v4873
      %4875 = vmatmul.f32.gmra.mxu0 %v4765
      %v4876 = vpop.f32.mrf.mxu0
      %v4877 = vadd.f32 0.0, %v4876
      %4878 = vmatmul.f32.gmra.mxu0 %v4767
      %v4879 = vpop.f32.mrf.mxu0
      %v4880 = vadd.f32 0.0, %v4879
      %4881 = vdwg.mxu0
      %v4882 = vsel %vm4394, %v4622, 0
      %v4884 = vsel %vm4394, %v4624, 0
      %v4886 = vsel %vm4394, %v4627, 0
      %v4888 = vsel %vm4394, %v4629, 0
      %v4890 = vsel %vm4394, %v4632, 0
      %v4892 = vsel %vm4394, %v4634, 0
      %v4894 = vsel %vm4394, %v4637, 0
      %v4896 = vsel %vm4394, %v4639, 0
      %v4898 = vsel %vm4394, %v4642, 0
      %v4900 = vsel %vm4394, %v4644, 0
      %v4902 = vsel %vm4394, %v4647, 0
      %v4904 = vsel %vm4394, %v4649, 0
      %v4906 = vsel %vm4394, %v4652, 0
      %v4908 = vsel %vm4394, %v4654, 0
      %v4910 = vsel %vm4394, %v4657, 0
      %v4912 = vsel %vm4394, %v4659, 0
      %v4914 = vsel %vm4394, %v4662, 0
      %v4916 = vsel %vm4394, %v4664, 0
      %v4918 = vsel %vm4394, %v4667, 0
      %v4920 = vsel %vm4394, %v4669, 0
      %v4922 = vsel %vm4394, %v4672, 0
      %v4924 = vsel %vm4394, %v4674, 0
      %v4926 = vsel %vm4394, %v4677, 0
      %v4928 = vsel %vm4394, %v4679, 0
      %v4930 = vsel %vm4394, %v4682, 0
      %v4932 = vsel %vm4394, %v4684, 0
      %v4934 = vsel %vm4394, %v4687, 0
      %v4936 = vsel %vm4394, %v4689, 0
      %v4938 = vsel %vm4394, %v4692, 0
      %v4940 = vsel %vm4394, %v4694, 0
      %v4942 = vsel %vm4394, %v4697, 0
      %v4944 = vsel %vm4394, %v4699, 0
      %4946 = vmatpush.msra.mxu0 0.0
      %4947 = vmatpush.msra.mxu0 0.0
      %4948 = vmatpush.msra.mxu0 0.0
      %4949 = vmatpush.msra.mxu0 0.0
      %4950 = vmatpush.msra.mxu0 0.0
      %4951 = vmatpush.msra.mxu0 0.0
      %4952 = vmatpush.msra.mxu0 0.0
      %4953 = vmatpush.msra.mxu0 0.0
      %4954 = vmatpush.msra.mxu0 0.0
      %4955 = vmatpush.msra.mxu0 0.0
      %4956 = vmatpush.msra.mxu0 0.0
      %4957 = vmatpush.msra.mxu0 0.0
      %4958 = vmatpush.msra.mxu0 0.0
      %4959 = vmatpush.msra.mxu0 0.0
      %4960 = vmatpush.msra.mxu0 %v4701
      %4961 = vmatpush.msra.mxu0 %v4700
      %4962 = vmatmul.f32.gmra.mxu0 %v4882
      %v4963 = vpop.f32.mrf.mxu0
      %v4964 = vadd.f32 %v4787, %v4963
      %4965 = vmatmul.f32.gmra.mxu0 %v4884
      %v4966 = vpop.f32.mrf.mxu0
      %v4967 = vadd.f32 %v4790, %v4966
      %4968 = vmatmul.f32.gmra.mxu0 %v4886
      %v4969 = vpop.f32.mrf.mxu0
      %v4970 = vadd.f32 %v4793, %v4969
      %4971 = vmatmul.f32.gmra.mxu0 %v4888
      %v4972 = vpop.f32.mrf.mxu0
      %v4973 = vadd.f32 %v4796, %v4972
      %4974 = vmatmul.f32.gmra.mxu0 %v4890
      %v4975 = vpop.f32.mrf.mxu0
      %v4976 = vadd.f32 %v4799, %v4975
      %4977 = vmatmul.f32.gmra.mxu0 %v4892
      %v4978 = vpop.f32.mrf.mxu0
      %v4979 = vadd.f32 %v4802, %v4978
      %4980 = vmatmul.f32.gmra.mxu0 %v4894
      %v4981 = vpop.f32.mrf.mxu0
      %v4982 = vadd.f32 %v4805, %v4981
      %4983 = vmatmul.f32.gmra.mxu0 %v4896
      %v4984 = vpop.f32.mrf.mxu0
      %v4985 = vadd.f32 %v4808, %v4984
      %4986 = vmatmul.f32.gmra.mxu0 %v4898
      %v4987 = vpop.f32.mrf.mxu0
      %v4988 = vadd.f32 %v4811, %v4987
      %4989 = vmatmul.f32.gmra.mxu0 %v4900
      %v4990 = vpop.f32.mrf.mxu0
      %v4991 = vadd.f32 %v4814, %v4990
      %4992 = vmatmul.f32.gmra.mxu0 %v4902
      %v4993 = vpop.f32.mrf.mxu0
      %v4994 = vadd.f32 %v4817, %v4993
      %4995 = vmatmul.f32.gmra.mxu0 %v4904
      %v4996 = vpop.f32.mrf.mxu0
      %v4997 = vadd.f32 %v4820, %v4996
      %4998 = vmatmul.f32.gmra.mxu0 %v4906
      %v4999 = vpop.f32.mrf.mxu0
      %v5000 = vadd.f32 %v4823, %v4999
      %5001 = vmatmul.f32.gmra.mxu0 %v4908
      %v5002 = vpop.f32.mrf.mxu0
      %v5003 = vadd.f32 %v4826, %v5002
      %5004 = vmatmul.f32.gmra.mxu0 %v4910
      %v5005 = vpop.f32.mrf.mxu0
      %v5006 = vadd.f32 %v4829, %v5005
      %5007 = vmatmul.f32.gmra.mxu0 %v4912
      %v5008 = vpop.f32.mrf.mxu0
      %v5009 = vadd.f32 %v4832, %v5008
      %5010 = vmatmul.f32.gmra.mxu0 %v4914
      %v5011 = vpop.f32.mrf.mxu0
      %v5012 = vadd.f32 %v4835, %v5011
      %5013 = vmatmul.f32.gmra.mxu0 %v4916
      %v5014 = vpop.f32.mrf.mxu0
      %v5015 = vadd.f32 %v4838, %v5014
      %5016 = vmatmul.f32.gmra.mxu0 %v4918
      %v5017 = vpop.f32.mrf.mxu0
      %v5018 = vadd.f32 %v4841, %v5017
      %5019 = vmatmul.f32.gmra.mxu0 %v4920
      %v5020 = vpop.f32.mrf.mxu0
      %v5021 = vadd.f32 %v4844, %v5020
      %5022 = vmatmul.f32.gmra.mxu0 %v4922
      %v5023 = vpop.f32.mrf.mxu0
      %v5024 = vadd.f32 %v4847, %v5023
      %5025 = vmatmul.f32.gmra.mxu0 %v4924
      %v5026 = vpop.f32.mrf.mxu0
      %v5027 = vadd.f32 %v4850, %v5026
      %5028 = vmatmul.f32.gmra.mxu0 %v4926
      %v5029 = vpop.f32.mrf.mxu0
      %v5030 = vadd.f32 %v4853, %v5029
      %5031 = vmatmul.f32.gmra.mxu0 %v4928
      %v5032 = vpop.f32.mrf.mxu0
      %v5033 = vadd.f32 %v4856, %v5032
      %5034 = vmatmul.f32.gmra.mxu0 %v4930
      %v5035 = vpop.f32.mrf.mxu0
      %v5036 = vadd.f32 %v4859, %v5035
      %5037 = vmatmul.f32.gmra.mxu0 %v4932
      %v5038 = vpop.f32.mrf.mxu0
      %v5039 = vadd.f32 %v4862, %v5038
      %5040 = vmatmul.f32.gmra.mxu0 %v4934
      %v5041 = vpop.f32.mrf.mxu0
      %v5042 = vadd.f32 %v4865, %v5041
      %5043 = vmatmul.f32.gmra.mxu0 %v4936
      %v5044 = vpop.f32.mrf.mxu0
      %v5045 = vadd.f32 %v4868, %v5044
      %5046 = vmatmul.f32.gmra.mxu0 %v4938
      %v5047 = vpop.f32.mrf.mxu0
      %v5048 = vadd.f32 %v4871, %v5047
      %5049 = vmatmul.f32.gmra.mxu0 %v4940
      %v5050 = vpop.f32.mrf.mxu0
      %v5051 = vadd.f32 %v4874, %v5050
      %5052 = vmatmul.f32.gmra.mxu0 %v4942
      %v5053 = vpop.f32.mrf.mxu0
      %v5054 = vadd.f32 %v4877, %v5053
      %5055 = vmatmul.f32.gmra.mxu0 %v4944
      %v5056 = vpop.f32.mrf.mxu0
      %v5057 = vadd.f32 %v4880, %v5056
      %5058 = vdwg.mxu0
      %v5075 = vrot.slane %v4501, 1
      %v5076 = vrot.slane %v4502, 1
      %v5077 = vsel %vm1823, %v5075, %v5076
      %v5078 = vrot.slane %v4503, 1
      %v5079 = vsel %vm1823, %v5076, %v5078
      %v5080 = vrot.slane %v4505, 1
      %v5081 = vrot.slane %v4506, 1
      %v5082 = vsel %vm1823, %v5080, %v5081
      %v5083 = vrot.slane %v4507, 1
      %v5084 = vsel %vm1823, %v5081, %v5083
      %v5085 = vrot.slane %v4509, 1
      %v5086 = vrot.slane %v4510, 1
      %v5087 = vsel %vm1823, %v5085, %v5086
      %v5088 = vrot.slane %v4511, 1
      %v5089 = vsel %vm1823, %v5086, %v5088
      %v5090 = vrot.slane %v4513, 1
      %v5091 = vrot.slane %v4514, 1
      %v5092 = vsel %vm1823, %v5090, %v5091
      %v5093 = vrot.slane %v4515, 1
      %v5094 = vsel %vm1823, %v5091, %v5093
      %v5095 = vrot.slane %v4517, 1
      %v5096 = vrot.slane %v4518, 1
      %v5097 = vsel %vm1823, %v5095, %v5096
      %v5098 = vrot.slane %v4519, 1
      %v5099 = vsel %vm1823, %v5096, %v5098
      %v5100 = vrot.slane %v4521, 1
      %v5101 = vrot.slane %v4522, 1
      %v5102 = vsel %vm1823, %v5100, %v5101
      %v5103 = vrot.slane %v4523, 1
      %v5104 = vsel %vm1823, %v5101, %v5103
      %v5105 = vrot.slane %v4525, 1
      %v5106 = vrot.slane %v4526, 1
      %v5107 = vsel %vm1823, %v5105, %v5106
      %v5108 = vrot.slane %v4527, 1
      %v5109 = vsel %vm1823, %v5106, %v5108
      %v5110 = vrot.slane %v4529, 1
      %v5111 = vrot.slane %v4530, 1
      %v5112 = vsel %vm1823, %v5110, %v5111
      %v5113 = vrot.slane %v4531, 1
      %v5114 = vsel %vm1823, %v5111, %v5113
      %v5115 = vrot.slane %v4533, 1
      %v5116 = vrot.slane %v4534, 1
      %v5117 = vsel %vm1823, %v5115, %v5116
      %v5118 = vrot.slane %v4535, 1
      %v5119 = vsel %vm1823, %v5116, %v5118
      %v5120 = vrot.slane %v4537, 1
      %v5121 = vrot.slane %v4538, 1
      %v5122 = vsel %vm1823, %v5120, %v5121
      %v5123 = vrot.slane %v4539, 1
      %v5124 = vsel %vm1823, %v5121, %v5123
      %v5125 = vrot.slane %v4541, 1
      %v5126 = vrot.slane %v4542, 1
      %v5127 = vsel %vm1823, %v5125, %v5126
      %v5128 = vrot.slane %v4543, 1
      %v5129 = vsel %vm1823, %v5126, %v5128
      %v5130 = vrot.slane %v4545, 1
      %v5131 = vrot.slane %v4546, 1
      %v5132 = vsel %vm1823, %v5130, %v5131
      %v5133 = vrot.slane %v4547, 1
      %v5134 = vsel %vm1823, %v5131, %v5133
      %v5135 = vrot.slane %v4549, 1
      %v5136 = vrot.slane %v4550, 1
      %v5137 = vsel %vm1823, %v5135, %v5136
      %v5138 = vrot.slane %v4551, 1
      %v5139 = vsel %vm1823, %v5136, %v5138
      %v5140 = vrot.slane %v4553, 1
      %v5141 = vrot.slane %v4554, 1
      %v5142 = vsel %vm1823, %v5140, %v5141
      %v5143 = vrot.slane %v4555, 1
      %v5144 = vsel %vm1823, %v5141, %v5143
      %v5145 = vrot.slane %v4557, 1
      %v5146 = vrot.slane %v4558, 1
      %v5147 = vsel %vm1823, %v5145, %v5146
      %v5148 = vrot.slane %v4559, 1
      %v5149 = vsel %vm1823, %v5146, %v5148
      %v5150 = vrot.slane %v4561, 1
      %v5151 = vrot.slane %v4562, 1
      %v5152 = vsel %vm1823, %v5150, %v5151
      %v5153 = vrot.slane %v4563, 1
      %v5154 = vsel %vm1823, %v5151, %v5153
      %s5155 = scalar_lea.vmem %s6, 32
      %v5156 = vld [vmem:[%s5155] sm:$0xff]
      %v5157 = vld [vmem:[%s5155 + $0x8] sm:$0xff]
      %v5158 = vsel %vm4394, %v5077, 0
      %v5160 = vsel %vm4394, %v5079, 0
      %v5162 = vsel %vm4394, %v5082, 0
      %v5164 = vsel %vm4394, %v5084, 0
      %v5166 = vsel %vm4394, %v5087, 0
      %v5168 = vsel %vm4394, %v5089, 0
      %v5170 = vsel %vm4394, %v5092, 0
      %v5172 = vsel %vm4394, %v5094, 0
      %v5174 = vsel %vm4394, %v5097, 0
      %v5176 = vsel %vm4394, %v5099, 0
      %v5178 = vsel %vm4394, %v5102, 0
      %v5180 = vsel %vm4394, %v5104, 0
      %v5182 = vsel %vm4394, %v5107, 0
      %v5184 = vsel %vm4394, %v5109, 0
      %v5186 = vsel %vm4394, %v5112, 0
      %v5188 = vsel %vm4394, %v5114, 0
      %v5190 = vsel %vm4394, %v5117, 0
      %v5192 = vsel %vm4394, %v5119, 0
      %v5194 = vsel %vm4394, %v5122, 0
      %v5196 = vsel %vm4394, %v5124, 0
      %v5198 = vsel %vm4394, %v5127, 0
      %v5200 = vsel %vm4394, %v5129, 0
      %v5202 = vsel %vm4394, %v5132, 0
      %v5204 = vsel %vm4394, %v5134, 0
      %v5206 = vsel %vm4394, %v5137, 0
      %v5208 = vsel %vm4394, %v5139, 0
      %v5210 = vsel %vm4394, %v5142, 0
      %v5212 = vsel %vm4394, %v5144, 0
      %v5214 = vsel %vm4394, %v5147, 0
      %v5216 = vsel %vm4394, %v5149, 0
      %v5218 = vsel %vm4394, %v5152, 0
      %v5220 = vsel %vm4394, %v5154, 0
      %5222 = vmatpush.msra.mxu0 0.0
      %5223 = vmatpush.msra.mxu0 0.0
      %5224 = vmatpush.msra.mxu0 0.0
      %5225 = vmatpush.msra.mxu0 0.0
      %5226 = vmatpush.msra.mxu0 0.0
      %5227 = vmatpush.msra.mxu0 0.0
      %5228 = vmatpush.msra.mxu0 0.0
      %5229 = vmatpush.msra.mxu0 0.0
      %5230 = vmatpush.msra.mxu0 0.0
      %5231 = vmatpush.msra.mxu0 0.0
      %5232 = vmatpush.msra.mxu0 0.0
      %5233 = vmatpush.msra.mxu0 0.0
      %5234 = vmatpush.msra.mxu0 0.0
      %5235 = vmatpush.msra.mxu0 0.0
      %5236 = vmatpush.msra.mxu0 %v5157
      %5237 = vmatpush.msra.mxu0 %v5156
      %5238 = vmatmul.f32.gmra.mxu0 %v5158
      %v5239 = vpop.f32.mrf.mxu0
      %v5240 = vadd.f32 0.0, %v5239
      %5241 = vmatmul.f32.gmra.mxu0 %v5160
      %v5242 = vpop.f32.mrf.mxu0
      %v5243 = vadd.f32 0.0, %v5242
      %5244 = vmatmul.f32.gmra.mxu0 %v5162
      %v5245 = vpop.f32.mrf.mxu0
      %v5246 = vadd.f32 0.0, %v5245
      %5247 = vmatmul.f32.gmra.mxu0 %v5164
      %v5248 = vpop.f32.mrf.mxu0
      %v5249 = vadd.f32 0.0, %v5248
      %5250 = vmatmul.f32.gmra.mxu0 %v5166
      %v5251 = vpop.f32.mrf.mxu0
      %v5252 = vadd.f32 0.0, %v5251
      %5253 = vmatmul.f32.gmra.mxu0 %v5168
      %v5254 = vpop.f32.mrf.mxu0
      %v5255 = vadd.f32 0.0, %v5254
      %5256 = vmatmul.f32.gmra.mxu0 %v5170
      %v5257 = vpop.f32.mrf.mxu0
      %v5258 = vadd.f32 0.0, %v5257
      %5259 = vmatmul.f32.gmra.mxu0 %v5172
      %v5260 = vpop.f32.mrf.mxu0
      %v5261 = vadd.f32 0.0, %v5260
      %5262 = vmatmul.f32.gmra.mxu0 %v5174
      %v5263 = vpop.f32.mrf.mxu0
      %v5264 = vadd.f32 0.0, %v5263
      %5265 = vmatmul.f32.gmra.mxu0 %v5176
      %v5266 = vpop.f32.mrf.mxu0
      %v5267 = vadd.f32 0.0, %v5266
      %5268 = vmatmul.f32.gmra.mxu0 %v5178
      %v5269 = vpop.f32.mrf.mxu0
      %v5270 = vadd.f32 0.0, %v5269
      %5271 = vmatmul.f32.gmra.mxu0 %v5180
      %v5272 = vpop.f32.mrf.mxu0
      %v5273 = vadd.f32 0.0, %v5272
      %5274 = vmatmul.f32.gmra.mxu0 %v5182
      %v5275 = vpop.f32.mrf.mxu0
      %v5276 = vadd.f32 0.0, %v5275
      %5277 = vmatmul.f32.gmra.mxu0 %v5184
      %v5278 = vpop.f32.mrf.mxu0
      %v5279 = vadd.f32 0.0, %v5278
      %5280 = vmatmul.f32.gmra.mxu0 %v5186
      %v5281 = vpop.f32.mrf.mxu0
      %v5282 = vadd.f32 0.0, %v5281
      %5283 = vmatmul.f32.gmra.mxu0 %v5188
      %v5284 = vpop.f32.mrf.mxu0
      %v5285 = vadd.f32 0.0, %v5284
      %5286 = vmatmul.f32.gmra.mxu0 %v5190
      %v5287 = vpop.f32.mrf.mxu0
      %v5288 = vadd.f32 0.0, %v5287
      %5289 = vmatmul.f32.gmra.mxu0 %v5192
      %v5290 = vpop.f32.mrf.mxu0
      %v5291 = vadd.f32 0.0, %v5290
      %5292 = vmatmul.f32.gmra.mxu0 %v5194
      %v5293 = vpop.f32.mrf.mxu0
      %v5294 = vadd.f32 0.0, %v5293
      %5295 = vmatmul.f32.gmra.mxu0 %v5196
      %v5296 = vpop.f32.mrf.mxu0
      %v5297 = vadd.f32 0.0, %v5296
      %5298 = vmatmul.f32.gmra.mxu0 %v5198
      %v5299 = vpop.f32.mrf.mxu0
      %v5300 = vadd.f32 0.0, %v5299
      %5301 = vmatmul.f32.gmra.mxu0 %v5200
      %v5302 = vpop.f32.mrf.mxu0
      %v5303 = vadd.f32 0.0, %v5302
      %5304 = vmatmul.f32.gmra.mxu0 %v5202
      %v5305 = vpop.f32.mrf.mxu0
      %v5306 = vadd.f32 0.0, %v5305
      %5307 = vmatmul.f32.gmra.mxu0 %v5204
      %v5308 = vpop.f32.mrf.mxu0
      %v5309 = vadd.f32 0.0, %v5308
      %5310 = vmatmul.f32.gmra.mxu0 %v5206
      %v5311 = vpop.f32.mrf.mxu0
      %v5312 = vadd.f32 0.0, %v5311
      %5313 = vmatmul.f32.gmra.mxu0 %v5208
      %v5314 = vpop.f32.mrf.mxu0
      %v5315 = vadd.f32 0.0, %v5314
      %5316 = vmatmul.f32.gmra.mxu0 %v5210
      %v5317 = vpop.f32.mrf.mxu0
      %v5318 = vadd.f32 0.0, %v5317
      %5319 = vmatmul.f32.gmra.mxu0 %v5212
      %v5320 = vpop.f32.mrf.mxu0
      %v5321 = vadd.f32 0.0, %v5320
      %5322 = vmatmul.f32.gmra.mxu0 %v5214
      %v5323 = vpop.f32.mrf.mxu0
      %v5324 = vadd.f32 0.0, %v5323
      %5325 = vmatmul.f32.gmra.mxu0 %v5216
      %v5326 = vpop.f32.mrf.mxu0
      %v5327 = vadd.f32 0.0, %v5326
      %5328 = vmatmul.f32.gmra.mxu0 %v5218
      %v5329 = vpop.f32.mrf.mxu0
      %v5330 = vadd.f32 0.0, %v5329
      %5331 = vmatmul.f32.gmra.mxu0 %v5220
      %v5332 = vpop.f32.mrf.mxu0
      %v5333 = vadd.f32 0.0, %v5332
      %5334 = vdwg.mxu0
      %v5335 = vadd.f32 %v4964, %v5240
      %v5336 = vadd.f32 %v4967, %v5243
      %v5337 = vadd.f32 %v4970, %v5246
      %v5338 = vadd.f32 %v4973, %v5249
      %v5339 = vadd.f32 %v4976, %v5252
      %v5340 = vadd.f32 %v4979, %v5255
      %v5341 = vadd.f32 %v4982, %v5258
      %v5342 = vadd.f32 %v4985, %v5261
      %v5343 = vadd.f32 %v4988, %v5264
      %v5344 = vadd.f32 %v4991, %v5267
      %v5345 = vadd.f32 %v4994, %v5270
      %v5346 = vadd.f32 %v4997, %v5273
      %v5347 = vadd.f32 %v5000, %v5276
      %v5348 = vadd.f32 %v5003, %v5279
      %v5349 = vadd.f32 %v5006, %v5282
      %v5350 = vadd.f32 %v5009, %v5285
      %v5351 = vadd.f32 %v5012, %v5288
      %v5352 = vadd.f32 %v5015, %v5291
      %v5353 = vadd.f32 %v5018, %v5294
      %v5354 = vadd.f32 %v5021, %v5297
      %v5355 = vadd.f32 %v5024, %v5300
      %v5356 = vadd.f32 %v5027, %v5303
      %v5357 = vadd.f32 %v5030, %v5306
      %v5358 = vadd.f32 %v5033, %v5309
      %v5359 = vadd.f32 %v5036, %v5312
      %v5360 = vadd.f32 %v5039, %v5315
      %v5361 = vadd.f32 %v5042, %v5318
      %v5362 = vadd.f32 %v5045, %v5321
      %v5363 = vadd.f32 %v5048, %v5324
      %v5364 = vadd.f32 %v5051, %v5327
      %v5365 = vadd.f32 %v5054, %v5330
      %v5366 = vadd.f32 %v5057, %v5333
      %v5370 = vrot.slane %v4564, 7
      %v5371 = vrot.slane %v4565, 7
      %v5372 = vsel %vm820, %v5370, %v5371
      %v5373 = vrot.slane %v4566, 7
      %v5374 = vsel %vm820, %v5371, %v5373
      %s5375 = scalar_lea.vmem %s6, 48
      %v5376 = vld [vmem:[%s5375] sm:$0xff]
      %v5377 = vld [vmem:[%s5375 + $0x8] sm:$0xff]
      %v5378 = vsel %vm4394, %v5372, 0
      %v5380 = vsel %vm4394, %v5374, 0
      %5382 = vmatpush.msra.mxu0 0.0
      %5383 = vmatpush.msra.mxu0 0.0
      %5384 = vmatpush.msra.mxu0 0.0
      %5385 = vmatpush.msra.mxu0 0.0
      %5386 = vmatpush.msra.mxu0 0.0
      %5387 = vmatpush.msra.mxu0 0.0
      %5388 = vmatpush.msra.mxu0 0.0
      %5389 = vmatpush.msra.mxu0 0.0
      %5390 = vmatpush.msra.mxu0 0.0
      %5391 = vmatpush.msra.mxu0 0.0
      %5392 = vmatpush.msra.mxu0 0.0
      %5393 = vmatpush.msra.mxu0 0.0
      %5394 = vmatpush.msra.mxu0 0.0
      %5395 = vmatpush.msra.mxu0 0.0
      %5396 = vmatpush.msra.mxu0 %v5377
      %5397 = vmatpush.msra.mxu0 %v5376
      %5398 = vmatmul.f32.gmra.mxu0 %v4886
      %v5399 = vpop.f32.mrf.mxu0
      %v5400 = vadd.f32 0.0, %v5399
      %5401 = vmatmul.f32.gmra.mxu0 %v4888
      %v5402 = vpop.f32.mrf.mxu0
      %v5403 = vadd.f32 0.0, %v5402
      %5404 = vmatmul.f32.gmra.mxu0 %v4890
      %v5405 = vpop.f32.mrf.mxu0
      %v5406 = vadd.f32 0.0, %v5405
      %5407 = vmatmul.f32.gmra.mxu0 %v4892
      %v5408 = vpop.f32.mrf.mxu0
      %v5409 = vadd.f32 0.0, %v5408
      %5410 = vmatmul.f32.gmra.mxu0 %v4894
      %v5411 = vpop.f32.mrf.mxu0
      %v5412 = vadd.f32 0.0, %v5411
      %5413 = vmatmul.f32.gmra.mxu0 %v4896
      %v5414 = vpop.f32.mrf.mxu0
      %v5415 = vadd.f32 0.0, %v5414
      %5416 = vmatmul.f32.gmra.mxu0 %v4898
      %v5417 = vpop.f32.mrf.mxu0
      %v5418 = vadd.f32 0.0, %v5417
      %5419 = vmatmul.f32.gmra.mxu0 %v4900
      %v5420 = vpop.f32.mrf.mxu0
      %v5421 = vadd.f32 0.0, %v5420
      %5422 = vmatmul.f32.gmra.mxu0 %v4902
      %v5423 = vpop.f32.mrf.mxu0
      %v5424 = vadd.f32 0.0, %v5423
      %5425 = vmatmul.f32.gmra.mxu0 %v4904
      %v5426 = vpop.f32.mrf.mxu0
      %v5427 = vadd.f32 0.0, %v5426
      %5428 = vmatmul.f32.gmra.mxu0 %v4906
      %v5429 = vpop.f32.mrf.mxu0
      %v5430 = vadd.f32 0.0, %v5429
      %5431 = vmatmul.f32.gmra.mxu0 %v4908
      %v5432 = vpop.f32.mrf.mxu0
      %v5433 = vadd.f32 0.0, %v5432
      %5434 = vmatmul.f32.gmra.mxu0 %v4910
      %v5435 = vpop.f32.mrf.mxu0
      %v5436 = vadd.f32 0.0, %v5435
      %5437 = vmatmul.f32.gmra.mxu0 %v4912
      %v5438 = vpop.f32.mrf.mxu0
      %v5439 = vadd.f32 0.0, %v5438
      %5440 = vmatmul.f32.gmra.mxu0 %v4914
      %v5441 = vpop.f32.mrf.mxu0
      %v5442 = vadd.f32 0.0, %v5441
      %5443 = vmatmul.f32.gmra.mxu0 %v4916
      %v5444 = vpop.f32.mrf.mxu0
      %v5445 = vadd.f32 0.0, %v5444
      %5446 = vmatmul.f32.gmra.mxu0 %v4918
      %v5447 = vpop.f32.mrf.mxu0
      %v5448 = vadd.f32 0.0, %v5447
      %5449 = vmatmul.f32.gmra.mxu0 %v4920
      %v5450 = vpop.f32.mrf.mxu0
      %v5451 = vadd.f32 0.0, %v5450
      %5452 = vmatmul.f32.gmra.mxu0 %v4922
      %v5453 = vpop.f32.mrf.mxu0
      %v5454 = vadd.f32 0.0, %v5453
      %5455 = vmatmul.f32.gmra.mxu0 %v4924
      %v5456 = vpop.f32.mrf.mxu0
      %v5457 = vadd.f32 0.0, %v5456
      %5458 = vmatmul.f32.gmra.mxu0 %v4926
      %v5459 = vpop.f32.mrf.mxu0
      %v5460 = vadd.f32 0.0, %v5459
      %5461 = vmatmul.f32.gmra.mxu0 %v4928
      %v5462 = vpop.f32.mrf.mxu0
      %v5463 = vadd.f32 0.0, %v5462
      %5464 = vmatmul.f32.gmra.mxu0 %v4930
      %v5465 = vpop.f32.mrf.mxu0
      %v5466 = vadd.f32 0.0, %v5465
      %5467 = vmatmul.f32.gmra.mxu0 %v4932
      %v5468 = vpop.f32.mrf.mxu0
      %v5469 = vadd.f32 0.0, %v5468
      %5470 = vmatmul.f32.gmra.mxu0 %v4934
      %v5471 = vpop.f32.mrf.mxu0
      %v5472 = vadd.f32 0.0, %v5471
      %5473 = vmatmul.f32.gmra.mxu0 %v4936
      %v5474 = vpop.f32.mrf.mxu0
      %v5475 = vadd.f32 0.0, %v5474
      %5476 = vmatmul.f32.gmra.mxu0 %v4938
      %v5477 = vpop.f32.mrf.mxu0
      %v5478 = vadd.f32 0.0, %v5477
      %5479 = vmatmul.f32.gmra.mxu0 %v4940
      %v5480 = vpop.f32.mrf.mxu0
      %v5481 = vadd.f32 0.0, %v5480
      %5482 = vmatmul.f32.gmra.mxu0 %v4942
      %v5483 = vpop.f32.mrf.mxu0
      %v5484 = vadd.f32 0.0, %v5483
      %5485 = vmatmul.f32.gmra.mxu0 %v4944
      %v5486 = vpop.f32.mrf.mxu0
      %v5487 = vadd.f32 0.0, %v5486
      %5488 = vmatmul.f32.gmra.mxu0 %v5378
      %v5489 = vpop.f32.mrf.mxu0
      %v5490 = vadd.f32 0.0, %v5489
      %5491 = vmatmul.f32.gmra.mxu0 %v5380
      %v5492 = vpop.f32.mrf.mxu0
      %v5493 = vadd.f32 0.0, %v5492
      %5494 = vdwg.mxu0
      %v5495 = vadd.f32 %v5335, %v5400
      %v5496 = vadd.f32 %v5336, %v5403
      %v5497 = vadd.f32 %v5337, %v5406
      %v5498 = vadd.f32 %v5338, %v5409
      %v5499 = vadd.f32 %v5339, %v5412
      %v5500 = vadd.f32 %v5340, %v5415
      %v5501 = vadd.f32 %v5341, %v5418
      %v5502 = vadd.f32 %v5342, %v5421
      %v5503 = vadd.f32 %v5343, %v5424
      %v5504 = vadd.f32 %v5344, %v5427
      %v5505 = vadd.f32 %v5345, %v5430
      %v5506 = vadd.f32 %v5346, %v5433
      %v5507 = vadd.f32 %v5347, %v5436
      %v5508 = vadd.f32 %v5348, %v5439
      %v5509 = vadd.f32 %v5349, %v5442
      %v5510 = vadd.f32 %v5350, %v5445
      %v5511 = vadd.f32 %v5351, %v5448
      %v5512 = vadd.f32 %v5352, %v5451
      %v5513 = vadd.f32 %v5353, %v5454
      %v5514 = vadd.f32 %v5354, %v5457
      %v5515 = vadd.f32 %v5355, %v5460
      %v5516 = vadd.f32 %v5356, %v5463
      %v5517 = vadd.f32 %v5357, %v5466
      %v5518 = vadd.f32 %v5358, %v5469
      %v5519 = vadd.f32 %v5359, %v5472
      %v5520 = vadd.f32 %v5360, %v5475
      %v5521 = vadd.f32 %v5361, %v5478
      %v5522 = vadd.f32 %v5362, %v5481
      %v5523 = vadd.f32 %v5363, %v5484
      %v5524 = vadd.f32 %v5364, %v5487
      %v5525 = vadd.f32 %v5365, %v5490
      %v5526 = vadd.f32 %v5366, %v5493
      %s5527 = scalar_lea.vmem %s6, 64
      %v5528 = vld [vmem:[%s5527] sm:$0xff]
      %v5529 = vld [vmem:[%s5527 + $0x8] sm:$0xff]
      %v5530 = vsel %vm4394, %v4565, 0
      %v5532 = vsel %vm4394, %v4566, 0
      %5534 = vmatpush.msra.mxu0 0.0
      %5535 = vmatpush.msra.mxu0 0.0
      %5536 = vmatpush.msra.mxu0 0.0
      %5537 = vmatpush.msra.mxu0 0.0
      %5538 = vmatpush.msra.mxu0 0.0
      %5539 = vmatpush.msra.mxu0 0.0
      %5540 = vmatpush.msra.mxu0 0.0
      %5541 = vmatpush.msra.mxu0 0.0
      %5542 = vmatpush.msra.mxu0 0.0
      %5543 = vmatpush.msra.mxu0 0.0
      %5544 = vmatpush.msra.mxu0 0.0
      %5545 = vmatpush.msra.mxu0 0.0
      %5546 = vmatpush.msra.mxu0 0.0
      %5547 = vmatpush.msra.mxu0 0.0
      %5548 = vmatpush.msra.mxu0 %v5529
      %5549 = vmatpush.msra.mxu0 %v5528
      %5550 = vmatmul.f32.gmra.mxu0 %v4709
      %v5551 = vpop.f32.mrf.mxu0
      %v5552 = vadd.f32 0.0, %v5551
      %5553 = vmatmul.f32.gmra.mxu0 %v4711
      %v5554 = vpop.f32.mrf.mxu0
      %v5555 = vadd.f32 0.0, %v5554
      %5556 = vmatmul.f32.gmra.mxu0 %v4713
      %v5557 = vpop.f32.mrf.mxu0
      %v5558 = vadd.f32 0.0, %v5557
      %5559 = vmatmul.f32.gmra.mxu0 %v4715
      %v5560 = vpop.f32.mrf.mxu0
      %v5561 = vadd.f32 0.0, %v5560
      %5562 = vmatmul.f32.gmra.mxu0 %v4717
      %v5563 = vpop.f32.mrf.mxu0
      %v5564 = vadd.f32 0.0, %v5563
      %5565 = vmatmul.f32.gmra.mxu0 %v4719
      %v5566 = vpop.f32.mrf.mxu0
      %v5567 = vadd.f32 0.0, %v5566
      %5568 = vmatmul.f32.gmra.mxu0 %v4721
      %v5569 = vpop.f32.mrf.mxu0
      %v5570 = vadd.f32 0.0, %v5569
      %5571 = vmatmul.f32.gmra.mxu0 %v4723
      %v5572 = vpop.f32.mrf.mxu0
      %v5573 = vadd.f32 0.0, %v5572
      %5574 = vmatmul.f32.gmra.mxu0 %v4725
      %v5575 = vpop.f32.mrf.mxu0
      %v5576 = vadd.f32 0.0, %v5575
      %5577 = vmatmul.f32.gmra.mxu0 %v4727
      %v5578 = vpop.f32.mrf.mxu0
      %v5579 = vadd.f32 0.0, %v5578
      %5580 = vmatmul.f32.gmra.mxu0 %v4729
      %v5581 = vpop.f32.mrf.mxu0
      %v5582 = vadd.f32 0.0, %v5581
      %5583 = vmatmul.f32.gmra.mxu0 %v4731
      %v5584 = vpop.f32.mrf.mxu0
      %v5585 = vadd.f32 0.0, %v5584
      %5586 = vmatmul.f32.gmra.mxu0 %v4733
      %v5587 = vpop.f32.mrf.mxu0
      %v5588 = vadd.f32 0.0, %v5587
      %5589 = vmatmul.f32.gmra.mxu0 %v4735
      %v5590 = vpop.f32.mrf.mxu0
      %v5591 = vadd.f32 0.0, %v5590
      %5592 = vmatmul.f32.gmra.mxu0 %v4737
      %v5593 = vpop.f32.mrf.mxu0
      %v5594 = vadd.f32 0.0, %v5593
      %5595 = vmatmul.f32.gmra.mxu0 %v4739
      %v5596 = vpop.f32.mrf.mxu0
      %v5597 = vadd.f32 0.0, %v5596
      %5598 = vmatmul.f32.gmra.mxu0 %v4741
      %v5599 = vpop.f32.mrf.mxu0
      %v5600 = vadd.f32 0.0, %v5599
      %5601 = vmatmul.f32.gmra.mxu0 %v4743
      %v5602 = vpop.f32.mrf.mxu0
      %v5603 = vadd.f32 0.0, %v5602
      %5604 = vmatmul.f32.gmra.mxu0 %v4745
      %v5605 = vpop.f32.mrf.mxu0
      %v5606 = vadd.f32 0.0, %v5605
      %5607 = vmatmul.f32.gmra.mxu0 %v4747
      %v5608 = vpop.f32.mrf.mxu0
      %v5609 = vadd.f32 0.0, %v5608
      %5610 = vmatmul.f32.gmra.mxu0 %v4749
      %v5611 = vpop.f32.mrf.mxu0
      %v5612 = vadd.f32 0.0, %v5611
      %5613 = vmatmul.f32.gmra.mxu0 %v4751
      %v5614 = vpop.f32.mrf.mxu0
      %v5615 = vadd.f32 0.0, %v5614
      %5616 = vmatmul.f32.gmra.mxu0 %v4753
      %v5617 = vpop.f32.mrf.mxu0
      %v5618 = vadd.f32 0.0, %v5617
      %5619 = vmatmul.f32.gmra.mxu0 %v4755
      %v5620 = vpop.f32.mrf.mxu0
      %v5621 = vadd.f32 0.0, %v5620
      %5622 = vmatmul.f32.gmra.mxu0 %v4757
      %v5623 = vpop.f32.mrf.mxu0
      %v5624 = vadd.f32 0.0, %v5623
      %5625 = vmatmul.f32.gmra.mxu0 %v4759
      %v5626 = vpop.f32.mrf.mxu0
      %v5627 = vadd.f32 0.0, %v5626
      %5628 = vmatmul.f32.gmra.mxu0 %v4761
      %v5629 = vpop.f32.mrf.mxu0
      %v5630 = vadd.f32 0.0, %v5629
      %5631 = vmatmul.f32.gmra.mxu0 %v4763
      %v5632 = vpop.f32.mrf.mxu0
      %v5633 = vadd.f32 0.0, %v5632
      %5634 = vmatmul.f32.gmra.mxu0 %v4765
      %v5635 = vpop.f32.mrf.mxu0
      %v5636 = vadd.f32 0.0, %v5635
      %5637 = vmatmul.f32.gmra.mxu0 %v4767
      %v5638 = vpop.f32.mrf.mxu0
      %v5639 = vadd.f32 0.0, %v5638
      %5640 = vmatmul.f32.gmra.mxu0 %v5530
      %v5641 = vpop.f32.mrf.mxu0
      %v5642 = vadd.f32 0.0, %v5641
      %5643 = vmatmul.f32.gmra.mxu0 %v5532
      %v5644 = vpop.f32.mrf.mxu0
      %v5645 = vadd.f32 0.0, %v5644
      %5646 = vdwg.mxu0
      %v5647 = vadd.f32 %v5495, %v5552
      %v5648 = vadd.f32 %v5496, %v5555
      %v5649 = vadd.f32 %v5497, %v5558
      %v5650 = vadd.f32 %v5498, %v5561
      %v5651 = vadd.f32 %v5499, %v5564
      %v5652 = vadd.f32 %v5500, %v5567
      %v5653 = vadd.f32 %v5501, %v5570
      %v5654 = vadd.f32 %v5502, %v5573
      %v5655 = vadd.f32 %v5503, %v5576
      %v5656 = vadd.f32 %v5504, %v5579
      %v5657 = vadd.f32 %v5505, %v5582
      %v5658 = vadd.f32 %v5506, %v5585
      %v5659 = vadd.f32 %v5507, %v5588
      %v5660 = vadd.f32 %v5508, %v5591
      %v5661 = vadd.f32 %v5509, %v5594
      %v5662 = vadd.f32 %v5510, %v5597
      %v5663 = vadd.f32 %v5511, %v5600
      %v5664 = vadd.f32 %v5512, %v5603
      %v5665 = vadd.f32 %v5513, %v5606
      %v5666 = vadd.f32 %v5514, %v5609
      %v5667 = vadd.f32 %v5515, %v5612
      %v5668 = vadd.f32 %v5516, %v5615
      %v5669 = vadd.f32 %v5517, %v5618
      %v5670 = vadd.f32 %v5518, %v5621
      %v5671 = vadd.f32 %v5519, %v5624
      %v5672 = vadd.f32 %v5520, %v5627
      %v5673 = vadd.f32 %v5521, %v5630
      %v5674 = vadd.f32 %v5522, %v5633
      %v5675 = vadd.f32 %v5523, %v5636
      %v5676 = vadd.f32 %v5524, %v5639
      %v5677 = vadd.f32 %v5525, %v5642
      %v5678 = vadd.f32 %v5526, %v5645
      %v5680 = vrot.slane %v4565, 1
      %v5681 = vrot.slane %v4566, 1
      %v5682 = vsel %vm1823, %v5680, %v5681
      %v5683 = vrot.slane %v4567, 1
      %v5684 = vsel %vm1823, %v5681, %v5683
      %s5685 = scalar_lea.vmem %s6, 80
      %v5686 = vld [vmem:[%s5685] sm:$0xff]
      %v5687 = vld [vmem:[%s5685 + $0x8] sm:$0xff]
      %v5688 = vsel %vm4394, %v5682, 0
      %v5690 = vsel %vm4394, %v5684, 0
      %5692 = vmatpush.msra.mxu0 0.0
      %5693 = vmatpush.msra.mxu0 0.0
      %5694 = vmatpush.msra.mxu0 0.0
      %5695 = vmatpush.msra.mxu0 0.0
      %5696 = vmatpush.msra.mxu0 0.0
      %5697 = vmatpush.msra.mxu0 0.0
      %5698 = vmatpush.msra.mxu0 0.0
      %5699 = vmatpush.msra.mxu0 0.0
      %5700 = vmatpush.msra.mxu0 0.0
      %5701 = vmatpush.msra.mxu0 0.0
      %5702 = vmatpush.msra.mxu0 0.0
      %5703 = vmatpush.msra.mxu0 0.0
      %5704 = vmatpush.msra.mxu0 0.0
      %5705 = vmatpush.msra.mxu0 0.0
      %5706 = vmatpush.msra.mxu0 %v5687
      %5707 = vmatpush.msra.mxu0 %v5686
      %5708 = vmatmul.f32.gmra.mxu0 %v5162
      %v5709 = vpop.f32.mrf.mxu0
      %v5710 = vadd.f32 0.0, %v5709
      %5711 = vmatmul.f32.gmra.mxu0 %v5164
      %v5712 = vpop.f32.mrf.mxu0
      %v5713 = vadd.f32 0.0, %v5712
      %5714 = vmatmul.f32.gmra.mxu0 %v5166
      %v5715 = vpop.f32.mrf.mxu0
      %v5716 = vadd.f32 0.0, %v5715
      %5717 = vmatmul.f32.gmra.mxu0 %v5168
      %v5718 = vpop.f32.mrf.mxu0
      %v5719 = vadd.f32 0.0, %v5718
      %5720 = vmatmul.f32.gmra.mxu0 %v5170
      %v5721 = vpop.f32.mrf.mxu0
      %v5722 = vadd.f32 0.0, %v5721
      %5723 = vmatmul.f32.gmra.mxu0 %v5172
      %v5724 = vpop.f32.mrf.mxu0
      %v5725 = vadd.f32 0.0, %v5724
      %5726 = vmatmul.f32.gmra.mxu0 %v5174
      %v5727 = vpop.f32.mrf.mxu0
      %v5728 = vadd.f32 0.0, %v5727
      %5729 = vmatmul.f32.gmra.mxu0 %v5176
      %v5730 = vpop.f32.mrf.mxu0
      %v5731 = vadd.f32 0.0, %v5730
      %5732 = vmatmul.f32.gmra.mxu0 %v5178
      %v5733 = vpop.f32.mrf.mxu0
      %v5734 = vadd.f32 0.0, %v5733
      %5735 = vmatmul.f32.gmra.mxu0 %v5180
      %v5736 = vpop.f32.mrf.mxu0
      %v5737 = vadd.f32 0.0, %v5736
      %5738 = vmatmul.f32.gmra.mxu0 %v5182
      %v5739 = vpop.f32.mrf.mxu0
      %v5740 = vadd.f32 0.0, %v5739
      %5741 = vmatmul.f32.gmra.mxu0 %v5184
      %v5742 = vpop.f32.mrf.mxu0
      %v5743 = vadd.f32 0.0, %v5742
      %5744 = vmatmul.f32.gmra.mxu0 %v5186
      %v5745 = vpop.f32.mrf.mxu0
      %v5746 = vadd.f32 0.0, %v5745
      %5747 = vmatmul.f32.gmra.mxu0 %v5188
      %v5748 = vpop.f32.mrf.mxu0
      %v5749 = vadd.f32 0.0, %v5748
      %5750 = vmatmul.f32.gmra.mxu0 %v5190
      %v5751 = vpop.f32.mrf.mxu0
      %v5752 = vadd.f32 0.0, %v5751
      %5753 = vmatmul.f32.gmra.mxu0 %v5192
      %v5754 = vpop.f32.mrf.mxu0
      %v5755 = vadd.f32 0.0, %v5754
      %5756 = vmatmul.f32.gmra.mxu0 %v5194
      %v5757 = vpop.f32.mrf.mxu0
      %v5758 = vadd.f32 0.0, %v5757
      %5759 = vmatmul.f32.gmra.mxu0 %v5196
      %v5760 = vpop.f32.mrf.mxu0
      %v5761 = vadd.f32 0.0, %v5760
      %5762 = vmatmul.f32.gmra.mxu0 %v5198
      %v5763 = vpop.f32.mrf.mxu0
      %v5764 = vadd.f32 0.0, %v5763
      %5765 = vmatmul.f32.gmra.mxu0 %v5200
      %v5766 = vpop.f32.mrf.mxu0
      %v5767 = vadd.f32 0.0, %v5766
      %5768 = vmatmul.f32.gmra.mxu0 %v5202
      %v5769 = vpop.f32.mrf.mxu0
      %v5770 = vadd.f32 0.0, %v5769
      %5771 = vmatmul.f32.gmra.mxu0 %v5204
      %v5772 = vpop.f32.mrf.mxu0
      %v5773 = vadd.f32 0.0, %v5772
      %5774 = vmatmul.f32.gmra.mxu0 %v5206
      %v5775 = vpop.f32.mrf.mxu0
      %v5776 = vadd.f32 0.0, %v5775
      %5777 = vmatmul.f32.gmra.mxu0 %v5208
      %v5778 = vpop.f32.mrf.mxu0
      %v5779 = vadd.f32 0.0, %v5778
      %5780 = vmatmul.f32.gmra.mxu0 %v5210
      %v5781 = vpop.f32.mrf.mxu0
      %v5782 = vadd.f32 0.0, %v5781
      %5783 = vmatmul.f32.gmra.mxu0 %v5212
      %v5784 = vpop.f32.mrf.mxu0
      %v5785 = vadd.f32 0.0, %v5784
      %5786 = vmatmul.f32.gmra.mxu0 %v5214
      %v5787 = vpop.f32.mrf.mxu0
      %v5788 = vadd.f32 0.0, %v5787
      %5789 = vmatmul.f32.gmra.mxu0 %v5216
      %v5790 = vpop.f32.mrf.mxu0
      %v5791 = vadd.f32 0.0, %v5790
      %5792 = vmatmul.f32.gmra.mxu0 %v5218
      %v5793 = vpop.f32.mrf.mxu0
      %v5794 = vadd.f32 0.0, %v5793
      %5795 = vmatmul.f32.gmra.mxu0 %v5220
      %v5796 = vpop.f32.mrf.mxu0
      %v5797 = vadd.f32 0.0, %v5796
      %5798 = vmatmul.f32.gmra.mxu0 %v5688
      %v5799 = vpop.f32.mrf.mxu0
      %v5800 = vadd.f32 0.0, %v5799
      %5801 = vmatmul.f32.gmra.mxu0 %v5690
      %v5802 = vpop.f32.mrf.mxu0
      %v5803 = vadd.f32 0.0, %v5802
      %5804 = vdwg.mxu0
      %v5805 = vadd.f32 %v5647, %v5710
      %v5806 = vadd.f32 %v5648, %v5713
      %v5807 = vadd.f32 %v5649, %v5716
      %v5808 = vadd.f32 %v5650, %v5719
      %v5809 = vadd.f32 %v5651, %v5722
      %v5810 = vadd.f32 %v5652, %v5725
      %v5811 = vadd.f32 %v5653, %v5728
      %v5812 = vadd.f32 %v5654, %v5731
      %v5813 = vadd.f32 %v5655, %v5734
      %v5814 = vadd.f32 %v5656, %v5737
      %v5815 = vadd.f32 %v5657, %v5740
      %v5816 = vadd.f32 %v5658, %v5743
      %v5817 = vadd.f32 %v5659, %v5746
      %v5818 = vadd.f32 %v5660, %v5749
      %v5819 = vadd.f32 %v5661, %v5752
      %v5820 = vadd.f32 %v5662, %v5755
      %v5821 = vadd.f32 %v5663, %v5758
      %v5822 = vadd.f32 %v5664, %v5761
      %v5823 = vadd.f32 %v5665, %v5764
      %v5824 = vadd.f32 %v5666, %v5767
      %v5825 = vadd.f32 %v5667, %v5770
      %v5826 = vadd.f32 %v5668, %v5773
      %v5827 = vadd.f32 %v5669, %v5776
      %v5828 = vadd.f32 %v5670, %v5779
      %v5829 = vadd.f32 %v5671, %v5782
      %v5830 = vadd.f32 %v5672, %v5785
      %v5831 = vadd.f32 %v5673, %v5788
      %v5832 = vadd.f32 %v5674, %v5791
      %v5833 = vadd.f32 %v5675, %v5794
      %v5834 = vadd.f32 %v5676, %v5797
      %v5835 = vadd.f32 %v5677, %v5800
      %v5836 = vadd.f32 %v5678, %v5803
      %v5840 = vrot.slane %v4568, 7
      %v5841 = vrot.slane %v4569, 7
      %v5842 = vsel %vm820, %v5840, %v5841
      %v5843 = vrot.slane %v4570, 7
      %v5844 = vsel %vm820, %v5841, %v5843
      %s5845 = scalar_lea.vmem %s6, 96
      %v5846 = vld [vmem:[%s5845] sm:$0xff]
      %v5847 = vld [vmem:[%s5845 + $0x8] sm:$0xff]
      %v5848 = vsel %vm4394, %v5842, 0
      %v5850 = vsel %vm4394, %v5844, 0
      %5852 = vmatpush.msra.mxu0 0.0
      %5853 = vmatpush.msra.mxu0 0.0
      %5854 = vmatpush.msra.mxu0 0.0
      %5855 = vmatpush.msra.mxu0 0.0
      %5856 = vmatpush.msra.mxu0 0.0
      %5857 = vmatpush.msra.mxu0 0.0
      %5858 = vmatpush.msra.mxu0 0.0
      %5859 = vmatpush.msra.mxu0 0.0
      %5860 = vmatpush.msra.mxu0 0.0
      %5861 = vmatpush.msra.mxu0 0.0
      %5862 = vmatpush.msra.mxu0 0.0
      %5863 = vmatpush.msra.mxu0 0.0
      %5864 = vmatpush.msra.mxu0 0.0
      %5865 = vmatpush.msra.mxu0 0.0
      %5866 = vmatpush.msra.mxu0 %v5847
      %5867 = vmatpush.msra.mxu0 %v5846
      %5868 = vmatmul.f32.gmra.mxu0 %v4890
      %v5869 = vpop.f32.mrf.mxu0
      %v5870 = vadd.f32 0.0, %v5869
      %5871 = vmatmul.f32.gmra.mxu0 %v4892
      %v5872 = vpop.f32.mrf.mxu0
      %v5873 = vadd.f32 0.0, %v5872
      %5874 = vmatmul.f32.gmra.mxu0 %v4894
      %v5875 = vpop.f32.mrf.mxu0
      %v5876 = vadd.f32 0.0, %v5875
      %5877 = vmatmul.f32.gmra.mxu0 %v4896
      %v5878 = vpop.f32.mrf.mxu0
      %v5879 = vadd.f32 0.0, %v5878
      %5880 = vmatmul.f32.gmra.mxu0 %v4898
      %v5881 = vpop.f32.mrf.mxu0
      %v5882 = vadd.f32 0.0, %v5881
      %5883 = vmatmul.f32.gmra.mxu0 %v4900
      %v5884 = vpop.f32.mrf.mxu0
      %v5885 = vadd.f32 0.0, %v5884
      %5886 = vmatmul.f32.gmra.mxu0 %v4902
      %v5887 = vpop.f32.mrf.mxu0
      %v5888 = vadd.f32 0.0, %v5887
      %5889 = vmatmul.f32.gmra.mxu0 %v4904
      %v5890 = vpop.f32.mrf.mxu0
      %v5891 = vadd.f32 0.0, %v5890
      %5892 = vmatmul.f32.gmra.mxu0 %v4906
      %v5893 = vpop.f32.mrf.mxu0
      %v5894 = vadd.f32 0.0, %v5893
      %5895 = vmatmul.f32.gmra.mxu0 %v4908
      %v5896 = vpop.f32.mrf.mxu0
      %v5897 = vadd.f32 0.0, %v5896
      %5898 = vmatmul.f32.gmra.mxu0 %v4910
      %v5899 = vpop.f32.mrf.mxu0
      %v5900 = vadd.f32 0.0, %v5899
      %5901 = vmatmul.f32.gmra.mxu0 %v4912
      %v5902 = vpop.f32.mrf.mxu0
      %v5903 = vadd.f32 0.0, %v5902
      %5904 = vmatmul.f32.gmra.mxu0 %v4914
      %v5905 = vpop.f32.mrf.mxu0
      %v5906 = vadd.f32 0.0, %v5905
      %5907 = vmatmul.f32.gmra.mxu0 %v4916
      %v5908 = vpop.f32.mrf.mxu0
      %v5909 = vadd.f32 0.0, %v5908
      %5910 = vmatmul.f32.gmra.mxu0 %v4918
      %v5911 = vpop.f32.mrf.mxu0
      %v5912 = vadd.f32 0.0, %v5911
      %5913 = vmatmul.f32.gmra.mxu0 %v4920
      %v5914 = vpop.f32.mrf.mxu0
      %v5915 = vadd.f32 0.0, %v5914
      %5916 = vmatmul.f32.gmra.mxu0 %v4922
      %v5917 = vpop.f32.mrf.mxu0
      %v5918 = vadd.f32 0.0, %v5917
      %5919 = vmatmul.f32.gmra.mxu0 %v4924
      %v5920 = vpop.f32.mrf.mxu0
      %v5921 = vadd.f32 0.0, %v5920
      %5922 = vmatmul.f32.gmra.mxu0 %v4926
      %v5923 = vpop.f32.mrf.mxu0
      %v5924 = vadd.f32 0.0, %v5923
      %5925 = vmatmul.f32.gmra.mxu0 %v4928
      %v5926 = vpop.f32.mrf.mxu0
      %v5927 = vadd.f32 0.0, %v5926
      %5928 = vmatmul.f32.gmra.mxu0 %v4930
      %v5929 = vpop.f32.mrf.mxu0
      %v5930 = vadd.f32 0.0, %v5929
      %5931 = vmatmul.f32.gmra.mxu0 %v4932
      %v5932 = vpop.f32.mrf.mxu0
      %v5933 = vadd.f32 0.0, %v5932
      %5934 = vmatmul.f32.gmra.mxu0 %v4934
      %v5935 = vpop.f32.mrf.mxu0
      %v5936 = vadd.f32 0.0, %v5935
      %5937 = vmatmul.f32.gmra.mxu0 %v4936
      %v5938 = vpop.f32.mrf.mxu0
      %v5939 = vadd.f32 0.0, %v5938
      %5940 = vmatmul.f32.gmra.mxu0 %v4938
      %v5941 = vpop.f32.mrf.mxu0
      %v5942 = vadd.f32 0.0, %v5941
      %5943 = vmatmul.f32.gmra.mxu0 %v4940
      %v5944 = vpop.f32.mrf.mxu0
      %v5945 = vadd.f32 0.0, %v5944
      %5946 = vmatmul.f32.gmra.mxu0 %v4942
      %v5947 = vpop.f32.mrf.mxu0
      %v5948 = vadd.f32 0.0, %v5947
      %5949 = vmatmul.f32.gmra.mxu0 %v4944
      %v5950 = vpop.f32.mrf.mxu0
      %v5951 = vadd.f32 0.0, %v5950
      %5952 = vmatmul.f32.gmra.mxu0 %v5378
      %v5953 = vpop.f32.mrf.mxu0
      %v5954 = vadd.f32 0.0, %v5953
      %5955 = vmatmul.f32.gmra.mxu0 %v5380
      %v5956 = vpop.f32.mrf.mxu0
      %v5957 = vadd.f32 0.0, %v5956
      %5958 = vmatmul.f32.gmra.mxu0 %v5848
      %v5959 = vpop.f32.mrf.mxu0
      %v5960 = vadd.f32 0.0, %v5959
      %5961 = vmatmul.f32.gmra.mxu0 %v5850
      %v5962 = vpop.f32.mrf.mxu0
      %v5963 = vadd.f32 0.0, %v5962
      %5964 = vdwg.mxu0
      %v5965 = vadd.f32 %v5805, %v5870
      %v5966 = vadd.f32 %v5806, %v5873
      %v5967 = vadd.f32 %v5807, %v5876
      %v5968 = vadd.f32 %v5808, %v5879
      %v5969 = vadd.f32 %v5809, %v5882
      %v5970 = vadd.f32 %v5810, %v5885
      %v5971 = vadd.f32 %v5811, %v5888
      %v5972 = vadd.f32 %v5812, %v5891
      %v5973 = vadd.f32 %v5813, %v5894
      %v5974 = vadd.f32 %v5814, %v5897
      %v5975 = vadd.f32 %v5815, %v5900
      %v5976 = vadd.f32 %v5816, %v5903
      %v5977 = vadd.f32 %v5817, %v5906
      %v5978 = vadd.f32 %v5818, %v5909
      %v5979 = vadd.f32 %v5819, %v5912
      %v5980 = vadd.f32 %v5820, %v5915
      %v5981 = vadd.f32 %v5821, %v5918
      %v5982 = vadd.f32 %v5822, %v5921
      %v5983 = vadd.f32 %v5823, %v5924
      %v5984 = vadd.f32 %v5824, %v5927
      %v5985 = vadd.f32 %v5825, %v5930
      %v5986 = vadd.f32 %v5826, %v5933
      %v5987 = vadd.f32 %v5827, %v5936
      %v5988 = vadd.f32 %v5828, %v5939
      %v5989 = vadd.f32 %v5829, %v5942
      %v5990 = vadd.f32 %v5830, %v5945
      %v5991 = vadd.f32 %v5831, %v5948
      %v5992 = vadd.f32 %v5832, %v5951
      %v5993 = vadd.f32 %v5833, %v5954
      %v5994 = vadd.f32 %v5834, %v5957
      %v5995 = vadd.f32 %v5835, %v5960
      %v5996 = vadd.f32 %v5836, %v5963
      %s5997 = scalar_lea.vmem %s6, 112
      %v5998 = vld [vmem:[%s5997] sm:$0xff]
      %v5999 = vld [vmem:[%s5997 + $0x8] sm:$0xff]
      %v6000 = vsel %vm4394, %v4569, 0
      %v6002 = vsel %vm4394, %v4570, 0
      %6004 = vmatpush.msra.mxu0 0.0
      %6005 = vmatpush.msra.mxu0 0.0
      %6006 = vmatpush.msra.mxu0 0.0
      %6007 = vmatpush.msra.mxu0 0.0
      %6008 = vmatpush.msra.mxu0 0.0
      %6009 = vmatpush.msra.mxu0 0.0
      %6010 = vmatpush.msra.mxu0 0.0
      %6011 = vmatpush.msra.mxu0 0.0
      %6012 = vmatpush.msra.mxu0 0.0
      %6013 = vmatpush.msra.mxu0 0.0
      %6014 = vmatpush.msra.mxu0 0.0
      %6015 = vmatpush.msra.mxu0 0.0
      %6016 = vmatpush.msra.mxu0 0.0
      %6017 = vmatpush.msra.mxu0 0.0
      %6018 = vmatpush.msra.mxu0 %v5999
      %6019 = vmatpush.msra.mxu0 %v5998
      %6020 = vmatmul.f32.gmra.mxu0 %v4713
      %v6021 = vpop.f32.mrf.mxu0
      %v6022 = vadd.f32 0.0, %v6021
      %6023 = vmatmul.f32.gmra.mxu0 %v4715
      %v6024 = vpop.f32.mrf.mxu0
      %v6025 = vadd.f32 0.0, %v6024
      %6026 = vmatmul.f32.gmra.mxu0 %v4717
      %v6027 = vpop.f32.mrf.mxu0
      %v6028 = vadd.f32 0.0, %v6027
      %6029 = vmatmul.f32.gmra.mxu0 %v4719
      %v6030 = vpop.f32.mrf.mxu0
      %v6031 = vadd.f32 0.0, %v6030
      %6032 = vmatmul.f32.gmra.mxu0 %v4721
      %v6033 = vpop.f32.mrf.mxu0
      %v6034 = vadd.f32 0.0, %v6033
      %6035 = vmatmul.f32.gmra.mxu0 %v4723
      %v6036 = vpop.f32.mrf.mxu0
      %v6037 = vadd.f32 0.0, %v6036
      %6038 = vmatmul.f32.gmra.mxu0 %v4725
      %v6039 = vpop.f32.mrf.mxu0
      %v6040 = vadd.f32 0.0, %v6039
      %6041 = vmatmul.f32.gmra.mxu0 %v4727
      %v6042 = vpop.f32.mrf.mxu0
      %v6043 = vadd.f32 0.0, %v6042
      %6044 = vmatmul.f32.gmra.mxu0 %v4729
      %v6045 = vpop.f32.mrf.mxu0
      %v6046 = vadd.f32 0.0, %v6045
      %6047 = vmatmul.f32.gmra.mxu0 %v4731
      %v6048 = vpop.f32.mrf.mxu0
      %v6049 = vadd.f32 0.0, %v6048
      %6050 = vmatmul.f32.gmra.mxu0 %v4733
      %v6051 = vpop.f32.mrf.mxu0
      %v6052 = vadd.f32 0.0, %v6051
      %6053 = vmatmul.f32.gmra.mxu0 %v4735
      %v6054 = vpop.f32.mrf.mxu0
      %v6055 = vadd.f32 0.0, %v6054
      %6056 = vmatmul.f32.gmra.mxu0 %v4737
      %v6057 = vpop.f32.mrf.mxu0
      %v6058 = vadd.f32 0.0, %v6057
      %6059 = vmatmul.f32.gmra.mxu0 %v4739
      %v6060 = vpop.f32.mrf.mxu0
      %v6061 = vadd.f32 0.0, %v6060
      %6062 = vmatmul.f32.gmra.mxu0 %v4741
      %v6063 = vpop.f32.mrf.mxu0
      %v6064 = vadd.f32 0.0, %v6063
      %6065 = vmatmul.f32.gmra.mxu0 %v4743
      %v6066 = vpop.f32.mrf.mxu0
      %v6067 = vadd.f32 0.0, %v6066
      %6068 = vmatmul.f32.gmra.mxu0 %v4745
      %v6069 = vpop.f32.mrf.mxu0
      %v6070 = vadd.f32 0.0, %v6069
      %6071 = vmatmul.f32.gmra.mxu0 %v4747
      %v6072 = vpop.f32.mrf.mxu0
      %v6073 = vadd.f32 0.0, %v6072
      %6074 = vmatmul.f32.gmra.mxu0 %v4749
      %v6075 = vpop.f32.mrf.mxu0
      %v6076 = vadd.f32 0.0, %v6075
      %6077 = vmatmul.f32.gmra.mxu0 %v4751
      %v6078 = vpop.f32.mrf.mxu0
      %v6079 = vadd.f32 0.0, %v6078
      %6080 = vmatmul.f32.gmra.mxu0 %v4753
      %v6081 = vpop.f32.mrf.mxu0
      %v6082 = vadd.f32 0.0, %v6081
      %6083 = vmatmul.f32.gmra.mxu0 %v4755
      %v6084 = vpop.f32.mrf.mxu0
      %v6085 = vadd.f32 0.0, %v6084
      %6086 = vmatmul.f32.gmra.mxu0 %v4757
      %v6087 = vpop.f32.mrf.mxu0
      %v6088 = vadd.f32 0.0, %v6087
      %6089 = vmatmul.f32.gmra.mxu0 %v4759
      %v6090 = vpop.f32.mrf.mxu0
      %v6091 = vadd.f32 0.0, %v6090
      %6092 = vmatmul.f32.gmra.mxu0 %v4761
      %v6093 = vpop.f32.mrf.mxu0
      %v6094 = vadd.f32 0.0, %v6093
      %6095 = vmatmul.f32.gmra.mxu0 %v4763
      %v6096 = vpop.f32.mrf.mxu0
      %v6097 = vadd.f32 0.0, %v6096
      %6098 = vmatmul.f32.gmra.mxu0 %v4765
      %v6099 = vpop.f32.mrf.mxu0
      %v6100 = vadd.f32 0.0, %v6099
      %6101 = vmatmul.f32.gmra.mxu0 %v4767
      %v6102 = vpop.f32.mrf.mxu0
      %v6103 = vadd.f32 0.0, %v6102
      %6104 = vmatmul.f32.gmra.mxu0 %v5530
      %v6105 = vpop.f32.mrf.mxu0
      %v6106 = vadd.f32 0.0, %v6105
      %6107 = vmatmul.f32.gmra.mxu0 %v5532
      %v6108 = vpop.f32.mrf.mxu0
      %v6109 = vadd.f32 0.0, %v6108
      %6110 = vmatmul.f32.gmra.mxu0 %v6000
      %v6111 = vpop.f32.mrf.mxu0
      %v6112 = vadd.f32 0.0, %v6111
      %6113 = vmatmul.f32.gmra.mxu0 %v6002
      %v6114 = vpop.f32.mrf.mxu0
      %v6115 = vadd.f32 0.0, %v6114
      %6116 = vdwg.mxu0
      %v6117 = vadd.f32 %v5965, %v6022
      %v6118 = vadd.f32 %v5966, %v6025
      %v6119 = vadd.f32 %v5967, %v6028
      %v6120 = vadd.f32 %v5968, %v6031
      %v6121 = vadd.f32 %v5969, %v6034
      %v6122 = vadd.f32 %v5970, %v6037
      %v6123 = vadd.f32 %v5971, %v6040
      %v6124 = vadd.f32 %v5972, %v6043
      %v6125 = vadd.f32 %v5973, %v6046
      %v6126 = vadd.f32 %v5974, %v6049
      %v6127 = vadd.f32 %v5975, %v6052
      %v6128 = vadd.f32 %v5976, %v6055
      %v6129 = vadd.f32 %v5977, %v6058
      %v6130 = vadd.f32 %v5978, %v6061
      %v6131 = vadd.f32 %v5979, %v6064
      %v6132 = vadd.f32 %v5980, %v6067
      %v6133 = vadd.f32 %v5981, %v6070
      %v6134 = vadd.f32 %v5982, %v6073
      %v6135 = vadd.f32 %v5983, %v6076
      %v6136 = vadd.f32 %v5984, %v6079
      %v6137 = vadd.f32 %v5985, %v6082
      %v6138 = vadd.f32 %v5986, %v6085
      %v6139 = vadd.f32 %v5987, %v6088
      %v6140 = vadd.f32 %v5988, %v6091
      %v6141 = vadd.f32 %v5989, %v6094
      %v6142 = vadd.f32 %v5990, %v6097
      %v6143 = vadd.f32 %v5991, %v6100
      %v6144 = vadd.f32 %v5992, %v6103
      %v6145 = vadd.f32 %v5993, %v6106
      %v6146 = vadd.f32 %v5994, %v6109
      %v6147 = vadd.f32 %v5995, %v6112
      %v6148 = vadd.f32 %v5996, %v6115
      %v6150 = vrot.slane %v4569, 1
      %v6151 = vrot.slane %v4570, 1
      %v6152 = vsel %vm1823, %v6150, %v6151
      %v6153 = vrot.slane %v4571, 1
      %v6154 = vsel %vm1823, %v6151, %v6153
      %s6155 = scalar_lea.vmem %s6, 128
      %v6156 = vld [vmem:[%s6155] sm:$0xff]
      %v6157 = vld [vmem:[%s6155 + $0x8] sm:$0xff]
      %v6158 = vsel %vm4394, %v6152, 0
      %v6160 = vsel %vm4394, %v6154, 0
      %6162 = vmatpush.msra.mxu0 0.0
      %6163 = vmatpush.msra.mxu0 0.0
      %6164 = vmatpush.msra.mxu0 0.0
      %6165 = vmatpush.msra.mxu0 0.0
      %6166 = vmatpush.msra.mxu0 0.0
      %6167 = vmatpush.msra.mxu0 0.0
      %6168 = vmatpush.msra.mxu0 0.0
      %6169 = vmatpush.msra.mxu0 0.0
      %6170 = vmatpush.msra.mxu0 0.0
      %6171 = vmatpush.msra.mxu0 0.0
      %6172 = vmatpush.msra.mxu0 0.0
      %6173 = vmatpush.msra.mxu0 0.0
      %6174 = vmatpush.msra.mxu0 0.0
      %6175 = vmatpush.msra.mxu0 0.0
      %6176 = vmatpush.msra.mxu0 %v6157
      %6177 = vmatpush.msra.mxu0 %v6156
      %6178 = vmatmul.f32.gmra.mxu0 %v5166
      %v6179 = vpop.f32.mrf.mxu0
      %v6180 = vadd.f32 0.0, %v6179
      %6181 = vmatmul.f32.gmra.mxu0 %v5168
      %v6182 = vpop.f32.mrf.mxu0
      %v6183 = vadd.f32 0.0, %v6182
      %6184 = vmatmul.f32.gmra.mxu0 %v5170
      %v6185 = vpop.f32.mrf.mxu0
      %v6186 = vadd.f32 0.0, %v6185
      %6187 = vmatmul.f32.gmra.mxu0 %v5172
      %v6188 = vpop.f32.mrf.mxu0
      %v6189 = vadd.f32 0.0, %v6188
      %6190 = vmatmul.f32.gmra.mxu0 %v5174
      %v6191 = vpop.f32.mrf.mxu0
      %v6192 = vadd.f32 0.0, %v6191
      %6193 = vmatmul.f32.gmra.mxu0 %v5176
      %v6194 = vpop.f32.mrf.mxu0
      %v6195 = vadd.f32 0.0, %v6194
      %6196 = vmatmul.f32.gmra.mxu0 %v5178
      %v6197 = vpop.f32.mrf.mxu0
      %v6198 = vadd.f32 0.0, %v6197
      %6199 = vmatmul.f32.gmra.mxu0 %v5180
      %v6200 = vpop.f32.mrf.mxu0
      %v6201 = vadd.f32 0.0, %v6200
      %6202 = vmatmul.f32.gmra.mxu0 %v5182
      %v6203 = vpop.f32.mrf.mxu0
      %v6204 = vadd.f32 0.0, %v6203
      %6205 = vmatmul.f32.gmra.mxu0 %v5184
      %v6206 = vpop.f32.mrf.mxu0
      %v6207 = vadd.f32 0.0, %v6206
      %6208 = vmatmul.f32.gmra.mxu0 %v5186
      %v6209 = vpop.f32.mrf.mxu0
      %v6210 = vadd.f32 0.0, %v6209
      %6211 = vmatmul.f32.gmra.mxu0 %v5188
      %v6212 = vpop.f32.mrf.mxu0
      %v6213 = vadd.f32 0.0, %v6212
      %6214 = vmatmul.f32.gmra.mxu0 %v5190
      %v6215 = vpop.f32.mrf.mxu0
      %v6216 = vadd.f32 0.0, %v6215
      %6217 = vmatmul.f32.gmra.mxu0 %v5192
      %v6218 = vpop.f32.mrf.mxu0
      %v6219 = vadd.f32 0.0, %v6218
      %6220 = vmatmul.f32.gmra.mxu0 %v5194
      %v6221 = vpop.f32.mrf.mxu0
      %v6222 = vadd.f32 0.0, %v6221
      %6223 = vmatmul.f32.gmra.mxu0 %v5196
      %v6224 = vpop.f32.mrf.mxu0
      %v6225 = vadd.f32 0.0, %v6224
      %6226 = vmatmul.f32.gmra.mxu0 %v5198
      %v6227 = vpop.f32.mrf.mxu0
      %v6228 = vadd.f32 0.0, %v6227
      %6229 = vmatmul.f32.gmra.mxu0 %v5200
      %v6230 = vpop.f32.mrf.mxu0
      %v6231 = vadd.f32 0.0, %v6230
      %6232 = vmatmul.f32.gmra.mxu0 %v5202
      %v6233 = vpop.f32.mrf.mxu0
      %v6234 = vadd.f32 0.0, %v6233
      %6235 = vmatmul.f32.gmra.mxu0 %v5204
      %v6236 = vpop.f32.mrf.mxu0
      %v6237 = vadd.f32 0.0, %v6236
      %6238 = vmatmul.f32.gmra.mxu0 %v5206
      %v6239 = vpop.f32.mrf.mxu0
      %v6240 = vadd.f32 0.0, %v6239
      %6241 = vmatmul.f32.gmra.mxu0 %v5208
      %v6242 = vpop.f32.mrf.mxu0
      %v6243 = vadd.f32 0.0, %v6242
      %6244 = vmatmul.f32.gmra.mxu0 %v5210
      %v6245 = vpop.f32.mrf.mxu0
      %v6246 = vadd.f32 0.0, %v6245
      %6247 = vmatmul.f32.gmra.mxu0 %v5212
      %v6248 = vpop.f32.mrf.mxu0
      %v6249 = vadd.f32 0.0, %v6248
      %6250 = vmatmul.f32.gmra.mxu0 %v5214
      %v6251 = vpop.f32.mrf.mxu0
      %v6252 = vadd.f32 0.0, %v6251
      %6253 = vmatmul.f32.gmra.mxu0 %v5216
      %v6254 = vpop.f32.mrf.mxu0
      %v6255 = vadd.f32 0.0, %v6254
      %6256 = vmatmul.f32.gmra.mxu0 %v5218
      %v6257 = vpop.f32.mrf.mxu0
      %v6258 = vadd.f32 0.0, %v6257
      %6259 = vmatmul.f32.gmra.mxu0 %v5220
      %v6260 = vpop.f32.mrf.mxu0
      %v6261 = vadd.f32 0.0, %v6260
      %6262 = vmatmul.f32.gmra.mxu0 %v5688
      %v6263 = vpop.f32.mrf.mxu0
      %v6264 = vadd.f32 0.0, %v6263
      %6265 = vmatmul.f32.gmra.mxu0 %v5690
      %v6266 = vpop.f32.mrf.mxu0
      %v6267 = vadd.f32 0.0, %v6266
      %6268 = vmatmul.f32.gmra.mxu0 %v6158
      %v6269 = vpop.f32.mrf.mxu0
      %v6270 = vadd.f32 0.0, %v6269
      %6271 = vmatmul.f32.gmra.mxu0 %v6160
      %v6272 = vpop.f32.mrf.mxu0
      %v6273 = vadd.f32 0.0, %v6272
      %6274 = vdwg.mxu0
      %v6275 = vadd.f32 %v6117, %v6180
      %v6276 = vadd.f32 %v6118, %v6183
      %v6277 = vadd.f32 %v6119, %v6186
      %v6278 = vadd.f32 %v6120, %v6189
      %v6279 = vadd.f32 %v6121, %v6192
      %v6280 = vadd.f32 %v6122, %v6195
      %v6281 = vadd.f32 %v6123, %v6198
      %v6282 = vadd.f32 %v6124, %v6201
      %v6283 = vadd.f32 %v6125, %v6204
      %v6284 = vadd.f32 %v6126, %v6207
      %v6285 = vadd.f32 %v6127, %v6210
      %v6286 = vadd.f32 %v6128, %v6213
      %v6287 = vadd.f32 %v6129, %v6216
      %v6288 = vadd.f32 %v6130, %v6219
      %v6289 = vadd.f32 %v6131, %v6222
      %v6290 = vadd.f32 %v6132, %v6225
      %v6291 = vadd.f32 %v6133, %v6228
      %v6292 = vadd.f32 %v6134, %v6231
      %v6293 = vadd.f32 %v6135, %v6234
      %v6294 = vadd.f32 %v6136, %v6237
      %v6295 = vadd.f32 %v6137, %v6240
      %v6296 = vadd.f32 %v6138, %v6243
      %v6297 = vadd.f32 %v6139, %v6246
      %v6298 = vadd.f32 %v6140, %v6249
      %v6299 = vadd.f32 %v6141, %v6252
      %v6300 = vadd.f32 %v6142, %v6255
      %v6301 = vadd.f32 %v6143, %v6258
      %v6302 = vadd.f32 %v6144, %v6261
      %v6303 = vadd.f32 %v6145, %v6264
      %v6304 = vadd.f32 %v6146, %v6267
      %v6305 = vadd.f32 %v6147, %v6270
      %v6306 = vadd.f32 %v6148, %v6273
      %v6307 = vld [vmem:[%s7] sm:$0x1]
      %v6309 = vperm.slane %v6307, 0
      %v6311 = vmul.f32 %v6275, %v6309
      %v6312 = vmul.f32 %v6276, %v6309
      %v6313 = vmul.f32 %v6277, %v6309
      %v6314 = vmul.f32 %v6278, %v6309
      %v6315 = vmul.f32 %v6279, %v6309
      %v6316 = vmul.f32 %v6280, %v6309
      %v6317 = vmul.f32 %v6281, %v6309
      %v6318 = vmul.f32 %v6282, %v6309
      %v6319 = vmul.f32 %v6283, %v6309
      %v6320 = vmul.f32 %v6284, %v6309
      %v6321 = vmul.f32 %v6285, %v6309
      %v6322 = vmul.f32 %v6286, %v6309
      %v6323 = vmul.f32 %v6287, %v6309
      %v6324 = vmul.f32 %v6288, %v6309
      %v6325 = vmul.f32 %v6289, %v6309
      %v6326 = vmul.f32 %v6290, %v6309
      %v6327 = vmul.f32 %v6291, %v6309
      %v6328 = vmul.f32 %v6292, %v6309
      %v6329 = vmul.f32 %v6293, %v6309
      %v6330 = vmul.f32 %v6294, %v6309
      %v6331 = vmul.f32 %v6295, %v6309
      %v6332 = vmul.f32 %v6296, %v6309
      %v6333 = vmul.f32 %v6297, %v6309
      %v6334 = vmul.f32 %v6298, %v6309
      %v6335 = vmul.f32 %v6299, %v6309
      %v6336 = vmul.f32 %v6300, %v6309
      %v6337 = vmul.f32 %v6301, %v6309
      %v6338 = vmul.f32 %v6302, %v6309
      %v6339 = vmul.f32 %v6303, %v6309
      %v6340 = vmul.f32 %v6304, %v6309
      %v6341 = vmul.f32 %v6305, %v6309
      %v6342 = vmul.f32 %v6306, %v6309
      %v6343 = vld [vmem:[%s8] sm:$0x1]
      %v6345 = vperm.slane %v6343, 0
      %v6347 = vadd.f32 %v6311, %v6345
      %v6348 = vadd.f32 %v6312, %v6345
      %v6349 = vadd.f32 %v6313, %v6345
      %v6350 = vadd.f32 %v6314, %v6345
      %v6351 = vadd.f32 %v6315, %v6345
      %v6352 = vadd.f32 %v6316, %v6345
      %v6353 = vadd.f32 %v6317, %v6345
      %v6354 = vadd.f32 %v6318, %v6345
      %v6355 = vadd.f32 %v6319, %v6345
      %v6356 = vadd.f32 %v6320, %v6345
      %v6357 = vadd.f32 %v6321, %v6345
      %v6358 = vadd.f32 %v6322, %v6345
      %v6359 = vadd.f32 %v6323, %v6345
      %v6360 = vadd.f32 %v6324, %v6345
      %v6361 = vadd.f32 %v6325, %v6345
      %v6362 = vadd.f32 %v6326, %v6345
      %v6363 = vadd.f32 %v6327, %v6345
      %v6364 = vadd.f32 %v6328, %v6345
      %v6365 = vadd.f32 %v6329, %v6345
      %v6366 = vadd.f32 %v6330, %v6345
      %v6367 = vadd.f32 %v6331, %v6345
      %v6368 = vadd.f32 %v6332, %v6345
      %v6369 = vadd.f32 %v6333, %v6345
      %v6370 = vadd.f32 %v6334, %v6345
      %v6371 = vadd.f32 %v6335, %v6345
      %v6372 = vadd.f32 %v6336, %v6345
      %v6373 = vadd.f32 %v6337, %v6345
      %v6374 = vadd.f32 %v6338, %v6345
      %v6375 = vadd.f32 %v6339, %v6345
      %v6376 = vadd.f32 %v6340, %v6345
      %v6377 = vadd.f32 %v6341, %v6345
      %v6378 = vadd.f32 %v6342, %v6345
      %v6379 = vmax.f32 %v6347, 0.0
      %v6380 = vmax.f32 %v6348, 0.0
      %v6381 = vmax.f32 %v6349, 0.0
      %v6382 = vmax.f32 %v6350, 0.0
      %v6383 = vmax.f32 %v6351, 0.0
      %v6384 = vmax.f32 %v6352, 0.0
      %v6385 = vmax.f32 %v6353, 0.0
      %v6386 = vmax.f32 %v6354, 0.0
      %v6387 = vmax.f32 %v6355, 0.0
      %v6388 = vmax.f32 %v6356, 0.0
      %v6389 = vmax.f32 %v6357, 0.0
      %v6390 = vmax.f32 %v6358, 0.0
      %v6391 = vmax.f32 %v6359, 0.0
      %v6392 = vmax.f32 %v6360, 0.0
      %v6393 = vmax.f32 %v6361, 0.0
      %v6394 = vmax.f32 %v6362, 0.0
      %v6395 = vmax.f32 %v6363, 0.0
      %v6396 = vmax.f32 %v6364, 0.0
      %v6397 = vmax.f32 %v6365, 0.0
      %v6398 = vmax.f32 %v6366, 0.0
      %v6399 = vmax.f32 %v6367, 0.0
      %v6400 = vmax.f32 %v6368, 0.0
      %v6401 = vmax.f32 %v6369, 0.0
      %v6402 = vmax.f32 %v6370, 0.0
      %v6403 = vmax.f32 %v6371, 0.0
      %v6404 = vmax.f32 %v6372, 0.0
      %v6405 = vmax.f32 %v6373, 0.0
      %v6406 = vmax.f32 %v6374, 0.0
      %v6407 = vmax.f32 %v6375, 0.0
      %v6408 = vmax.f32 %v6376, 0.0
      %v6409 = vmax.f32 %v6377, 0.0
      %v6410 = vmax.f32 %v6378, 0.0
      %6411 = vst.msk [vmem:[%s352] sm:$0xff] %vm4394, %v6379
      %6412 = vst.msk [vmem:[%s352 + $0x8] sm:$0xff] %vm4394, %v6380
      %6413 = vst.msk [vmem:[%s352 + $0x10] sm:$0xff] %vm4394, %v6381
      %6414 = vst.msk [vmem:[%s352 + $0x18] sm:$0xff] %vm4394, %v6382
      %6415 = vst.msk [vmem:[%s352 + $0x20] sm:$0xff] %vm4394, %v6383
      %6416 = vst.msk [vmem:[%s352 + $0x28] sm:$0xff] %vm4394, %v6384
      %6417 = vst.msk [vmem:[%s352 + $0x30] sm:$0xff] %vm4394, %v6385
      %6418 = vst.msk [vmem:[%s352 + $0x38] sm:$0xff] %vm4394, %v6386
      %6419 = vst.msk [vmem:[%s352 + $0x40] sm:$0xff] %vm4394, %v6387
      %6420 = vst.msk [vmem:[%s352 + $0x48] sm:$0xff] %vm4394, %v6388
      %6421 = vst.msk [vmem:[%s352 + $0x50] sm:$0xff] %vm4394, %v6389
      %6422 = vst.msk [vmem:[%s352 + $0x58] sm:$0xff] %vm4394, %v6390
      %6423 = vst.msk [vmem:[%s352 + $0x60] sm:$0xff] %vm4394, %v6391
      %6424 = vst.msk [vmem:[%s352 + $0x68] sm:$0xff] %vm4394, %v6392
      %6425 = vst.msk [vmem:[%s352 + $0x70] sm:$0xff] %vm4394, %v6393
      %6426 = vst.msk [vmem:[%s352 + $0x78] sm:$0xff] %vm4394, %v6394
      %6427 = vst.msk [vmem:[%s352 + $0x80] sm:$0xff] %vm4394, %v6395
      %6428 = vst.msk [vmem:[%s352 + $0x88] sm:$0xff] %vm4394, %v6396
      %6429 = vst.msk [vmem:[%s352 + $0x90] sm:$0xff] %vm4394, %v6397
      %6430 = vst.msk [vmem:[%s352 + $0x98] sm:$0xff] %vm4394, %v6398
      %6431 = vst.msk [vmem:[%s352 + $0xa0] sm:$0xff] %vm4394, %v6399
      %6432 = vst.msk [vmem:[%s352 + $0xa8] sm:$0xff] %vm4394, %v6400
      %6433 = vst.msk [vmem:[%s352 + $0xb0] sm:$0xff] %vm4394, %v6401
      %6434 = vst.msk [vmem:[%s352 + $0xb8] sm:$0xff] %vm4394, %v6402
      %6435 = vst.msk [vmem:[%s352 + $0xc0] sm:$0xff] %vm4394, %v6403
      %6436 = vst.msk [vmem:[%s352 + $0xc8] sm:$0xff] %vm4394, %v6404
      %6437 = vst.msk [vmem:[%s352 + $0xd0] sm:$0xff] %vm4394, %v6405
      %6438 = vst.msk [vmem:[%s352 + $0xd8] sm:$0xff] %vm4394, %v6406
      %6439 = vst.msk [vmem:[%s352 + $0xe0] sm:$0xff] %vm4394, %v6407
      %6440 = vst.msk [vmem:[%s352 + $0xe8] sm:$0xff] %vm4394, %v6408
      %6441 = vst.msk [vmem:[%s352 + $0xf0] sm:$0xff] %vm4394, %v6409
      %6442 = vst.msk [vmem:[%s352 + $0xf8] sm:$0xff] %vm4394, %v6410
      %p6443 = scmp.lt.s32.totalorder %s20, 1
      %s6444 = scalar_select %p6443, %s20, 1
      %s6445 = smul.addr %s6444, 32
      %s6446 = smul.addr %s6445, 8
      %s6447 = scalar_lea.vmem %s9, %s6446
      // Predicated region
      $region57: #{up_forward.3} parent=55 // pred_check
        %p6448 = pneg %p237
      $region58: #{up_forward.3} parent=55 // pred_check_branch
        %6450 = sbr.rel (%p6448) target = $region60
      $region59: #{up_forward.3} parent=55 // pred_region
        _
      $region60: #{up_forward.3} parent=55 // pred_fallthru
        _
    $region56: #{up_forward.3} parent=5 // pred_fallthru
      _
    %p6451 = scmp.le.s32.totalorder 2, %s15
    // Predicated region
    $region61: #{up_forward.3} parent=5 // pred_check
      %p6452 = pneg %p6451
    $region62: #{up_forward.3} parent=5 // pred_check_branch
      %6454 = sbr.rel (%p6452) target = $region64
    $region63: #{up_forward.3} parent=5 // pred_region
      %s6455 = ssub.s32 %s15, 2
      // Predicated region
      $region65: #{up_forward.3} parent=63 // pred_check
        %p6456 = pneg %p243
      $region66: #{up_forward.3} parent=63 // pred_check_branch
        %6458 = sbr.rel (%p6456) target = $region68
      $region67: #{up_forward.3} parent=63 // pred_region
        %p6459 = scmp.lt.s32.totalorder %s21, 1
        %s6460 = scalar_select %p6459, %s21, 1
        %s6461 = smul.addr %s6460, 32
        %s6462 = smul.addr %s6461, 8
        %s6463 = scalar_lea.vmem %s9, %s6462
      $region68: #{up_forward.3} parent=63 // pred_fallthru
        _
    $region64: #{up_forward.3} parent=5 // pred_fallthru
      _
  $region6: #{up_forward.3} parent=0 // loop_footer
    %s19 = sadd.s32 1, %s15
  $region7: #{up_forward.3} parent=0 // loop_footer_branch
    %14 = sbr.rel target = $region3
  $region8: #{up_forward.3} parent=0 // loop_exit
    _

</llo_original>
